<compile_context>
chip_gen: v5e
topology: v5e:2x2
jax: 0.10.0
libtpu: 0.0.40
codegen_flags: <defaults>
</compile_context>

<pallas_src>
import jax
import jax.numpy as jnp
from jax import lax
from jax.experimental import pallas as pl
from jax.experimental.pallas import tpu as pltpu

EPS = 1e-5


# ---------------------------- VMEM budgeting ----------------------------------

def _budgets():
    """Generation-aware (block_budget, vmem_limit) in bytes."""
    cap = 64 * 1024 * 1024                      # conservative default (v7x-like)
    try:
        cap = int(pltpu.get_tpu_info().vmem_capacity_bytes)
    except Exception:
        pass
    block_budget = min(cap // 6, 24 * 1024 * 1024)   # per double-buffered block
    vmem_limit = min(cap // 2, 100 * 1024 * 1024)    # scoped-VMEM request
    return block_budget, vmem_limit


def _round_up(x, m):
    return ((x + m - 1) // m) * m


def _pick_tile(rows, row_bytes, block_budget):
    """Largest row tile that fits the double-buffered block budget; leaves >= 2
    grid steps when possible so a 'parallel' axis can feed both v7x cores."""
    cap = _round_up(rows, 8)
    for t in (2048, 1024, 512, 256, 128):
        if 2 * t * row_bytes <= block_budget and (rows >= 2 * t or t == 128):
            return min(t, cap)
    return min(128, cap)


def _pad_rows(x, mult):
    pad = (-x.shape[0]) % mult
    if pad == 0:
        return x
    return jnp.pad(x, ((0, pad),) + ((0, 0),) * (x.ndim - 1))


# ==============================================================================
#  Fused single-kernel path (used whenever the whole block fits in VMEM).
# ==============================================================================

def _fused_fits(N, H, W, Cin, Cout, Hout, Wout, vmem_limit):
    M = N * Hout * Wout
    b = 4 * N * (H + 2) * (W + 2) * Cin           # padded input (or its phases)
    b += 4 * N * (Hout + 2) * (Wout + 2) * Cout   # padded-h1 VMEM scratch
    b += 4 * M * Cout * 10                        # acc/tap/intermediate headroom
    b += 2 * 9 * (Cin + Cout) * Cout + 4 * M * Cout
    return 3 * b < vmem_limit


def _fused_call(x, p, same_shape, vmem_limit):
    """x: (N, H, W, Cin) f32 NHWC.  Returns (M, Cout) f32."""
    N, H, W, Cin = x.shape
    stride = 1 if same_shape else 2
    Cout = p['w1'].shape[-1]
    Hout = (H - 1) // stride + 1
    Wout = (W - 1) // stride + 1
    M = N * Hout * Wout
    f32, bf16 = jnp.float32, jnp.bfloat16

    xp = jnp.pad(x, ((0, 0), (1, 1), (1, 1), (0, 0)))
    w1 = p['w1'].reshape(9, Cin, Cout).astype(bf16)
    w2 = p['w2'].reshape(9, Cout, Cout).astype(bf16)
    g1 = p['g1'].reshape(1, Cout).astype(f32)
    b1 = p['b1'].reshape(1, Cout).astype(f32)
    g2 = p['g2'].reshape(1, Cout).astype(f32)
    b2 = p['b2'].reshape(1, Cout).astype(f32)

    if same_shape:
        act_inputs = [xp]                         # residual read from the interior
    else:
        # Even/odd phase split of the padded input: every stride-2 tap window
        # becomes a unit-stride slice of one phase array (no strided slicing
        # in-kernel, same total bytes as xp).
        act_inputs = [xp[:, a::2, b::2, :] for a in (0, 1) for b in (0, 1)]

    inputs = list(act_inputs) + [w1, g1, b1, w2, g2, b2]
    if not same_shape:
        inputs += [p['w3'].reshape(Cin, Cout).astype(bf16),
                   p['b3'].reshape(1, Cout).astype(f32)]

    n_act = len(act_inputs)
    inv_m = 1.0 / M

    def kernel(*refs):
        act_refs = refs[:n_act]
        w1_ref, g1_ref, b1_ref, w2_ref, g2_ref, b2_ref = refs[n_act:n_act + 6]
        if same_shape:
            out_ref, hp_ref = refs[n_act + 6], refs[n_act + 7]
        else:
            w3_ref, b3_ref = refs[n_act + 6], refs[n_act + 7]
            out_ref, hp_ref = refs[n_act + 8], refs[n_act + 9]

        act = [r[...] for r in act_refs]

        # ---- conv1 (3x3, stride=s, pad=1, no bias): in-VMEM tap gather ----
        acc1 = jnp.zeros((M, Cout), f32)
        for dy in range(3):
            for dx in range(3):
                t = dy * 3 + dx
                if same_shape:
                    win = act[0][:, dy:dy + Hout, dx:dx + Wout, :]
                else:
                    src = act[(dy % 2) * 2 + (dx % 2)]
                    win = src[:, dy // 2:dy // 2 + Hout, dx // 2:dx // 2 + Wout, :]
                a = win.reshape(M, Cin).astype(bf16)          # bf16 MXU operands
                acc1 = acc1 + jnp.dot(a, w1_ref[t], preferred_element_type=f32)

        # ---- bn1 (training-mode batch stats, biased var) + relu ----
        mean1 = jnp.sum(acc1, axis=0, keepdims=True) * inv_m
        var1 = jnp.maximum(
            jnp.sum(acc1 * acc1, axis=0, keepdims=True) * inv_m - mean1 * mean1, 0.0)
        sc1 = g1_ref[...] * lax.rsqrt(var1 + EPS)
        sh1 = b1_ref[...] - mean1 * sc1
        h1 = jnp.maximum(acc1 * sc1 + sh1, 0.0)

        # ---- zero-pad h1 in VMEM scratch (conv2 input never touches HBM) ----
        hp_ref[...] = jnp.zeros_like(hp_ref)
        hp_ref[:, 1:Hout + 1, 1:Wout + 1, :] = h1.reshape(N, Hout, Wout, Cout)
        hpv = hp_ref[...]

        # ---- conv2 (3x3, stride=1, pad=1, no bias) ----
        acc2 = jnp.zeros((M, Cout), f32)
        for dy in range(3):
            for dx in range(3):
                t = dy * 3 + dx
                a = hpv[:, dy:dy + Hout, dx:dx + Wout, :].reshape(M, Cout).astype(bf16)
                acc2 = acc2 + jnp.dot(a, w2_ref[t], preferred_element_type=f32)

        # ---- bn2 ----
        mean2 = jnp.sum(acc2, axis=0, keepdims=True) * inv_m
        var2 = jnp.maximum(
            jnp.sum(acc2 * acc2, axis=0, keepdims=True) * inv_m - mean2 * mean2, 0.0)
        sc2 = g2_ref[...] * lax.rsqrt(var2 + EPS)
        sh2 = b2_ref[...] - mean2 * sc2

        # ---- residual branch ----
        if same_shape:
            res = act[0][:, 1:H + 1, 1:W + 1, :].reshape(M, Cin)   # identity, f32
        else:
            # 1x1 conv, stride 2, with bias.  (bn3 is defined in the PyTorch
            # module but never applied in forward(), so it is omitted.)
            a3 = act[3][:, 0:Hout, 0:Wout, :].reshape(M, Cin).astype(bf16)
            res = jnp.dot(a3, w3_ref[...], preferred_element_type=f32) + b3_ref[...]

        out_ref[...] = jnp.maximum(acc2 * sc2 + sh2 + res, 0.0)

    def _full(arr):
        nd = arr.ndim
        return pl.BlockSpec(arr.shape, lambda i, _nd=nd: (0,) * _nd)

    return pl.pallas_call(
        kernel,
        out_shape=jax.ShapeDtypeStruct((M, Cout), f32),
        grid_spec=pltpu.PrefetchScalarGridSpec(
            num_scalar_prefetch=0,
            grid=(1,),
            in_specs=[_full(a) for a in inputs],
            out_specs=pl.BlockSpec((M, Cout), lambda i: (0, 0)),
            scratch_shapes=[pltpu.VMEM((N, Hout + 2, Wout + 2, Cout), f32)]),
        compiler_params=pltpu.CompilerParams(
            dimension_semantics=("arbitrary",),
            vmem_limit_bytes=vmem_limit),
    )(*inputs)


# ==============================================================================
#  Tiled fallback path (shapes that do not fit VMEM).
# ==============================================================================

def _conv_stats_kernel(a_ref, w_ref, o_ref, s_ref, q_ref):
    # bf16 taps/weights, f32 accumulation.  Per-tile partial stats (no init /
    # read-modify-write) so the row grid axis is genuinely 'parallel'; column
    # sums are done on the MXU via a ones-dot instead of a sublane reduction.
    y = jnp.dot(a_ref[...], w_ref[...], preferred_element_type=jnp.float32)
    o_ref[...] = y
    ones = jnp.ones((8, a_ref.shape[0]), jnp.float32)
    s_ref[...] = jnp.dot(ones, y, preferred_element_type=jnp.float32)
    q_ref[...] = jnp.dot(ones, y * y, preferred_element_type=jnp.float32)


def _conv_kernel(a_ref, w_ref, o_ref):
    # Stats-free conv for the 1x1 skip branch (its stats would be discarded).
    o_ref[...] = jnp.dot(a_ref[...], w_ref[...], preferred_element_type=jnp.float32)


def _affine_relu_kernel(x_ref, sc_ref, sh_ref, o_ref):
    o_ref[...] = jnp.maximum(x_ref[...] * sc_ref[...] + sh_ref[...], 0.0)


def _affine_add_relu_kernel(x_ref, sc_ref, sh_ref, r_ref, o_ref):
    o_ref[...] = jnp.maximum(x_ref[...] * sc_ref[...] + sh_ref[...] + r_ref[...], 0.0)


def conv_matmul_stats(a, w, block_budget, vmem_limit):
    """a: (M, Kc) folded taps, w: (Kc, Cout) -> (out (M, Cout) f32, sum, sumsq)."""
    M, Kc = a.shape
    Cout = w.shape[-1]
    a = a.astype(jnp.bfloat16)
    w = w.astype(jnp.bfloat16)
    tm = _pick_tile(M, 2 * Kc + 6 * Cout, block_budget)
    a = _pad_rows(a, tm)                       # zero rows: exact (contribute 0)
    Mp = a.shape[0]
    G = Mp // tm
    # TODO(synk): weights are grid-invariant; pipeline_mode=pl.Buffered(1) would
    # save one VMEM copy of them for very deep channel counts.
    o, s_part, q_part = pl.pallas_call(
        _conv_stats_kernel,
        out_shape=(jax.ShapeDtypeStruct((Mp, Cout), jnp.float32),
                   jax.ShapeDtypeStruct((G * 8, Cout), jnp.float32),
                   jax.ShapeDtypeStruct((G * 8, Cout), jnp.float32)),
        grid_spec=pltpu.PrefetchScalarGridSpec(
            num_scalar_prefetch=0,
            grid=(G,),
            in_specs=[pl.BlockSpec((tm, Kc), lambda i: (i, 0)),
                      pl.BlockSpec((Kc, Cout), lambda i: (0, 0))],   # resident
            out_specs=(pl.BlockSpec((tm, Cout), lambda i: (i, 0)),
                       pl.BlockSpec((8, Cout), lambda i: (i, 0)),
                       pl.BlockSpec((8, Cout), lambda i: (i, 0)))),
        compiler_params=pltpu.CompilerParams(
            dimension_semantics=("parallel",),        # v7x: shard across both TCs
            vmem_limit_bytes=vmem_limit),
    )(a, w)
    # Per-tile f32 partials reduced here (slightly better numerics than one
    # serial accumulation over the whole row axis).
    s = jnp.sum(s_part.reshape(G, 8, Cout)[:, 0, :], axis=0, keepdims=True)
    q = jnp.sum(q_part.reshape(G, 8, Cout)[:, 0, :], axis=0, keepdims=True)
    return o[:M], s, q


def conv_matmul(a, w, block_budget, vmem_limit):
    """Plain (stats-free) matmul conv: a (M, Kc), w (Kc, Cout) -> (M, Cout) f32."""
    M, Kc = a.shape
    Cout = w.shape[-1]
    a = a.astype(jnp.bfloat16)
    w = w.astype(jnp.bfloat16)
    tm = _pick_tile(M, 2 * Kc + 4 * Cout, block_budget)
    a = _pad_rows(a, tm)
    Mp = a.shape[0]
    o = pl.pallas_call(
        _conv_kernel,
        out_shape=jax.ShapeDtypeStruct((Mp, Cout), jnp.float32),
        grid_spec=pltpu.PrefetchScalarGridSpec(
            num_scalar_prefetch=0,
            grid=(Mp // tm,),
            in_specs=[pl.BlockSpec((tm, Kc), lambda i: (i, 0)),
                      pl.BlockSpec((Kc, Cout), lambda i: (0, 0))],
            out_specs=pl.BlockSpec((tm, Cout), lambda i: (i, 0))),
        compiler_params=pltpu.CompilerParams(
            dimension_semantics=("parallel",),
            vmem_limit_bytes=vmem_limit),
    )(a, w)
    return o[:M]


def affine_relu(x, scale, shift, block_budget, vmem_limit, res=None):
    """relu(x * scale + shift [+ res]), lane-dense for narrow channel counts."""
    M, C = x.shape
    arrs = [x] if res is None else [x, res]
    lane_dense = C < 128 and 128 % C == 0 and (M * C) % 128 == 0
    if lane_dense:
        # Repack to 128-wide rows so stores are full-lane vst.  Within a row the
        # channel index repeats with period C, so tiling scale/shift to 128
        # lanes keeps the math identical.  (Requires 128 % C == 0.)
        R = (M * C) // 128
        rep = 128 // C
        arrs = [a.reshape(R, 128) for a in arrs]
        scale = jnp.tile(scale, (1, rep))
        shift = jnp.tile(shift, (1, rep))
    R, L = arrs[0].shape
    tr = _pick_tile(R, 4 * L * (len(arrs) + 1), block_budget)
    arrs = [_pad_rows(a, tr) for a in arrs]
    Rp = arrs[0].shape[0]
    data_spec = pl.BlockSpec((tr, L), lambda i: (i, 0))
    vec_spec = pl.BlockSpec((1, L), lambda i: (0, 0))
    kernel = _affine_relu_kernel if res is None else _affine_add_relu_kernel
    in_specs = [data_spec, vec_spec, vec_spec] + ([data_spec] if res is not None else [])
    out = pl.pallas_call(
        kernel,
        out_shape=jax.ShapeDtypeStruct((Rp, L), jnp.float32),
        grid_spec=pltpu.PrefetchScalarGridSpec(
            num_scalar_prefetch=0,
            grid=(Rp // tr,),
            in_specs=in_specs,
            out_specs=data_spec),
        compiler_params=pltpu.CompilerParams(
            dimension_semantics=("parallel",),
            vmem_limit_bytes=vmem_limit),
    )(arrs[0], scale, shift, *arrs[1:])
    return out[:R].reshape(M, C)


def _im2col_folded(xp, k, stride, Hout, Wout):
    """xp: (N, Hp, Wp, C) padded NHWC -> (N*Hout*Wout, k*k*C) folded taps."""
    N, _, _, C = xp.shape
    taps = []
    for dy in range(k):
        for dx in range(k):
            taps.append(xp[:, dy:dy + stride * (Hout - 1) + 1:stride,
                            dx:dx + stride * (Wout - 1) + 1:stride, :])
    a = jnp.stack(taps, axis=-2)                  # (N, Hout, Wout, k*k, C)
    return a.reshape(N * Hout * Wout, k * k * C)


def _bn_scale_shift(s, q, rows, gamma, beta):
    mean = s / rows
    var = jnp.maximum(q / rows - mean * mean, 0.0)   # clamp fp cancellation
    sc = gamma.reshape(1, -1) * lax.rsqrt(var + EPS)
    return sc, beta.reshape(1, -1) - mean * sc


def residual_block_tiled(x, p, same_shape, block_budget, vmem_limit):
    """x: (N, H, W, Cin) f32 NHWC.  Returns (M, Cout) f32."""
    N, H, W, Cin = x.shape
    stride = 1 if same_shape else 2
    Cout = p['w1'].shape[-1]
    Hout = (H - 1) // stride + 1
    Wout = (W - 1) // stride + 1
    M = N * Hout * Wout

    # TODO(synk): this fallback still materializes im2col taps in HBM; gathering
    # the shifted windows in-kernel (as the fused path does) would cut the conv
    # input HBM stream a further ~9x for shapes that overflow VMEM.
    xp = jnp.pad(x, ((0, 0), (1, 1), (1, 1), (0, 0)))
    a1 = _im2col_folded(xp, 3, stride, Hout, Wout)
    o1, s1, q1 = conv_matmul_stats(a1, p['w1'].reshape(-1, Cout), block_budget, vmem_limit)
    sc1, sh1 = _bn_scale_shift(s1, q1, M, p['g1'], p['b1'])
    # TODO(synk): bn1+relu could be fused into conv2's tap path to drop this pass.
    h1 = affine_relu(o1, sc1, sh1, block_budget, vmem_limit)

    hp = jnp.pad(h1.reshape(N, Hout, Wout, Cout), ((0, 0), (1, 1), (1, 1), (0, 0)))
    a2 = _im2col_folded(hp, 3, 1, Hout, Wout)
    o2, s2, q2 = conv_matmul_stats(a2, p['w2'].reshape(-1, Cout), block_budget, vmem_limit)
    sc2, sh2 = _bn_scale_shift(s2, q2, M, p['g2'], p['b2'])

    if same_shape:
        res = x.reshape(M, Cin)
    else:
        a3 = x[:, ::2, ::2, :].reshape(M, Cin)
        res = conv_matmul(a3, p['w3'].reshape(Cin, Cout), block_budget, vmem_limit)
        sh2 = sh2 + p['b3'].reshape(1, -1)        # conv3 bias folded into bn2 shift

    return affine_relu(o2, sc2, sh2, block_budget, vmem_limit, res=res)


# ------------------------------ dispatcher -------------------------------------

def residual_block_forward(x_nchw, p, same_shape=True):
    # TODO(synk): accepting/returning NHWC at the block boundary would remove
    # these two full-tensor XLA transposes.
    x = jnp.transpose(x_nchw, (0, 2, 3, 1)).astype(jnp.float32)
    N, H, W, Cin = x.shape
    stride = 1 if same_shape else 2
    Cout = p['w1'].shape[-1]
    Hout = (H - 1) // stride + 1
    Wout = (W - 1) // stride + 1

    block_budget, vmem_limit = _budgets()

    y2d = None
    if _fused_fits(N, H, W, Cin, Cout, Hout, Wout, vmem_limit):
        try:
            y2d = _fused_call(x, p, same_shape, vmem_limit)
            jax.block_until_ready(y2d)
        except Exception:
            y2d = None                             # fall back to the tiled path
    if y2d is None:
        y2d = residual_block_tiled(x, p, same_shape, block_budget, vmem_limit)

    y = y2d.reshape(N, Hout, Wout, Cout)
    return jnp.transpose(y, (0, 3, 1, 2))          # NHWC -> NCHW


# --------------------- deterministic parameter init ---------------------------

def init_params(key, in_ch, out_ch, same_shape):
    ks = jax.random.split(key, 8)
    p = {
        'w1': jax.random.normal(ks[0], (9, in_ch, out_ch), jnp.float32) * 0.2,
        'g1': 1.0 + 0.1 * jax.random.normal(ks[1], (out_ch,), jnp.float32),
        'b1': 0.1 * jax.random.normal(ks[2], (out_ch,), jnp.float32),
        'w2': jax.random.normal(ks[3], (9, out_ch, out_ch), jnp.float32) * 0.2,
        'g2': 1.0 + 0.1 * jax.random.normal(ks[4], (out_ch,), jnp.float32),
        'b2': 0.1 * jax.random.normal(ks[5], (out_ch,), jnp.float32),
    }
    if not same_shape:
        p['w3'] = jax.random.normal(ks[6], (1, in_ch, out_ch), jnp.float32) * 0.2
        p['b3'] = 0.1 * jax.random.normal(ks[7], (out_ch,), jnp.float32)
    return p


# ------------------------- pure-JAX reference ----------------------------------

def _taps_to_oihw(w, k):
    K, Cin, Cout = w.shape
    return jnp.transpose(w.reshape(k, k, Cin, Cout), (3, 2, 0, 1))


def _bn_train_ref(x, gamma, beta):
    mean = jnp.mean(x, axis=(0, 2, 3), keepdims=True)
    var = jnp.var(x, axis=(0, 2, 3), keepdims=True)
    return ((x - mean) / jnp.sqrt(var + EPS) * gamma.reshape(1, -1, 1, 1)
            + beta.reshape(1, -1, 1, 1))


def ref_forward(x, p, same_shape):
    dn = ('NCHW', 'OIHW', 'NCHW')
    s = 1 if same_shape else 2
    out = lax.conv_general_dilated(x, _taps_to_oihw(p['w1'], 3), (s, s),
                                   ((1, 1), (1, 1)), dimension_numbers=dn)
    out = jax.nn.relu(_bn_train_ref(out, p['g1'], p['b1']))
    out = lax.conv_general_dilated(out, _taps_to_oihw(p['w2'], 3), (1, 1),
                                   ((1, 1), (1, 1)), dimension_numbers=dn)
    out = _bn_train_ref(out, p['g2'], p['b2'])
    if not same_shape:
        x = lax.conv_general_dilated(x, _taps_to_oihw(p['w3'], 1), (2, 2),
                                     ((0, 0), (0, 0)), dimension_numbers=dn)
        x = x + p['b3'].reshape(1, -1, 1, 1)
    return jax.nn.relu(x + out)


# --------------------------------- main -----------------------------------------

if __name__ == "__main__":
    key = jax.random.PRNGKey(0)
    kx, kp1, kp2 = jax.random.split(key, 3)

    x = jax.random.normal(kx, (2, 4, 16, 16), jnp.float32)

    # Case 1: same_shape=True (in=out=4, stride 1, identity skip)
    p1 = init_params(kp1, 4, 4, same_shape=True)
    y1 = residual_block_forward(x, p1, same_shape=True)
    jax.block_until_ready(y1)
    r1 = ref_forward(x, p1, True)
    assert y1.shape == (2, 4, 16, 16)
    assert jnp.allclose(y1, r1, atol=5e-2, rtol=5e-2), float(jnp.max(jnp.abs(y1 - r1)))

    # Case 2: same_shape=False (in=4 -> out=8, stride 2, 1x1-conv skip)
    p2 = init_params(kp2, 4, 8, same_shape=False)
    y2 = residual_block_forward(x, p2, same_shape=False)
    jax.block_until_ready(y2)
    r2 = ref_forward(x, p2, False)
    assert y2.shape == (2, 8, 8, 8)
    assert jnp.allclose(y2, r2, atol=5e-2, rtol=5e-2), float(jnp.max(jnp.abs(y2 - r2)))

    print("KERNEL_OK")
</pallas_src>

<mosaic_0001>
module attributes {stable_mosaic.version = 11 : i64} {
  func.func @kernel(%arg0: i32, %arg1: memref<2x18x18x4xf32, #tpu.memory_space<vmem>>, %arg2: memref<9x4x4xbf16, #tpu.memory_space<vmem>>, %arg3: memref<1x4xf32, #tpu.memory_space<vmem>>, %arg4: memref<1x4xf32, #tpu.memory_space<vmem>>, %arg5: memref<9x4x4xbf16, #tpu.memory_space<vmem>>, %arg6: memref<1x4xf32, #tpu.memory_space<vmem>>, %arg7: memref<1x4xf32, #tpu.memory_space<vmem>>, %arg8: memref<512x4xf32, #tpu.memory_space<vmem>>, %arg9: memref<2x18x18x4xf32, #tpu.memory_space<vmem>>) attributes {dimension_semantics = [#tpu.dimension_semantics<arbitrary>], iteration_bounds = array<i64: 1>, scalar_prefetch = 0 : i64, scratch_operands = 1 : i64, tpu.core_type = #tpu.core_type<tc>, window_params = [{pipeline_mode = #tpu.pipeline_mode<synchronous>, transform_indices = @transform_0, window_bounds = array<i64: 2, 18, 18, 4>}, {pipeline_mode = #tpu.pipeline_mode<synchronous>, transform_indices = @transform_1, window_bounds = array<i64: 9, 4, 4>}, {pipeline_mode = #tpu.pipeline_mode<synchronous>, transform_indices = @transform_2, window_bounds = array<i64: 1, 4>}, {pipeline_mode = #tpu.pipeline_mode<synchronous>, transform_indices = @transform_3, window_bounds = array<i64: 1, 4>}, {pipeline_mode = #tpu.pipeline_mode<synchronous>, transform_indices = @transform_4, window_bounds = array<i64: 9, 4, 4>}, {pipeline_mode = #tpu.pipeline_mode<synchronous>, transform_indices = @transform_5, window_bounds = array<i64: 1, 4>}, {pipeline_mode = #tpu.pipeline_mode<synchronous>, transform_indices = @transform_6, window_bounds = array<i64: 1, 4>}, {pipeline_mode = #tpu.pipeline_mode<synchronous>, transform_indices = @transform_7, window_bounds = array<i64: 512, 4>}]} {
    %c0 = arith.constant 0 : index
    %c0_0 = arith.constant 0 : index
    %c0_1 = arith.constant 0 : index
    %c0_2 = arith.constant 0 : index
    %0 = vector.load %arg1[%c0, %c0_0, %c0_1, %c0_2] : memref<2x18x18x4xf32, #tpu.memory_space<vmem>>, vector<2x18x18x4xf32>
    %cst = arith.constant 0.000000e+00 : f32
    %1 = vector.broadcast %cst : f32 to vector<512x4xf32>
    %2 = vector.extract_strided_slice %0 {offsets = [0, 0, 0, 0], sizes = [2, 16, 16, 4], strides = [1, 1, 1, 1]} : vector<2x18x18x4xf32> to vector<2x16x16x4xf32>
    %3 = vector.shape_cast %2 : vector<2x16x16x4xf32> to vector<512x4xf32>
    %4 = arith.truncf %3 : vector<512x4xf32> to vector<512x4xbf16>
    %c0_3 = arith.constant 0 : index
    %c0_4 = arith.constant 0 : index
    %c0_5 = arith.constant 0 : index
    %5 = vector.load %arg2[%c0_3, %c0_4, %c0_5] : memref<9x4x4xbf16, #tpu.memory_space<vmem>>, vector<1x4x4xbf16>
    %6 = vector.shape_cast %5 : vector<1x4x4xbf16> to vector<4x4xbf16>
    %cst_6 = arith.constant dense<0.000000e+00> : vector<512x4xf32>
    %7 = tpu.matmul %4, %6, %cst_6 {dimension_numbers = #tpu.dot_dimension_numbers<[1], [0], [0], [1], [0, 0, 1, 1], [], []>} : vector<512x4xbf16>, vector<4x4xbf16>, vector<512x4xf32> -> vector<512x4xf32>
    %8 = arith.addf %1, %7 : vector<512x4xf32>
    %9 = vector.extract_strided_slice %0 {offsets = [0, 0, 1, 0], sizes = [2, 16, 16, 4], strides = [1, 1, 1, 1]} : vector<2x18x18x4xf32> to vector<2x16x16x4xf32>
    %10 = vector.shape_cast %9 : vector<2x16x16x4xf32> to vector<512x4xf32>
    %11 = arith.truncf %10 : vector<512x4xf32> to vector<512x4xbf16>
    %c1 = arith.constant 1 : index
    %c0_7 = arith.constant 0 : index
    %c0_8 = arith.constant 0 : index
    %12 = vector.load %arg2[%c1, %c0_7, %c0_8] : memref<9x4x4xbf16, #tpu.memory_space<vmem>>, vector<1x4x4xbf16>
    %13 = vector.shape_cast %12 : vector<1x4x4xbf16> to vector<4x4xbf16>
    %cst_9 = arith.constant dense<0.000000e+00> : vector<512x4xf32>
    %14 = tpu.matmul %11, %13, %cst_9 {dimension_numbers = #tpu.dot_dimension_numbers<[1], [0], [0], [1], [0, 0, 1, 1], [], []>} : vector<512x4xbf16>, vector<4x4xbf16>, vector<512x4xf32> -> vector<512x4xf32>
    %15 = arith.addf %8, %14 : vector<512x4xf32>
    %16 = vector.extract_strided_slice %0 {offsets = [0, 0, 2, 0], sizes = [2, 16, 16, 4], strides = [1, 1, 1, 1]} : vector<2x18x18x4xf32> to vector<2x16x16x4xf32>
    %17 = vector.shape_cast %16 : vector<2x16x16x4xf32> to vector<512x4xf32>
    %18 = arith.truncf %17 : vector<512x4xf32> to vector<512x4xbf16>
    %c2 = arith.constant 2 : index
    %c0_10 = arith.constant 0 : index
    %c0_11 = arith.constant 0 : index
    %19 = vector.load %arg2[%c2, %c0_10, %c0_11] : memref<9x4x4xbf16, #tpu.memory_space<vmem>>, vector<1x4x4xbf16>
    %20 = vector.shape_cast %19 : vector<1x4x4xbf16> to vector<4x4xbf16>
    %cst_12 = arith.constant dense<0.000000e+00> : vector<512x4xf32>
    %21 = tpu.matmul %18, %20, %cst_12 {dimension_numbers = #tpu.dot_dimension_numbers<[1], [0], [0], [1], [0, 0, 1, 1], [], []>} : vector<512x4xbf16>, vector<4x4xbf16>, vector<512x4xf32> -> vector<512x4xf32>
    %22 = arith.addf %15, %21 : vector<512x4xf32>
    %23 = vector.extract_strided_slice %0 {offsets = [0, 1, 0, 0], sizes = [2, 16, 16, 4], strides = [1, 1, 1, 1]} : vector<2x18x18x4xf32> to vector<2x16x16x4xf32>
    %24 = vector.shape_cast %23 : vector<2x16x16x4xf32> to vector<512x4xf32>
    %25 = arith.truncf %24 : vector<512x4xf32> to vector<512x4xbf16>
    %c3 = arith.constant 3 : index
    %c0_13 = arith.constant 0 : index
    %c0_14 = arith.constant 0 : index
    %26 = vector.load %arg2[%c3, %c0_13, %c0_14] : memref<9x4x4xbf16, #tpu.memory_space<vmem>>, vector<1x4x4xbf16>
    %27 = vector.shape_cast %26 : vector<1x4x4xbf16> to vector<4x4xbf16>
    %cst_15 = arith.constant dense<0.000000e+00> : vector<512x4xf32>
    %28 = tpu.matmul %25, %27, %cst_15 {dimension_numbers = #tpu.dot_dimension_numbers<[1], [0], [0], [1], [0, 0, 1, 1], [], []>} : vector<512x4xbf16>, vector<4x4xbf16>, vector<512x4xf32> -> vector<512x4xf32>
    %29 = arith.addf %22, %28 : vector<512x4xf32>
    %30 = vector.extract_strided_slice %0 {offsets = [0, 1, 1, 0], sizes = [2, 16, 16, 4], strides = [1, 1, 1, 1]} : vector<2x18x18x4xf32> to vector<2x16x16x4xf32>
    %31 = vector.shape_cast %30 : vector<2x16x16x4xf32> to vector<512x4xf32>
    %32 = arith.truncf %31 : vector<512x4xf32> to vector<512x4xbf16>
    %c4 = arith.constant 4 : index
    %c0_16 = arith.constant 0 : index
    %c0_17 = arith.constant 0 : index
    %33 = vector.load %arg2[%c4, %c0_16, %c0_17] : memref<9x4x4xbf16, #tpu.memory_space<vmem>>, vector<1x4x4xbf16>
    %34 = vector.shape_cast %33 : vector<1x4x4xbf16> to vector<4x4xbf16>
    %cst_18 = arith.constant dense<0.000000e+00> : vector<512x4xf32>
    %35 = tpu.matmul %32, %34, %cst_18 {dimension_numbers = #tpu.dot_dimension_numbers<[1], [0], [0], [1], [0, 0, 1, 1], [], []>} : vector<512x4xbf16>, vector<4x4xbf16>, vector<512x4xf32> -> vector<512x4xf32>
    %36 = arith.addf %29, %35 : vector<512x4xf32>
    %37 = vector.extract_strided_slice %0 {offsets = [0, 1, 2, 0], sizes = [2, 16, 16, 4], strides = [1, 1, 1, 1]} : vector<2x18x18x4xf32> to vector<2x16x16x4xf32>
    %38 = vector.shape_cast %37 : vector<2x16x16x4xf32> to vector<512x4xf32>
    %39 = arith.truncf %38 : vector<512x4xf32> to vector<512x4xbf16>
    %c5 = arith.constant 5 : index
    %c0_19 = arith.constant 0 : index
    %c0_20 = arith.constant 0 : index
    %40 = vector.load %arg2[%c5, %c0_19, %c0_20] : memref<9x4x4xbf16, #tpu.memory_space<vmem>>, vector<1x4x4xbf16>
    %41 = vector.shape_cast %40 : vector<1x4x4xbf16> to vector<4x4xbf16>
    %cst_21 = arith.constant dense<0.000000e+00> : vector<512x4xf32>
    %42 = tpu.matmul %39, %41, %cst_21 {dimension_numbers = #tpu.dot_dimension_numbers<[1], [0], [0], [1], [0, 0, 1, 1], [], []>} : vector<512x4xbf16>, vector<4x4xbf16>, vector<512x4xf32> -> vector<512x4xf32>
    %43 = arith.addf %36, %42 : vector<512x4xf32>
    %44 = vector.extract_strided_slice %0 {offsets = [0, 2, 0, 0], sizes = [2, 16, 16, 4], strides = [1, 1, 1, 1]} : vector<2x18x18x4xf32> to vector<2x16x16x4xf32>
    %45 = vector.shape_cast %44 : vector<2x16x16x4xf32> to vector<512x4xf32>
    %46 = arith.truncf %45 : vector<512x4xf32> to vector<512x4xbf16>
    %c6 = arith.constant 6 : index
    %c0_22 = arith.constant 0 : index
    %c0_23 = arith.constant 0 : index
    %47 = vector.load %arg2[%c6, %c0_22, %c0_23] : memref<9x4x4xbf16, #tpu.memory_space<vmem>>, vector<1x4x4xbf16>
    %48 = vector.shape_cast %47 : vector<1x4x4xbf16> to vector<4x4xbf16>
    %cst_24 = arith.constant dense<0.000000e+00> : vector<512x4xf32>
    %49 = tpu.matmul %46, %48, %cst_24 {dimension_numbers = #tpu.dot_dimension_numbers<[1], [0], [0], [1], [0, 0, 1, 1], [], []>} : vector<512x4xbf16>, vector<4x4xbf16>, vector<512x4xf32> -> vector<512x4xf32>
    %50 = arith.addf %43, %49 : vector<512x4xf32>
    %51 = vector.extract_strided_slice %0 {offsets = [0, 2, 1, 0], sizes = [2, 16, 16, 4], strides = [1, 1, 1, 1]} : vector<2x18x18x4xf32> to vector<2x16x16x4xf32>
    %52 = vector.shape_cast %51 : vector<2x16x16x4xf32> to vector<512x4xf32>
    %53 = arith.truncf %52 : vector<512x4xf32> to vector<512x4xbf16>
    %c7 = arith.constant 7 : index
    %c0_25 = arith.constant 0 : index
    %c0_26 = arith.constant 0 : index
    %54 = vector.load %arg2[%c7, %c0_25, %c0_26] : memref<9x4x4xbf16, #tpu.memory_space<vmem>>, vector<1x4x4xbf16>
    %55 = vector.shape_cast %54 : vector<1x4x4xbf16> to vector<4x4xbf16>
    %cst_27 = arith.constant dense<0.000000e+00> : vector<512x4xf32>
    %56 = tpu.matmul %53, %55, %cst_27 {dimension_numbers = #tpu.dot_dimension_numbers<[1], [0], [0], [1], [0, 0, 1, 1], [], []>} : vector<512x4xbf16>, vector<4x4xbf16>, vector<512x4xf32> -> vector<512x4xf32>
    %57 = arith.addf %50, %56 : vector<512x4xf32>
    %58 = vector.extract_strided_slice %0 {offsets = [0, 2, 2, 0], sizes = [2, 16, 16, 4], strides = [1, 1, 1, 1]} : vector<2x18x18x4xf32> to vector<2x16x16x4xf32>
    %59 = vector.shape_cast %58 : vector<2x16x16x4xf32> to vector<512x4xf32>
    %60 = arith.truncf %59 : vector<512x4xf32> to vector<512x4xbf16>
    %c8 = arith.constant 8 : index
    %c0_28 = arith.constant 0 : index
    %c0_29 = arith.constant 0 : index
    %61 = vector.load %arg2[%c8, %c0_28, %c0_29] : memref<9x4x4xbf16, #tpu.memory_space<vmem>>, vector<1x4x4xbf16>
    %62 = vector.shape_cast %61 : vector<1x4x4xbf16> to vector<4x4xbf16>
    %cst_30 = arith.constant dense<0.000000e+00> : vector<512x4xf32>
    %63 = tpu.matmul %60, %62, %cst_30 {dimension_numbers = #tpu.dot_dimension_numbers<[1], [0], [0], [1], [0, 0, 1, 1], [], []>} : vector<512x4xbf16>, vector<4x4xbf16>, vector<512x4xf32> -> vector<512x4xf32>
    %64 = arith.addf %57, %63 : vector<512x4xf32>
    %cst_31 = arith.constant dense<0.000000e+00> : vector<4xf32>
    %65 = vector.multi_reduction <add>, %64, %cst_31 [0] : vector<512x4xf32> to vector<4xf32>
    %66 = vector.shape_cast %65 : vector<4xf32> to vector<1x4xf32>
    %cst_32 = arith.constant 0.001953125 : f32
    %67 = vector.broadcast %cst_32 : f32 to vector<1x4xf32>
    %68 = arith.mulf %66, %67 : vector<1x4xf32>
    %69 = arith.mulf %64, %64 : vector<512x4xf32>
    %cst_33 = arith.constant dense<0.000000e+00> : vector<4xf32>
    %70 = vector.multi_reduction <add>, %69, %cst_33 [0] : vector<512x4xf32> to vector<4xf32>
    %71 = vector.shape_cast %70 : vector<4xf32> to vector<1x4xf32>
    %cst_34 = arith.constant 0.001953125 : f32
    %72 = vector.broadcast %cst_34 : f32 to vector<1x4xf32>
    %73 = arith.mulf %71, %72 : vector<1x4xf32>
    %74 = arith.mulf %68, %68 : vector<1x4xf32>
    %75 = arith.subf %73, %74 : vector<1x4xf32>
    %cst_35 = arith.constant 0.000000e+00 : f32
    %76 = vector.broadcast %cst_35 : f32 to vector<1x4xf32>
    %77 = arith.maximumf %75, %76 : vector<1x4xf32>
    %c0_36 = arith.constant 0 : index
    %c0_37 = arith.constant 0 : index
    %78 = vector.load %arg3[%c0_36, %c0_37] : memref<1x4xf32, #tpu.memory_space<vmem>>, vector<1x4xf32>
    %cst_38 = arith.constant 9.99999974E-6 : f32
    %79 = vector.broadcast %cst_38 : f32 to vector<1x4xf32>
    %80 = arith.addf %77, %79 : vector<1x4xf32>
    %81 = math.rsqrt %80 : vector<1x4xf32>
    %82 = arith.mulf %78, %81 : vector<1x4xf32>
    %c0_39 = arith.constant 0 : index
    %c0_40 = arith.constant 0 : index
    %83 = vector.load %arg4[%c0_39, %c0_40] : memref<1x4xf32, #tpu.memory_space<vmem>>, vector<1x4xf32>
    %84 = arith.mulf %68, %82 : vector<1x4xf32>
    %85 = arith.subf %83, %84 : vector<1x4xf32>
    %86 = vector.broadcast %82 : vector<1x4xf32> to vector<512x4xf32>
    %87 = arith.mulf %64, %86 : vector<512x4xf32>
    %88 = vector.broadcast %85 : vector<1x4xf32> to vector<512x4xf32>
    %89 = arith.addf %87, %88 : vector<512x4xf32>
    %cst_41 = arith.constant 0.000000e+00 : f32
    %90 = vector.broadcast %cst_41 : f32 to vector<512x4xf32>
    %91 = arith.maximumf %89, %90 : vector<512x4xf32>
    %cst_42 = arith.constant 0.000000e+00 : f32
    %92 = vector.broadcast %cst_42 : f32 to vector<2x18x18x4xf32>
    %c0_43 = arith.constant 0 : index
    %c0_44 = arith.constant 0 : index
    %c0_45 = arith.constant 0 : index
    %c0_46 = arith.constant 0 : index
    %93 = vector.load %arg9[%c0_43, %c0_44, %c0_45, %c0_46] : memref<2x18x18x4xf32, #tpu.memory_space<vmem>>, vector<2x18x18x4xf32>
    tpu.vector_store %arg9[%c0_43, %c0_44, %c0_45, %c0_46], %92 {strides = array<i32>} : memref<2x18x18x4xf32, #tpu.memory_space<vmem>>, vector<2x18x18x4xf32>,
    %94 = vector.shape_cast %91 : vector<512x4xf32> to vector<2x16x16x4xf32>
    %c0_47 = arith.constant 0 : index
    %c1_48 = arith.constant 1 : index
    %c1_49 = arith.constant 1 : index
    %c0_50 = arith.constant 0 : index
    %95 = vector.load %arg9[%c0_47, %c1_48, %c1_49, %c0_50] : memref<2x18x18x4xf32, #tpu.memory_space<vmem>>, vector<2x16x16x4xf32>
    tpu.vector_store %arg9[%c0_47, %c1_48, %c1_49, %c0_50], %94 {strides = array<i32>} : memref<2x18x18x4xf32, #tpu.memory_space<vmem>>, vector<2x16x16x4xf32>,
    %c0_51 = arith.constant 0 : index
    %c0_52 = arith.constant 0 : index
    %c0_53 = arith.constant 0 : index
    %c0_54 = arith.constant 0 : index
    %96 = vector.load %arg9[%c0_51, %c0_52, %c0_53, %c0_54] : memref<2x18x18x4xf32, #tpu.memory_space<vmem>>, vector<2x18x18x4xf32>
    %cst_55 = arith.constant 0.000000e+00 : f32
    %97 = vector.broadcast %cst_55 : f32 to vector<512x4xf32>
    %98 = vector.extract_strided_slice %96 {offsets = [0, 0, 0, 0], sizes = [2, 16, 16, 4], strides = [1, 1, 1, 1]} : vector<2x18x18x4xf32> to vector<2x16x16x4xf32>
    %99 = vector.shape_cast %98 : vector<2x16x16x4xf32> to vector<512x4xf32>
    %100 = arith.truncf %99 : vector<512x4xf32> to vector<512x4xbf16>
    %c0_56 = arith.constant 0 : index
    %c0_57 = arith.constant 0 : index
    %c0_58 = arith.constant 0 : index
    %101 = vector.load %arg5[%c0_56, %c0_57, %c0_58] : memref<9x4x4xbf16, #tpu.memory_space<vmem>>, vector<1x4x4xbf16>
    %102 = vector.shape_cast %101 : vector<1x4x4xbf16> to vector<4x4xbf16>
    %cst_59 = arith.constant dense<0.000000e+00> : vector<512x4xf32>
    %103 = tpu.matmul %100, %102, %cst_59 {dimension_numbers = #tpu.dot_dimension_numbers<[1], [0], [0], [1], [0, 0, 1, 1], [], []>} : vector<512x4xbf16>, vector<4x4xbf16>, vector<512x4xf32> -> vector<512x4xf32>
    %104 = arith.addf %97, %103 : vector<512x4xf32>
    %105 = vector.extract_strided_slice %96 {offsets = [0, 0, 1, 0], sizes = [2, 16, 16, 4], strides = [1, 1, 1, 1]} : vector<2x18x18x4xf32> to vector<2x16x16x4xf32>
    %106 = vector.shape_cast %105 : vector<2x16x16x4xf32> to vector<512x4xf32>
    %107 = arith.truncf %106 : vector<512x4xf32> to vector<512x4xbf16>
    %c1_60 = arith.constant 1 : index
    %c0_61 = arith.constant 0 : index
    %c0_62 = arith.constant 0 : index
    %108 = vector.load %arg5[%c1_60, %c0_61, %c0_62] : memref<9x4x4xbf16, #tpu.memory_space<vmem>>, vector<1x4x4xbf16>
    %109 = vector.shape_cast %108 : vector<1x4x4xbf16> to vector<4x4xbf16>
    %cst_63 = arith.constant dense<0.000000e+00> : vector<512x4xf32>
    %110 = tpu.matmul %107, %109, %cst_63 {dimension_numbers = #tpu.dot_dimension_numbers<[1], [0], [0], [1], [0, 0, 1, 1], [], []>} : vector<512x4xbf16>, vector<4x4xbf16>, vector<512x4xf32> -> vector<512x4xf32>
    %111 = arith.addf %104, %110 : vector<512x4xf32>
    %112 = vector.extract_strided_slice %96 {offsets = [0, 0, 2, 0], sizes = [2, 16, 16, 4], strides = [1, 1, 1, 1]} : vector<2x18x18x4xf32> to vector<2x16x16x4xf32>
    %113 = vector.shape_cast %112 : vector<2x16x16x4xf32> to vector<512x4xf32>
    %114 = arith.truncf %113 : vector<512x4xf32> to vector<512x4xbf16>
    %c2_64 = arith.constant 2 : index
    %c0_65 = arith.constant 0 : index
    %c0_66 = arith.constant 0 : index
    %115 = vector.load %arg5[%c2_64, %c0_65, %c0_66] : memref<9x4x4xbf16, #tpu.memory_space<vmem>>, vector<1x4x4xbf16>
    %116 = vector.shape_cast %115 : vector<1x4x4xbf16> to vector<4x4xbf16>
    %cst_67 = arith.constant dense<0.000000e+00> : vector<512x4xf32>
    %117 = tpu.matmul %114, %116, %cst_67 {dimension_numbers = #tpu.dot_dimension_numbers<[1], [0], [0], [1], [0, 0, 1, 1], [], []>} : vector<512x4xbf16>, vector<4x4xbf16>, vector<512x4xf32> -> vector<512x4xf32>
    %118 = arith.addf %111, %117 : vector<512x4xf32>
    %119 = vector.extract_strided_slice %96 {offsets = [0, 1, 0, 0], sizes = [2, 16, 16, 4], strides = [1, 1, 1, 1]} : vector<2x18x18x4xf32> to vector<2x16x16x4xf32>
    %120 = vector.shape_cast %119 : vector<2x16x16x4xf32> to vector<512x4xf32>
    %121 = arith.truncf %120 : vector<512x4xf32> to vector<512x4xbf16>
    %c3_68 = arith.constant 3 : index
    %c0_69 = arith.constant 0 : index
    %c0_70 = arith.constant 0 : index
    %122 = vector.load %arg5[%c3_68, %c0_69, %c0_70] : memref<9x4x4xbf16, #tpu.memory_space<vmem>>, vector<1x4x4xbf16>
    %123 = vector.shape_cast %122 : vector<1x4x4xbf16> to vector<4x4xbf16>
    %cst_71 = arith.constant dense<0.000000e+00> : vector<512x4xf32>
    %124 = tpu.matmul %121, %123, %cst_71 {dimension_numbers = #tpu.dot_dimension_numbers<[1], [0], [0], [1], [0, 0, 1, 1], [], []>} : vector<512x4xbf16>, vector<4x4xbf16>, vector<512x4xf32> -> vector<512x4xf32>
    %125 = arith.addf %118, %124 : vector<512x4xf32>
    %126 = vector.extract_strided_slice %96 {offsets = [0, 1, 1, 0], sizes = [2, 16, 16, 4], strides = [1, 1, 1, 1]} : vector<2x18x18x4xf32> to vector<2x16x16x4xf32>
    %127 = vector.shape_cast %126 : vector<2x16x16x4xf32> to vector<512x4xf32>
    %128 = arith.truncf %127 : vector<512x4xf32> to vector<512x4xbf16>
    %c4_72 = arith.constant 4 : index
    %c0_73 = arith.constant 0 : index
    %c0_74 = arith.constant 0 : index
    %129 = vector.load %arg5[%c4_72, %c0_73, %c0_74] : memref<9x4x4xbf16, #tpu.memory_space<vmem>>, vector<1x4x4xbf16>
    %130 = vector.shape_cast %129 : vector<1x4x4xbf16> to vector<4x4xbf16>
    %cst_75 = arith.constant dense<0.000000e+00> : vector<512x4xf32>
    %131 = tpu.matmul %128, %130, %cst_75 {dimension_numbers = #tpu.dot_dimension_numbers<[1], [0], [0], [1], [0, 0, 1, 1], [], []>} : vector<512x4xbf16>, vector<4x4xbf16>, vector<512x4xf32> -> vector<512x4xf32>
    %132 = arith.addf %125, %131 : vector<512x4xf32>
    %133 = vector.extract_strided_slice %96 {offsets = [0, 1, 2, 0], sizes = [2, 16, 16, 4], strides = [1, 1, 1, 1]} : vector<2x18x18x4xf32> to vector<2x16x16x4xf32>
    %134 = vector.shape_cast %133 : vector<2x16x16x4xf32> to vector<512x4xf32>
    %135 = arith.truncf %134 : vector<512x4xf32> to vector<512x4xbf16>
    %c5_76 = arith.constant 5 : index
    %c0_77 = arith.constant 0 : index
    %c0_78 = arith.constant 0 : index
    %136 = vector.load %arg5[%c5_76, %c0_77, %c0_78] : memref<9x4x4xbf16, #tpu.memory_space<vmem>>, vector<1x4x4xbf16>
    %137 = vector.shape_cast %136 : vector<1x4x4xbf16> to vector<4x4xbf16>
    %cst_79 = arith.constant dense<0.000000e+00> : vector<512x4xf32>
    %138 = tpu.matmul %135, %137, %cst_79 {dimension_numbers = #tpu.dot_dimension_numbers<[1], [0], [0], [1], [0, 0, 1, 1], [], []>} : vector<512x4xbf16>, vector<4x4xbf16>, vector<512x4xf32> -> vector<512x4xf32>
    %139 = arith.addf %132, %138 : vector<512x4xf32>
    %140 = vector.extract_strided_slice %96 {offsets = [0, 2, 0, 0], sizes = [2, 16, 16, 4], strides = [1, 1, 1, 1]} : vector<2x18x18x4xf32> to vector<2x16x16x4xf32>
    %141 = vector.shape_cast %140 : vector<2x16x16x4xf32> to vector<512x4xf32>
    %142 = arith.truncf %141 : vector<512x4xf32> to vector<512x4xbf16>
    %c6_80 = arith.constant 6 : index
    %c0_81 = arith.constant 0 : index
    %c0_82 = arith.constant 0 : index
    %143 = vector.load %arg5[%c6_80, %c0_81, %c0_82] : memref<9x4x4xbf16, #tpu.memory_space<vmem>>, vector<1x4x4xbf16>
    %144 = vector.shape_cast %143 : vector<1x4x4xbf16> to vector<4x4xbf16>
    %cst_83 = arith.constant dense<0.000000e+00> : vector<512x4xf32>
    %145 = tpu.matmul %142, %144, %cst_83 {dimension_numbers = #tpu.dot_dimension_numbers<[1], [0], [0], [1], [0, 0, 1, 1], [], []>} : vector<512x4xbf16>, vector<4x4xbf16>, vector<512x4xf32> -> vector<512x4xf32>
    %146 = arith.addf %139, %145 : vector<512x4xf32>
    %147 = vector.extract_strided_slice %96 {offsets = [0, 2, 1, 0], sizes = [2, 16, 16, 4], strides = [1, 1, 1, 1]} : vector<2x18x18x4xf32> to vector<2x16x16x4xf32>
    %148 = vector.shape_cast %147 : vector<2x16x16x4xf32> to vector<512x4xf32>
    %149 = arith.truncf %148 : vector<512x4xf32> to vector<512x4xbf16>
    %c7_84 = arith.constant 7 : index
    %c0_85 = arith.constant 0 : index
    %c0_86 = arith.constant 0 : index
    %150 = vector.load %arg5[%c7_84, %c0_85, %c0_86] : memref<9x4x4xbf16, #tpu.memory_space<vmem>>, vector<1x4x4xbf16>
    %151 = vector.shape_cast %150 : vector<1x4x4xbf16> to vector<4x4xbf16>
    %cst_87 = arith.constant dense<0.000000e+00> : vector<512x4xf32>
    %152 = tpu.matmul %149, %151, %cst_87 {dimension_numbers = #tpu.dot_dimension_numbers<[1], [0], [0], [1], [0, 0, 1, 1], [], []>} : vector<512x4xbf16>, vector<4x4xbf16>, vector<512x4xf32> -> vector<512x4xf32>
    %153 = arith.addf %146, %152 : vector<512x4xf32>
    %154 = vector.extract_strided_slice %96 {offsets = [0, 2, 2, 0], sizes = [2, 16, 16, 4], strides = [1, 1, 1, 1]} : vector<2x18x18x4xf32> to vector<2x16x16x4xf32>
    %155 = vector.shape_cast %154 : vector<2x16x16x4xf32> to vector<512x4xf32>
    %156 = arith.truncf %155 : vector<512x4xf32> to vector<512x4xbf16>
    %c8_88 = arith.constant 8 : index
    %c0_89 = arith.constant 0 : index
    %c0_90 = arith.constant 0 : index
    %157 = vector.load %arg5[%c8_88, %c0_89, %c0_90] : memref<9x4x4xbf16, #tpu.memory_space<vmem>>, vector<1x4x4xbf16>
    %158 = vector.shape_cast %157 : vector<1x4x4xbf16> to vector<4x4xbf16>
    %cst_91 = arith.constant dense<0.000000e+00> : vector<512x4xf32>
    %159 = tpu.matmul %156, %158, %cst_91 {dimension_numbers = #tpu.dot_dimension_numbers<[1], [0], [0], [1], [0, 0, 1, 1], [], []>} : vector<512x4xbf16>, vector<4x4xbf16>, vector<512x4xf32> -> vector<512x4xf32>
    %160 = arith.addf %153, %159 : vector<512x4xf32>
    %cst_92 = arith.constant dense<0.000000e+00> : vector<4xf32>
    %161 = vector.multi_reduction <add>, %160, %cst_92 [0] : vector<512x4xf32> to vector<4xf32>
    %162 = vector.shape_cast %161 : vector<4xf32> to vector<1x4xf32>
    %cst_93 = arith.constant 0.001953125 : f32
    %163 = vector.broadcast %cst_93 : f32 to vector<1x4xf32>
    %164 = arith.mulf %162, %163 : vector<1x4xf32>
    %165 = arith.mulf %160, %160 : vector<512x4xf32>
    %cst_94 = arith.constant dense<0.000000e+00> : vector<4xf32>
    %166 = vector.multi_reduction <add>, %165, %cst_94 [0] : vector<512x4xf32> to vector<4xf32>
    %167 = vector.shape_cast %166 : vector<4xf32> to vector<1x4xf32>
    %cst_95 = arith.constant 0.001953125 : f32
    %168 = vector.broadcast %cst_95 : f32 to vector<1x4xf32>
    %169 = arith.mulf %167, %168 : vector<1x4xf32>
    %170 = arith.mulf %164, %164 : vector<1x4xf32>
    %171 = arith.subf %169, %170 : vector<1x4xf32>
    %cst_96 = arith.constant 0.000000e+00 : f32
    %172 = vector.broadcast %cst_96 : f32 to vector<1x4xf32>
    %173 = arith.maximumf %171, %172 : vector<1x4xf32>
    %c0_97 = arith.constant 0 : index
    %c0_98 = arith.constant 0 : index
    %174 = vector.load %arg6[%c0_97, %c0_98] : memref<1x4xf32, #tpu.memory_space<vmem>>, vector<1x4xf32>
    %cst_99 = arith.constant 9.99999974E-6 : f32
    %175 = vector.broadcast %cst_99 : f32 to vector<1x4xf32>
    %176 = arith.addf %173, %175 : vector<1x4xf32>
    %177 = math.rsqrt %176 : vector<1x4xf32>
    %178 = arith.mulf %174, %177 : vector<1x4xf32>
    %c0_100 = arith.constant 0 : index
    %c0_101 = arith.constant 0 : index
    %179 = vector.load %arg7[%c0_100, %c0_101] : memref<1x4xf32, #tpu.memory_space<vmem>>, vector<1x4xf32>
    %180 = arith.mulf %164, %178 : vector<1x4xf32>
    %181 = arith.subf %179, %180 : vector<1x4xf32>
    %182 = vector.extract_strided_slice %0 {offsets = [0, 1, 1, 0], sizes = [2, 16, 16, 4], strides = [1, 1, 1, 1]} : vector<2x18x18x4xf32> to vector<2x16x16x4xf32>
    %183 = vector.shape_cast %182 : vector<2x16x16x4xf32> to vector<512x4xf32>
    %184 = vector.broadcast %178 : vector<1x4xf32> to vector<512x4xf32>
    %185 = arith.mulf %160, %184 : vector<512x4xf32>
    %186 = vector.broadcast %181 : vector<1x4xf32> to vector<512x4xf32>
    %187 = arith.addf %185, %186 : vector<512x4xf32>
    %188 = arith.addf %187, %183 : vector<512x4xf32>
    %cst_102 = arith.constant 0.000000e+00 : f32
    %189 = vector.broadcast %cst_102 : f32 to vector<512x4xf32>
    %190 = arith.maximumf %188, %189 : vector<512x4xf32>
    %c0_103 = arith.constant 0 : index
    %c0_104 = arith.constant 0 : index
    %191 = vector.load %arg8[%c0_103, %c0_104] : memref<512x4xf32, #tpu.memory_space<vmem>>, vector<512x4xf32>
    tpu.vector_store %arg8[%c0_103, %c0_104], %190 {strides = array<i32>} : memref<512x4xf32, #tpu.memory_space<vmem>>, vector<512x4xf32>,
    return
  }
  func.func @transform_0(%arg0: i32) -> (i32, i32, i32, i32) {
    %c0_i32 = arith.constant 0 : i32
    %c0_i32_0 = arith.constant 0 : i32
    %c0_i32_1 = arith.constant 0 : i32
    %c0_i32_2 = arith.constant 0 : i32
    %c0_i32_3 = arith.constant 0 : i32
    return %c0_i32, %c0_i32_0, %c0_i32_1, %c0_i32_2 : i32, i32, i32, i32
  }
  func.func @transform_1(%arg0: i32) -> (i32, i32, i32) {
    %c0_i32 = arith.constant 0 : i32
    %c0_i32_0 = arith.constant 0 : i32
    %c0_i32_1 = arith.constant 0 : i32
    %c0_i32_2 = arith.constant 0 : i32
    return %c0_i32, %c0_i32_0, %c0_i32_1 : i32, i32, i32
  }
  func.func @transform_2(%arg0: i32) -> (i32, i32) {
    %c0_i32 = arith.constant 0 : i32
    %c0_i32_0 = arith.constant 0 : i32
    %c0_i32_1 = arith.constant 0 : i32
    return %c0_i32, %c0_i32_0 : i32, i32
  }
  func.func @transform_3(%arg0: i32) -> (i32, i32) {
    %c0_i32 = arith.constant 0 : i32
    %c0_i32_0 = arith.constant 0 : i32
    %c0_i32_1 = arith.constant 0 : i32
    return %c0_i32, %c0_i32_0 : i32, i32
  }
  func.func @transform_4(%arg0: i32) -> (i32, i32, i32) {
    %c0_i32 = arith.constant 0 : i32
    %c0_i32_0 = arith.constant 0 : i32
    %c0_i32_1 = arith.constant 0 : i32
    %c0_i32_2 = arith.constant 0 : i32
    return %c0_i32, %c0_i32_0, %c0_i32_1 : i32, i32, i32
  }
  func.func @transform_5(%arg0: i32) -> (i32, i32) {
    %c0_i32 = arith.constant 0 : i32
    %c0_i32_0 = arith.constant 0 : i32
    %c0_i32_1 = arith.constant 0 : i32
    return %c0_i32, %c0_i32_0 : i32, i32
  }
  func.func @transform_6(%arg0: i32) -> (i32, i32) {
    %c0_i32 = arith.constant 0 : i32
    %c0_i32_0 = arith.constant 0 : i32
    %c0_i32_1 = arith.constant 0 : i32
    return %c0_i32, %c0_i32_0 : i32, i32
  }
  func.func @transform_7(%arg0: i32) -> (i32, i32) {
    %c0_i32 = arith.constant 0 : i32
    %c0_i32_0 = arith.constant 0 : i32
    %c0_i32_1 = arith.constant 0 : i32
    return %c0_i32, %c0_i32_0 : i32, i32
  }
}

module attributes {stable_mosaic.version = 11 : i64} {
  func.func @_conv_stats_kernel(%arg0: i32, %arg1: memref<256x36xbf16, #tpu.memory_space<vmem>>, %arg2: memref<36x4xbf16, #tpu.memory_space<vmem>>, %arg3: memref<256x4xf32, #tpu.memory_space<vmem>>, %arg4: memref<8x4xf32, #tpu.memory_space<vmem>>, %arg5: memref<8x4xf32, #tpu.memory_space<vmem>>) attributes {dimension_semantics = [#tpu.dimension_semantics<parallel>], iteration_bounds = array<i64: 2>, scalar_prefetch = 0 : i64, scratch_operands = 0 : i64, tpu.core_type = #tpu.core_type<tc>, window_params = [{transform_indices = @transform_0, window_bounds = array<i64: 256, 36>}, {pipeline_mode = #tpu.pipeline_mode<synchronous>, transform_indices = @transform_1, window_bounds = array<i64: 36, 4>}, {transform_indices = @transform_2, window_bounds = array<i64: 256, 4>}, {transform_indices = @transform_3, window_bounds = array<i64: 8, 4>}, {transform_indices = @transform_4, window_bounds = array<i64: 8, 4>}]} {
    %c0 = arith.constant 0 : index
    %c0_0 = arith.constant 0 : index
    %0 = vector.load %arg1[%c0, %c0_0] : memref<256x36xbf16, #tpu.memory_space<vmem>>, vector<256x36xbf16>
    %c0_1 = arith.constant 0 : index
    %c0_2 = arith.constant 0 : index
    %1 = vector.load %arg2[%c0_1, %c0_2] : memref<36x4xbf16, #tpu.memory_space<vmem>>, vector<36x4xbf16>
    %cst = arith.constant dense<0.000000e+00> : vector<256x4xf32>
    %2 = tpu.matmul %0, %1, %cst {dimension_numbers = #tpu.dot_dimension_numbers<[1], [0], [0], [1], [0, 0, 1, 1], [], []>} : vector<256x36xbf16>, vector<36x4xbf16>, vector<256x4xf32> -> vector<256x4xf32>
    %c0_3 = arith.constant 0 : index
    %c0_4 = arith.constant 0 : index
    %3 = vector.load %arg3[%c0_3, %c0_4] : memref<256x4xf32, #tpu.memory_space<vmem>>, vector<256x4xf32>
    tpu.vector_store %arg3[%c0_3, %c0_4], %2 {strides = array<i32>} : memref<256x4xf32, #tpu.memory_space<vmem>>, vector<256x4xf32>,
    %cst_5 = arith.constant 1.000000e+00 : f32
    %4 = vector.broadcast %cst_5 : f32 to vector<8x256xf32>
    %cst_6 = arith.constant dense<0.000000e+00> : vector<8x4xf32>
    %5 = tpu.matmul %4, %2, %cst_6 {dimension_numbers = #tpu.dot_dimension_numbers<[1], [0], [0], [1], [0, 0, 1, 1], [], []>} : vector<8x256xf32>, vector<256x4xf32>, vector<8x4xf32> -> vector<8x4xf32>
    %c0_7 = arith.constant 0 : index
    %c0_8 = arith.constant 0 : index
    %6 = vector.load %arg4[%c0_7, %c0_8] : memref<8x4xf32, #tpu.memory_space<vmem>>, vector<8x4xf32>
    tpu.vector_store %arg4[%c0_7, %c0_8], %5 {strides = array<i32>} : memref<8x4xf32, #tpu.memory_space<vmem>>, vector<8x4xf32>,
    %7 = arith.mulf %2, %2 : vector<256x4xf32>
    %cst_9 = arith.constant dense<0.000000e+00> : vector<8x4xf32>
    %8 = tpu.matmul %4, %7, %cst_9 {dimension_numbers = #tpu.dot_dimension_numbers<[1], [0], [0], [1], [0, 0, 1, 1], [], []>} : vector<8x256xf32>, vector<256x4xf32>, vector<8x4xf32> -> vector<8x4xf32>
    %c0_10 = arith.constant 0 : index
    %c0_11 = arith.constant 0 : index
    %9 = vector.load %arg5[%c0_10, %c0_11] : memref<8x4xf32, #tpu.memory_space<vmem>>, vector<8x4xf32>
    tpu.vector_store %arg5[%c0_10, %c0_11], %8 {strides = array<i32>} : memref<8x4xf32, #tpu.memory_space<vmem>>, vector<8x4xf32>,
    return
  }
  func.func @transform_0(%arg0: i32) -> (i32, i32) {
    %c0_i32 = arith.constant 0 : i32
    %c0_i32_0 = arith.constant 0 : i32
    return %arg0, %c0_i32 : i32, i32
  }
  func.func @transform_1(%arg0: i32) -> (i32, i32) {
    %c0_i32 = arith.constant 0 : i32
    %c0_i32_0 = arith.constant 0 : i32
    %c0_i32_1 = arith.constant 0 : i32
    return %c0_i32, %c0_i32_0 : i32, i32
  }
  func.func @transform_2(%arg0: i32) -> (i32, i32) {
    %c0_i32 = arith.constant 0 : i32
    %c0_i32_0 = arith.constant 0 : i32
    return %arg0, %c0_i32 : i32, i32
  }
  func.func @transform_3(%arg0: i32) -> (i32, i32) {
    %c0_i32 = arith.constant 0 : i32
    %c0_i32_0 = arith.constant 0 : i32
    return %arg0, %c0_i32 : i32, i32
  }
  func.func @transform_4(%arg0: i32) -> (i32, i32) {
    %c0_i32 = arith.constant 0 : i32
    %c0_i32_0 = arith.constant 0 : i32
    return %arg0, %c0_i32 : i32, i32
  }
}

</mosaic_0001>

<llo_original>
// kernel: tpu_custom_call.1
$region0: #{tpu_custom_call.1}
  #allocation0 [shape = 'u32[]', space=smem, size = 0x4, offset = 0x4, fixed_abs, tag = 'smem constant byte address 0x4 - core index']
  #allocation1 [shape = 'u32[72,128]{1,0:T(1,128)}', space=vmem, size = 0x9000, scoped, tag = 'internal scratch']
  #allocation2 [shape = 'f32[2,18,18,4]{3,2,1,0:T(8,128)}', space=vmem, size = 0x6c000, scoped, tag = 'scratch operand']
  %s0 = inlined_call_operand.vmem [shape: f32[2,18,18,4], index: 0, kind: input, shape index: {}]
  %s1 = inlined_call_operand.vmem [shape: bf16[9,4,4], index: 1, kind: input, shape index: {}]
  %s2 = inlined_call_operand.vmem [shape: f32[1,4], index: 2, kind: input, shape index: {}]
  %s3 = inlined_call_operand.vmem [shape: f32[1,4], index: 3, kind: input, shape index: {}]
  %s4 = inlined_call_operand.vmem [shape: bf16[9,4,4], index: 4, kind: input, shape index: {}]
  %s5 = inlined_call_operand.vmem [shape: f32[1,4], index: 5, kind: input, shape index: {}]
  %s6 = inlined_call_operand.vmem [shape: f32[1,4], index: 6, kind: input, shape index: {}]
  %s7 = inlined_call_operand.vmem [shape: f32[512,4], index: 7, kind: output, shape index: {}]
  %s8 = sld [smem:[#allocation0]]
  $region38: #{tpu_custom_call.1} parent=0
    _
  %s10 = ssub.s32 1, %s8
  %s11 = scalar_select 0, %s10, %s8
  // Predicated region
  $region2: #{tpu_custom_call.1} parent=0 // pred_check
    _
  $region3: #{tpu_custom_call.1} parent=0 // pred_check_branch
    %13 = sbr.rel (0) target = $region5
  $region4: #{tpu_custom_call.1} parent=0 // pred_region
    _
  $region5: #{tpu_custom_call.1} parent=0 // pred_fallthru
    _
  // Predicated region
  $region6: #{tpu_custom_call.1} parent=0 // pred_check
    _
  $region7: #{tpu_custom_call.1} parent=0 // pred_check_branch
    %15 = sbr.rel (0) target = $region9
  $region8: #{tpu_custom_call.1} parent=0 // pred_region
    _
  $region9: #{tpu_custom_call.1} parent=0 // pred_fallthru
    _
  // Predicated region
  $region10: #{tpu_custom_call.1} parent=0 // pred_check
    _
  $region11: #{tpu_custom_call.1} parent=0 // pred_check_branch
    %17 = sbr.rel (0) target = $region13
  $region12: #{tpu_custom_call.1} parent=0 // pred_region
    _
  $region13: #{tpu_custom_call.1} parent=0 // pred_fallthru
    _
  // Predicated region
  $region14: #{tpu_custom_call.1} parent=0 // pred_check
    _
  $region15: #{tpu_custom_call.1} parent=0 // pred_check_branch
    %19 = sbr.rel (0) target = $region17
  $region16: #{tpu_custom_call.1} parent=0 // pred_region
    _
  $region17: #{tpu_custom_call.1} parent=0 // pred_fallthru
    _
  // Predicated region
  $region18: #{tpu_custom_call.1} parent=0 // pred_check
    _
  $region19: #{tpu_custom_call.1} parent=0 // pred_check_branch
    %21 = sbr.rel (0) target = $region21
  $region20: #{tpu_custom_call.1} parent=0 // pred_region
    _
  $region21: #{tpu_custom_call.1} parent=0 // pred_fallthru
    _
  // Predicated region
  $region22: #{tpu_custom_call.1} parent=0 // pred_check
    _
  $region23: #{tpu_custom_call.1} parent=0 // pred_check_branch
    %23 = sbr.rel (0) target = $region25
  $region24: #{tpu_custom_call.1} parent=0 // pred_region
    _
  $region25: #{tpu_custom_call.1} parent=0 // pred_fallthru
    _
  // Predicated region
  $region26: #{tpu_custom_call.1} parent=0 // pred_check
    _
  $region27: #{tpu_custom_call.1} parent=0 // pred_check_branch
    %25 = sbr.rel (0) target = $region29
  $region28: #{tpu_custom_call.1} parent=0 // pred_region
    _
  $region29: #{tpu_custom_call.1} parent=0 // pred_fallthru
    _
  %v27 = vld [vmem:[%s0] sm:$0xff]
  %v28 = vld [vmem:[%s0 + $0x8] sm:$0xff]
  %v29 = vld [vmem:[%s0 + $0x10] sm:$0x3]
  %v30 = vld [vmem:[%s0 + $0x18] sm:$0xff]
  %v31 = vld [vmem:[%s0 + $0x20] sm:$0xff]
  %v32 = vld [vmem:[%s0 + $0x28] sm:$0x3]
  %v33 = vld [vmem:[%s0 + $0x30] sm:$0xff]
  %v34 = vld [vmem:[%s0 + $0x38] sm:$0xff]
  %v35 = vld [vmem:[%s0 + $0x40] sm:$0x3]
  %v36 = vld [vmem:[%s0 + $0x48] sm:$0xff]
  %v37 = vld [vmem:[%s0 + $0x50] sm:$0xff]
  %v38 = vld [vmem:[%s0 + $0x58] sm:$0x3]
  %v39 = vld [vmem:[%s0 + $0x60] sm:$0xff]
  %v40 = vld [vmem:[%s0 + $0x68] sm:$0xff]
  %v41 = vld [vmem:[%s0 + $0x70] sm:$0x3]
  %v42 = vld [vmem:[%s0 + $0x78] sm:$0xff]
  %v43 = vld [vmem:[%s0 + $0x80] sm:$0xff]
  %v44 = vld [vmem:[%s0 + $0x88] sm:$0x3]
  %v45 = vld [vmem:[%s0 + $0x90] sm:$0xff]
  %v46 = vld [vmem:[%s0 + $0x98] sm:$0xff]
  %v47 = vld [vmem:[%s0 + $0xa0] sm:$0x3]
  %v48 = vld [vmem:[%s0 + $0xa8] sm:$0xff]
  %v49 = vld [vmem:[%s0 + $0xb0] sm:$0xff]
  %v50 = vld [vmem:[%s0 + $0xb8] sm:$0x3]
  %v51 = vld [vmem:[%s0 + $0xc0] sm:$0xff]
  %v52 = vld [vmem:[%s0 + $0xc8] sm:$0xff]
  %v53 = vld [vmem:[%s0 + $0xd0] sm:$0x3]
  %v54 = vld [vmem:[%s0 + $0xd8] sm:$0xff]
  %v55 = vld [vmem:[%s0 + $0xe0] sm:$0xff]
  %v56 = vld [vmem:[%s0 + $0xe8] sm:$0x3]
  %v57 = vld [vmem:[%s0 + $0xf0] sm:$0xff]
  %v58 = vld [vmem:[%s0 + $0xf8] sm:$0xff]
  %v59 = vld [vmem:[%s0 + $0x100] sm:$0x3]
  %v60 = vld [vmem:[%s0 + $0x108] sm:$0xff]
  %v61 = vld [vmem:[%s0 + $0x110] sm:$0xff]
  %v62 = vld [vmem:[%s0 + $0x118] sm:$0x3]
  %v63 = vld [vmem:[%s0 + $0x120] sm:$0xff]
  %v64 = vld [vmem:[%s0 + $0x128] sm:$0xff]
  %v65 = vld [vmem:[%s0 + $0x130] sm:$0x3]
  %v66 = vld [vmem:[%s0 + $0x138] sm:$0xff]
  %v67 = vld [vmem:[%s0 + $0x140] sm:$0xff]
  %v68 = vld [vmem:[%s0 + $0x148] sm:$0x3]
  %v69 = vld [vmem:[%s0 + $0x150] sm:$0xff]
  %v70 = vld [vmem:[%s0 + $0x158] sm:$0xff]
  %v71 = vld [vmem:[%s0 + $0x160] sm:$0x3]
  %v72 = vld [vmem:[%s0 + $0x168] sm:$0xff]
  %v73 = vld [vmem:[%s0 + $0x170] sm:$0xff]
  %v74 = vld [vmem:[%s0 + $0x178] sm:$0x3]
  %v75 = vld [vmem:[%s0 + $0x180] sm:$0xff]
  %v76 = vld [vmem:[%s0 + $0x188] sm:$0xff]
  %v77 = vld [vmem:[%s0 + $0x190] sm:$0x3]
  %v78 = vld [vmem:[%s0 + $0x198] sm:$0xff]
  %v79 = vld [vmem:[%s0 + $0x1a0] sm:$0xff]
  %v80 = vld [vmem:[%s0 + $0x1a8] sm:$0x3]
  %v81 = vld [vmem:[%s0 + $0x1b0] sm:$0xff]
  %v82 = vld [vmem:[%s0 + $0x1b8] sm:$0xff]
  %v83 = vld [vmem:[%s0 + $0x1c0] sm:$0x3]
  %v84 = vld [vmem:[%s0 + $0x1c8] sm:$0xff]
  %v85 = vld [vmem:[%s0 + $0x1d0] sm:$0xff]
  %v86 = vld [vmem:[%s0 + $0x1d8] sm:$0x3]
  %v87 = vld [vmem:[%s0 + $0x1e0] sm:$0xff]
  %v88 = vld [vmem:[%s0 + $0x1e8] sm:$0xff]
  %v89 = vld [vmem:[%s0 + $0x1f0] sm:$0x3]
  %v90 = vld [vmem:[%s0 + $0x1f8] sm:$0xff]
  %v91 = vld [vmem:[%s0 + $0x200] sm:$0xff]
  %v92 = vld [vmem:[%s0 + $0x208] sm:$0x3]
  %v93 = vld [vmem:[%s0 + $0x210] sm:$0xff]
  %v94 = vld [vmem:[%s0 + $0x218] sm:$0xff]
  %v95 = vld [vmem:[%s0 + $0x220] sm:$0x3]
  %v96 = vld [vmem:[%s0 + $0x228] sm:$0xff]
  %v97 = vld [vmem:[%s0 + $0x230] sm:$0xff]
  %v98 = vld [vmem:[%s0 + $0x238] sm:$0x3]
  %v99 = vld [vmem:[%s0 + $0x240] sm:$0xff]
  %v100 = vld [vmem:[%s0 + $0x248] sm:$0xff]
  %v101 = vld [vmem:[%s0 + $0x250] sm:$0x3]
  %v102 = vld [vmem:[%s0 + $0x258] sm:$0xff]
  %v103 = vld [vmem:[%s0 + $0x260] sm:$0xff]
  %v104 = vld [vmem:[%s0 + $0x268] sm:$0x3]
  %v105 = vld [vmem:[%s0 + $0x270] sm:$0xff]
  %v106 = vld [vmem:[%s0 + $0x278] sm:$0xff]
  %v107 = vld [vmem:[%s0 + $0x280] sm:$0x3]
  %v108 = vld [vmem:[%s0 + $0x288] sm:$0xff]
  %v109 = vld [vmem:[%s0 + $0x290] sm:$0xff]
  %v110 = vld [vmem:[%s0 + $0x298] sm:$0x3]
  %v111 = vld [vmem:[%s0 + $0x2a0] sm:$0xff]
  %v112 = vld [vmem:[%s0 + $0x2a8] sm:$0xff]
  %v113 = vld [vmem:[%s0 + $0x2b0] sm:$0x3]
  %v114 = vld [vmem:[%s0 + $0x2b8] sm:$0xff]
  %v115 = vld [vmem:[%s0 + $0x2c0] sm:$0xff]
  %v116 = vld [vmem:[%s0 + $0x2c8] sm:$0x3]
  %v117 = vld [vmem:[%s0 + $0x2d0] sm:$0xff]
  %v118 = vld [vmem:[%s0 + $0x2d8] sm:$0xff]
  %v119 = vld [vmem:[%s0 + $0x2e0] sm:$0x3]
  %v120 = vld [vmem:[%s0 + $0x2e8] sm:$0xff]
  %v121 = vld [vmem:[%s0 + $0x2f0] sm:$0xff]
  %v122 = vld [vmem:[%s0 + $0x2f8] sm:$0x3]
  %v123 = vld [vmem:[%s0 + $0x300] sm:$0xff]
  %v124 = vld [vmem:[%s0 + $0x308] sm:$0xff]
  %v125 = vld [vmem:[%s0 + $0x310] sm:$0x3]
  %v126 = vld [vmem:[%s0 + $0x318] sm:$0xff]
  %v127 = vld [vmem:[%s0 + $0x320] sm:$0xff]
  %v128 = vld [vmem:[%s0 + $0x328] sm:$0x3]
  %v129 = vld [vmem:[%s0 + $0x330] sm:$0xff]
  %v130 = vld [vmem:[%s0 + $0x338] sm:$0xff]
  %v131 = vld [vmem:[%s0 + $0x340] sm:$0x3]
  %v132 = vld [vmem:[%s0 + $0x348] sm:$0xff]
  %v133 = vld [vmem:[%s0 + $0x350] sm:$0xff]
  %v134 = vld [vmem:[%s0 + $0x358] sm:$0x3]
  %v135 = vpack.c.bf16 %v28, %v27
  %v136 = vpack.c.bf16 %v31, %v30
  %v137 = vpack.c.bf16 %v34, %v33
  %v138 = vpack.c.bf16 %v37, %v36
  %v139 = vpack.c.bf16 %v40, %v39
  %v140 = vpack.c.bf16 %v43, %v42
  %v141 = vpack.c.bf16 %v46, %v45
  %v142 = vpack.c.bf16 %v49, %v48
  %v143 = vpack.c.bf16 %v52, %v51
  %v144 = vpack.c.bf16 %v55, %v54
  %v145 = vpack.c.bf16 %v58, %v57
  %v146 = vpack.c.bf16 %v61, %v60
  %v147 = vpack.c.bf16 %v64, %v63
  %v148 = vpack.c.bf16 %v67, %v66
  %v149 = vpack.c.bf16 %v70, %v69
  %v150 = vpack.c.bf16 %v73, %v72
  %v151 = vpack.c.bf16 %v82, %v81
  %v152 = vpack.c.bf16 %v85, %v84
  %v153 = vpack.c.bf16 %v88, %v87
  %v154 = vpack.c.bf16 %v91, %v90
  %v155 = vpack.c.bf16 %v94, %v93
  %v156 = vpack.c.bf16 %v97, %v96
  %v157 = vpack.c.bf16 %v100, %v99
  %v158 = vpack.c.bf16 %v103, %v102
  %v159 = vpack.c.bf16 %v106, %v105
  %v160 = vpack.c.bf16 %v109, %v108
  %v161 = vpack.c.bf16 %v112, %v111
  %v162 = vpack.c.bf16 %v115, %v114
  %v163 = vpack.c.bf16 %v118, %v117
  %v164 = vpack.c.bf16 %v121, %v120
  %v165 = vpack.c.bf16 %v124, %v123
  %v166 = vpack.c.bf16 %v127, %v126
  %v167 = vld [vmem:[%s1] sm:$0x3]
  %vm264 = vcmask 1046528
  %v265 = vrot.slane %v27, 1
  %v266 = vrot.slane %v28, 1
  %v267 = vsel %vm264, %v265, %v266
  %v268 = vrot.slane %v29, 1
  %v269 = vsel %vm264, %v266, %v268
  %v270 = vrot.slane %v30, 1
  %v271 = vrot.slane %v31, 1
  %v272 = vsel %vm264, %v270, %v271
  %v273 = vrot.slane %v32, 1
  %v274 = vsel %vm264, %v271, %v273
  %v275 = vrot.slane %v33, 1
  %v276 = vrot.slane %v34, 1
  %v277 = vsel %vm264, %v275, %v276
  %v278 = vrot.slane %v35, 1
  %v279 = vsel %vm264, %v276, %v278
  %v280 = vrot.slane %v36, 1
  %v281 = vrot.slane %v37, 1
  %v282 = vsel %vm264, %v280, %v281
  %v283 = vrot.slane %v38, 1
  %v284 = vsel %vm264, %v281, %v283
  %v285 = vrot.slane %v39, 1
  %v286 = vrot.slane %v40, 1
  %v287 = vsel %vm264, %v285, %v286
  %v288 = vrot.slane %v41, 1
  %v289 = vsel %vm264, %v286, %v288
  %v290 = vrot.slane %v42, 1
  %v291 = vrot.slane %v43, 1
  %v292 = vsel %vm264, %v290, %v291
  %v293 = vrot.slane %v44, 1
  %v294 = vsel %vm264, %v291, %v293
  %v295 = vrot.slane %v45, 1
  %v296 = vrot.slane %v46, 1
  %v297 = vsel %vm264, %v295, %v296
  %v298 = vrot.slane %v47, 1
  %v299 = vsel %vm264, %v296, %v298
  %v300 = vrot.slane %v48, 1
  %v301 = vrot.slane %v49, 1
  %v302 = vsel %vm264, %v300, %v301
  %v303 = vrot.slane %v50, 1
  %v304 = vsel %vm264, %v301, %v303
  %v305 = vrot.slane %v51, 1
  %v306 = vrot.slane %v52, 1
  %v307 = vsel %vm264, %v305, %v306
  %v308 = vrot.slane %v53, 1
  %v309 = vsel %vm264, %v306, %v308
  %v310 = vrot.slane %v54, 1
  %v311 = vrot.slane %v55, 1
  %v312 = vsel %vm264, %v310, %v311
  %v313 = vrot.slane %v56, 1
  %v314 = vsel %vm264, %v311, %v313
  %v315 = vrot.slane %v57, 1
  %v316 = vrot.slane %v58, 1
  %v317 = vsel %vm264, %v315, %v316
  %v318 = vrot.slane %v59, 1
  %v319 = vsel %vm264, %v316, %v318
  %v320 = vrot.slane %v60, 1
  %v321 = vrot.slane %v61, 1
  %v322 = vsel %vm264, %v320, %v321
  %v323 = vrot.slane %v62, 1
  %v324 = vsel %vm264, %v321, %v323
  %v325 = vrot.slane %v63, 1
  %v326 = vrot.slane %v64, 1
  %v327 = vsel %vm264, %v325, %v326
  %v328 = vrot.slane %v65, 1
  %v329 = vsel %vm264, %v326, %v328
  %v330 = vrot.slane %v66, 1
  %v331 = vrot.slane %v67, 1
  %v332 = vsel %vm264, %v330, %v331
  %v333 = vrot.slane %v68, 1
  %v334 = vsel %vm264, %v331, %v333
  %v335 = vrot.slane %v69, 1
  %v336 = vrot.slane %v70, 1
  %v337 = vsel %vm264, %v335, %v336
  %v338 = vrot.slane %v71, 1
  %v339 = vsel %vm264, %v336, %v338
  %v340 = vrot.slane %v72, 1
  %v341 = vrot.slane %v73, 1
  %v342 = vsel %vm264, %v340, %v341
  %v343 = vrot.slane %v74, 1
  %v344 = vsel %vm264, %v341, %v343
  %v345 = vrot.slane %v81, 1
  %v346 = vrot.slane %v82, 1
  %v347 = vsel %vm264, %v345, %v346
  %v348 = vrot.slane %v83, 1
  %v349 = vsel %vm264, %v346, %v348
  %v350 = vrot.slane %v84, 1
  %v351 = vrot.slane %v85, 1
  %v352 = vsel %vm264, %v350, %v351
  %v353 = vrot.slane %v86, 1
  %v354 = vsel %vm264, %v351, %v353
  %v355 = vrot.slane %v87, 1
  %v356 = vrot.slane %v88, 1
  %v357 = vsel %vm264, %v355, %v356
  %v358 = vrot.slane %v89, 1
  %v359 = vsel %vm264, %v356, %v358
  %v360 = vrot.slane %v90, 1
  %v361 = vrot.slane %v91, 1
  %v362 = vsel %vm264, %v360, %v361
  %v363 = vrot.slane %v92, 1
  %v364 = vsel %vm264, %v361, %v363
  %v365 = vrot.slane %v93, 1
  %v366 = vrot.slane %v94, 1
  %v367 = vsel %vm264, %v365, %v366
  %v368 = vrot.slane %v95, 1
  %v369 = vsel %vm264, %v366, %v368
  %v370 = vrot.slane %v96, 1
  %v371 = vrot.slane %v97, 1
  %v372 = vsel %vm264, %v370, %v371
  %v373 = vrot.slane %v98, 1
  %v374 = vsel %vm264, %v371, %v373
  %v375 = vrot.slane %v99, 1
  %v376 = vrot.slane %v100, 1
  %v377 = vsel %vm264, %v375, %v376
  %v378 = vrot.slane %v101, 1
  %v379 = vsel %vm264, %v376, %v378
  %v380 = vrot.slane %v102, 1
  %v381 = vrot.slane %v103, 1
  %v382 = vsel %vm264, %v380, %v381
  %v383 = vrot.slane %v104, 1
  %v384 = vsel %vm264, %v381, %v383
  %v385 = vrot.slane %v105, 1
  %v386 = vrot.slane %v106, 1
  %v387 = vsel %vm264, %v385, %v386
  %v388 = vrot.slane %v107, 1
  %v389 = vsel %vm264, %v386, %v388
  %v390 = vrot.slane %v108, 1
  %v391 = vrot.slane %v109, 1
  %v392 = vsel %vm264, %v390, %v391
  %v393 = vrot.slane %v110, 1
  %v394 = vsel %vm264, %v391, %v393
  %v395 = vrot.slane %v111, 1
  %v396 = vrot.slane %v112, 1
  %v397 = vsel %vm264, %v395, %v396
  %v398 = vrot.slane %v113, 1
  %v399 = vsel %vm264, %v396, %v398
  %v400 = vrot.slane %v114, 1
  %v401 = vrot.slane %v115, 1
  %v402 = vsel %vm264, %v400, %v401
  %v403 = vrot.slane %v116, 1
  %v404 = vsel %vm264, %v401, %v403
  %v405 = vrot.slane %v117, 1
  %v406 = vrot.slane %v118, 1
  %v407 = vsel %vm264, %v405, %v406
  %v408 = vrot.slane %v119, 1
  %v409 = vsel %vm264, %v406, %v408
  %v410 = vrot.slane %v120, 1
  %v411 = vrot.slane %v121, 1
  %v412 = vsel %vm264, %v410, %v411
  %v413 = vrot.slane %v122, 1
  %v414 = vsel %vm264, %v411, %v413
  %v415 = vrot.slane %v123, 1
  %v416 = vrot.slane %v124, 1
  %v417 = vsel %vm264, %v415, %v416
  %v418 = vrot.slane %v125, 1
  %v419 = vsel %vm264, %v416, %v418
  %v420 = vrot.slane %v126, 1
  %v421 = vrot.slane %v127, 1
  %v422 = vsel %vm264, %v420, %v421
  %v423 = vrot.slane %v128, 1
  %v424 = vsel %vm264, %v421, %v423
  %v489 = vpack.c.bf16 %v269, %v267
  %v490 = vpack.c.bf16 %v274, %v272
  %v491 = vpack.c.bf16 %v279, %v277
  %v492 = vpack.c.bf16 %v284, %v282
  %v493 = vpack.c.bf16 %v289, %v287
  %v494 = vpack.c.bf16 %v294, %v292
  %v495 = vpack.c.bf16 %v299, %v297
  %v496 = vpack.c.bf16 %v304, %v302
  %v497 = vpack.c.bf16 %v309, %v307
  %v498 = vpack.c.bf16 %v314, %v312
  %v499 = vpack.c.bf16 %v319, %v317
  %v500 = vpack.c.bf16 %v324, %v322
  %v501 = vpack.c.bf16 %v329, %v327
  %v502 = vpack.c.bf16 %v334, %v332
  %v503 = vpack.c.bf16 %v339, %v337
  %v504 = vpack.c.bf16 %v344, %v342
  %v505 = vpack.c.bf16 %v349, %v347
  %v506 = vpack.c.bf16 %v354, %v352
  %v507 = vpack.c.bf16 %v359, %v357
  %v508 = vpack.c.bf16 %v364, %v362
  %v509 = vpack.c.bf16 %v369, %v367
  %v510 = vpack.c.bf16 %v374, %v372
  %v511 = vpack.c.bf16 %v379, %v377
  %v512 = vpack.c.bf16 %v384, %v382
  %v513 = vpack.c.bf16 %v389, %v387
  %v514 = vpack.c.bf16 %v394, %v392
  %v515 = vpack.c.bf16 %v399, %v397
  %v516 = vpack.c.bf16 %v404, %v402
  %v517 = vpack.c.bf16 %v409, %v407
  %v518 = vpack.c.bf16 %v414, %v412
  %v519 = vpack.c.bf16 %v419, %v417
  %v520 = vpack.c.bf16 %v424, %v422
  %s521 = scalar_lea.vmem %s1, 2
  %v522 = vld [vmem:[%s521] sm:$0x3]
  %vm523 = vcmask 31744
  %v525 = vsel %vm523, %v489, 0
  %v528 = vsel %vm523, %v490, 0
  %v531 = vsel %vm523, %v491, 0
  %v534 = vsel %vm523, %v492, 0
  %v537 = vsel %vm523, %v493, 0
  %v540 = vsel %vm523, %v494, 0
  %v543 = vsel %vm523, %v495, 0
  %v546 = vsel %vm523, %v496, 0
  %v549 = vsel %vm523, %v497, 0
  %v552 = vsel %vm523, %v498, 0
  %v555 = vsel %vm523, %v499, 0
  %v558 = vsel %vm523, %v500, 0
  %v561 = vsel %vm523, %v501, 0
  %v564 = vsel %vm523, %v502, 0
  %v567 = vsel %vm523, %v503, 0
  %v570 = vsel %vm523, %v504, 0
  %v573 = vsel %vm523, %v505, 0
  %v576 = vsel %vm523, %v506, 0
  %v579 = vsel %vm523, %v507, 0
  %v582 = vsel %vm523, %v508, 0
  %v585 = vsel %vm523, %v509, 0
  %v588 = vsel %vm523, %v510, 0
  %v591 = vsel %vm523, %v511, 0
  %v594 = vsel %vm523, %v512, 0
  %v597 = vsel %vm523, %v513, 0
  %v600 = vsel %vm523, %v514, 0
  %v603 = vsel %vm523, %v515, 0
  %v606 = vsel %vm523, %v516, 0
  %v609 = vsel %vm523, %v517, 0
  %v612 = vsel %vm523, %v518, 0
  %v615 = vsel %vm523, %v519, 0
  %v618 = vsel %vm523, %v520, 0
  %vm620 = vcmask 1041408
  %v622 = vsel %vm620, %v522, 0
  %624 = vmatpush.bf16.msra.mxu0 0
  %625 = vmatpush.bf16.msra.mxu0 0
  %626 = vmatpush.bf16.msra.mxu0 0
  %627 = vmatpush.bf16.msra.mxu0 0
  %628 = vmatpush.bf16.msra.mxu0 0
  %629 = vmatpush.bf16.msra.mxu0 0
  %630 = vmatpush.bf16.msra.mxu0 0
  %631 = vmatpush.bf16.msra.mxu0 %v622
  %632 = vmatmul.bf16.gmra.mxu0 %v525
  %v633 = vpop.f32.mrf.mxu0
  %v634 = vadd.f32 0.0, %v633
  %v635 = vpop.f32.mrf.mxu0
  %v636 = vadd.f32 0.0, %v635
  %637 = vmatmul.bf16.gmra.mxu0 %v528
  %v638 = vpop.f32.mrf.mxu0
  %v639 = vadd.f32 0.0, %v638
  %v640 = vpop.f32.mrf.mxu0
  %v641 = vadd.f32 0.0, %v640
  %642 = vmatmul.bf16.gmra.mxu0 %v531
  %v643 = vpop.f32.mrf.mxu0
  %v644 = vadd.f32 0.0, %v643
  %v645 = vpop.f32.mrf.mxu0
  %v646 = vadd.f32 0.0, %v645
  %647 = vmatmul.bf16.gmra.mxu0 %v534
  %v648 = vpop.f32.mrf.mxu0
  %v649 = vadd.f32 0.0, %v648
  %v650 = vpop.f32.mrf.mxu0
  %v651 = vadd.f32 0.0, %v650
  %652 = vmatmul.bf16.gmra.mxu0 %v537
  %v653 = vpop.f32.mrf.mxu0
  %v654 = vadd.f32 0.0, %v653
  %v655 = vpop.f32.mrf.mxu0
  %v656 = vadd.f32 0.0, %v655
  %657 = vmatmul.bf16.gmra.mxu0 %v540
  %v658 = vpop.f32.mrf.mxu0
  %v659 = vadd.f32 0.0, %v658
  %v660 = vpop.f32.mrf.mxu0
  %v661 = vadd.f32 0.0, %v660
  %662 = vmatmul.bf16.gmra.mxu0 %v543
  %v663 = vpop.f32.mrf.mxu0
  %v664 = vadd.f32 0.0, %v663
  %v665 = vpop.f32.mrf.mxu0
  %v666 = vadd.f32 0.0, %v665
  %667 = vmatmul.bf16.gmra.mxu0 %v546
  %v668 = vpop.f32.mrf.mxu0
  %v669 = vadd.f32 0.0, %v668
  %v670 = vpop.f32.mrf.mxu0
  %v671 = vadd.f32 0.0, %v670
  %672 = vmatmul.bf16.gmra.mxu0 %v549
  %v673 = vpop.f32.mrf.mxu0
  %v674 = vadd.f32 0.0, %v673
  %v675 = vpop.f32.mrf.mxu0
  %v676 = vadd.f32 0.0, %v675
  %677 = vmatmul.bf16.gmra.mxu0 %v552
  %v678 = vpop.f32.mrf.mxu0
  %v679 = vadd.f32 0.0, %v678
  %v680 = vpop.f32.mrf.mxu0
  %v681 = vadd.f32 0.0, %v680
  %682 = vmatmul.bf16.gmra.mxu0 %v555
  %v683 = vpop.f32.mrf.mxu0
  %v684 = vadd.f32 0.0, %v683
  %v685 = vpop.f32.mrf.mxu0
  %v686 = vadd.f32 0.0, %v685
  %687 = vmatmul.bf16.gmra.mxu0 %v558
  %v688 = vpop.f32.mrf.mxu0
  %v689 = vadd.f32 0.0, %v688
  %v690 = vpop.f32.mrf.mxu0
  %v691 = vadd.f32 0.0, %v690
  %692 = vmatmul.bf16.gmra.mxu0 %v561
  %v693 = vpop.f32.mrf.mxu0
  %v694 = vadd.f32 0.0, %v693
  %v695 = vpop.f32.mrf.mxu0
  %v696 = vadd.f32 0.0, %v695
  %697 = vmatmul.bf16.gmra.mxu0 %v564
  %v698 = vpop.f32.mrf.mxu0
  %v699 = vadd.f32 0.0, %v698
  %v700 = vpop.f32.mrf.mxu0
  %v701 = vadd.f32 0.0, %v700
  %702 = vmatmul.bf16.gmra.mxu0 %v567
  %v703 = vpop.f32.mrf.mxu0
  %v704 = vadd.f32 0.0, %v703
  %v705 = vpop.f32.mrf.mxu0
  %v706 = vadd.f32 0.0, %v705
  %707 = vmatmul.bf16.gmra.mxu0 %v570
  %v708 = vpop.f32.mrf.mxu0
  %v709 = vadd.f32 0.0, %v708
  %v710 = vpop.f32.mrf.mxu0
  %v711 = vadd.f32 0.0, %v710
  %712 = vmatmul.bf16.gmra.mxu0 %v573
  %v713 = vpop.f32.mrf.mxu0
  %v714 = vadd.f32 0.0, %v713
  %v715 = vpop.f32.mrf.mxu0
  %v716 = vadd.f32 0.0, %v715
  %717 = vmatmul.bf16.gmra.mxu0 %v576
  %v718 = vpop.f32.mrf.mxu0
  %v719 = vadd.f32 0.0, %v718
  %v720 = vpop.f32.mrf.mxu0
  %v721 = vadd.f32 0.0, %v720
  %722 = vmatmul.bf16.gmra.mxu0 %v579
  %v723 = vpop.f32.mrf.mxu0
  %v724 = vadd.f32 0.0, %v723
  %v725 = vpop.f32.mrf.mxu0
  %v726 = vadd.f32 0.0, %v725
  %727 = vmatmul.bf16.gmra.mxu0 %v582
  %v728 = vpop.f32.mrf.mxu0
  %v729 = vadd.f32 0.0, %v728
  %v730 = vpop.f32.mrf.mxu0
  %v731 = vadd.f32 0.0, %v730
  %732 = vmatmul.bf16.gmra.mxu0 %v585
  %v733 = vpop.f32.mrf.mxu0
  %v734 = vadd.f32 0.0, %v733
  %v735 = vpop.f32.mrf.mxu0
  %v736 = vadd.f32 0.0, %v735
  %737 = vmatmul.bf16.gmra.mxu0 %v588
  %v738 = vpop.f32.mrf.mxu0
  %v739 = vadd.f32 0.0, %v738
  %v740 = vpop.f32.mrf.mxu0
  %v741 = vadd.f32 0.0, %v740
  %742 = vmatmul.bf16.gmra.mxu0 %v591
  %v743 = vpop.f32.mrf.mxu0
  %v744 = vadd.f32 0.0, %v743
  %v745 = vpop.f32.mrf.mxu0
  %v746 = vadd.f32 0.0, %v745
  %747 = vmatmul.bf16.gmra.mxu0 %v594
  %v748 = vpop.f32.mrf.mxu0
  %v749 = vadd.f32 0.0, %v748
  %v750 = vpop.f32.mrf.mxu0
  %v751 = vadd.f32 0.0, %v750
  %752 = vmatmul.bf16.gmra.mxu0 %v597
  %v753 = vpop.f32.mrf.mxu0
  %v754 = vadd.f32 0.0, %v753
  %v755 = vpop.f32.mrf.mxu0
  %v756 = vadd.f32 0.0, %v755
  %757 = vmatmul.bf16.gmra.mxu0 %v600
  %v758 = vpop.f32.mrf.mxu0
  %v759 = vadd.f32 0.0, %v758
  %v760 = vpop.f32.mrf.mxu0
  %v761 = vadd.f32 0.0, %v760
  %762 = vmatmul.bf16.gmra.mxu0 %v603
  %v763 = vpop.f32.mrf.mxu0
  %v764 = vadd.f32 0.0, %v763
  %v765 = vpop.f32.mrf.mxu0
  %v766 = vadd.f32 0.0, %v765
  %767 = vmatmul.bf16.gmra.mxu0 %v606
  %v768 = vpop.f32.mrf.mxu0
  %v769 = vadd.f32 0.0, %v768
  %v770 = vpop.f32.mrf.mxu0
  %v771 = vadd.f32 0.0, %v770
  %772 = vmatmul.bf16.gmra.mxu0 %v609
  %v773 = vpop.f32.mrf.mxu0
  %v774 = vadd.f32 0.0, %v773
  %v775 = vpop.f32.mrf.mxu0
  %v776 = vadd.f32 0.0, %v775
  %777 = vmatmul.bf16.gmra.mxu0 %v612
  %v778 = vpop.f32.mrf.mxu0
  %v779 = vadd.f32 0.0, %v778
  %v780 = vpop.f32.mrf.mxu0
  %v781 = vadd.f32 0.0, %v780
  %782 = vmatmul.bf16.gmra.mxu0 %v615
  %v783 = vpop.f32.mrf.mxu0
  %v784 = vadd.f32 0.0, %v783
  %v785 = vpop.f32.mrf.mxu0
  %v786 = vadd.f32 0.0, %v785
  %787 = vmatmul.bf16.gmra.mxu0 %v618
  %v788 = vpop.f32.mrf.mxu0
  %v789 = vadd.f32 0.0, %v788
  %v790 = vpop.f32.mrf.mxu0
  %v791 = vadd.f32 0.0, %v790
  %792 = vdwg.mxu0
  %v794 = vsel %vm523, %v135, 0
  %v797 = vsel %vm523, %v136, 0
  %v800 = vsel %vm523, %v137, 0
  %v803 = vsel %vm523, %v138, 0
  %v806 = vsel %vm523, %v139, 0
  %v809 = vsel %vm523, %v140, 0
  %v812 = vsel %vm523, %v141, 0
  %v815 = vsel %vm523, %v142, 0
  %v818 = vsel %vm523, %v143, 0
  %v821 = vsel %vm523, %v144, 0
  %v824 = vsel %vm523, %v145, 0
  %v827 = vsel %vm523, %v146, 0
  %v830 = vsel %vm523, %v147, 0
  %v833 = vsel %vm523, %v148, 0
  %v836 = vsel %vm523, %v149, 0
  %v839 = vsel %vm523, %v150, 0
  %v842 = vsel %vm523, %v151, 0
  %v845 = vsel %vm523, %v152, 0
  %v848 = vsel %vm523, %v153, 0
  %v851 = vsel %vm523, %v154, 0
  %v854 = vsel %vm523, %v155, 0
  %v857 = vsel %vm523, %v156, 0
  %v860 = vsel %vm523, %v157, 0
  %v863 = vsel %vm523, %v158, 0
  %v866 = vsel %vm523, %v159, 0
  %v869 = vsel %vm523, %v160, 0
  %v872 = vsel %vm523, %v161, 0
  %v875 = vsel %vm523, %v162, 0
  %v878 = vsel %vm523, %v163, 0
  %v881 = vsel %vm523, %v164, 0
  %v884 = vsel %vm523, %v165, 0
  %v887 = vsel %vm523, %v166, 0
  %v890 = vsel %vm620, %v167, 0
  %892 = vmatpush.bf16.msra.mxu0 0
  %893 = vmatpush.bf16.msra.mxu0 0
  %894 = vmatpush.bf16.msra.mxu0 0
  %895 = vmatpush.bf16.msra.mxu0 0
  %896 = vmatpush.bf16.msra.mxu0 0
  %897 = vmatpush.bf16.msra.mxu0 0
  %898 = vmatpush.bf16.msra.mxu0 0
  %899 = vmatpush.bf16.msra.mxu0 %v890
  %900 = vmatmul.bf16.gmra.mxu0 %v794
  %v901 = vpop.f32.mrf.mxu0
  %v902 = vadd.f32 %v634, %v901
  %v903 = vpop.f32.mrf.mxu0
  %v904 = vadd.f32 %v636, %v903
  %905 = vmatmul.bf16.gmra.mxu0 %v797
  %v906 = vpop.f32.mrf.mxu0
  %v907 = vadd.f32 %v639, %v906
  %v908 = vpop.f32.mrf.mxu0
  %v909 = vadd.f32 %v641, %v908
  %910 = vmatmul.bf16.gmra.mxu0 %v800
  %v911 = vpop.f32.mrf.mxu0
  %v912 = vadd.f32 %v644, %v911
  %v913 = vpop.f32.mrf.mxu0
  %v914 = vadd.f32 %v646, %v913
  %915 = vmatmul.bf16.gmra.mxu0 %v803
  %v916 = vpop.f32.mrf.mxu0
  %v917 = vadd.f32 %v649, %v916
  %v918 = vpop.f32.mrf.mxu0
  %v919 = vadd.f32 %v651, %v918
  %920 = vmatmul.bf16.gmra.mxu0 %v806
  %v921 = vpop.f32.mrf.mxu0
  %v922 = vadd.f32 %v654, %v921
  %v923 = vpop.f32.mrf.mxu0
  %v924 = vadd.f32 %v656, %v923
  %925 = vmatmul.bf16.gmra.mxu0 %v809
  %v926 = vpop.f32.mrf.mxu0
  %v927 = vadd.f32 %v659, %v926
  %v928 = vpop.f32.mrf.mxu0
  %v929 = vadd.f32 %v661, %v928
  %930 = vmatmul.bf16.gmra.mxu0 %v812
  %v931 = vpop.f32.mrf.mxu0
  %v932 = vadd.f32 %v664, %v931
  %v933 = vpop.f32.mrf.mxu0
  %v934 = vadd.f32 %v666, %v933
  %935 = vmatmul.bf16.gmra.mxu0 %v815
  %v936 = vpop.f32.mrf.mxu0
  %v937 = vadd.f32 %v669, %v936
  %v938 = vpop.f32.mrf.mxu0
  %v939 = vadd.f32 %v671, %v938
  %940 = vmatmul.bf16.gmra.mxu0 %v818
  %v941 = vpop.f32.mrf.mxu0
  %v942 = vadd.f32 %v674, %v941
  %v943 = vpop.f32.mrf.mxu0
  %v944 = vadd.f32 %v676, %v943
  %945 = vmatmul.bf16.gmra.mxu0 %v821
  %v946 = vpop.f32.mrf.mxu0
  %v947 = vadd.f32 %v679, %v946
  %v948 = vpop.f32.mrf.mxu0
  %v949 = vadd.f32 %v681, %v948
  %950 = vmatmul.bf16.gmra.mxu0 %v824
  %v951 = vpop.f32.mrf.mxu0
  %v952 = vadd.f32 %v684, %v951
  %v953 = vpop.f32.mrf.mxu0
  %v954 = vadd.f32 %v686, %v953
  %955 = vmatmul.bf16.gmra.mxu0 %v827
  %v956 = vpop.f32.mrf.mxu0
  %v957 = vadd.f32 %v689, %v956
  %v958 = vpop.f32.mrf.mxu0
  %v959 = vadd.f32 %v691, %v958
  %960 = vmatmul.bf16.gmra.mxu0 %v830
  %v961 = vpop.f32.mrf.mxu0
  %v962 = vadd.f32 %v694, %v961
  %v963 = vpop.f32.mrf.mxu0
  %v964 = vadd.f32 %v696, %v963
  %965 = vmatmul.bf16.gmra.mxu0 %v833
  %v966 = vpop.f32.mrf.mxu0
  %v967 = vadd.f32 %v699, %v966
  %v968 = vpop.f32.mrf.mxu0
  %v969 = vadd.f32 %v701, %v968
  %970 = vmatmul.bf16.gmra.mxu0 %v836
  %v971 = vpop.f32.mrf.mxu0
  %v972 = vadd.f32 %v704, %v971
  %v973 = vpop.f32.mrf.mxu0
  %v974 = vadd.f32 %v706, %v973
  %975 = vmatmul.bf16.gmra.mxu0 %v839
  %v976 = vpop.f32.mrf.mxu0
  %v977 = vadd.f32 %v709, %v976
  %v978 = vpop.f32.mrf.mxu0
  %v979 = vadd.f32 %v711, %v978
  %980 = vmatmul.bf16.gmra.mxu0 %v842
  %v981 = vpop.f32.mrf.mxu0
  %v982 = vadd.f32 %v714, %v981
  %v983 = vpop.f32.mrf.mxu0
  %v984 = vadd.f32 %v716, %v983
  %985 = vmatmul.bf16.gmra.mxu0 %v845
  %v986 = vpop.f32.mrf.mxu0
  %v987 = vadd.f32 %v719, %v986
  %v988 = vpop.f32.mrf.mxu0
  %v989 = vadd.f32 %v721, %v988
  %990 = vmatmul.bf16.gmra.mxu0 %v848
  %v991 = vpop.f32.mrf.mxu0
  %v992 = vadd.f32 %v724, %v991
  %v993 = vpop.f32.mrf.mxu0
  %v994 = vadd.f32 %v726, %v993
  %995 = vmatmul.bf16.gmra.mxu0 %v851
  %v996 = vpop.f32.mrf.mxu0
  %v997 = vadd.f32 %v729, %v996
  %v998 = vpop.f32.mrf.mxu0
  %v999 = vadd.f32 %v731, %v998
  %1000 = vmatmul.bf16.gmra.mxu0 %v854
  %v1001 = vpop.f32.mrf.mxu0
  %v1002 = vadd.f32 %v734, %v1001
  %v1003 = vpop.f32.mrf.mxu0
  %v1004 = vadd.f32 %v736, %v1003
  %1005 = vmatmul.bf16.gmra.mxu0 %v857
  %v1006 = vpop.f32.mrf.mxu0
  %v1007 = vadd.f32 %v739, %v1006
  %v1008 = vpop.f32.mrf.mxu0
  %v1009 = vadd.f32 %v741, %v1008
  %1010 = vmatmul.bf16.gmra.mxu0 %v860
  %v1011 = vpop.f32.mrf.mxu0
  %v1012 = vadd.f32 %v744, %v1011
  %v1013 = vpop.f32.mrf.mxu0
  %v1014 = vadd.f32 %v746, %v1013
  %1015 = vmatmul.bf16.gmra.mxu0 %v863
  %v1016 = vpop.f32.mrf.mxu0
  %v1017 = vadd.f32 %v749, %v1016
  %v1018 = vpop.f32.mrf.mxu0
  %v1019 = vadd.f32 %v751, %v1018
  %1020 = vmatmul.bf16.gmra.mxu0 %v866
  %v1021 = vpop.f32.mrf.mxu0
  %v1022 = vadd.f32 %v754, %v1021
  %v1023 = vpop.f32.mrf.mxu0
  %v1024 = vadd.f32 %v756, %v1023
  %1025 = vmatmul.bf16.gmra.mxu0 %v869
  %v1026 = vpop.f32.mrf.mxu0
  %v1027 = vadd.f32 %v759, %v1026
  %v1028 = vpop.f32.mrf.mxu0
  %v1029 = vadd.f32 %v761, %v1028
  %1030 = vmatmul.bf16.gmra.mxu0 %v872
  %v1031 = vpop.f32.mrf.mxu0
  %v1032 = vadd.f32 %v764, %v1031
  %v1033 = vpop.f32.mrf.mxu0
  %v1034 = vadd.f32 %v766, %v1033
  %1035 = vmatmul.bf16.gmra.mxu0 %v875
  %v1036 = vpop.f32.mrf.mxu0
  %v1037 = vadd.f32 %v769, %v1036
  %v1038 = vpop.f32.mrf.mxu0
  %v1039 = vadd.f32 %v771, %v1038
  %1040 = vmatmul.bf16.gmra.mxu0 %v878
  %v1041 = vpop.f32.mrf.mxu0
  %v1042 = vadd.f32 %v774, %v1041
  %v1043 = vpop.f32.mrf.mxu0
  %v1044 = vadd.f32 %v776, %v1043
  %1045 = vmatmul.bf16.gmra.mxu0 %v881
  %v1046 = vpop.f32.mrf.mxu0
  %v1047 = vadd.f32 %v779, %v1046
  %v1048 = vpop.f32.mrf.mxu0
  %v1049 = vadd.f32 %v781, %v1048
  %1050 = vmatmul.bf16.gmra.mxu0 %v884
  %v1051 = vpop.f32.mrf.mxu0
  %v1052 = vadd.f32 %v784, %v1051
  %v1053 = vpop.f32.mrf.mxu0
  %v1054 = vadd.f32 %v786, %v1053
  %1055 = vmatmul.bf16.gmra.mxu0 %v887
  %v1056 = vpop.f32.mrf.mxu0
  %v1057 = vadd.f32 %v789, %v1056
  %v1058 = vpop.f32.mrf.mxu0
  %v1059 = vadd.f32 %v791, %v1058
  %1060 = vdwg.mxu0
  %vm1061 = vcmask 1045504
  %v1062 = vrot.slane %v27, 2
  %v1063 = vrot.slane %v28, 2
  %v1064 = vsel %vm1061, %v1062, %v1063
  %v1065 = vrot.slane %v29, 2
  %v1066 = vsel %vm1061, %v1063, %v1065
  %v1067 = vrot.slane %v30, 2
  %v1068 = vrot.slane %v31, 2
  %v1069 = vsel %vm1061, %v1067, %v1068
  %v1070 = vrot.slane %v32, 2
  %v1071 = vsel %vm1061, %v1068, %v1070
  %v1072 = vrot.slane %v33, 2
  %v1073 = vrot.slane %v34, 2
  %v1074 = vsel %vm1061, %v1072, %v1073
  %v1075 = vrot.slane %v35, 2
  %v1076 = vsel %vm1061, %v1073, %v1075
  %v1077 = vrot.slane %v36, 2
  %v1078 = vrot.slane %v37, 2
  %v1079 = vsel %vm1061, %v1077, %v1078
  %v1080 = vrot.slane %v38, 2
  %v1081 = vsel %vm1061, %v1078, %v1080
  %v1082 = vrot.slane %v39, 2
  %v1083 = vrot.slane %v40, 2
  %v1084 = vsel %vm1061, %v1082, %v1083
  %v1085 = vrot.slane %v41, 2
  %v1086 = vsel %vm1061, %v1083, %v1085
  %v1087 = vrot.slane %v42, 2
  %v1088 = vrot.slane %v43, 2
  %v1089 = vsel %vm1061, %v1087, %v1088
  %v1090 = vrot.slane %v44, 2
  %v1091 = vsel %vm1061, %v1088, %v1090
  %v1092 = vrot.slane %v45, 2
  %v1093 = vrot.slane %v46, 2
  %v1094 = vsel %vm1061, %v1092, %v1093
  %v1095 = vrot.slane %v47, 2
  %v1096 = vsel %vm1061, %v1093, %v1095
  %v1097 = vrot.slane %v48, 2
  %v1098 = vrot.slane %v49, 2
  %v1099 = vsel %vm1061, %v1097, %v1098
  %v1100 = vrot.slane %v50, 2
  %v1101 = vsel %vm1061, %v1098, %v1100
  %v1102 = vrot.slane %v51, 2
  %v1103 = vrot.slane %v52, 2
  %v1104 = vsel %vm1061, %v1102, %v1103
  %v1105 = vrot.slane %v53, 2
  %v1106 = vsel %vm1061, %v1103, %v1105
  %v1107 = vrot.slane %v54, 2
  %v1108 = vrot.slane %v55, 2
  %v1109 = vsel %vm1061, %v1107, %v1108
  %v1110 = vrot.slane %v56, 2
  %v1111 = vsel %vm1061, %v1108, %v1110
  %v1112 = vrot.slane %v57, 2
  %v1113 = vrot.slane %v58, 2
  %v1114 = vsel %vm1061, %v1112, %v1113
  %v1115 = vrot.slane %v59, 2
  %v1116 = vsel %vm1061, %v1113, %v1115
  %v1117 = vrot.slane %v60, 2
  %v1118 = vrot.slane %v61, 2
  %v1119 = vsel %vm1061, %v1117, %v1118
  %v1120 = vrot.slane %v62, 2
  %v1121 = vsel %vm1061, %v1118, %v1120
  %v1122 = vrot.slane %v63, 2
  %v1123 = vrot.slane %v64, 2
  %v1124 = vsel %vm1061, %v1122, %v1123
  %v1125 = vrot.slane %v65, 2
  %v1126 = vsel %vm1061, %v1123, %v1125
  %v1127 = vrot.slane %v66, 2
  %v1128 = vrot.slane %v67, 2
  %v1129 = vsel %vm1061, %v1127, %v1128
  %v1130 = vrot.slane %v68, 2
  %v1131 = vsel %vm1061, %v1128, %v1130
  %v1132 = vrot.slane %v69, 2
  %v1133 = vrot.slane %v70, 2
  %v1134 = vsel %vm1061, %v1132, %v1133
  %v1135 = vrot.slane %v71, 2
  %v1136 = vsel %vm1061, %v1133, %v1135
  %v1137 = vrot.slane %v72, 2
  %v1138 = vrot.slane %v73, 2
  %v1139 = vsel %vm1061, %v1137, %v1138
  %v1140 = vrot.slane %v74, 2
  %v1141 = vsel %vm1061, %v1138, %v1140
  %v1142 = vrot.slane %v81, 2
  %v1143 = vrot.slane %v82, 2
  %v1144 = vsel %vm1061, %v1142, %v1143
  %v1145 = vrot.slane %v83, 2
  %v1146 = vsel %vm1061, %v1143, %v1145
  %v1147 = vrot.slane %v84, 2
  %v1148 = vrot.slane %v85, 2
  %v1149 = vsel %vm1061, %v1147, %v1148
  %v1150 = vrot.slane %v86, 2
  %v1151 = vsel %vm1061, %v1148, %v1150
  %v1152 = vrot.slane %v87, 2
  %v1153 = vrot.slane %v88, 2
  %v1154 = vsel %vm1061, %v1152, %v1153
  %v1155 = vrot.slane %v89, 2
  %v1156 = vsel %vm1061, %v1153, %v1155
  %v1157 = vrot.slane %v90, 2
  %v1158 = vrot.slane %v91, 2
  %v1159 = vsel %vm1061, %v1157, %v1158
  %v1160 = vrot.slane %v92, 2
  %v1161 = vsel %vm1061, %v1158, %v1160
  %v1162 = vrot.slane %v93, 2
  %v1163 = vrot.slane %v94, 2
  %v1164 = vsel %vm1061, %v1162, %v1163
  %v1165 = vrot.slane %v95, 2
  %v1166 = vsel %vm1061, %v1163, %v1165
  %v1167 = vrot.slane %v96, 2
  %v1168 = vrot.slane %v97, 2
  %v1169 = vsel %vm1061, %v1167, %v1168
  %v1170 = vrot.slane %v98, 2
  %v1171 = vsel %vm1061, %v1168, %v1170
  %v1172 = vrot.slane %v99, 2
  %v1173 = vrot.slane %v100, 2
  %v1174 = vsel %vm1061, %v1172, %v1173
  %v1175 = vrot.slane %v101, 2
  %v1176 = vsel %vm1061, %v1173, %v1175
  %v1177 = vrot.slane %v102, 2
  %v1178 = vrot.slane %v103, 2
  %v1179 = vsel %vm1061, %v1177, %v1178
  %v1180 = vrot.slane %v104, 2
  %v1181 = vsel %vm1061, %v1178, %v1180
  %v1182 = vrot.slane %v105, 2
  %v1183 = vrot.slane %v106, 2
  %v1184 = vsel %vm1061, %v1182, %v1183
  %v1185 = vrot.slane %v107, 2
  %v1186 = vsel %vm1061, %v1183, %v1185
  %v1187 = vrot.slane %v108, 2
  %v1188 = vrot.slane %v109, 2
  %v1189 = vsel %vm1061, %v1187, %v1188
  %v1190 = vrot.slane %v110, 2
  %v1191 = vsel %vm1061, %v1188, %v1190
  %v1192 = vrot.slane %v111, 2
  %v1193 = vrot.slane %v112, 2
  %v1194 = vsel %vm1061, %v1192, %v1193
  %v1195 = vrot.slane %v113, 2
  %v1196 = vsel %vm1061, %v1193, %v1195
  %v1197 = vrot.slane %v114, 2
  %v1198 = vrot.slane %v115, 2
  %v1199 = vsel %vm1061, %v1197, %v1198
  %v1200 = vrot.slane %v116, 2
  %v1201 = vsel %vm1061, %v1198, %v1200
  %v1202 = vrot.slane %v117, 2
  %v1203 = vrot.slane %v118, 2
  %v1204 = vsel %vm1061, %v1202, %v1203
  %v1205 = vrot.slane %v119, 2
  %v1206 = vsel %vm1061, %v1203, %v1205
  %v1207 = vrot.slane %v120, 2
  %v1208 = vrot.slane %v121, 2
  %v1209 = vsel %vm1061, %v1207, %v1208
  %v1210 = vrot.slane %v122, 2
  %v1211 = vsel %vm1061, %v1208, %v1210
  %v1212 = vrot.slane %v123, 2
  %v1213 = vrot.slane %v124, 2
  %v1214 = vsel %vm1061, %v1212, %v1213
  %v1215 = vrot.slane %v125, 2
  %v1216 = vsel %vm1061, %v1213, %v1215
  %v1217 = vrot.slane %v126, 2
  %v1218 = vrot.slane %v127, 2
  %v1219 = vsel %vm1061, %v1217, %v1218
  %v1220 = vrot.slane %v128, 2
  %v1221 = vsel %vm1061, %v1218, %v1220
  %v1286 = vpack.c.bf16 %v1066, %v1064
  %v1287 = vpack.c.bf16 %v1071, %v1069
  %v1288 = vpack.c.bf16 %v1076, %v1074
  %v1289 = vpack.c.bf16 %v1081, %v1079
  %v1290 = vpack.c.bf16 %v1086, %v1084
  %v1291 = vpack.c.bf16 %v1091, %v1089
  %v1292 = vpack.c.bf16 %v1096, %v1094
  %v1293 = vpack.c.bf16 %v1101, %v1099
  %v1294 = vpack.c.bf16 %v1106, %v1104
  %v1295 = vpack.c.bf16 %v1111, %v1109
  %v1296 = vpack.c.bf16 %v1116, %v1114
  %v1297 = vpack.c.bf16 %v1121, %v1119
  %v1298 = vpack.c.bf16 %v1126, %v1124
  %v1299 = vpack.c.bf16 %v1131, %v1129
  %v1300 = vpack.c.bf16 %v1136, %v1134
  %v1301 = vpack.c.bf16 %v1141, %v1139
  %v1302 = vpack.c.bf16 %v1146, %v1144
  %v1303 = vpack.c.bf16 %v1151, %v1149
  %v1304 = vpack.c.bf16 %v1156, %v1154
  %v1305 = vpack.c.bf16 %v1161, %v1159
  %v1306 = vpack.c.bf16 %v1166, %v1164
  %v1307 = vpack.c.bf16 %v1171, %v1169
  %v1308 = vpack.c.bf16 %v1176, %v1174
  %v1309 = vpack.c.bf16 %v1181, %v1179
  %v1310 = vpack.c.bf16 %v1186, %v1184
  %v1311 = vpack.c.bf16 %v1191, %v1189
  %v1312 = vpack.c.bf16 %v1196, %v1194
  %v1313 = vpack.c.bf16 %v1201, %v1199
  %v1314 = vpack.c.bf16 %v1206, %v1204
  %v1315 = vpack.c.bf16 %v1211, %v1209
  %v1316 = vpack.c.bf16 %v1216, %v1214
  %v1317 = vpack.c.bf16 %v1221, %v1219
  %s1318 = scalar_lea.vmem %s1, 4
  %v1319 = vld [vmem:[%s1318] sm:$0x3]
  %v1321 = vsel %vm523, %v1286, 0
  %v1324 = vsel %vm523, %v1287, 0
  %v1327 = vsel %vm523, %v1288, 0
  %v1330 = vsel %vm523, %v1289, 0
  %v1333 = vsel %vm523, %v1290, 0
  %v1336 = vsel %vm523, %v1291, 0
  %v1339 = vsel %vm523, %v1292, 0
  %v1342 = vsel %vm523, %v1293, 0
  %v1345 = vsel %vm523, %v1294, 0
  %v1348 = vsel %vm523, %v1295, 0
  %v1351 = vsel %vm523, %v1296, 0
  %v1354 = vsel %vm523, %v1297, 0
  %v1357 = vsel %vm523, %v1298, 0
  %v1360 = vsel %vm523, %v1299, 0
  %v1363 = vsel %vm523, %v1300, 0
  %v1366 = vsel %vm523, %v1301, 0
  %v1369 = vsel %vm523, %v1302, 0
  %v1372 = vsel %vm523, %v1303, 0
  %v1375 = vsel %vm523, %v1304, 0
  %v1378 = vsel %vm523, %v1305, 0
  %v1381 = vsel %vm523, %v1306, 0
  %v1384 = vsel %vm523, %v1307, 0
  %v1387 = vsel %vm523, %v1308, 0
  %v1390 = vsel %vm523, %v1309, 0
  %v1393 = vsel %vm523, %v1310, 0
  %v1396 = vsel %vm523, %v1311, 0
  %v1399 = vsel %vm523, %v1312, 0
  %v1402 = vsel %vm523, %v1313, 0
  %v1405 = vsel %vm523, %v1314, 0
  %v1408 = vsel %vm523, %v1315, 0
  %v1411 = vsel %vm523, %v1316, 0
  %v1414 = vsel %vm523, %v1317, 0
  %v1417 = vsel %vm620, %v1319, 0
  %1419 = vmatpush.bf16.msra.mxu0 0
  %1420 = vmatpush.bf16.msra.mxu0 0
  %1421 = vmatpush.bf16.msra.mxu0 0
  %1422 = vmatpush.bf16.msra.mxu0 0
  %1423 = vmatpush.bf16.msra.mxu0 0
  %1424 = vmatpush.bf16.msra.mxu0 0
  %1425 = vmatpush.bf16.msra.mxu0 0
  %1426 = vmatpush.bf16.msra.mxu0 %v1417
  %1427 = vmatmul.bf16.gmra.mxu0 %v1321
  %v1428 = vpop.f32.mrf.mxu0
  %v1429 = vadd.f32 0.0, %v1428
  %v1430 = vpop.f32.mrf.mxu0
  %v1431 = vadd.f32 0.0, %v1430
  %1432 = vmatmul.bf16.gmra.mxu0 %v1324
  %v1433 = vpop.f32.mrf.mxu0
  %v1434 = vadd.f32 0.0, %v1433
  %v1435 = vpop.f32.mrf.mxu0
  %v1436 = vadd.f32 0.0, %v1435
  %1437 = vmatmul.bf16.gmra.mxu0 %v1327
  %v1438 = vpop.f32.mrf.mxu0
  %v1439 = vadd.f32 0.0, %v1438
  %v1440 = vpop.f32.mrf.mxu0
  %v1441 = vadd.f32 0.0, %v1440
  %1442 = vmatmul.bf16.gmra.mxu0 %v1330
  %v1443 = vpop.f32.mrf.mxu0
  %v1444 = vadd.f32 0.0, %v1443
  %v1445 = vpop.f32.mrf.mxu0
  %v1446 = vadd.f32 0.0, %v1445
  %1447 = vmatmul.bf16.gmra.mxu0 %v1333
  %v1448 = vpop.f32.mrf.mxu0
  %v1449 = vadd.f32 0.0, %v1448
  %v1450 = vpop.f32.mrf.mxu0
  %v1451 = vadd.f32 0.0, %v1450
  %1452 = vmatmul.bf16.gmra.mxu0 %v1336
  %v1453 = vpop.f32.mrf.mxu0
  %v1454 = vadd.f32 0.0, %v1453
  %v1455 = vpop.f32.mrf.mxu0
  %v1456 = vadd.f32 0.0, %v1455
  %1457 = vmatmul.bf16.gmra.mxu0 %v1339
  %v1458 = vpop.f32.mrf.mxu0
  %v1459 = vadd.f32 0.0, %v1458
  %v1460 = vpop.f32.mrf.mxu0
  %v1461 = vadd.f32 0.0, %v1460
  %1462 = vmatmul.bf16.gmra.mxu0 %v1342
  %v1463 = vpop.f32.mrf.mxu0
  %v1464 = vadd.f32 0.0, %v1463
  %v1465 = vpop.f32.mrf.mxu0
  %v1466 = vadd.f32 0.0, %v1465
  %1467 = vmatmul.bf16.gmra.mxu0 %v1345
  %v1468 = vpop.f32.mrf.mxu0
  %v1469 = vadd.f32 0.0, %v1468
  %v1470 = vpop.f32.mrf.mxu0
  %v1471 = vadd.f32 0.0, %v1470
  %1472 = vmatmul.bf16.gmra.mxu0 %v1348
  %v1473 = vpop.f32.mrf.mxu0
  %v1474 = vadd.f32 0.0, %v1473
  %v1475 = vpop.f32.mrf.mxu0
  %v1476 = vadd.f32 0.0, %v1475
  %1477 = vmatmul.bf16.gmra.mxu0 %v1351
  %v1478 = vpop.f32.mrf.mxu0
  %v1479 = vadd.f32 0.0, %v1478
  %v1480 = vpop.f32.mrf.mxu0
  %v1481 = vadd.f32 0.0, %v1480
  %1482 = vmatmul.bf16.gmra.mxu0 %v1354
  %v1483 = vpop.f32.mrf.mxu0
  %v1484 = vadd.f32 0.0, %v1483
  %v1485 = vpop.f32.mrf.mxu0
  %v1486 = vadd.f32 0.0, %v1485
  %1487 = vmatmul.bf16.gmra.mxu0 %v1357
  %v1488 = vpop.f32.mrf.mxu0
  %v1489 = vadd.f32 0.0, %v1488
  %v1490 = vpop.f32.mrf.mxu0
  %v1491 = vadd.f32 0.0, %v1490
  %1492 = vmatmul.bf16.gmra.mxu0 %v1360
  %v1493 = vpop.f32.mrf.mxu0
  %v1494 = vadd.f32 0.0, %v1493
  %v1495 = vpop.f32.mrf.mxu0
  %v1496 = vadd.f32 0.0, %v1495
  %1497 = vmatmul.bf16.gmra.mxu0 %v1363
  %v1498 = vpop.f32.mrf.mxu0
  %v1499 = vadd.f32 0.0, %v1498
  %v1500 = vpop.f32.mrf.mxu0
  %v1501 = vadd.f32 0.0, %v1500
  %1502 = vmatmul.bf16.gmra.mxu0 %v1366
  %v1503 = vpop.f32.mrf.mxu0
  %v1504 = vadd.f32 0.0, %v1503
  %v1505 = vpop.f32.mrf.mxu0
  %v1506 = vadd.f32 0.0, %v1505
  %1507 = vmatmul.bf16.gmra.mxu0 %v1369
  %v1508 = vpop.f32.mrf.mxu0
  %v1509 = vadd.f32 0.0, %v1508
  %v1510 = vpop.f32.mrf.mxu0
  %v1511 = vadd.f32 0.0, %v1510
  %1512 = vmatmul.bf16.gmra.mxu0 %v1372
  %v1513 = vpop.f32.mrf.mxu0
  %v1514 = vadd.f32 0.0, %v1513
  %v1515 = vpop.f32.mrf.mxu0
  %v1516 = vadd.f32 0.0, %v1515
  %1517 = vmatmul.bf16.gmra.mxu0 %v1375
  %v1518 = vpop.f32.mrf.mxu0
  %v1519 = vadd.f32 0.0, %v1518
  %v1520 = vpop.f32.mrf.mxu0
  %v1521 = vadd.f32 0.0, %v1520
  %1522 = vmatmul.bf16.gmra.mxu0 %v1378
  %v1523 = vpop.f32.mrf.mxu0
  %v1524 = vadd.f32 0.0, %v1523
  %v1525 = vpop.f32.mrf.mxu0
  %v1526 = vadd.f32 0.0, %v1525
  %1527 = vmatmul.bf16.gmra.mxu0 %v1381
  %v1528 = vpop.f32.mrf.mxu0
  %v1529 = vadd.f32 0.0, %v1528
  %v1530 = vpop.f32.mrf.mxu0
  %v1531 = vadd.f32 0.0, %v1530
  %1532 = vmatmul.bf16.gmra.mxu0 %v1384
  %v1533 = vpop.f32.mrf.mxu0
  %v1534 = vadd.f32 0.0, %v1533
  %v1535 = vpop.f32.mrf.mxu0
  %v1536 = vadd.f32 0.0, %v1535
  %1537 = vmatmul.bf16.gmra.mxu0 %v1387
  %v1538 = vpop.f32.mrf.mxu0
  %v1539 = vadd.f32 0.0, %v1538
  %v1540 = vpop.f32.mrf.mxu0
  %v1541 = vadd.f32 0.0, %v1540
  %1542 = vmatmul.bf16.gmra.mxu0 %v1390
  %v1543 = vpop.f32.mrf.mxu0
  %v1544 = vadd.f32 0.0, %v1543
  %v1545 = vpop.f32.mrf.mxu0
  %v1546 = vadd.f32 0.0, %v1545
  %1547 = vmatmul.bf16.gmra.mxu0 %v1393
  %v1548 = vpop.f32.mrf.mxu0
  %v1549 = vadd.f32 0.0, %v1548
  %v1550 = vpop.f32.mrf.mxu0
  %v1551 = vadd.f32 0.0, %v1550
  %1552 = vmatmul.bf16.gmra.mxu0 %v1396
  %v1553 = vpop.f32.mrf.mxu0
  %v1554 = vadd.f32 0.0, %v1553
  %v1555 = vpop.f32.mrf.mxu0
  %v1556 = vadd.f32 0.0, %v1555
  %1557 = vmatmul.bf16.gmra.mxu0 %v1399
  %v1558 = vpop.f32.mrf.mxu0
  %v1559 = vadd.f32 0.0, %v1558
  %v1560 = vpop.f32.mrf.mxu0
  %v1561 = vadd.f32 0.0, %v1560
  %1562 = vmatmul.bf16.gmra.mxu0 %v1402
  %v1563 = vpop.f32.mrf.mxu0
  %v1564 = vadd.f32 0.0, %v1563
  %v1565 = vpop.f32.mrf.mxu0
  %v1566 = vadd.f32 0.0, %v1565
  %1567 = vmatmul.bf16.gmra.mxu0 %v1405
  %v1568 = vpop.f32.mrf.mxu0
  %v1569 = vadd.f32 0.0, %v1568
  %v1570 = vpop.f32.mrf.mxu0
  %v1571 = vadd.f32 0.0, %v1570
  %1572 = vmatmul.bf16.gmra.mxu0 %v1408
  %v1573 = vpop.f32.mrf.mxu0
  %v1574 = vadd.f32 0.0, %v1573
  %v1575 = vpop.f32.mrf.mxu0
  %v1576 = vadd.f32 0.0, %v1575
  %1577 = vmatmul.bf16.gmra.mxu0 %v1411
  %v1578 = vpop.f32.mrf.mxu0
  %v1579 = vadd.f32 0.0, %v1578
  %v1580 = vpop.f32.mrf.mxu0
  %v1581 = vadd.f32 0.0, %v1580
  %1582 = vmatmul.bf16.gmra.mxu0 %v1414
  %v1583 = vpop.f32.mrf.mxu0
  %v1584 = vadd.f32 0.0, %v1583
  %v1585 = vpop.f32.mrf.mxu0
  %v1586 = vadd.f32 0.0, %v1585
  %1587 = vdwg.mxu0
  %v1588 = vadd.f32 %v902, %v1429
  %v1589 = vadd.f32 %v904, %v1431
  %v1590 = vadd.f32 %v907, %v1434
  %v1591 = vadd.f32 %v909, %v1436
  %v1592 = vadd.f32 %v912, %v1439
  %v1593 = vadd.f32 %v914, %v1441
  %v1594 = vadd.f32 %v917, %v1444
  %v1595 = vadd.f32 %v919, %v1446
  %v1596 = vadd.f32 %v922, %v1449
  %v1597 = vadd.f32 %v924, %v1451
  %v1598 = vadd.f32 %v927, %v1454
  %v1599 = vadd.f32 %v929, %v1456
  %v1600 = vadd.f32 %v932, %v1459
  %v1601 = vadd.f32 %v934, %v1461
  %v1602 = vadd.f32 %v937, %v1464
  %v1603 = vadd.f32 %v939, %v1466
  %v1604 = vadd.f32 %v942, %v1469
  %v1605 = vadd.f32 %v944, %v1471
  %v1606 = vadd.f32 %v947, %v1474
  %v1607 = vadd.f32 %v949, %v1476
  %v1608 = vadd.f32 %v952, %v1479
  %v1609 = vadd.f32 %v954, %v1481
  %v1610 = vadd.f32 %v957, %v1484
  %v1611 = vadd.f32 %v959, %v1486
  %v1612 = vadd.f32 %v962, %v1489
  %v1613 = vadd.f32 %v964, %v1491
  %v1614 = vadd.f32 %v967, %v1494
  %v1615 = vadd.f32 %v969, %v1496
  %v1616 = vadd.f32 %v972, %v1499
  %v1617 = vadd.f32 %v974, %v1501
  %v1618 = vadd.f32 %v977, %v1504
  %v1619 = vadd.f32 %v979, %v1506
  %v1620 = vadd.f32 %v982, %v1509
  %v1621 = vadd.f32 %v984, %v1511
  %v1622 = vadd.f32 %v987, %v1514
  %v1623 = vadd.f32 %v989, %v1516
  %v1624 = vadd.f32 %v992, %v1519
  %v1625 = vadd.f32 %v994, %v1521
  %v1626 = vadd.f32 %v997, %v1524
  %v1627 = vadd.f32 %v999, %v1526
  %v1628 = vadd.f32 %v1002, %v1529
  %v1629 = vadd.f32 %v1004, %v1531
  %v1630 = vadd.f32 %v1007, %v1534
  %v1631 = vadd.f32 %v1009, %v1536
  %v1632 = vadd.f32 %v1012, %v1539
  %v1633 = vadd.f32 %v1014, %v1541
  %v1634 = vadd.f32 %v1017, %v1544
  %v1635 = vadd.f32 %v1019, %v1546
  %v1636 = vadd.f32 %v1022, %v1549
  %v1637 = vadd.f32 %v1024, %v1551
  %v1638 = vadd.f32 %v1027, %v1554
  %v1639 = vadd.f32 %v1029, %v1556
  %v1640 = vadd.f32 %v1032, %v1559
  %v1641 = vadd.f32 %v1034, %v1561
  %v1642 = vadd.f32 %v1037, %v1564
  %v1643 = vadd.f32 %v1039, %v1566
  %v1644 = vadd.f32 %v1042, %v1569
  %v1645 = vadd.f32 %v1044, %v1571
  %v1646 = vadd.f32 %v1047, %v1574
  %v1647 = vadd.f32 %v1049, %v1576
  %v1648 = vadd.f32 %v1052, %v1579
  %v1649 = vadd.f32 %v1054, %v1581
  %v1650 = vadd.f32 %v1057, %v1584
  %v1651 = vadd.f32 %v1059, %v1586
  %v1652 = vpack.c.bf16 %v76, %v75
  %v1653 = vpack.c.bf16 %v130, %v129
  %s1654 = scalar_lea.vmem %s1, 6
  %v1655 = vld [vmem:[%s1654] sm:$0x3]
  %v1657 = vsel %vm523, %v1652, 0
  %v1660 = vsel %vm523, %v1653, 0
  %v1663 = vsel %vm620, %v1655, 0
  %1665 = vmatpush.bf16.msra.mxu0 0
  %1666 = vmatpush.bf16.msra.mxu0 0
  %1667 = vmatpush.bf16.msra.mxu0 0
  %1668 = vmatpush.bf16.msra.mxu0 0
  %1669 = vmatpush.bf16.msra.mxu0 0
  %1670 = vmatpush.bf16.msra.mxu0 0
  %1671 = vmatpush.bf16.msra.mxu0 0
  %1672 = vmatpush.bf16.msra.mxu0 %v1663
  %1673 = vmatmul.bf16.gmra.mxu0 %v797
  %v1674 = vpop.f32.mrf.mxu0
  %v1675 = vadd.f32 0.0, %v1674
  %v1676 = vpop.f32.mrf.mxu0
  %v1677 = vadd.f32 0.0, %v1676
  %1678 = vmatmul.bf16.gmra.mxu0 %v800
  %v1679 = vpop.f32.mrf.mxu0
  %v1680 = vadd.f32 0.0, %v1679
  %v1681 = vpop.f32.mrf.mxu0
  %v1682 = vadd.f32 0.0, %v1681
  %1683 = vmatmul.bf16.gmra.mxu0 %v803
  %v1684 = vpop.f32.mrf.mxu0
  %v1685 = vadd.f32 0.0, %v1684
  %v1686 = vpop.f32.mrf.mxu0
  %v1687 = vadd.f32 0.0, %v1686
  %1688 = vmatmul.bf16.gmra.mxu0 %v806
  %v1689 = vpop.f32.mrf.mxu0
  %v1690 = vadd.f32 0.0, %v1689
  %v1691 = vpop.f32.mrf.mxu0
  %v1692 = vadd.f32 0.0, %v1691
  %1693 = vmatmul.bf16.gmra.mxu0 %v809
  %v1694 = vpop.f32.mrf.mxu0
  %v1695 = vadd.f32 0.0, %v1694
  %v1696 = vpop.f32.mrf.mxu0
  %v1697 = vadd.f32 0.0, %v1696
  %1698 = vmatmul.bf16.gmra.mxu0 %v812
  %v1699 = vpop.f32.mrf.mxu0
  %v1700 = vadd.f32 0.0, %v1699
  %v1701 = vpop.f32.mrf.mxu0
  %v1702 = vadd.f32 0.0, %v1701
  %1703 = vmatmul.bf16.gmra.mxu0 %v815
  %v1704 = vpop.f32.mrf.mxu0
  %v1705 = vadd.f32 0.0, %v1704
  %v1706 = vpop.f32.mrf.mxu0
  %v1707 = vadd.f32 0.0, %v1706
  %1708 = vmatmul.bf16.gmra.mxu0 %v818
  %v1709 = vpop.f32.mrf.mxu0
  %v1710 = vadd.f32 0.0, %v1709
  %v1711 = vpop.f32.mrf.mxu0
  %v1712 = vadd.f32 0.0, %v1711
  %1713 = vmatmul.bf16.gmra.mxu0 %v821
  %v1714 = vpop.f32.mrf.mxu0
  %v1715 = vadd.f32 0.0, %v1714
  %v1716 = vpop.f32.mrf.mxu0
  %v1717 = vadd.f32 0.0, %v1716
  %1718 = vmatmul.bf16.gmra.mxu0 %v824
  %v1719 = vpop.f32.mrf.mxu0
  %v1720 = vadd.f32 0.0, %v1719
  %v1721 = vpop.f32.mrf.mxu0
  %v1722 = vadd.f32 0.0, %v1721
  %1723 = vmatmul.bf16.gmra.mxu0 %v827
  %v1724 = vpop.f32.mrf.mxu0
  %v1725 = vadd.f32 0.0, %v1724
  %v1726 = vpop.f32.mrf.mxu0
  %v1727 = vadd.f32 0.0, %v1726
  %1728 = vmatmul.bf16.gmra.mxu0 %v830
  %v1729 = vpop.f32.mrf.mxu0
  %v1730 = vadd.f32 0.0, %v1729
  %v1731 = vpop.f32.mrf.mxu0
  %v1732 = vadd.f32 0.0, %v1731
  %1733 = vmatmul.bf16.gmra.mxu0 %v833
  %v1734 = vpop.f32.mrf.mxu0
  %v1735 = vadd.f32 0.0, %v1734
  %v1736 = vpop.f32.mrf.mxu0
  %v1737 = vadd.f32 0.0, %v1736
  %1738 = vmatmul.bf16.gmra.mxu0 %v836
  %v1739 = vpop.f32.mrf.mxu0
  %v1740 = vadd.f32 0.0, %v1739
  %v1741 = vpop.f32.mrf.mxu0
  %v1742 = vadd.f32 0.0, %v1741
  %1743 = vmatmul.bf16.gmra.mxu0 %v839
  %v1744 = vpop.f32.mrf.mxu0
  %v1745 = vadd.f32 0.0, %v1744
  %v1746 = vpop.f32.mrf.mxu0
  %v1747 = vadd.f32 0.0, %v1746
  %1748 = vmatmul.bf16.gmra.mxu0 %v1657
  %v1749 = vpop.f32.mrf.mxu0
  %v1750 = vadd.f32 0.0, %v1749
  %v1751 = vpop.f32.mrf.mxu0
  %v1752 = vadd.f32 0.0, %v1751
  %1753 = vmatmul.bf16.gmra.mxu0 %v845
  %v1754 = vpop.f32.mrf.mxu0
  %v1755 = vadd.f32 0.0, %v1754
  %v1756 = vpop.f32.mrf.mxu0
  %v1757 = vadd.f32 0.0, %v1756
  %1758 = vmatmul.bf16.gmra.mxu0 %v848
  %v1759 = vpop.f32.mrf.mxu0
  %v1760 = vadd.f32 0.0, %v1759
  %v1761 = vpop.f32.mrf.mxu0
  %v1762 = vadd.f32 0.0, %v1761
  %1763 = vmatmul.bf16.gmra.mxu0 %v851
  %v1764 = vpop.f32.mrf.mxu0
  %v1765 = vadd.f32 0.0, %v1764
  %v1766 = vpop.f32.mrf.mxu0
  %v1767 = vadd.f32 0.0, %v1766
  %1768 = vmatmul.bf16.gmra.mxu0 %v854
  %v1769 = vpop.f32.mrf.mxu0
  %v1770 = vadd.f32 0.0, %v1769
  %v1771 = vpop.f32.mrf.mxu0
  %v1772 = vadd.f32 0.0, %v1771
  %1773 = vmatmul.bf16.gmra.mxu0 %v857
  %v1774 = vpop.f32.mrf.mxu0
  %v1775 = vadd.f32 0.0, %v1774
  %v1776 = vpop.f32.mrf.mxu0
  %v1777 = vadd.f32 0.0, %v1776
  %1778 = vmatmul.bf16.gmra.mxu0 %v860
  %v1779 = vpop.f32.mrf.mxu0
  %v1780 = vadd.f32 0.0, %v1779
  %v1781 = vpop.f32.mrf.mxu0
  %v1782 = vadd.f32 0.0, %v1781
  %1783 = vmatmul.bf16.gmra.mxu0 %v863
  %v1784 = vpop.f32.mrf.mxu0
  %v1785 = vadd.f32 0.0, %v1784
  %v1786 = vpop.f32.mrf.mxu0
  %v1787 = vadd.f32 0.0, %v1786
  %1788 = vmatmul.bf16.gmra.mxu0 %v866
  %v1789 = vpop.f32.mrf.mxu0
  %v1790 = vadd.f32 0.0, %v1789
  %v1791 = vpop.f32.mrf.mxu0
  %v1792 = vadd.f32 0.0, %v1791
  %1793 = vmatmul.bf16.gmra.mxu0 %v869
  %v1794 = vpop.f32.mrf.mxu0
  %v1795 = vadd.f32 0.0, %v1794
  %v1796 = vpop.f32.mrf.mxu0
  %v1797 = vadd.f32 0.0, %v1796
  %1798 = vmatmul.bf16.gmra.mxu0 %v872
  %v1799 = vpop.f32.mrf.mxu0
  %v1800 = vadd.f32 0.0, %v1799
  %v1801 = vpop.f32.mrf.mxu0
  %v1802 = vadd.f32 0.0, %v1801
  %1803 = vmatmul.bf16.gmra.mxu0 %v875
  %v1804 = vpop.f32.mrf.mxu0
  %v1805 = vadd.f32 0.0, %v1804
  %v1806 = vpop.f32.mrf.mxu0
  %v1807 = vadd.f32 0.0, %v1806
  %1808 = vmatmul.bf16.gmra.mxu0 %v878
  %v1809 = vpop.f32.mrf.mxu0
  %v1810 = vadd.f32 0.0, %v1809
  %v1811 = vpop.f32.mrf.mxu0
  %v1812 = vadd.f32 0.0, %v1811
  %1813 = vmatmul.bf16.gmra.mxu0 %v881
  %v1814 = vpop.f32.mrf.mxu0
  %v1815 = vadd.f32 0.0, %v1814
  %v1816 = vpop.f32.mrf.mxu0
  %v1817 = vadd.f32 0.0, %v1816
  %1818 = vmatmul.bf16.gmra.mxu0 %v884
  %v1819 = vpop.f32.mrf.mxu0
  %v1820 = vadd.f32 0.0, %v1819
  %v1821 = vpop.f32.mrf.mxu0
  %v1822 = vadd.f32 0.0, %v1821
  %1823 = vmatmul.bf16.gmra.mxu0 %v887
  %v1824 = vpop.f32.mrf.mxu0
  %v1825 = vadd.f32 0.0, %v1824
  %v1826 = vpop.f32.mrf.mxu0
  %v1827 = vadd.f32 0.0, %v1826
  %1828 = vmatmul.bf16.gmra.mxu0 %v1660
  %v1829 = vpop.f32.mrf.mxu0
  %v1830 = vadd.f32 0.0, %v1829
  %v1831 = vpop.f32.mrf.mxu0
  %v1832 = vadd.f32 0.0, %v1831
  %1833 = vdwg.mxu0
  %v1834 = vadd.f32 %v1588, %v1675
  %v1835 = vadd.f32 %v1589, %v1677
  %v1836 = vadd.f32 %v1590, %v1680
  %v1837 = vadd.f32 %v1591, %v1682
  %v1838 = vadd.f32 %v1592, %v1685
  %v1839 = vadd.f32 %v1593, %v1687
  %v1840 = vadd.f32 %v1594, %v1690
  %v1841 = vadd.f32 %v1595, %v1692
  %v1842 = vadd.f32 %v1596, %v1695
  %v1843 = vadd.f32 %v1597, %v1697
  %v1844 = vadd.f32 %v1598, %v1700
  %v1845 = vadd.f32 %v1599, %v1702
  %v1846 = vadd.f32 %v1600, %v1705
  %v1847 = vadd.f32 %v1601, %v1707
  %v1848 = vadd.f32 %v1602, %v1710
  %v1849 = vadd.f32 %v1603, %v1712
  %v1850 = vadd.f32 %v1604, %v1715
  %v1851 = vadd.f32 %v1605, %v1717
  %v1852 = vadd.f32 %v1606, %v1720
  %v1853 = vadd.f32 %v1607, %v1722
  %v1854 = vadd.f32 %v1608, %v1725
  %v1855 = vadd.f32 %v1609, %v1727
  %v1856 = vadd.f32 %v1610, %v1730
  %v1857 = vadd.f32 %v1611, %v1732
  %v1858 = vadd.f32 %v1612, %v1735
  %v1859 = vadd.f32 %v1613, %v1737
  %v1860 = vadd.f32 %v1614, %v1740
  %v1861 = vadd.f32 %v1615, %v1742
  %v1862 = vadd.f32 %v1616, %v1745
  %v1863 = vadd.f32 %v1617, %v1747
  %v1864 = vadd.f32 %v1618, %v1750
  %v1865 = vadd.f32 %v1619, %v1752
  %v1866 = vadd.f32 %v1620, %v1755
  %v1867 = vadd.f32 %v1621, %v1757
  %v1868 = vadd.f32 %v1622, %v1760
  %v1869 = vadd.f32 %v1623, %v1762
  %v1870 = vadd.f32 %v1624, %v1765
  %v1871 = vadd.f32 %v1625, %v1767
  %v1872 = vadd.f32 %v1626, %v1770
  %v1873 = vadd.f32 %v1627, %v1772
  %v1874 = vadd.f32 %v1628, %v1775
  %v1875 = vadd.f32 %v1629, %v1777
  %v1876 = vadd.f32 %v1630, %v1780
  %v1877 = vadd.f32 %v1631, %v1782
  %v1878 = vadd.f32 %v1632, %v1785
  %v1879 = vadd.f32 %v1633, %v1787
  %v1880 = vadd.f32 %v1634, %v1790
  %v1881 = vadd.f32 %v1635, %v1792
  %v1882 = vadd.f32 %v1636, %v1795
  %v1883 = vadd.f32 %v1637, %v1797
  %v1884 = vadd.f32 %v1638, %v1800
  %v1885 = vadd.f32 %v1639, %v1802
  %v1886 = vadd.f32 %v1640, %v1805
  %v1887 = vadd.f32 %v1641, %v1807
  %v1888 = vadd.f32 %v1642, %v1810
  %v1889 = vadd.f32 %v1643, %v1812
  %v1890 = vadd.f32 %v1644, %v1815
  %v1891 = vadd.f32 %v1645, %v1817
  %v1892 = vadd.f32 %v1646, %v1820
  %v1893 = vadd.f32 %v1647, %v1822
  %v1894 = vadd.f32 %v1648, %v1825
  %v1895 = vadd.f32 %v1649, %v1827
  %v1896 = vadd.f32 %v1650, %v1830
  %v1897 = vadd.f32 %v1651, %v1832
  %v1904 = vrot.slane %v75, 1
  %v1905 = vrot.slane %v76, 1
  %v1906 = vsel %vm264, %v1904, %v1905
  %v1907 = vrot.slane %v77, 1
  %v1908 = vsel %vm264, %v1905, %v1907
  %v1909 = vrot.slane %v129, 1
  %v1910 = vrot.slane %v130, 1
  %v1911 = vsel %vm264, %v1909, %v1910
  %v1912 = vrot.slane %v131, 1
  %v1913 = vsel %vm264, %v1910, %v1912
  %v1918 = vpack.c.bf16 %v1908, %v1906
  %v1919 = vpack.c.bf16 %v1913, %v1911
  %s1920 = scalar_lea.vmem %s1, 8
  %v1921 = vld [vmem:[%s1920] sm:$0x3]
  %v1923 = vsel %vm523, %v1918, 0
  %v1926 = vsel %vm523, %v1919, 0
  %v1929 = vsel %vm620, %v1921, 0
  %1931 = vmatpush.bf16.msra.mxu0 0
  %1932 = vmatpush.bf16.msra.mxu0 0
  %1933 = vmatpush.bf16.msra.mxu0 0
  %1934 = vmatpush.bf16.msra.mxu0 0
  %1935 = vmatpush.bf16.msra.mxu0 0
  %1936 = vmatpush.bf16.msra.mxu0 0
  %1937 = vmatpush.bf16.msra.mxu0 0
  %1938 = vmatpush.bf16.msra.mxu0 %v1929
  %1939 = vmatmul.bf16.gmra.mxu0 %v528
  %v1940 = vpop.f32.mrf.mxu0
  %v1941 = vadd.f32 0.0, %v1940
  %v1942 = vpop.f32.mrf.mxu0
  %v1943 = vadd.f32 0.0, %v1942
  %1944 = vmatmul.bf16.gmra.mxu0 %v531
  %v1945 = vpop.f32.mrf.mxu0
  %v1946 = vadd.f32 0.0, %v1945
  %v1947 = vpop.f32.mrf.mxu0
  %v1948 = vadd.f32 0.0, %v1947
  %1949 = vmatmul.bf16.gmra.mxu0 %v534
  %v1950 = vpop.f32.mrf.mxu0
  %v1951 = vadd.f32 0.0, %v1950
  %v1952 = vpop.f32.mrf.mxu0
  %v1953 = vadd.f32 0.0, %v1952
  %1954 = vmatmul.bf16.gmra.mxu0 %v537
  %v1955 = vpop.f32.mrf.mxu0
  %v1956 = vadd.f32 0.0, %v1955
  %v1957 = vpop.f32.mrf.mxu0
  %v1958 = vadd.f32 0.0, %v1957
  %1959 = vmatmul.bf16.gmra.mxu0 %v540
  %v1960 = vpop.f32.mrf.mxu0
  %v1961 = vadd.f32 0.0, %v1960
  %v1962 = vpop.f32.mrf.mxu0
  %v1963 = vadd.f32 0.0, %v1962
  %1964 = vmatmul.bf16.gmra.mxu0 %v543
  %v1965 = vpop.f32.mrf.mxu0
  %v1966 = vadd.f32 0.0, %v1965
  %v1967 = vpop.f32.mrf.mxu0
  %v1968 = vadd.f32 0.0, %v1967
  %1969 = vmatmul.bf16.gmra.mxu0 %v546
  %v1970 = vpop.f32.mrf.mxu0
  %v1971 = vadd.f32 0.0, %v1970
  %v1972 = vpop.f32.mrf.mxu0
  %v1973 = vadd.f32 0.0, %v1972
  %1974 = vmatmul.bf16.gmra.mxu0 %v549
  %v1975 = vpop.f32.mrf.mxu0
  %v1976 = vadd.f32 0.0, %v1975
  %v1977 = vpop.f32.mrf.mxu0
  %v1978 = vadd.f32 0.0, %v1977
  %1979 = vmatmul.bf16.gmra.mxu0 %v552
  %v1980 = vpop.f32.mrf.mxu0
  %v1981 = vadd.f32 0.0, %v1980
  %v1982 = vpop.f32.mrf.mxu0
  %v1983 = vadd.f32 0.0, %v1982
  %1984 = vmatmul.bf16.gmra.mxu0 %v555
  %v1985 = vpop.f32.mrf.mxu0
  %v1986 = vadd.f32 0.0, %v1985
  %v1987 = vpop.f32.mrf.mxu0
  %v1988 = vadd.f32 0.0, %v1987
  %1989 = vmatmul.bf16.gmra.mxu0 %v558
  %v1990 = vpop.f32.mrf.mxu0
  %v1991 = vadd.f32 0.0, %v1990
  %v1992 = vpop.f32.mrf.mxu0
  %v1993 = vadd.f32 0.0, %v1992
  %1994 = vmatmul.bf16.gmra.mxu0 %v561
  %v1995 = vpop.f32.mrf.mxu0
  %v1996 = vadd.f32 0.0, %v1995
  %v1997 = vpop.f32.mrf.mxu0
  %v1998 = vadd.f32 0.0, %v1997
  %1999 = vmatmul.bf16.gmra.mxu0 %v564
  %v2000 = vpop.f32.mrf.mxu0
  %v2001 = vadd.f32 0.0, %v2000
  %v2002 = vpop.f32.mrf.mxu0
  %v2003 = vadd.f32 0.0, %v2002
  %2004 = vmatmul.bf16.gmra.mxu0 %v567
  %v2005 = vpop.f32.mrf.mxu0
  %v2006 = vadd.f32 0.0, %v2005
  %v2007 = vpop.f32.mrf.mxu0
  %v2008 = vadd.f32 0.0, %v2007
  %2009 = vmatmul.bf16.gmra.mxu0 %v570
  %v2010 = vpop.f32.mrf.mxu0
  %v2011 = vadd.f32 0.0, %v2010
  %v2012 = vpop.f32.mrf.mxu0
  %v2013 = vadd.f32 0.0, %v2012
  %2014 = vmatmul.bf16.gmra.mxu0 %v1923
  %v2015 = vpop.f32.mrf.mxu0
  %v2016 = vadd.f32 0.0, %v2015
  %v2017 = vpop.f32.mrf.mxu0
  %v2018 = vadd.f32 0.0, %v2017
  %2019 = vmatmul.bf16.gmra.mxu0 %v576
  %v2020 = vpop.f32.mrf.mxu0
  %v2021 = vadd.f32 0.0, %v2020
  %v2022 = vpop.f32.mrf.mxu0
  %v2023 = vadd.f32 0.0, %v2022
  %2024 = vmatmul.bf16.gmra.mxu0 %v579
  %v2025 = vpop.f32.mrf.mxu0
  %v2026 = vadd.f32 0.0, %v2025
  %v2027 = vpop.f32.mrf.mxu0
  %v2028 = vadd.f32 0.0, %v2027
  %2029 = vmatmul.bf16.gmra.mxu0 %v582
  %v2030 = vpop.f32.mrf.mxu0
  %v2031 = vadd.f32 0.0, %v2030
  %v2032 = vpop.f32.mrf.mxu0
  %v2033 = vadd.f32 0.0, %v2032
  %2034 = vmatmul.bf16.gmra.mxu0 %v585
  %v2035 = vpop.f32.mrf.mxu0
  %v2036 = vadd.f32 0.0, %v2035
  %v2037 = vpop.f32.mrf.mxu0
  %v2038 = vadd.f32 0.0, %v2037
  %2039 = vmatmul.bf16.gmra.mxu0 %v588
  %v2040 = vpop.f32.mrf.mxu0
  %v2041 = vadd.f32 0.0, %v2040
  %v2042 = vpop.f32.mrf.mxu0
  %v2043 = vadd.f32 0.0, %v2042
  %2044 = vmatmul.bf16.gmra.mxu0 %v591
  %v2045 = vpop.f32.mrf.mxu0
  %v2046 = vadd.f32 0.0, %v2045
  %v2047 = vpop.f32.mrf.mxu0
  %v2048 = vadd.f32 0.0, %v2047
  %2049 = vmatmul.bf16.gmra.mxu0 %v594
  %v2050 = vpop.f32.mrf.mxu0
  %v2051 = vadd.f32 0.0, %v2050
  %v2052 = vpop.f32.mrf.mxu0
  %v2053 = vadd.f32 0.0, %v2052
  %2054 = vmatmul.bf16.gmra.mxu0 %v597
  %v2055 = vpop.f32.mrf.mxu0
  %v2056 = vadd.f32 0.0, %v2055
  %v2057 = vpop.f32.mrf.mxu0
  %v2058 = vadd.f32 0.0, %v2057
  %2059 = vmatmul.bf16.gmra.mxu0 %v600
  %v2060 = vpop.f32.mrf.mxu0
  %v2061 = vadd.f32 0.0, %v2060
  %v2062 = vpop.f32.mrf.mxu0
  %v2063 = vadd.f32 0.0, %v2062
  %2064 = vmatmul.bf16.gmra.mxu0 %v603
  %v2065 = vpop.f32.mrf.mxu0
  %v2066 = vadd.f32 0.0, %v2065
  %v2067 = vpop.f32.mrf.mxu0
  %v2068 = vadd.f32 0.0, %v2067
  %2069 = vmatmul.bf16.gmra.mxu0 %v606
  %v2070 = vpop.f32.mrf.mxu0
  %v2071 = vadd.f32 0.0, %v2070
  %v2072 = vpop.f32.mrf.mxu0
  %v2073 = vadd.f32 0.0, %v2072
  %2074 = vmatmul.bf16.gmra.mxu0 %v609
  %v2075 = vpop.f32.mrf.mxu0
  %v2076 = vadd.f32 0.0, %v2075
  %v2077 = vpop.f32.mrf.mxu0
  %v2078 = vadd.f32 0.0, %v2077
  %2079 = vmatmul.bf16.gmra.mxu0 %v612
  %v2080 = vpop.f32.mrf.mxu0
  %v2081 = vadd.f32 0.0, %v2080
  %v2082 = vpop.f32.mrf.mxu0
  %v2083 = vadd.f32 0.0, %v2082
  %2084 = vmatmul.bf16.gmra.mxu0 %v615
  %v2085 = vpop.f32.mrf.mxu0
  %v2086 = vadd.f32 0.0, %v2085
  %v2087 = vpop.f32.mrf.mxu0
  %v2088 = vadd.f32 0.0, %v2087
  %2089 = vmatmul.bf16.gmra.mxu0 %v618
  %v2090 = vpop.f32.mrf.mxu0
  %v2091 = vadd.f32 0.0, %v2090
  %v2092 = vpop.f32.mrf.mxu0
  %v2093 = vadd.f32 0.0, %v2092
  %2094 = vmatmul.bf16.gmra.mxu0 %v1926
  %v2095 = vpop.f32.mrf.mxu0
  %v2096 = vadd.f32 0.0, %v2095
  %v2097 = vpop.f32.mrf.mxu0
  %v2098 = vadd.f32 0.0, %v2097
  %2099 = vdwg.mxu0
  %v2100 = vadd.f32 %v1834, %v1941
  %v2101 = vadd.f32 %v1835, %v1943
  %v2102 = vadd.f32 %v1836, %v1946
  %v2103 = vadd.f32 %v1837, %v1948
  %v2104 = vadd.f32 %v1838, %v1951
  %v2105 = vadd.f32 %v1839, %v1953
  %v2106 = vadd.f32 %v1840, %v1956
  %v2107 = vadd.f32 %v1841, %v1958
  %v2108 = vadd.f32 %v1842, %v1961
  %v2109 = vadd.f32 %v1843, %v1963
  %v2110 = vadd.f32 %v1844, %v1966
  %v2111 = vadd.f32 %v1845, %v1968
  %v2112 = vadd.f32 %v1846, %v1971
  %v2113 = vadd.f32 %v1847, %v1973
  %v2114 = vadd.f32 %v1848, %v1976
  %v2115 = vadd.f32 %v1849, %v1978
  %v2116 = vadd.f32 %v1850, %v1981
  %v2117 = vadd.f32 %v1851, %v1983
  %v2118 = vadd.f32 %v1852, %v1986
  %v2119 = vadd.f32 %v1853, %v1988
  %v2120 = vadd.f32 %v1854, %v1991
  %v2121 = vadd.f32 %v1855, %v1993
  %v2122 = vadd.f32 %v1856, %v1996
  %v2123 = vadd.f32 %v1857, %v1998
  %v2124 = vadd.f32 %v1858, %v2001
  %v2125 = vadd.f32 %v1859, %v2003
  %v2126 = vadd.f32 %v1860, %v2006
  %v2127 = vadd.f32 %v1861, %v2008
  %v2128 = vadd.f32 %v1862, %v2011
  %v2129 = vadd.f32 %v1863, %v2013
  %v2130 = vadd.f32 %v1864, %v2016
  %v2131 = vadd.f32 %v1865, %v2018
  %v2132 = vadd.f32 %v1866, %v2021
  %v2133 = vadd.f32 %v1867, %v2023
  %v2134 = vadd.f32 %v1868, %v2026
  %v2135 = vadd.f32 %v1869, %v2028
  %v2136 = vadd.f32 %v1870, %v2031
  %v2137 = vadd.f32 %v1871, %v2033
  %v2138 = vadd.f32 %v1872, %v2036
  %v2139 = vadd.f32 %v1873, %v2038
  %v2140 = vadd.f32 %v1874, %v2041
  %v2141 = vadd.f32 %v1875, %v2043
  %v2142 = vadd.f32 %v1876, %v2046
  %v2143 = vadd.f32 %v1877, %v2048
  %v2144 = vadd.f32 %v1878, %v2051
  %v2145 = vadd.f32 %v1879, %v2053
  %v2146 = vadd.f32 %v1880, %v2056
  %v2147 = vadd.f32 %v1881, %v2058
  %v2148 = vadd.f32 %v1882, %v2061
  %v2149 = vadd.f32 %v1883, %v2063
  %v2150 = vadd.f32 %v1884, %v2066
  %v2151 = vadd.f32 %v1885, %v2068
  %v2152 = vadd.f32 %v1886, %v2071
  %v2153 = vadd.f32 %v1887, %v2073
  %v2154 = vadd.f32 %v1888, %v2076
  %v2155 = vadd.f32 %v1889, %v2078
  %v2156 = vadd.f32 %v1890, %v2081
  %v2157 = vadd.f32 %v1891, %v2083
  %v2158 = vadd.f32 %v1892, %v2086
  %v2159 = vadd.f32 %v1893, %v2088
  %v2160 = vadd.f32 %v1894, %v2091
  %v2161 = vadd.f32 %v1895, %v2093
  %v2162 = vadd.f32 %v1896, %v2096
  %v2163 = vadd.f32 %v1897, %v2098
  %v2164 = vrot.slane %v75, 2
  %v2165 = vrot.slane %v76, 2
  %v2166 = vsel %vm1061, %v2164, %v2165
  %v2167 = vrot.slane %v77, 2
  %v2168 = vsel %vm1061, %v2165, %v2167
  %v2169 = vrot.slane %v129, 2
  %v2170 = vrot.slane %v130, 2
  %v2171 = vsel %vm1061, %v2169, %v2170
  %v2172 = vrot.slane %v131, 2
  %v2173 = vsel %vm1061, %v2170, %v2172
  %v2178 = vpack.c.bf16 %v2168, %v2166
  %v2179 = vpack.c.bf16 %v2173, %v2171
  %s2180 = scalar_lea.vmem %s1, 10
  %v2181 = vld [vmem:[%s2180] sm:$0x3]
  %v2183 = vsel %vm523, %v2178, 0
  %v2186 = vsel %vm523, %v2179, 0
  %v2189 = vsel %vm620, %v2181, 0
  %2191 = vmatpush.bf16.msra.mxu0 0
  %2192 = vmatpush.bf16.msra.mxu0 0
  %2193 = vmatpush.bf16.msra.mxu0 0
  %2194 = vmatpush.bf16.msra.mxu0 0
  %2195 = vmatpush.bf16.msra.mxu0 0
  %2196 = vmatpush.bf16.msra.mxu0 0
  %2197 = vmatpush.bf16.msra.mxu0 0
  %2198 = vmatpush.bf16.msra.mxu0 %v2189
  %2199 = vmatmul.bf16.gmra.mxu0 %v1324
  %v2200 = vpop.f32.mrf.mxu0
  %v2201 = vadd.f32 0.0, %v2200
  %v2202 = vpop.f32.mrf.mxu0
  %v2203 = vadd.f32 0.0, %v2202
  %2204 = vmatmul.bf16.gmra.mxu0 %v1327
  %v2205 = vpop.f32.mrf.mxu0
  %v2206 = vadd.f32 0.0, %v2205
  %v2207 = vpop.f32.mrf.mxu0
  %v2208 = vadd.f32 0.0, %v2207
  %2209 = vmatmul.bf16.gmra.mxu0 %v1330
  %v2210 = vpop.f32.mrf.mxu0
  %v2211 = vadd.f32 0.0, %v2210
  %v2212 = vpop.f32.mrf.mxu0
  %v2213 = vadd.f32 0.0, %v2212
  %2214 = vmatmul.bf16.gmra.mxu0 %v1333
  %v2215 = vpop.f32.mrf.mxu0
  %v2216 = vadd.f32 0.0, %v2215
  %v2217 = vpop.f32.mrf.mxu0
  %v2218 = vadd.f32 0.0, %v2217
  %2219 = vmatmul.bf16.gmra.mxu0 %v1336
  %v2220 = vpop.f32.mrf.mxu0
  %v2221 = vadd.f32 0.0, %v2220
  %v2222 = vpop.f32.mrf.mxu0
  %v2223 = vadd.f32 0.0, %v2222
  %2224 = vmatmul.bf16.gmra.mxu0 %v1339
  %v2225 = vpop.f32.mrf.mxu0
  %v2226 = vadd.f32 0.0, %v2225
  %v2227 = vpop.f32.mrf.mxu0
  %v2228 = vadd.f32 0.0, %v2227
  %2229 = vmatmul.bf16.gmra.mxu0 %v1342
  %v2230 = vpop.f32.mrf.mxu0
  %v2231 = vadd.f32 0.0, %v2230
  %v2232 = vpop.f32.mrf.mxu0
  %v2233 = vadd.f32 0.0, %v2232
  %2234 = vmatmul.bf16.gmra.mxu0 %v1345
  %v2235 = vpop.f32.mrf.mxu0
  %v2236 = vadd.f32 0.0, %v2235
  %v2237 = vpop.f32.mrf.mxu0
  %v2238 = vadd.f32 0.0, %v2237
  %2239 = vmatmul.bf16.gmra.mxu0 %v1348
  %v2240 = vpop.f32.mrf.mxu0
  %v2241 = vadd.f32 0.0, %v2240
  %v2242 = vpop.f32.mrf.mxu0
  %v2243 = vadd.f32 0.0, %v2242
  %2244 = vmatmul.bf16.gmra.mxu0 %v1351
  %v2245 = vpop.f32.mrf.mxu0
  %v2246 = vadd.f32 0.0, %v2245
  %v2247 = vpop.f32.mrf.mxu0
  %v2248 = vadd.f32 0.0, %v2247
  %2249 = vmatmul.bf16.gmra.mxu0 %v1354
  %v2250 = vpop.f32.mrf.mxu0
  %v2251 = vadd.f32 0.0, %v2250
  %v2252 = vpop.f32.mrf.mxu0
  %v2253 = vadd.f32 0.0, %v2252
  %2254 = vmatmul.bf16.gmra.mxu0 %v1357
  %v2255 = vpop.f32.mrf.mxu0
  %v2256 = vadd.f32 0.0, %v2255
  %v2257 = vpop.f32.mrf.mxu0
  %v2258 = vadd.f32 0.0, %v2257
  %2259 = vmatmul.bf16.gmra.mxu0 %v1360
  %v2260 = vpop.f32.mrf.mxu0
  %v2261 = vadd.f32 0.0, %v2260
  %v2262 = vpop.f32.mrf.mxu0
  %v2263 = vadd.f32 0.0, %v2262
  %2264 = vmatmul.bf16.gmra.mxu0 %v1363
  %v2265 = vpop.f32.mrf.mxu0
  %v2266 = vadd.f32 0.0, %v2265
  %v2267 = vpop.f32.mrf.mxu0
  %v2268 = vadd.f32 0.0, %v2267
  %2269 = vmatmul.bf16.gmra.mxu0 %v1366
  %v2270 = vpop.f32.mrf.mxu0
  %v2271 = vadd.f32 0.0, %v2270
  %v2272 = vpop.f32.mrf.mxu0
  %v2273 = vadd.f32 0.0, %v2272
  %2274 = vmatmul.bf16.gmra.mxu0 %v2183
  %v2275 = vpop.f32.mrf.mxu0
  %v2276 = vadd.f32 0.0, %v2275
  %v2277 = vpop.f32.mrf.mxu0
  %v2278 = vadd.f32 0.0, %v2277
  %2279 = vmatmul.bf16.gmra.mxu0 %v1372
  %v2280 = vpop.f32.mrf.mxu0
  %v2281 = vadd.f32 0.0, %v2280
  %v2282 = vpop.f32.mrf.mxu0
  %v2283 = vadd.f32 0.0, %v2282
  %2284 = vmatmul.bf16.gmra.mxu0 %v1375
  %v2285 = vpop.f32.mrf.mxu0
  %v2286 = vadd.f32 0.0, %v2285
  %v2287 = vpop.f32.mrf.mxu0
  %v2288 = vadd.f32 0.0, %v2287
  %2289 = vmatmul.bf16.gmra.mxu0 %v1378
  %v2290 = vpop.f32.mrf.mxu0
  %v2291 = vadd.f32 0.0, %v2290
  %v2292 = vpop.f32.mrf.mxu0
  %v2293 = vadd.f32 0.0, %v2292
  %2294 = vmatmul.bf16.gmra.mxu0 %v1381
  %v2295 = vpop.f32.mrf.mxu0
  %v2296 = vadd.f32 0.0, %v2295
  %v2297 = vpop.f32.mrf.mxu0
  %v2298 = vadd.f32 0.0, %v2297
  %2299 = vmatmul.bf16.gmra.mxu0 %v1384
  %v2300 = vpop.f32.mrf.mxu0
  %v2301 = vadd.f32 0.0, %v2300
  %v2302 = vpop.f32.mrf.mxu0
  %v2303 = vadd.f32 0.0, %v2302
  %2304 = vmatmul.bf16.gmra.mxu0 %v1387
  %v2305 = vpop.f32.mrf.mxu0
  %v2306 = vadd.f32 0.0, %v2305
  %v2307 = vpop.f32.mrf.mxu0
  %v2308 = vadd.f32 0.0, %v2307
  %2309 = vmatmul.bf16.gmra.mxu0 %v1390
  %v2310 = vpop.f32.mrf.mxu0
  %v2311 = vadd.f32 0.0, %v2310
  %v2312 = vpop.f32.mrf.mxu0
  %v2313 = vadd.f32 0.0, %v2312
  %2314 = vmatmul.bf16.gmra.mxu0 %v1393
  %v2315 = vpop.f32.mrf.mxu0
  %v2316 = vadd.f32 0.0, %v2315
  %v2317 = vpop.f32.mrf.mxu0
  %v2318 = vadd.f32 0.0, %v2317
  %2319 = vmatmul.bf16.gmra.mxu0 %v1396
  %v2320 = vpop.f32.mrf.mxu0
  %v2321 = vadd.f32 0.0, %v2320
  %v2322 = vpop.f32.mrf.mxu0
  %v2323 = vadd.f32 0.0, %v2322
  %2324 = vmatmul.bf16.gmra.mxu0 %v1399
  %v2325 = vpop.f32.mrf.mxu0
  %v2326 = vadd.f32 0.0, %v2325
  %v2327 = vpop.f32.mrf.mxu0
  %v2328 = vadd.f32 0.0, %v2327
  %2329 = vmatmul.bf16.gmra.mxu0 %v1402
  %v2330 = vpop.f32.mrf.mxu0
  %v2331 = vadd.f32 0.0, %v2330
  %v2332 = vpop.f32.mrf.mxu0
  %v2333 = vadd.f32 0.0, %v2332
  %2334 = vmatmul.bf16.gmra.mxu0 %v1405
  %v2335 = vpop.f32.mrf.mxu0
  %v2336 = vadd.f32 0.0, %v2335
  %v2337 = vpop.f32.mrf.mxu0
  %v2338 = vadd.f32 0.0, %v2337
  %2339 = vmatmul.bf16.gmra.mxu0 %v1408
  %v2340 = vpop.f32.mrf.mxu0
  %v2341 = vadd.f32 0.0, %v2340
  %v2342 = vpop.f32.mrf.mxu0
  %v2343 = vadd.f32 0.0, %v2342
  %2344 = vmatmul.bf16.gmra.mxu0 %v1411
  %v2345 = vpop.f32.mrf.mxu0
  %v2346 = vadd.f32 0.0, %v2345
  %v2347 = vpop.f32.mrf.mxu0
  %v2348 = vadd.f32 0.0, %v2347
  %2349 = vmatmul.bf16.gmra.mxu0 %v1414
  %v2350 = vpop.f32.mrf.mxu0
  %v2351 = vadd.f32 0.0, %v2350
  %v2352 = vpop.f32.mrf.mxu0
  %v2353 = vadd.f32 0.0, %v2352
  %2354 = vmatmul.bf16.gmra.mxu0 %v2186
  %v2355 = vpop.f32.mrf.mxu0
  %v2356 = vadd.f32 0.0, %v2355
  %v2357 = vpop.f32.mrf.mxu0
  %v2358 = vadd.f32 0.0, %v2357
  %2359 = vdwg.mxu0
  %v2360 = vadd.f32 %v2100, %v2201
  %v2361 = vadd.f32 %v2101, %v2203
  %v2362 = vadd.f32 %v2102, %v2206
  %v2363 = vadd.f32 %v2103, %v2208
  %v2364 = vadd.f32 %v2104, %v2211
  %v2365 = vadd.f32 %v2105, %v2213
  %v2366 = vadd.f32 %v2106, %v2216
  %v2367 = vadd.f32 %v2107, %v2218
  %v2368 = vadd.f32 %v2108, %v2221
  %v2369 = vadd.f32 %v2109, %v2223
  %v2370 = vadd.f32 %v2110, %v2226
  %v2371 = vadd.f32 %v2111, %v2228
  %v2372 = vadd.f32 %v2112, %v2231
  %v2373 = vadd.f32 %v2113, %v2233
  %v2374 = vadd.f32 %v2114, %v2236
  %v2375 = vadd.f32 %v2115, %v2238
  %v2376 = vadd.f32 %v2116, %v2241
  %v2377 = vadd.f32 %v2117, %v2243
  %v2378 = vadd.f32 %v2118, %v2246
  %v2379 = vadd.f32 %v2119, %v2248
  %v2380 = vadd.f32 %v2120, %v2251
  %v2381 = vadd.f32 %v2121, %v2253
  %v2382 = vadd.f32 %v2122, %v2256
  %v2383 = vadd.f32 %v2123, %v2258
  %v2384 = vadd.f32 %v2124, %v2261
  %v2385 = vadd.f32 %v2125, %v2263
  %v2386 = vadd.f32 %v2126, %v2266
  %v2387 = vadd.f32 %v2127, %v2268
  %v2388 = vadd.f32 %v2128, %v2271
  %v2389 = vadd.f32 %v2129, %v2273
  %v2390 = vadd.f32 %v2130, %v2276
  %v2391 = vadd.f32 %v2131, %v2278
  %v2392 = vadd.f32 %v2132, %v2281
  %v2393 = vadd.f32 %v2133, %v2283
  %v2394 = vadd.f32 %v2134, %v2286
  %v2395 = vadd.f32 %v2135, %v2288
  %v2396 = vadd.f32 %v2136, %v2291
  %v2397 = vadd.f32 %v2137, %v2293
  %v2398 = vadd.f32 %v2138, %v2296
  %v2399 = vadd.f32 %v2139, %v2298
  %v2400 = vadd.f32 %v2140, %v2301
  %v2401 = vadd.f32 %v2141, %v2303
  %v2402 = vadd.f32 %v2142, %v2306
  %v2403 = vadd.f32 %v2143, %v2308
  %v2404 = vadd.f32 %v2144, %v2311
  %v2405 = vadd.f32 %v2145, %v2313
  %v2406 = vadd.f32 %v2146, %v2316
  %v2407 = vadd.f32 %v2147, %v2318
  %v2408 = vadd.f32 %v2148, %v2321
  %v2409 = vadd.f32 %v2149, %v2323
  %v2410 = vadd.f32 %v2150, %v2326
  %v2411 = vadd.f32 %v2151, %v2328
  %v2412 = vadd.f32 %v2152, %v2331
  %v2413 = vadd.f32 %v2153, %v2333
  %v2414 = vadd.f32 %v2154, %v2336
  %v2415 = vadd.f32 %v2155, %v2338
  %v2416 = vadd.f32 %v2156, %v2341
  %v2417 = vadd.f32 %v2157, %v2343
  %v2418 = vadd.f32 %v2158, %v2346
  %v2419 = vadd.f32 %v2159, %v2348
  %v2420 = vadd.f32 %v2160, %v2351
  %v2421 = vadd.f32 %v2161, %v2353
  %v2422 = vadd.f32 %v2162, %v2356
  %v2423 = vadd.f32 %v2163, %v2358
  %v2424 = vpack.c.bf16 %v79, %v78
  %v2425 = vpack.c.bf16 %v133, %v132
  %s2426 = scalar_lea.vmem %s1, 12
  %v2427 = vld [vmem:[%s2426] sm:$0x3]
  %v2429 = vsel %vm523, %v2424, 0
  %v2432 = vsel %vm523, %v2425, 0
  %v2435 = vsel %vm620, %v2427, 0
  %2437 = vmatpush.bf16.msra.mxu0 0
  %2438 = vmatpush.bf16.msra.mxu0 0
  %2439 = vmatpush.bf16.msra.mxu0 0
  %2440 = vmatpush.bf16.msra.mxu0 0
  %2441 = vmatpush.bf16.msra.mxu0 0
  %2442 = vmatpush.bf16.msra.mxu0 0
  %2443 = vmatpush.bf16.msra.mxu0 0
  %2444 = vmatpush.bf16.msra.mxu0 %v2435
  %2445 = vmatmul.bf16.gmra.mxu0 %v800
  %v2446 = vpop.f32.mrf.mxu0
  %v2447 = vadd.f32 0.0, %v2446
  %v2448 = vpop.f32.mrf.mxu0
  %v2449 = vadd.f32 0.0, %v2448
  %2450 = vmatmul.bf16.gmra.mxu0 %v803
  %v2451 = vpop.f32.mrf.mxu0
  %v2452 = vadd.f32 0.0, %v2451
  %v2453 = vpop.f32.mrf.mxu0
  %v2454 = vadd.f32 0.0, %v2453
  %2455 = vmatmul.bf16.gmra.mxu0 %v806
  %v2456 = vpop.f32.mrf.mxu0
  %v2457 = vadd.f32 0.0, %v2456
  %v2458 = vpop.f32.mrf.mxu0
  %v2459 = vadd.f32 0.0, %v2458
  %2460 = vmatmul.bf16.gmra.mxu0 %v809
  %v2461 = vpop.f32.mrf.mxu0
  %v2462 = vadd.f32 0.0, %v2461
  %v2463 = vpop.f32.mrf.mxu0
  %v2464 = vadd.f32 0.0, %v2463
  %2465 = vmatmul.bf16.gmra.mxu0 %v812
  %v2466 = vpop.f32.mrf.mxu0
  %v2467 = vadd.f32 0.0, %v2466
  %v2468 = vpop.f32.mrf.mxu0
  %v2469 = vadd.f32 0.0, %v2468
  %2470 = vmatmul.bf16.gmra.mxu0 %v815
  %v2471 = vpop.f32.mrf.mxu0
  %v2472 = vadd.f32 0.0, %v2471
  %v2473 = vpop.f32.mrf.mxu0
  %v2474 = vadd.f32 0.0, %v2473
  %2475 = vmatmul.bf16.gmra.mxu0 %v818
  %v2476 = vpop.f32.mrf.mxu0
  %v2477 = vadd.f32 0.0, %v2476
  %v2478 = vpop.f32.mrf.mxu0
  %v2479 = vadd.f32 0.0, %v2478
  %2480 = vmatmul.bf16.gmra.mxu0 %v821
  %v2481 = vpop.f32.mrf.mxu0
  %v2482 = vadd.f32 0.0, %v2481
  %v2483 = vpop.f32.mrf.mxu0
  %v2484 = vadd.f32 0.0, %v2483
  %2485 = vmatmul.bf16.gmra.mxu0 %v824
  %v2486 = vpop.f32.mrf.mxu0
  %v2487 = vadd.f32 0.0, %v2486
  %v2488 = vpop.f32.mrf.mxu0
  %v2489 = vadd.f32 0.0, %v2488
  %2490 = vmatmul.bf16.gmra.mxu0 %v827
  %v2491 = vpop.f32.mrf.mxu0
  %v2492 = vadd.f32 0.0, %v2491
  %v2493 = vpop.f32.mrf.mxu0
  %v2494 = vadd.f32 0.0, %v2493
  %2495 = vmatmul.bf16.gmra.mxu0 %v830
  %v2496 = vpop.f32.mrf.mxu0
  %v2497 = vadd.f32 0.0, %v2496
  %v2498 = vpop.f32.mrf.mxu0
  %v2499 = vadd.f32 0.0, %v2498
  %2500 = vmatmul.bf16.gmra.mxu0 %v833
  %v2501 = vpop.f32.mrf.mxu0
  %v2502 = vadd.f32 0.0, %v2501
  %v2503 = vpop.f32.mrf.mxu0
  %v2504 = vadd.f32 0.0, %v2503
  %2505 = vmatmul.bf16.gmra.mxu0 %v836
  %v2506 = vpop.f32.mrf.mxu0
  %v2507 = vadd.f32 0.0, %v2506
  %v2508 = vpop.f32.mrf.mxu0
  %v2509 = vadd.f32 0.0, %v2508
  %2510 = vmatmul.bf16.gmra.mxu0 %v839
  %v2511 = vpop.f32.mrf.mxu0
  %v2512 = vadd.f32 0.0, %v2511
  %v2513 = vpop.f32.mrf.mxu0
  %v2514 = vadd.f32 0.0, %v2513
  %2515 = vmatmul.bf16.gmra.mxu0 %v1657
  %v2516 = vpop.f32.mrf.mxu0
  %v2517 = vadd.f32 0.0, %v2516
  %v2518 = vpop.f32.mrf.mxu0
  %v2519 = vadd.f32 0.0, %v2518
  %2520 = vmatmul.bf16.gmra.mxu0 %v2429
  %v2521 = vpop.f32.mrf.mxu0
  %v2522 = vadd.f32 0.0, %v2521
  %v2523 = vpop.f32.mrf.mxu0
  %v2524 = vadd.f32 0.0, %v2523
  %2525 = vmatmul.bf16.gmra.mxu0 %v848
  %v2526 = vpop.f32.mrf.mxu0
  %v2527 = vadd.f32 0.0, %v2526
  %v2528 = vpop.f32.mrf.mxu0
  %v2529 = vadd.f32 0.0, %v2528
  %2530 = vmatmul.bf16.gmra.mxu0 %v851
  %v2531 = vpop.f32.mrf.mxu0
  %v2532 = vadd.f32 0.0, %v2531
  %v2533 = vpop.f32.mrf.mxu0
  %v2534 = vadd.f32 0.0, %v2533
  %2535 = vmatmul.bf16.gmra.mxu0 %v854
  %v2536 = vpop.f32.mrf.mxu0
  %v2537 = vadd.f32 0.0, %v2536
  %v2538 = vpop.f32.mrf.mxu0
  %v2539 = vadd.f32 0.0, %v2538
  %2540 = vmatmul.bf16.gmra.mxu0 %v857
  %v2541 = vpop.f32.mrf.mxu0
  %v2542 = vadd.f32 0.0, %v2541
  %v2543 = vpop.f32.mrf.mxu0
  %v2544 = vadd.f32 0.0, %v2543
  %2545 = vmatmul.bf16.gmra.mxu0 %v860
  %v2546 = vpop.f32.mrf.mxu0
  %v2547 = vadd.f32 0.0, %v2546
  %v2548 = vpop.f32.mrf.mxu0
  %v2549 = vadd.f32 0.0, %v2548
  %2550 = vmatmul.bf16.gmra.mxu0 %v863
  %v2551 = vpop.f32.mrf.mxu0
  %v2552 = vadd.f32 0.0, %v2551
  %v2553 = vpop.f32.mrf.mxu0
  %v2554 = vadd.f32 0.0, %v2553
  %2555 = vmatmul.bf16.gmra.mxu0 %v866
  %v2556 = vpop.f32.mrf.mxu0
  %v2557 = vadd.f32 0.0, %v2556
  %v2558 = vpop.f32.mrf.mxu0
  %v2559 = vadd.f32 0.0, %v2558
  %2560 = vmatmul.bf16.gmra.mxu0 %v869
  %v2561 = vpop.f32.mrf.mxu0
  %v2562 = vadd.f32 0.0, %v2561
  %v2563 = vpop.f32.mrf.mxu0
  %v2564 = vadd.f32 0.0, %v2563
  %2565 = vmatmul.bf16.gmra.mxu0 %v872
  %v2566 = vpop.f32.mrf.mxu0
  %v2567 = vadd.f32 0.0, %v2566
  %v2568 = vpop.f32.mrf.mxu0
  %v2569 = vadd.f32 0.0, %v2568
  %2570 = vmatmul.bf16.gmra.mxu0 %v875
  %v2571 = vpop.f32.mrf.mxu0
  %v2572 = vadd.f32 0.0, %v2571
  %v2573 = vpop.f32.mrf.mxu0
  %v2574 = vadd.f32 0.0, %v2573
  %2575 = vmatmul.bf16.gmra.mxu0 %v878
  %v2576 = vpop.f32.mrf.mxu0
  %v2577 = vadd.f32 0.0, %v2576
  %v2578 = vpop.f32.mrf.mxu0
  %v2579 = vadd.f32 0.0, %v2578
  %2580 = vmatmul.bf16.gmra.mxu0 %v881
  %v2581 = vpop.f32.mrf.mxu0
  %v2582 = vadd.f32 0.0, %v2581
  %v2583 = vpop.f32.mrf.mxu0
  %v2584 = vadd.f32 0.0, %v2583
  %2585 = vmatmul.bf16.gmra.mxu0 %v884
  %v2586 = vpop.f32.mrf.mxu0
  %v2587 = vadd.f32 0.0, %v2586
  %v2588 = vpop.f32.mrf.mxu0
  %v2589 = vadd.f32 0.0, %v2588
  %2590 = vmatmul.bf16.gmra.mxu0 %v887
  %v2591 = vpop.f32.mrf.mxu0
  %v2592 = vadd.f32 0.0, %v2591
  %v2593 = vpop.f32.mrf.mxu0
  %v2594 = vadd.f32 0.0, %v2593
  %2595 = vmatmul.bf16.gmra.mxu0 %v1660
  %v2596 = vpop.f32.mrf.mxu0
  %v2597 = vadd.f32 0.0, %v2596
  %v2598 = vpop.f32.mrf.mxu0
  %v2599 = vadd.f32 0.0, %v2598
  %2600 = vmatmul.bf16.gmra.mxu0 %v2432
  %v2601 = vpop.f32.mrf.mxu0
  %v2602 = vadd.f32 0.0, %v2601
  %v2603 = vpop.f32.mrf.mxu0
  %v2604 = vadd.f32 0.0, %v2603
  %2605 = vdwg.mxu0
  %v2606 = vadd.f32 %v2360, %v2447
  %v2607 = vadd.f32 %v2361, %v2449
  %v2608 = vadd.f32 %v2362, %v2452
  %v2609 = vadd.f32 %v2363, %v2454
  %v2610 = vadd.f32 %v2364, %v2457
  %v2611 = vadd.f32 %v2365, %v2459
  %v2612 = vadd.f32 %v2366, %v2462
  %v2613 = vadd.f32 %v2367, %v2464
  %v2614 = vadd.f32 %v2368, %v2467
  %v2615 = vadd.f32 %v2369, %v2469
  %v2616 = vadd.f32 %v2370, %v2472
  %v2617 = vadd.f32 %v2371, %v2474
  %v2618 = vadd.f32 %v2372, %v2477
  %v2619 = vadd.f32 %v2373, %v2479
  %v2620 = vadd.f32 %v2374, %v2482
  %v2621 = vadd.f32 %v2375, %v2484
  %v2622 = vadd.f32 %v2376, %v2487
  %v2623 = vadd.f32 %v2377, %v2489
  %v2624 = vadd.f32 %v2378, %v2492
  %v2625 = vadd.f32 %v2379, %v2494
  %v2626 = vadd.f32 %v2380, %v2497
  %v2627 = vadd.f32 %v2381, %v2499
  %v2628 = vadd.f32 %v2382, %v2502
  %v2629 = vadd.f32 %v2383, %v2504
  %v2630 = vadd.f32 %v2384, %v2507
  %v2631 = vadd.f32 %v2385, %v2509
  %v2632 = vadd.f32 %v2386, %v2512
  %v2633 = vadd.f32 %v2387, %v2514
  %v2634 = vadd.f32 %v2388, %v2517
  %v2635 = vadd.f32 %v2389, %v2519
  %v2636 = vadd.f32 %v2390, %v2522
  %v2637 = vadd.f32 %v2391, %v2524
  %v2638 = vadd.f32 %v2392, %v2527
  %v2639 = vadd.f32 %v2393, %v2529
  %v2640 = vadd.f32 %v2394, %v2532
  %v2641 = vadd.f32 %v2395, %v2534
  %v2642 = vadd.f32 %v2396, %v2537
  %v2643 = vadd.f32 %v2397, %v2539
  %v2644 = vadd.f32 %v2398, %v2542
  %v2645 = vadd.f32 %v2399, %v2544
  %v2646 = vadd.f32 %v2400, %v2547
  %v2647 = vadd.f32 %v2401, %v2549
  %v2648 = vadd.f32 %v2402, %v2552
  %v2649 = vadd.f32 %v2403, %v2554
  %v2650 = vadd.f32 %v2404, %v2557
  %v2651 = vadd.f32 %v2405, %v2559
  %v2652 = vadd.f32 %v2406, %v2562
  %v2653 = vadd.f32 %v2407, %v2564
  %v2654 = vadd.f32 %v2408, %v2567
  %v2655 = vadd.f32 %v2409, %v2569
  %v2656 = vadd.f32 %v2410, %v2572
  %v2657 = vadd.f32 %v2411, %v2574
  %v2658 = vadd.f32 %v2412, %v2577
  %v2659 = vadd.f32 %v2413, %v2579
  %v2660 = vadd.f32 %v2414, %v2582
  %v2661 = vadd.f32 %v2415, %v2584
  %v2662 = vadd.f32 %v2416, %v2587
  %v2663 = vadd.f32 %v2417, %v2589
  %v2664 = vadd.f32 %v2418, %v2592
  %v2665 = vadd.f32 %v2419, %v2594
  %v2666 = vadd.f32 %v2420, %v2597
  %v2667 = vadd.f32 %v2421, %v2599
  %v2668 = vadd.f32 %v2422, %v2602
  %v2669 = vadd.f32 %v2423, %v2604
  %v2676 = vrot.slane %v78, 1
  %v2677 = vrot.slane %v79, 1
  %v2678 = vsel %vm264, %v2676, %v2677
  %v2679 = vrot.slane %v80, 1
  %v2680 = vsel %vm264, %v2677, %v2679
  %v2681 = vrot.slane %v132, 1
  %v2682 = vrot.slane %v133, 1
  %v2683 = vsel %vm264, %v2681, %v2682
  %v2684 = vrot.slane %v134, 1
  %v2685 = vsel %vm264, %v2682, %v2684
  %v2690 = vpack.c.bf16 %v2680, %v2678
  %v2691 = vpack.c.bf16 %v2685, %v2683
  %s2692 = scalar_lea.vmem %s1, 14
  %v2693 = vld [vmem:[%s2692] sm:$0x3]
  %v2695 = vsel %vm523, %v2690, 0
  %v2698 = vsel %vm523, %v2691, 0
  %v2701 = vsel %vm620, %v2693, 0
  %2703 = vmatpush.bf16.msra.mxu0 0
  %2704 = vmatpush.bf16.msra.mxu0 0
  %2705 = vmatpush.bf16.msra.mxu0 0
  %2706 = vmatpush.bf16.msra.mxu0 0
  %2707 = vmatpush.bf16.msra.mxu0 0
  %2708 = vmatpush.bf16.msra.mxu0 0
  %2709 = vmatpush.bf16.msra.mxu0 0
  %2710 = vmatpush.bf16.msra.mxu0 %v2701
  %2711 = vmatmul.bf16.gmra.mxu0 %v531
  %v2712 = vpop.f32.mrf.mxu0
  %v2713 = vadd.f32 0.0, %v2712
  %v2714 = vpop.f32.mrf.mxu0
  %v2715 = vadd.f32 0.0, %v2714
  %2716 = vmatmul.bf16.gmra.mxu0 %v534
  %v2717 = vpop.f32.mrf.mxu0
  %v2718 = vadd.f32 0.0, %v2717
  %v2719 = vpop.f32.mrf.mxu0
  %v2720 = vadd.f32 0.0, %v2719
  %2721 = vmatmul.bf16.gmra.mxu0 %v537
  %v2722 = vpop.f32.mrf.mxu0
  %v2723 = vadd.f32 0.0, %v2722
  %v2724 = vpop.f32.mrf.mxu0
  %v2725 = vadd.f32 0.0, %v2724
  %2726 = vmatmul.bf16.gmra.mxu0 %v540
  %v2727 = vpop.f32.mrf.mxu0
  %v2728 = vadd.f32 0.0, %v2727
  %v2729 = vpop.f32.mrf.mxu0
  %v2730 = vadd.f32 0.0, %v2729
  %2731 = vmatmul.bf16.gmra.mxu0 %v543
  %v2732 = vpop.f32.mrf.mxu0
  %v2733 = vadd.f32 0.0, %v2732
  %v2734 = vpop.f32.mrf.mxu0
  %v2735 = vadd.f32 0.0, %v2734
  %2736 = vmatmul.bf16.gmra.mxu0 %v546
  %v2737 = vpop.f32.mrf.mxu0
  %v2738 = vadd.f32 0.0, %v2737
  %v2739 = vpop.f32.mrf.mxu0
  %v2740 = vadd.f32 0.0, %v2739
  %2741 = vmatmul.bf16.gmra.mxu0 %v549
  %v2742 = vpop.f32.mrf.mxu0
  %v2743 = vadd.f32 0.0, %v2742
  %v2744 = vpop.f32.mrf.mxu0
  %v2745 = vadd.f32 0.0, %v2744
  %2746 = vmatmul.bf16.gmra.mxu0 %v552
  %v2747 = vpop.f32.mrf.mxu0
  %v2748 = vadd.f32 0.0, %v2747
  %v2749 = vpop.f32.mrf.mxu0
  %v2750 = vadd.f32 0.0, %v2749
  %2751 = vmatmul.bf16.gmra.mxu0 %v555
  %v2752 = vpop.f32.mrf.mxu0
  %v2753 = vadd.f32 0.0, %v2752
  %v2754 = vpop.f32.mrf.mxu0
  %v2755 = vadd.f32 0.0, %v2754
  %2756 = vmatmul.bf16.gmra.mxu0 %v558
  %v2757 = vpop.f32.mrf.mxu0
  %v2758 = vadd.f32 0.0, %v2757
  %v2759 = vpop.f32.mrf.mxu0
  %v2760 = vadd.f32 0.0, %v2759
  %2761 = vmatmul.bf16.gmra.mxu0 %v561
  %v2762 = vpop.f32.mrf.mxu0
  %v2763 = vadd.f32 0.0, %v2762
  %v2764 = vpop.f32.mrf.mxu0
  %v2765 = vadd.f32 0.0, %v2764
  %2766 = vmatmul.bf16.gmra.mxu0 %v564
  %v2767 = vpop.f32.mrf.mxu0
  %v2768 = vadd.f32 0.0, %v2767
  %v2769 = vpop.f32.mrf.mxu0
  %v2770 = vadd.f32 0.0, %v2769
  %2771 = vmatmul.bf16.gmra.mxu0 %v567
  %v2772 = vpop.f32.mrf.mxu0
  %v2773 = vadd.f32 0.0, %v2772
  %v2774 = vpop.f32.mrf.mxu0
  %v2775 = vadd.f32 0.0, %v2774
  %2776 = vmatmul.bf16.gmra.mxu0 %v570
  %v2777 = vpop.f32.mrf.mxu0
  %v2778 = vadd.f32 0.0, %v2777
  %v2779 = vpop.f32.mrf.mxu0
  %v2780 = vadd.f32 0.0, %v2779
  %2781 = vmatmul.bf16.gmra.mxu0 %v1923
  %v2782 = vpop.f32.mrf.mxu0
  %v2783 = vadd.f32 0.0, %v2782
  %v2784 = vpop.f32.mrf.mxu0
  %v2785 = vadd.f32 0.0, %v2784
  %2786 = vmatmul.bf16.gmra.mxu0 %v2695
  %v2787 = vpop.f32.mrf.mxu0
  %v2788 = vadd.f32 0.0, %v2787
  %v2789 = vpop.f32.mrf.mxu0
  %v2790 = vadd.f32 0.0, %v2789
  %2791 = vmatmul.bf16.gmra.mxu0 %v579
  %v2792 = vpop.f32.mrf.mxu0
  %v2793 = vadd.f32 0.0, %v2792
  %v2794 = vpop.f32.mrf.mxu0
  %v2795 = vadd.f32 0.0, %v2794
  %2796 = vmatmul.bf16.gmra.mxu0 %v582
  %v2797 = vpop.f32.mrf.mxu0
  %v2798 = vadd.f32 0.0, %v2797
  %v2799 = vpop.f32.mrf.mxu0
  %v2800 = vadd.f32 0.0, %v2799
  %2801 = vmatmul.bf16.gmra.mxu0 %v585
  %v2802 = vpop.f32.mrf.mxu0
  %v2803 = vadd.f32 0.0, %v2802
  %v2804 = vpop.f32.mrf.mxu0
  %v2805 = vadd.f32 0.0, %v2804
  %2806 = vmatmul.bf16.gmra.mxu0 %v588
  %v2807 = vpop.f32.mrf.mxu0
  %v2808 = vadd.f32 0.0, %v2807
  %v2809 = vpop.f32.mrf.mxu0
  %v2810 = vadd.f32 0.0, %v2809
  %2811 = vmatmul.bf16.gmra.mxu0 %v591
  %v2812 = vpop.f32.mrf.mxu0
  %v2813 = vadd.f32 0.0, %v2812
  %v2814 = vpop.f32.mrf.mxu0
  %v2815 = vadd.f32 0.0, %v2814
  %2816 = vmatmul.bf16.gmra.mxu0 %v594
  %v2817 = vpop.f32.mrf.mxu0
  %v2818 = vadd.f32 0.0, %v2817
  %v2819 = vpop.f32.mrf.mxu0
  %v2820 = vadd.f32 0.0, %v2819
  %2821 = vmatmul.bf16.gmra.mxu0 %v597
  %v2822 = vpop.f32.mrf.mxu0
  %v2823 = vadd.f32 0.0, %v2822
  %v2824 = vpop.f32.mrf.mxu0
  %v2825 = vadd.f32 0.0, %v2824
  %2826 = vmatmul.bf16.gmra.mxu0 %v600
  %v2827 = vpop.f32.mrf.mxu0
  %v2828 = vadd.f32 0.0, %v2827
  %v2829 = vpop.f32.mrf.mxu0
  %v2830 = vadd.f32 0.0, %v2829
  %2831 = vmatmul.bf16.gmra.mxu0 %v603
  %v2832 = vpop.f32.mrf.mxu0
  %v2833 = vadd.f32 0.0, %v2832
  %v2834 = vpop.f32.mrf.mxu0
  %v2835 = vadd.f32 0.0, %v2834
  %2836 = vmatmul.bf16.gmra.mxu0 %v606
  %v2837 = vpop.f32.mrf.mxu0
  %v2838 = vadd.f32 0.0, %v2837
  %v2839 = vpop.f32.mrf.mxu0
  %v2840 = vadd.f32 0.0, %v2839
  %2841 = vmatmul.bf16.gmra.mxu0 %v609
  %v2842 = vpop.f32.mrf.mxu0
  %v2843 = vadd.f32 0.0, %v2842
  %v2844 = vpop.f32.mrf.mxu0
  %v2845 = vadd.f32 0.0, %v2844
  %2846 = vmatmul.bf16.gmra.mxu0 %v612
  %v2847 = vpop.f32.mrf.mxu0
  %v2848 = vadd.f32 0.0, %v2847
  %v2849 = vpop.f32.mrf.mxu0
  %v2850 = vadd.f32 0.0, %v2849
  %2851 = vmatmul.bf16.gmra.mxu0 %v615
  %v2852 = vpop.f32.mrf.mxu0
  %v2853 = vadd.f32 0.0, %v2852
  %v2854 = vpop.f32.mrf.mxu0
  %v2855 = vadd.f32 0.0, %v2854
  %2856 = vmatmul.bf16.gmra.mxu0 %v618
  %v2857 = vpop.f32.mrf.mxu0
  %v2858 = vadd.f32 0.0, %v2857
  %v2859 = vpop.f32.mrf.mxu0
  %v2860 = vadd.f32 0.0, %v2859
  %2861 = vmatmul.bf16.gmra.mxu0 %v1926
  %v2862 = vpop.f32.mrf.mxu0
  %v2863 = vadd.f32 0.0, %v2862
  %v2864 = vpop.f32.mrf.mxu0
  %v2865 = vadd.f32 0.0, %v2864
  %2866 = vmatmul.bf16.gmra.mxu0 %v2698
  %v2867 = vpop.f32.mrf.mxu0
  %v2868 = vadd.f32 0.0, %v2867
  %v2869 = vpop.f32.mrf.mxu0
  %v2870 = vadd.f32 0.0, %v2869
  %2871 = vdwg.mxu0
  %v2872 = vadd.f32 %v2606, %v2713
  %v2873 = vadd.f32 %v2607, %v2715
  %v2874 = vadd.f32 %v2608, %v2718
  %v2875 = vadd.f32 %v2609, %v2720
  %v2876 = vadd.f32 %v2610, %v2723
  %v2877 = vadd.f32 %v2611, %v2725
  %v2878 = vadd.f32 %v2612, %v2728
  %v2879 = vadd.f32 %v2613, %v2730
  %v2880 = vadd.f32 %v2614, %v2733
  %v2881 = vadd.f32 %v2615, %v2735
  %v2882 = vadd.f32 %v2616, %v2738
  %v2883 = vadd.f32 %v2617, %v2740
  %v2884 = vadd.f32 %v2618, %v2743
  %v2885 = vadd.f32 %v2619, %v2745
  %v2886 = vadd.f32 %v2620, %v2748
  %v2887 = vadd.f32 %v2621, %v2750
  %v2888 = vadd.f32 %v2622, %v2753
  %v2889 = vadd.f32 %v2623, %v2755
  %v2890 = vadd.f32 %v2624, %v2758
  %v2891 = vadd.f32 %v2625, %v2760
  %v2892 = vadd.f32 %v2626, %v2763
  %v2893 = vadd.f32 %v2627, %v2765
  %v2894 = vadd.f32 %v2628, %v2768
  %v2895 = vadd.f32 %v2629, %v2770
  %v2896 = vadd.f32 %v2630, %v2773
  %v2897 = vadd.f32 %v2631, %v2775
  %v2898 = vadd.f32 %v2632, %v2778
  %v2899 = vadd.f32 %v2633, %v2780
  %v2900 = vadd.f32 %v2634, %v2783
  %v2901 = vadd.f32 %v2635, %v2785
  %v2902 = vadd.f32 %v2636, %v2788
  %v2903 = vadd.f32 %v2637, %v2790
  %v2904 = vadd.f32 %v2638, %v2793
  %v2905 = vadd.f32 %v2639, %v2795
  %v2906 = vadd.f32 %v2640, %v2798
  %v2907 = vadd.f32 %v2641, %v2800
  %v2908 = vadd.f32 %v2642, %v2803
  %v2909 = vadd.f32 %v2643, %v2805
  %v2910 = vadd.f32 %v2644, %v2808
  %v2911 = vadd.f32 %v2645, %v2810
  %v2912 = vadd.f32 %v2646, %v2813
  %v2913 = vadd.f32 %v2647, %v2815
  %v2914 = vadd.f32 %v2648, %v2818
  %v2915 = vadd.f32 %v2649, %v2820
  %v2916 = vadd.f32 %v2650, %v2823
  %v2917 = vadd.f32 %v2651, %v2825
  %v2918 = vadd.f32 %v2652, %v2828
  %v2919 = vadd.f32 %v2653, %v2830
  %v2920 = vadd.f32 %v2654, %v2833
  %v2921 = vadd.f32 %v2655, %v2835
  %v2922 = vadd.f32 %v2656, %v2838
  %v2923 = vadd.f32 %v2657, %v2840
  %v2924 = vadd.f32 %v2658, %v2843
  %v2925 = vadd.f32 %v2659, %v2845
  %v2926 = vadd.f32 %v2660, %v2848
  %v2927 = vadd.f32 %v2661, %v2850
  %v2928 = vadd.f32 %v2662, %v2853
  %v2929 = vadd.f32 %v2663, %v2855
  %v2930 = vadd.f32 %v2664, %v2858
  %v2931 = vadd.f32 %v2665, %v2860
  %v2932 = vadd.f32 %v2666, %v2863
  %v2933 = vadd.f32 %v2667, %v2865
  %v2934 = vadd.f32 %v2668, %v2868
  %v2935 = vadd.f32 %v2669, %v2870
  %v2936 = vrot.slane %v78, 2
  %v2937 = vrot.slane %v79, 2
  %v2938 = vsel %vm1061, %v2936, %v2937
  %v2939 = vrot.slane %v80, 2
  %v2940 = vsel %vm1061, %v2937, %v2939
  %v2941 = vrot.slane %v132, 2
  %v2942 = vrot.slane %v133, 2
  %v2943 = vsel %vm1061, %v2941, %v2942
  %v2944 = vrot.slane %v134, 2
  %v2945 = vsel %vm1061, %v2942, %v2944
  %v2950 = vpack.c.bf16 %v2940, %v2938
  %v2951 = vpack.c.bf16 %v2945, %v2943
  %s2952 = scalar_lea.vmem %s1, 16
  %v2953 = vld [vmem:[%s2952] sm:$0x3]
  %v2955 = vsel %vm523, %v2950, 0
  %v2958 = vsel %vm523, %v2951, 0
  %v2961 = vsel %vm620, %v2953, 0
  %2963 = vmatpush.bf16.msra.mxu0 0
  %2964 = vmatpush.bf16.msra.mxu0 0
  %2965 = vmatpush.bf16.msra.mxu0 0
  %2966 = vmatpush.bf16.msra.mxu0 0
  %2967 = vmatpush.bf16.msra.mxu0 0
  %2968 = vmatpush.bf16.msra.mxu0 0
  %2969 = vmatpush.bf16.msra.mxu0 0
  %2970 = vmatpush.bf16.msra.mxu0 %v2961
  %2971 = vmatmul.bf16.gmra.mxu0 %v1327
  %v2972 = vpop.f32.mrf.mxu0
  %v2973 = vadd.f32 0.0, %v2972
  %v2974 = vpop.f32.mrf.mxu0
  %v2975 = vadd.f32 0.0, %v2974
  %2976 = vmatmul.bf16.gmra.mxu0 %v1330
  %v2977 = vpop.f32.mrf.mxu0
  %v2978 = vadd.f32 0.0, %v2977
  %v2979 = vpop.f32.mrf.mxu0
  %v2980 = vadd.f32 0.0, %v2979
  %2981 = vmatmul.bf16.gmra.mxu0 %v1333
  %v2982 = vpop.f32.mrf.mxu0
  %v2983 = vadd.f32 0.0, %v2982
  %v2984 = vpop.f32.mrf.mxu0
  %v2985 = vadd.f32 0.0, %v2984
  %2986 = vmatmul.bf16.gmra.mxu0 %v1336
  %v2987 = vpop.f32.mrf.mxu0
  %v2988 = vadd.f32 0.0, %v2987
  %v2989 = vpop.f32.mrf.mxu0
  %v2990 = vadd.f32 0.0, %v2989
  %2991 = vmatmul.bf16.gmra.mxu0 %v1339
  %v2992 = vpop.f32.mrf.mxu0
  %v2993 = vadd.f32 0.0, %v2992
  %v2994 = vpop.f32.mrf.mxu0
  %v2995 = vadd.f32 0.0, %v2994
  %2996 = vmatmul.bf16.gmra.mxu0 %v1342
  %v2997 = vpop.f32.mrf.mxu0
  %v2998 = vadd.f32 0.0, %v2997
  %v2999 = vpop.f32.mrf.mxu0
  %v3000 = vadd.f32 0.0, %v2999
  %3001 = vmatmul.bf16.gmra.mxu0 %v1345
  %v3002 = vpop.f32.mrf.mxu0
  %v3003 = vadd.f32 0.0, %v3002
  %v3004 = vpop.f32.mrf.mxu0
  %v3005 = vadd.f32 0.0, %v3004
  %3006 = vmatmul.bf16.gmra.mxu0 %v1348
  %v3007 = vpop.f32.mrf.mxu0
  %v3008 = vadd.f32 0.0, %v3007
  %v3009 = vpop.f32.mrf.mxu0
  %v3010 = vadd.f32 0.0, %v3009
  %3011 = vmatmul.bf16.gmra.mxu0 %v1351
  %v3012 = vpop.f32.mrf.mxu0
  %v3013 = vadd.f32 0.0, %v3012
  %v3014 = vpop.f32.mrf.mxu0
  %v3015 = vadd.f32 0.0, %v3014
  %3016 = vmatmul.bf16.gmra.mxu0 %v1354
  %v3017 = vpop.f32.mrf.mxu0
  %v3018 = vadd.f32 0.0, %v3017
  %v3019 = vpop.f32.mrf.mxu0
  %v3020 = vadd.f32 0.0, %v3019
  %3021 = vmatmul.bf16.gmra.mxu0 %v1357
  %v3022 = vpop.f32.mrf.mxu0
  %v3023 = vadd.f32 0.0, %v3022
  %v3024 = vpop.f32.mrf.mxu0
  %v3025 = vadd.f32 0.0, %v3024
  %3026 = vmatmul.bf16.gmra.mxu0 %v1360
  %v3027 = vpop.f32.mrf.mxu0
  %v3028 = vadd.f32 0.0, %v3027
  %v3029 = vpop.f32.mrf.mxu0
  %v3030 = vadd.f32 0.0, %v3029
  %3031 = vmatmul.bf16.gmra.mxu0 %v1363
  %v3032 = vpop.f32.mrf.mxu0
  %v3033 = vadd.f32 0.0, %v3032
  %v3034 = vpop.f32.mrf.mxu0
  %v3035 = vadd.f32 0.0, %v3034
  %3036 = vmatmul.bf16.gmra.mxu0 %v1366
  %v3037 = vpop.f32.mrf.mxu0
  %v3038 = vadd.f32 0.0, %v3037
  %v3039 = vpop.f32.mrf.mxu0
  %v3040 = vadd.f32 0.0, %v3039
  %3041 = vmatmul.bf16.gmra.mxu0 %v2183
  %v3042 = vpop.f32.mrf.mxu0
  %v3043 = vadd.f32 0.0, %v3042
  %v3044 = vpop.f32.mrf.mxu0
  %v3045 = vadd.f32 0.0, %v3044
  %3046 = vmatmul.bf16.gmra.mxu0 %v2955
  %v3047 = vpop.f32.mrf.mxu0
  %v3048 = vadd.f32 0.0, %v3047
  %v3049 = vpop.f32.mrf.mxu0
  %v3050 = vadd.f32 0.0, %v3049
  %3051 = vmatmul.bf16.gmra.mxu0 %v1375
  %v3052 = vpop.f32.mrf.mxu0
  %v3053 = vadd.f32 0.0, %v3052
  %v3054 = vpop.f32.mrf.mxu0
  %v3055 = vadd.f32 0.0, %v3054
  %3056 = vmatmul.bf16.gmra.mxu0 %v1378
  %v3057 = vpop.f32.mrf.mxu0
  %v3058 = vadd.f32 0.0, %v3057
  %v3059 = vpop.f32.mrf.mxu0
  %v3060 = vadd.f32 0.0, %v3059
  %3061 = vmatmul.bf16.gmra.mxu0 %v1381
  %v3062 = vpop.f32.mrf.mxu0
  %v3063 = vadd.f32 0.0, %v3062
  %v3064 = vpop.f32.mrf.mxu0
  %v3065 = vadd.f32 0.0, %v3064
  %3066 = vmatmul.bf16.gmra.mxu0 %v1384
  %v3067 = vpop.f32.mrf.mxu0
  %v3068 = vadd.f32 0.0, %v3067
  %v3069 = vpop.f32.mrf.mxu0
  %v3070 = vadd.f32 0.0, %v3069
  %3071 = vmatmul.bf16.gmra.mxu0 %v1387
  %v3072 = vpop.f32.mrf.mxu0
  %v3073 = vadd.f32 0.0, %v3072
  %v3074 = vpop.f32.mrf.mxu0
  %v3075 = vadd.f32 0.0, %v3074
  %3076 = vmatmul.bf16.gmra.mxu0 %v1390
  %v3077 = vpop.f32.mrf.mxu0
  %v3078 = vadd.f32 0.0, %v3077
  %v3079 = vpop.f32.mrf.mxu0
  %v3080 = vadd.f32 0.0, %v3079
  %3081 = vmatmul.bf16.gmra.mxu0 %v1393
  %v3082 = vpop.f32.mrf.mxu0
  %v3083 = vadd.f32 0.0, %v3082
  %v3084 = vpop.f32.mrf.mxu0
  %v3085 = vadd.f32 0.0, %v3084
  %3086 = vmatmul.bf16.gmra.mxu0 %v1396
  %v3087 = vpop.f32.mrf.mxu0
  %v3088 = vadd.f32 0.0, %v3087
  %v3089 = vpop.f32.mrf.mxu0
  %v3090 = vadd.f32 0.0, %v3089
  %3091 = vmatmul.bf16.gmra.mxu0 %v1399
  %v3092 = vpop.f32.mrf.mxu0
  %v3093 = vadd.f32 0.0, %v3092
  %v3094 = vpop.f32.mrf.mxu0
  %v3095 = vadd.f32 0.0, %v3094
  %3096 = vmatmul.bf16.gmra.mxu0 %v1402
  %v3097 = vpop.f32.mrf.mxu0
  %v3098 = vadd.f32 0.0, %v3097
  %v3099 = vpop.f32.mrf.mxu0
  %v3100 = vadd.f32 0.0, %v3099
  %3101 = vmatmul.bf16.gmra.mxu0 %v1405
  %v3102 = vpop.f32.mrf.mxu0
  %v3103 = vadd.f32 0.0, %v3102
  %v3104 = vpop.f32.mrf.mxu0
  %v3105 = vadd.f32 0.0, %v3104
  %3106 = vmatmul.bf16.gmra.mxu0 %v1408
  %v3107 = vpop.f32.mrf.mxu0
  %v3108 = vadd.f32 0.0, %v3107
  %v3109 = vpop.f32.mrf.mxu0
  %v3110 = vadd.f32 0.0, %v3109
  %3111 = vmatmul.bf16.gmra.mxu0 %v1411
  %v3112 = vpop.f32.mrf.mxu0
  %v3113 = vadd.f32 0.0, %v3112
  %v3114 = vpop.f32.mrf.mxu0
  %v3115 = vadd.f32 0.0, %v3114
  %3116 = vmatmul.bf16.gmra.mxu0 %v1414
  %v3117 = vpop.f32.mrf.mxu0
  %v3118 = vadd.f32 0.0, %v3117
  %v3119 = vpop.f32.mrf.mxu0
  %v3120 = vadd.f32 0.0, %v3119
  %3121 = vmatmul.bf16.gmra.mxu0 %v2186
  %v3122 = vpop.f32.mrf.mxu0
  %v3123 = vadd.f32 0.0, %v3122
  %v3124 = vpop.f32.mrf.mxu0
  %v3125 = vadd.f32 0.0, %v3124
  %3126 = vmatmul.bf16.gmra.mxu0 %v2958
  %v3127 = vpop.f32.mrf.mxu0
  %v3128 = vadd.f32 0.0, %v3127
  %v3129 = vpop.f32.mrf.mxu0
  %v3130 = vadd.f32 0.0, %v3129
  %3131 = vdwg.mxu0
  %v3132 = vadd.f32 %v2872, %v2973
  %v3133 = vadd.f32 %v2873, %v2975
  %v3134 = vadd.f32 %v2874, %v2978
  %v3135 = vadd.f32 %v2875, %v2980
  %v3136 = vadd.f32 %v2876, %v2983
  %v3137 = vadd.f32 %v2877, %v2985
  %v3138 = vadd.f32 %v2878, %v2988
  %v3139 = vadd.f32 %v2879, %v2990
  %v3140 = vadd.f32 %v2880, %v2993
  %v3141 = vadd.f32 %v2881, %v2995
  %v3142 = vadd.f32 %v2882, %v2998
  %v3143 = vadd.f32 %v2883, %v3000
  %v3144 = vadd.f32 %v2884, %v3003
  %v3145 = vadd.f32 %v2885, %v3005
  %v3146 = vadd.f32 %v2886, %v3008
  %v3147 = vadd.f32 %v2887, %v3010
  %v3148 = vadd.f32 %v2888, %v3013
  %v3149 = vadd.f32 %v2889, %v3015
  %v3150 = vadd.f32 %v2890, %v3018
  %v3151 = vadd.f32 %v2891, %v3020
  %v3152 = vadd.f32 %v2892, %v3023
  %v3153 = vadd.f32 %v2893, %v3025
  %v3154 = vadd.f32 %v2894, %v3028
  %v3155 = vadd.f32 %v2895, %v3030
  %v3156 = vadd.f32 %v2896, %v3033
  %v3157 = vadd.f32 %v2897, %v3035
  %v3158 = vadd.f32 %v2898, %v3038
  %v3159 = vadd.f32 %v2899, %v3040
  %v3160 = vadd.f32 %v2900, %v3043
  %v3161 = vadd.f32 %v2901, %v3045
  %v3162 = vadd.f32 %v2902, %v3048
  %v3163 = vadd.f32 %v2903, %v3050
  %v3164 = vadd.f32 %v2904, %v3053
  %v3165 = vadd.f32 %v2905, %v3055
  %v3166 = vadd.f32 %v2906, %v3058
  %v3167 = vadd.f32 %v2907, %v3060
  %v3168 = vadd.f32 %v2908, %v3063
  %v3169 = vadd.f32 %v2909, %v3065
  %v3170 = vadd.f32 %v2910, %v3068
  %v3171 = vadd.f32 %v2911, %v3070
  %v3172 = vadd.f32 %v2912, %v3073
  %v3173 = vadd.f32 %v2913, %v3075
  %v3174 = vadd.f32 %v2914, %v3078
  %v3175 = vadd.f32 %v2915, %v3080
  %v3176 = vadd.f32 %v2916, %v3083
  %v3177 = vadd.f32 %v2917, %v3085
  %v3178 = vadd.f32 %v2918, %v3088
  %v3179 = vadd.f32 %v2919, %v3090
  %v3180 = vadd.f32 %v2920, %v3093
  %v3181 = vadd.f32 %v2921, %v3095
  %v3182 = vadd.f32 %v2922, %v3098
  %v3183 = vadd.f32 %v2923, %v3100
  %v3184 = vadd.f32 %v2924, %v3103
  %v3185 = vadd.f32 %v2925, %v3105
  %v3186 = vadd.f32 %v2926, %v3108
  %v3187 = vadd.f32 %v2927, %v3110
  %v3188 = vadd.f32 %v2928, %v3113
  %v3189 = vadd.f32 %v2929, %v3115
  %v3190 = vadd.f32 %v2930, %v3118
  %v3191 = vadd.f32 %v2931, %v3120
  %v3192 = vadd.f32 %v2932, %v3123
  %v3193 = vadd.f32 %v2933, %v3125
  %v3194 = vadd.f32 %v2934, %v3128
  %v3195 = vadd.f32 %v2935, %v3130
  %v3196 = vsel %vm523, %v3132, 0.0
  %v3197 = vsel %vm523, %v3133, 0.0
  %v3198 = vadd.f32 %v3196, %v3197
  %v3199 = vsel %vm523, %v3134, 0.0
  %v3200 = vadd.f32 %v3198, %v3199
  %v3201 = vsel %vm523, %v3135, 0.0
  %v3202 = vadd.f32 %v3200, %v3201
  %v3203 = vsel %vm523, %v3136, 0.0
  %v3204 = vadd.f32 %v3202, %v3203
  %v3205 = vsel %vm523, %v3137, 0.0
  %v3206 = vadd.f32 %v3204, %v3205
  %v3207 = vsel %vm523, %v3138, 0.0
  %v3208 = vadd.f32 %v3206, %v3207
  %v3209 = vsel %vm523, %v3139, 0.0
  %v3210 = vadd.f32 %v3208, %v3209
  %v3211 = vsel %vm523, %v3140, 0.0
  %v3212 = vadd.f32 %v3210, %v3211
  %v3213 = vsel %vm523, %v3141, 0.0
  %v3214 = vadd.f32 %v3212, %v3213
  %v3215 = vsel %vm523, %v3142, 0.0
  %v3216 = vadd.f32 %v3214, %v3215
  %v3217 = vsel %vm523, %v3143, 0.0
  %v3218 = vadd.f32 %v3216, %v3217
  %v3219 = vsel %vm523, %v3144, 0.0
  %v3220 = vadd.f32 %v3218, %v3219
  %v3221 = vsel %vm523, %v3145, 0.0
  %v3222 = vadd.f32 %v3220, %v3221
  %v3223 = vsel %vm523, %v3146, 0.0
  %v3224 = vadd.f32 %v3222, %v3223
  %v3225 = vsel %vm523, %v3147, 0.0
  %v3226 = vadd.f32 %v3224, %v3225
  %v3227 = vsel %vm523, %v3148, 0.0
  %v3228 = vadd.f32 %v3226, %v3227
  %v3229 = vsel %vm523, %v3149, 0.0
  %v3230 = vadd.f32 %v3228, %v3229
  %v3231 = vsel %vm523, %v3150, 0.0
  %v3232 = vadd.f32 %v3230, %v3231
  %v3233 = vsel %vm523, %v3151, 0.0
  %v3234 = vadd.f32 %v3232, %v3233
  %v3235 = vsel %vm523, %v3152, 0.0
  %v3236 = vadd.f32 %v3234, %v3235
  %v3237 = vsel %vm523, %v3153, 0.0
  %v3238 = vadd.f32 %v3236, %v3237
  %v3239 = vsel %vm523, %v3154, 0.0
  %v3240 = vadd.f32 %v3238, %v3239
  %v3241 = vsel %vm523, %v3155, 0.0
  %v3242 = vadd.f32 %v3240, %v3241
  %v3243 = vsel %vm523, %v3156, 0.0
  %v3244 = vadd.f32 %v3242, %v3243
  %v3245 = vsel %vm523, %v3157, 0.0
  %v3246 = vadd.f32 %v3244, %v3245
  %v3247 = vsel %vm523, %v3158, 0.0
  %v3248 = vadd.f32 %v3246, %v3247
  %v3249 = vsel %vm523, %v3159, 0.0
  %v3250 = vadd.f32 %v3248, %v3249
  %v3251 = vsel %vm523, %v3160, 0.0
  %v3252 = vadd.f32 %v3250, %v3251
  %v3253 = vsel %vm523, %v3161, 0.0
  %v3254 = vadd.f32 %v3252, %v3253
  %v3255 = vsel %vm523, %v3162, 0.0
  %v3256 = vadd.f32 %v3254, %v3255
  %v3257 = vsel %vm523, %v3163, 0.0
  %v3258 = vadd.f32 %v3256, %v3257
  %v3259 = vsel %vm523, %v3164, 0.0
  %v3260 = vadd.f32 %v3258, %v3259
  %v3261 = vsel %vm523, %v3165, 0.0
  %v3262 = vadd.f32 %v3260, %v3261
  %v3263 = vsel %vm523, %v3166, 0.0
  %v3264 = vadd.f32 %v3262, %v3263
  %v3265 = vsel %vm523, %v3167, 0.0
  %v3266 = vadd.f32 %v3264, %v3265
  %v3267 = vsel %vm523, %v3168, 0.0
  %v3268 = vadd.f32 %v3266, %v3267
  %v3269 = vsel %vm523, %v3169, 0.0
  %v3270 = vadd.f32 %v3268, %v3269
  %v3271 = vsel %vm523, %v3170, 0.0
  %v3272 = vadd.f32 %v3270, %v3271
  %v3273 = vsel %vm523, %v3171, 0.0
  %v3274 = vadd.f32 %v3272, %v3273
  %v3275 = vsel %vm523, %v3172, 0.0
  %v3276 = vadd.f32 %v3274, %v3275
  %v3277 = vsel %vm523, %v3173, 0.0
  %v3278 = vadd.f32 %v3276, %v3277
  %v3279 = vsel %vm523, %v3174, 0.0
  %v3280 = vadd.f32 %v3278, %v3279
  %v3281 = vsel %vm523, %v3175, 0.0
  %v3282 = vadd.f32 %v3280, %v3281
  %v3283 = vsel %vm523, %v3176, 0.0
  %v3284 = vadd.f32 %v3282, %v3283
  %v3285 = vsel %vm523, %v3177, 0.0
  %v3286 = vadd.f32 %v3284, %v3285
  %v3287 = vsel %vm523, %v3178, 0.0
  %v3288 = vadd.f32 %v3286, %v3287
  %v3289 = vsel %vm523, %v3179, 0.0
  %v3290 = vadd.f32 %v3288, %v3289
  %v3291 = vsel %vm523, %v3180, 0.0
  %v3292 = vadd.f32 %v3290, %v3291
  %v3293 = vsel %vm523, %v3181, 0.0
  %v3294 = vadd.f32 %v3292, %v3293
  %v3295 = vsel %vm523, %v3182, 0.0
  %v3296 = vadd.f32 %v3294, %v3295
  %v3297 = vsel %vm523, %v3183, 0.0
  %v3298 = vadd.f32 %v3296, %v3297
  %v3299 = vsel %vm523, %v3184, 0.0
  %v3300 = vadd.f32 %v3298, %v3299
  %v3301 = vsel %vm523, %v3185, 0.0
  %v3302 = vadd.f32 %v3300, %v3301
  %v3303 = vsel %vm523, %v3186, 0.0
  %v3304 = vadd.f32 %v3302, %v3303
  %v3305 = vsel %vm523, %v3187, 0.0
  %v3306 = vadd.f32 %v3304, %v3305
  %v3307 = vsel %vm523, %v3188, 0.0
  %v3308 = vadd.f32 %v3306, %v3307
  %v3309 = vsel %vm523, %v3189, 0.0
  %v3310 = vadd.f32 %v3308, %v3309
  %v3311 = vsel %vm523, %v3190, 0.0
  %v3312 = vadd.f32 %v3310, %v3311
  %v3313 = vsel %vm523, %v3191, 0.0
  %v3314 = vadd.f32 %v3312, %v3313
  %v3315 = vsel %vm523, %v3192, 0.0
  %v3316 = vadd.f32 %v3314, %v3315
  %v3317 = vsel %vm523, %v3193, 0.0
  %v3318 = vadd.f32 %v3316, %v3317
  %v3319 = vsel %vm523, %v3194, 0.0
  %v3320 = vadd.f32 %v3318, %v3319
  %v3321 = vsel %vm523, %v3195, 0.0
  %v3322 = vadd.f32 %v3320, %v3321
  %v3323 = vrot.slane %v3322, 4
  %v3324 = vadd.f32 %v3322, %v3323
  %v3325 = vrot.slane %v3324, 2
  %v3326 = vadd.f32 %v3324, %v3325
  %v3327 = vrot.slane %v3326, 1
  %v3328 = vadd.f32 %v3326, %v3327
  %v3329 = vmul.f32 %v3328, 0.001953125
  %v3330 = vmul.f32 %v3132, %v3132
  %v3331 = vmul.f32 %v3133, %v3133
  %v3332 = vmul.f32 %v3134, %v3134
  %v3333 = vmul.f32 %v3135, %v3135
  %v3334 = vmul.f32 %v3136, %v3136
  %v3335 = vmul.f32 %v3137, %v3137
  %v3336 = vmul.f32 %v3138, %v3138
  %v3337 = vmul.f32 %v3139, %v3139
  %v3338 = vmul.f32 %v3140, %v3140
  %v3339 = vmul.f32 %v3141, %v3141
  %v3340 = vmul.f32 %v3142, %v3142
  %v3341 = vmul.f32 %v3143, %v3143
  %v3342 = vmul.f32 %v3144, %v3144
  %v3343 = vmul.f32 %v3145, %v3145
  %v3344 = vmul.f32 %v3146, %v3146
  %v3345 = vmul.f32 %v3147, %v3147
  %v3346 = vmul.f32 %v3148, %v3148
  %v3347 = vmul.f32 %v3149, %v3149
  %v3348 = vmul.f32 %v3150, %v3150
  %v3349 = vmul.f32 %v3151, %v3151
  %v3350 = vmul.f32 %v3152, %v3152
  %v3351 = vmul.f32 %v3153, %v3153
  %v3352 = vmul.f32 %v3154, %v3154
  %v3353 = vmul.f32 %v3155, %v3155
  %v3354 = vmul.f32 %v3156, %v3156
  %v3355 = vmul.f32 %v3157, %v3157
  %v3356 = vmul.f32 %v3158, %v3158
  %v3357 = vmul.f32 %v3159, %v3159
  %v3358 = vmul.f32 %v3160, %v3160
  %v3359 = vmul.f32 %v3161, %v3161
  %v3360 = vmul.f32 %v3162, %v3162
  %v3361 = vmul.f32 %v3163, %v3163
  %v3362 = vmul.f32 %v3164, %v3164
  %v3363 = vmul.f32 %v3165, %v3165
  %v3364 = vmul.f32 %v3166, %v3166
  %v3365 = vmul.f32 %v3167, %v3167
  %v3366 = vmul.f32 %v3168, %v3168
  %v3367 = vmul.f32 %v3169, %v3169
  %v3368 = vmul.f32 %v3170, %v3170
  %v3369 = vmul.f32 %v3171, %v3171
  %v3370 = vmul.f32 %v3172, %v3172
  %v3371 = vmul.f32 %v3173, %v3173
  %v3372 = vmul.f32 %v3174, %v3174
  %v3373 = vmul.f32 %v3175, %v3175
  %v3374 = vmul.f32 %v3176, %v3176
  %v3375 = vmul.f32 %v3177, %v3177
  %v3376 = vmul.f32 %v3178, %v3178
  %v3377 = vmul.f32 %v3179, %v3179
  %v3378 = vmul.f32 %v3180, %v3180
  %v3379 = vmul.f32 %v3181, %v3181
  %v3380 = vmul.f32 %v3182, %v3182
  %v3381 = vmul.f32 %v3183, %v3183
  %v3382 = vmul.f32 %v3184, %v3184
  %v3383 = vmul.f32 %v3185, %v3185
  %v3384 = vmul.f32 %v3186, %v3186
  %v3385 = vmul.f32 %v3187, %v3187
  %v3386 = vmul.f32 %v3188, %v3188
  %v3387 = vmul.f32 %v3189, %v3189
  %v3388 = vmul.f32 %v3190, %v3190
  %v3389 = vmul.f32 %v3191, %v3191
  %v3390 = vmul.f32 %v3192, %v3192
  %v3391 = vmul.f32 %v3193, %v3193
  %v3392 = vmul.f32 %v3194, %v3194
  %v3393 = vmul.f32 %v3195, %v3195
  %v3394 = vsel %vm523, %v3330, 0.0
  %v3395 = vsel %vm523, %v3331, 0.0
  %v3396 = vadd.f32 %v3394, %v3395
  %v3397 = vsel %vm523, %v3332, 0.0
  %v3398 = vadd.f32 %v3396, %v3397
  %v3399 = vsel %vm523, %v3333, 0.0
  %v3400 = vadd.f32 %v3398, %v3399
  %v3401 = vsel %vm523, %v3334, 0.0
  %v3402 = vadd.f32 %v3400, %v3401
  %v3403 = vsel %vm523, %v3335, 0.0
  %v3404 = vadd.f32 %v3402, %v3403
  %v3405 = vsel %vm523, %v3336, 0.0
  %v3406 = vadd.f32 %v3404, %v3405
  %v3407 = vsel %vm523, %v3337, 0.0
  %v3408 = vadd.f32 %v3406, %v3407
  %v3409 = vsel %vm523, %v3338, 0.0
  %v3410 = vadd.f32 %v3408, %v3409
  %v3411 = vsel %vm523, %v3339, 0.0
  %v3412 = vadd.f32 %v3410, %v3411
  %v3413 = vsel %vm523, %v3340, 0.0
  %v3414 = vadd.f32 %v3412, %v3413
  %v3415 = vsel %vm523, %v3341, 0.0
  %v3416 = vadd.f32 %v3414, %v3415
  %v3417 = vsel %vm523, %v3342, 0.0
  %v3418 = vadd.f32 %v3416, %v3417
  %v3419 = vsel %vm523, %v3343, 0.0
  %v3420 = vadd.f32 %v3418, %v3419
  %v3421 = vsel %vm523, %v3344, 0.0
  %v3422 = vadd.f32 %v3420, %v3421
  %v3423 = vsel %vm523, %v3345, 0.0
  %v3424 = vadd.f32 %v3422, %v3423
  %v3425 = vsel %vm523, %v3346, 0.0
  %v3426 = vadd.f32 %v3424, %v3425
  %v3427 = vsel %vm523, %v3347, 0.0
  %v3428 = vadd.f32 %v3426, %v3427
  %v3429 = vsel %vm523, %v3348, 0.0
  %v3430 = vadd.f32 %v3428, %v3429
  %v3431 = vsel %vm523, %v3349, 0.0
  %v3432 = vadd.f32 %v3430, %v3431
  %v3433 = vsel %vm523, %v3350, 0.0
  %v3434 = vadd.f32 %v3432, %v3433
  %v3435 = vsel %vm523, %v3351, 0.0
  %v3436 = vadd.f32 %v3434, %v3435
  %v3437 = vsel %vm523, %v3352, 0.0
  %v3438 = vadd.f32 %v3436, %v3437
  %v3439 = vsel %vm523, %v3353, 0.0
  %v3440 = vadd.f32 %v3438, %v3439
  %v3441 = vsel %vm523, %v3354, 0.0
  %v3442 = vadd.f32 %v3440, %v3441
  %v3443 = vsel %vm523, %v3355, 0.0
  %v3444 = vadd.f32 %v3442, %v3443
  %v3445 = vsel %vm523, %v3356, 0.0
  %v3446 = vadd.f32 %v3444, %v3445
  %v3447 = vsel %vm523, %v3357, 0.0
  %v3448 = vadd.f32 %v3446, %v3447
  %v3449 = vsel %vm523, %v3358, 0.0
  %v3450 = vadd.f32 %v3448, %v3449
  %v3451 = vsel %vm523, %v3359, 0.0
  %v3452 = vadd.f32 %v3450, %v3451
  %v3453 = vsel %vm523, %v3360, 0.0
  %v3454 = vadd.f32 %v3452, %v3453
  %v3455 = vsel %vm523, %v3361, 0.0
  %v3456 = vadd.f32 %v3454, %v3455
  %v3457 = vsel %vm523, %v3362, 0.0
  %v3458 = vadd.f32 %v3456, %v3457
  %v3459 = vsel %vm523, %v3363, 0.0
  %v3460 = vadd.f32 %v3458, %v3459
  %v3461 = vsel %vm523, %v3364, 0.0
  %v3462 = vadd.f32 %v3460, %v3461
  %v3463 = vsel %vm523, %v3365, 0.0
  %v3464 = vadd.f32 %v3462, %v3463
  %v3465 = vsel %vm523, %v3366, 0.0
  %v3466 = vadd.f32 %v3464, %v3465
  %v3467 = vsel %vm523, %v3367, 0.0
  %v3468 = vadd.f32 %v3466, %v3467
  %v3469 = vsel %vm523, %v3368, 0.0
  %v3470 = vadd.f32 %v3468, %v3469
  %v3471 = vsel %vm523, %v3369, 0.0
  %v3472 = vadd.f32 %v3470, %v3471
  %v3473 = vsel %vm523, %v3370, 0.0
  %v3474 = vadd.f32 %v3472, %v3473
  %v3475 = vsel %vm523, %v3371, 0.0
  %v3476 = vadd.f32 %v3474, %v3475
  %v3477 = vsel %vm523, %v3372, 0.0
  %v3478 = vadd.f32 %v3476, %v3477
  %v3479 = vsel %vm523, %v3373, 0.0
  %v3480 = vadd.f32 %v3478, %v3479
  %v3481 = vsel %vm523, %v3374, 0.0
  %v3482 = vadd.f32 %v3480, %v3481
  %v3483 = vsel %vm523, %v3375, 0.0
  %v3484 = vadd.f32 %v3482, %v3483
  %v3485 = vsel %vm523, %v3376, 0.0
  %v3486 = vadd.f32 %v3484, %v3485
  %v3487 = vsel %vm523, %v3377, 0.0
  %v3488 = vadd.f32 %v3486, %v3487
  %v3489 = vsel %vm523, %v3378, 0.0
  %v3490 = vadd.f32 %v3488, %v3489
  %v3491 = vsel %vm523, %v3379, 0.0
  %v3492 = vadd.f32 %v3490, %v3491
  %v3493 = vsel %vm523, %v3380, 0.0
  %v3494 = vadd.f32 %v3492, %v3493
  %v3495 = vsel %vm523, %v3381, 0.0
  %v3496 = vadd.f32 %v3494, %v3495
  %v3497 = vsel %vm523, %v3382, 0.0
  %v3498 = vadd.f32 %v3496, %v3497
  %v3499 = vsel %vm523, %v3383, 0.0
  %v3500 = vadd.f32 %v3498, %v3499
  %v3501 = vsel %vm523, %v3384, 0.0
  %v3502 = vadd.f32 %v3500, %v3501
  %v3503 = vsel %vm523, %v3385, 0.0
  %v3504 = vadd.f32 %v3502, %v3503
  %v3505 = vsel %vm523, %v3386, 0.0
  %v3506 = vadd.f32 %v3504, %v3505
  %v3507 = vsel %vm523, %v3387, 0.0
  %v3508 = vadd.f32 %v3506, %v3507
  %v3509 = vsel %vm523, %v3388, 0.0
  %v3510 = vadd.f32 %v3508, %v3509
  %v3511 = vsel %vm523, %v3389, 0.0
  %v3512 = vadd.f32 %v3510, %v3511
  %v3513 = vsel %vm523, %v3390, 0.0
  %v3514 = vadd.f32 %v3512, %v3513
  %v3515 = vsel %vm523, %v3391, 0.0
  %v3516 = vadd.f32 %v3514, %v3515
  %v3517 = vsel %vm523, %v3392, 0.0
  %v3518 = vadd.f32 %v3516, %v3517
  %v3519 = vsel %vm523, %v3393, 0.0
  %v3520 = vadd.f32 %v3518, %v3519
  %v3521 = vrot.slane %v3520, 4
  %v3522 = vadd.f32 %v3520, %v3521
  %v3523 = vrot.slane %v3522, 2
  %v3524 = vadd.f32 %v3522, %v3523
  %v3525 = vrot.slane %v3524, 1
  %v3526 = vadd.f32 %v3524, %v3525
  %v3527 = vmul.f32 %v3526, 0.001953125
  %v3528 = vmul.f32 %v3329, %v3329
  %v3529 = vsub.f32 %v3527, %v3528
  %v3530 = vmax.f32 %v3529, 0.0
  %v3531 = vld [vmem:[%s2] sm:$0x1]
  %v3532 = vadd.f32 %v3530, 1e-05
  %v3533 = vrsqrt.pop %v3532
  %v3534 = vmul.f32 %v3533, %v3532
  %v3535 = vmul.f32 %v3534, %v3533
  %v3536 = vmul.f32 0.5, %v3535
  %v3537 = vsub.f32 1.5, %v3536
  %v3538 = vmul.f32 %v3533, %v3537
  %vm3539 = vweird.f32 %v3532
  %vm3540 = vweird.f32 %v3533
  %vm3541 = vmor %vm3539, %vm3540
  %v3542 = vsel %vm3541, %v3533, %v3538
  %v3543 = vmul.f32 %v3531, %v3542
  %v3544 = vld [vmem:[%s3] sm:$0x1]
  %v3545 = vmul.f32 %v3329, %v3543
  %v3546 = vsub.f32 %v3544, %v3545
  %v3548 = vperm.slane %v3543, 0
  %v3550 = vmul.f32 %v3132, %v3548
  %v3551 = vmul.f32 %v3133, %v3548
  %v3552 = vmul.f32 %v3134, %v3548
  %v3553 = vmul.f32 %v3135, %v3548
  %v3554 = vmul.f32 %v3136, %v3548
  %v3555 = vmul.f32 %v3137, %v3548
  %v3556 = vmul.f32 %v3138, %v3548
  %v3557 = vmul.f32 %v3139, %v3548
  %v3558 = vmul.f32 %v3140, %v3548
  %v3559 = vmul.f32 %v3141, %v3548
  %v3560 = vmul.f32 %v3142, %v3548
  %v3561 = vmul.f32 %v3143, %v3548
  %v3562 = vmul.f32 %v3144, %v3548
  %v3563 = vmul.f32 %v3145, %v3548
  %v3564 = vmul.f32 %v3146, %v3548
  %v3565 = vmul.f32 %v3147, %v3548
  %v3566 = vmul.f32 %v3148, %v3548
  %v3567 = vmul.f32 %v3149, %v3548
  %v3568 = vmul.f32 %v3150, %v3548
  %v3569 = vmul.f32 %v3151, %v3548
  %v3570 = vmul.f32 %v3152, %v3548
  %v3571 = vmul.f32 %v3153, %v3548
  %v3572 = vmul.f32 %v3154, %v3548
  %v3573 = vmul.f32 %v3155, %v3548
  %v3574 = vmul.f32 %v3156, %v3548
  %v3575 = vmul.f32 %v3157, %v3548
  %v3576 = vmul.f32 %v3158, %v3548
  %v3577 = vmul.f32 %v3159, %v3548
  %v3578 = vmul.f32 %v3160, %v3548
  %v3579 = vmul.f32 %v3161, %v3548
  %v3580 = vmul.f32 %v3162, %v3548
  %v3581 = vmul.f32 %v3163, %v3548
  %v3582 = vmul.f32 %v3164, %v3548
  %v3583 = vmul.f32 %v3165, %v3548
  %v3584 = vmul.f32 %v3166, %v3548
  %v3585 = vmul.f32 %v3167, %v3548
  %v3586 = vmul.f32 %v3168, %v3548
  %v3587 = vmul.f32 %v3169, %v3548
  %v3588 = vmul.f32 %v3170, %v3548
  %v3589 = vmul.f32 %v3171, %v3548
  %v3590 = vmul.f32 %v3172, %v3548
  %v3591 = vmul.f32 %v3173, %v3548
  %v3592 = vmul.f32 %v3174, %v3548
  %v3593 = vmul.f32 %v3175, %v3548
  %v3594 = vmul.f32 %v3176, %v3548
  %v3595 = vmul.f32 %v3177, %v3548
  %v3596 = vmul.f32 %v3178, %v3548
  %v3597 = vmul.f32 %v3179, %v3548
  %v3598 = vmul.f32 %v3180, %v3548
  %v3599 = vmul.f32 %v3181, %v3548
  %v3600 = vmul.f32 %v3182, %v3548
  %v3601 = vmul.f32 %v3183, %v3548
  %v3602 = vmul.f32 %v3184, %v3548
  %v3603 = vmul.f32 %v3185, %v3548
  %v3604 = vmul.f32 %v3186, %v3548
  %v3605 = vmul.f32 %v3187, %v3548
  %v3606 = vmul.f32 %v3188, %v3548
  %v3607 = vmul.f32 %v3189, %v3548
  %v3608 = vmul.f32 %v3190, %v3548
  %v3609 = vmul.f32 %v3191, %v3548
  %v3610 = vmul.f32 %v3192, %v3548
  %v3611 = vmul.f32 %v3193, %v3548
  %v3612 = vmul.f32 %v3194, %v3548
  %v3613 = vmul.f32 %v3195, %v3548
  %v3615 = vperm.slane %v3546, 0
  %v3617 = vadd.f32 %v3550, %v3615
  %v3618 = vadd.f32 %v3551, %v3615
  %v3619 = vadd.f32 %v3552, %v3615
  %v3620 = vadd.f32 %v3553, %v3615
  %v3621 = vadd.f32 %v3554, %v3615
  %v3622 = vadd.f32 %v3555, %v3615
  %v3623 = vadd.f32 %v3556, %v3615
  %v3624 = vadd.f32 %v3557, %v3615
  %v3625 = vadd.f32 %v3558, %v3615
  %v3626 = vadd.f32 %v3559, %v3615
  %v3627 = vadd.f32 %v3560, %v3615
  %v3628 = vadd.f32 %v3561, %v3615
  %v3629 = vadd.f32 %v3562, %v3615
  %v3630 = vadd.f32 %v3563, %v3615
  %v3631 = vadd.f32 %v3564, %v3615
  %v3632 = vadd.f32 %v3565, %v3615
  %v3633 = vadd.f32 %v3566, %v3615
  %v3634 = vadd.f32 %v3567, %v3615
  %v3635 = vadd.f32 %v3568, %v3615
  %v3636 = vadd.f32 %v3569, %v3615
  %v3637 = vadd.f32 %v3570, %v3615
  %v3638 = vadd.f32 %v3571, %v3615
  %v3639 = vadd.f32 %v3572, %v3615
  %v3640 = vadd.f32 %v3573, %v3615
  %v3641 = vadd.f32 %v3574, %v3615
  %v3642 = vadd.f32 %v3575, %v3615
  %v3643 = vadd.f32 %v3576, %v3615
  %v3644 = vadd.f32 %v3577, %v3615
  %v3645 = vadd.f32 %v3578, %v3615
  %v3646 = vadd.f32 %v3579, %v3615
  %v3647 = vadd.f32 %v3580, %v3615
  %v3648 = vadd.f32 %v3581, %v3615
  %v3649 = vadd.f32 %v3582, %v3615
  %v3650 = vadd.f32 %v3583, %v3615
  %v3651 = vadd.f32 %v3584, %v3615
  %v3652 = vadd.f32 %v3585, %v3615
  %v3653 = vadd.f32 %v3586, %v3615
  %v3654 = vadd.f32 %v3587, %v3615
  %v3655 = vadd.f32 %v3588, %v3615
  %v3656 = vadd.f32 %v3589, %v3615
  %v3657 = vadd.f32 %v3590, %v3615
  %v3658 = vadd.f32 %v3591, %v3615
  %v3659 = vadd.f32 %v3592, %v3615
  %v3660 = vadd.f32 %v3593, %v3615
  %v3661 = vadd.f32 %v3594, %v3615
  %v3662 = vadd.f32 %v3595, %v3615
  %v3663 = vadd.f32 %v3596, %v3615
  %v3664 = vadd.f32 %v3597, %v3615
  %v3665 = vadd.f32 %v3598, %v3615
  %v3666 = vadd.f32 %v3599, %v3615
  %v3667 = vadd.f32 %v3600, %v3615
  %v3668 = vadd.f32 %v3601, %v3615
  %v3669 = vadd.f32 %v3602, %v3615
  %v3670 = vadd.f32 %v3603, %v3615
  %v3671 = vadd.f32 %v3604, %v3615
  %v3672 = vadd.f32 %v3605, %v3615
  %v3673 = vadd.f32 %v3606, %v3615
  %v3674 = vadd.f32 %v3607, %v3615
  %v3675 = vadd.f32 %v3608, %v3615
  %v3676 = vadd.f32 %v3609, %v3615
  %v3677 = vadd.f32 %v3610, %v3615
  %v3678 = vadd.f32 %v3611, %v3615
  %v3679 = vadd.f32 %v3612, %v3615
  %v3680 = vadd.f32 %v3613, %v3615
  %v3681 = vmax.f32 %v3617, 0.0
  %v3682 = vmax.f32 %v3618, 0.0
  %v3683 = vmax.f32 %v3619, 0.0
  %v3684 = vmax.f32 %v3620, 0.0
  %v3685 = vmax.f32 %v3621, 0.0
  %v3686 = vmax.f32 %v3622, 0.0
  %v3687 = vmax.f32 %v3623, 0.0
  %v3688 = vmax.f32 %v3624, 0.0
  %v3689 = vmax.f32 %v3625, 0.0
  %v3690 = vmax.f32 %v3626, 0.0
  %v3691 = vmax.f32 %v3627, 0.0
  %v3692 = vmax.f32 %v3628, 0.0
  %v3693 = vmax.f32 %v3629, 0.0
  %v3694 = vmax.f32 %v3630, 0.0
  %v3695 = vmax.f32 %v3631, 0.0
  %v3696 = vmax.f32 %v3632, 0.0
  %v3697 = vmax.f32 %v3633, 0.0
  %v3698 = vmax.f32 %v3634, 0.0
  %v3699 = vmax.f32 %v3635, 0.0
  %v3700 = vmax.f32 %v3636, 0.0
  %v3701 = vmax.f32 %v3637, 0.0
  %v3702 = vmax.f32 %v3638, 0.0
  %v3703 = vmax.f32 %v3639, 0.0
  %v3704 = vmax.f32 %v3640, 0.0
  %v3705 = vmax.f32 %v3641, 0.0
  %v3706 = vmax.f32 %v3642, 0.0
  %v3707 = vmax.f32 %v3643, 0.0
  %v3708 = vmax.f32 %v3644, 0.0
  %v3709 = vmax.f32 %v3645, 0.0
  %v3710 = vmax.f32 %v3646, 0.0
  %v3711 = vmax.f32 %v3647, 0.0
  %v3712 = vmax.f32 %v3648, 0.0
  %v3713 = vmax.f32 %v3649, 0.0
  %v3714 = vmax.f32 %v3650, 0.0
  %v3715 = vmax.f32 %v3651, 0.0
  %v3716 = vmax.f32 %v3652, 0.0
  %v3717 = vmax.f32 %v3653, 0.0
  %v3718 = vmax.f32 %v3654, 0.0
  %v3719 = vmax.f32 %v3655, 0.0
  %v3720 = vmax.f32 %v3656, 0.0
  %v3721 = vmax.f32 %v3657, 0.0
  %v3722 = vmax.f32 %v3658, 0.0
  %v3723 = vmax.f32 %v3659, 0.0
  %v3724 = vmax.f32 %v3660, 0.0
  %v3725 = vmax.f32 %v3661, 0.0
  %v3726 = vmax.f32 %v3662, 0.0
  %v3727 = vmax.f32 %v3663, 0.0
  %v3728 = vmax.f32 %v3664, 0.0
  %v3729 = vmax.f32 %v3665, 0.0
  %v3730 = vmax.f32 %v3666, 0.0
  %v3731 = vmax.f32 %v3667, 0.0
  %v3732 = vmax.f32 %v3668, 0.0
  %v3733 = vmax.f32 %v3669, 0.0
  %v3734 = vmax.f32 %v3670, 0.0
  %v3735 = vmax.f32 %v3671, 0.0
  %v3736 = vmax.f32 %v3672, 0.0
  %v3737 = vmax.f32 %v3673, 0.0
  %v3738 = vmax.f32 %v3674, 0.0
  %v3739 = vmax.f32 %v3675, 0.0
  %v3740 = vmax.f32 %v3676, 0.0
  %v3741 = vmax.f32 %v3677, 0.0
  %v3742 = vmax.f32 %v3678, 0.0
  %v3743 = vmax.f32 %v3679, 0.0
  %v3744 = vmax.f32 %v3680, 0.0
  %3745 = vst.msk [vmem:[#allocation2] sm:$0xff] %vm523, 0.0
  %3746 = vst.msk [vmem:[#allocation2 + $0x8] sm:$0xff] %vm523, 0.0
  %vm3747 = vcmask 25600
  %3748 = vst.msk [vmem:[#allocation2 + $0x10] sm:$0x3] %vm3747, 0.0
  %3749 = vst.msk [vmem:[#allocation2 + $0x18] sm:$0xff] %vm523, 0.0
  %3750 = vst.msk [vmem:[#allocation2 + $0x20] sm:$0xff] %vm523, 0.0
  %3751 = vst.msk [vmem:[#allocation2 + $0x28] sm:$0x3] %vm3747, 0.0
  %3752 = vst.msk [vmem:[#allocation2 + $0x30] sm:$0xff] %vm523, 0.0
  %3753 = vst.msk [vmem:[#allocation2 + $0x38] sm:$0xff] %vm523, 0.0
  %3754 = vst.msk [vmem:[#allocation2 + $0x40] sm:$0x3] %vm3747, 0.0
  %3755 = vst.msk [vmem:[#allocation2 + $0x48] sm:$0xff] %vm523, 0.0
  %3756 = vst.msk [vmem:[#allocation2 + $0x50] sm:$0xff] %vm523, 0.0
  %3757 = vst.msk [vmem:[#allocation2 + $0x58] sm:$0x3] %vm3747, 0.0
  %3758 = vst.msk [vmem:[#allocation2 + $0x60] sm:$0xff] %vm523, 0.0
  %3759 = vst.msk [vmem:[#allocation2 + $0x68] sm:$0xff] %vm523, 0.0
  %3760 = vst.msk [vmem:[#allocation2 + $0x70] sm:$0x3] %vm3747, 0.0
  %3761 = vst.msk [vmem:[#allocation2 + $0x78] sm:$0xff] %vm523, 0.0
  %3762 = vst.msk [vmem:[#allocation2 + $0x80] sm:$0xff] %vm523, 0.0
  %3763 = vst.msk [vmem:[#allocation2 + $0x88] sm:$0x3] %vm3747, 0.0
  %3764 = vst.msk [vmem:[#allocation2 + $0x90] sm:$0xff] %vm523, 0.0
  %3765 = vst.msk [vmem:[#allocation2 + $0x98] sm:$0xff] %vm523, 0.0
  %3766 = vst.msk [vmem:[#allocation2 + $0xa0] sm:$0x3] %vm3747, 0.0
  %3767 = vst.msk [vmem:[#allocation2 + $0xa8] sm:$0xff] %vm523, 0.0
  %3768 = vst.msk [vmem:[#allocation2 + $0xb0] sm:$0xff] %vm523, 0.0
  %3769 = vst.msk [vmem:[#allocation2 + $0xb8] sm:$0x3] %vm3747, 0.0
  %3770 = vst.msk [vmem:[#allocation2 + $0xc0] sm:$0xff] %vm523, 0.0
  %3771 = vst.msk [vmem:[#allocation2 + $0xc8] sm:$0xff] %vm523, 0.0
  %3772 = vst.msk [vmem:[#allocation2 + $0xd0] sm:$0x3] %vm3747, 0.0
  %3773 = vst.msk [vmem:[#allocation2 + $0xd8] sm:$0xff] %vm523, 0.0
  %3774 = vst.msk [vmem:[#allocation2 + $0xe0] sm:$0xff] %vm523, 0.0
  %3775 = vst.msk [vmem:[#allocation2 + $0xe8] sm:$0x3] %vm3747, 0.0
  %3776 = vst.msk [vmem:[#allocation2 + $0xf0] sm:$0xff] %vm523, 0.0
  %3777 = vst.msk [vmem:[#allocation2 + $0xf8] sm:$0xff] %vm523, 0.0
  %3778 = vst.msk [vmem:[#allocation2 + $0x100] sm:$0x3] %vm3747, 0.0
  %3779 = vst.msk [vmem:[#allocation2 + $0x108] sm:$0xff] %vm523, 0.0
  %3780 = vst.msk [vmem:[#allocation2 + $0x110] sm:$0xff] %vm523, 0.0
  %3781 = vst.msk [vmem:[#allocation2 + $0x118] sm:$0x3] %vm3747, 0.0
  %3782 = vst.msk [vmem:[#allocation2 + $0x120] sm:$0xff] %vm523, 0.0
  %3783 = vst.msk [vmem:[#allocation2 + $0x128] sm:$0xff] %vm523, 0.0
  %3784 = vst.msk [vmem:[#allocation2 + $0x130] sm:$0x3] %vm3747, 0.0
  %3785 = vst.msk [vmem:[#allocation2 + $0x138] sm:$0xff] %vm523, 0.0
  %3786 = vst.msk [vmem:[#allocation2 + $0x140] sm:$0xff] %vm523, 0.0
  %3787 = vst.msk [vmem:[#allocation2 + $0x148] sm:$0x3] %vm3747, 0.0
  %3788 = vst.msk [vmem:[#allocation2 + $0x150] sm:$0xff] %vm523, 0.0
  %3789 = vst.msk [vmem:[#allocation2 + $0x158] sm:$0xff] %vm523, 0.0
  %3790 = vst.msk [vmem:[#allocation2 + $0x160] sm:$0x3] %vm3747, 0.0
  %3791 = vst.msk [vmem:[#allocation2 + $0x168] sm:$0xff] %vm523, 0.0
  %3792 = vst.msk [vmem:[#allocation2 + $0x170] sm:$0xff] %vm523, 0.0
  %3793 = vst.msk [vmem:[#allocation2 + $0x178] sm:$0x3] %vm3747, 0.0
  %3794 = vst.msk [vmem:[#allocation2 + $0x180] sm:$0xff] %vm523, 0.0
  %3795 = vst.msk [vmem:[#allocation2 + $0x188] sm:$0xff] %vm523, 0.0
  %3796 = vst.msk [vmem:[#allocation2 + $0x190] sm:$0x3] %vm3747, 0.0
  %3797 = vst.msk [vmem:[#allocation2 + $0x198] sm:$0xff] %vm523, 0.0
  %3798 = vst.msk [vmem:[#allocation2 + $0x1a0] sm:$0xff] %vm523, 0.0
  %3799 = vst.msk [vmem:[#allocation2 + $0x1a8] sm:$0x3] %vm3747, 0.0
  %3800 = vst.msk [vmem:[#allocation2 + $0x1b0] sm:$0xff] %vm523, 0.0
  %3801 = vst.msk [vmem:[#allocation2 + $0x1b8] sm:$0xff] %vm523, 0.0
  %3802 = vst.msk [vmem:[#allocation2 + $0x1c0] sm:$0x3] %vm3747, 0.0
  %3803 = vst.msk [vmem:[#allocation2 + $0x1c8] sm:$0xff] %vm523, 0.0
  %3804 = vst.msk [vmem:[#allocation2 + $0x1d0] sm:$0xff] %vm523, 0.0
  %3805 = vst.msk [vmem:[#allocation2 + $0x1d8] sm:$0x3] %vm3747, 0.0
  %3806 = vst.msk [vmem:[#allocation2 + $0x1e0] sm:$0xff] %vm523, 0.0
  %3807 = vst.msk [vmem:[#allocation2 + $0x1e8] sm:$0xff] %vm523, 0.0
  %3808 = vst.msk [vmem:[#allocation2 + $0x1f0] sm:$0x3] %vm3747, 0.0
  %3809 = vst.msk [vmem:[#allocation2 + $0x1f8] sm:$0xff] %vm523, 0.0
  %3810 = vst.msk [vmem:[#allocation2 + $0x200] sm:$0xff] %vm523, 0.0
  %3811 = vst.msk [vmem:[#allocation2 + $0x208] sm:$0x3] %vm3747, 0.0
  %3812 = vst.msk [vmem:[#allocation2 + $0x210] sm:$0xff] %vm523, 0.0
  %3813 = vst.msk [vmem:[#allocation2 + $0x218] sm:$0xff] %vm523, 0.0
  %3814 = vst.msk [vmem:[#allocation2 + $0x220] sm:$0x3] %vm3747, 0.0
  %3815 = vst.msk [vmem:[#allocation2 + $0x228] sm:$0xff] %vm523, 0.0
  %3816 = vst.msk [vmem:[#allocation2 + $0x230] sm:$0xff] %vm523, 0.0
  %3817 = vst.msk [vmem:[#allocation2 + $0x238] sm:$0x3] %vm3747, 0.0
  %3818 = vst.msk [vmem:[#allocation2 + $0x240] sm:$0xff] %vm523, 0.0
  %3819 = vst.msk [vmem:[#allocation2 + $0x248] sm:$0xff] %vm523, 0.0
  %3820 = vst.msk [vmem:[#allocation2 + $0x250] sm:$0x3] %vm3747, 0.0
  %3821 = vst.msk [vmem:[#allocation2 + $0x258] sm:$0xff] %vm523, 0.0
  %3822 = vst.msk [vmem:[#allocation2 + $0x260] sm:$0xff] %vm523, 0.0
  %3823 = vst.msk [vmem:[#allocation2 + $0x268] sm:$0x3] %vm3747, 0.0
  %3824 = vst.msk [vmem:[#allocation2 + $0x270] sm:$0xff] %vm523, 0.0
  %3825 = vst.msk [vmem:[#allocation2 + $0x278] sm:$0xff] %vm523, 0.0
  %3826 = vst.msk [vmem:[#allocation2 + $0x280] sm:$0x3] %vm3747, 0.0
  %3827 = vst.msk [vmem:[#allocation2 + $0x288] sm:$0xff] %vm523, 0.0
  %3828 = vst.msk [vmem:[#allocation2 + $0x290] sm:$0xff] %vm523, 0.0
  %3829 = vst.msk [vmem:[#allocation2 + $0x298] sm:$0x3] %vm3747, 0.0
  %3830 = vst.msk [vmem:[#allocation2 + $0x2a0] sm:$0xff] %vm523, 0.0
  %3831 = vst.msk [vmem:[#allocation2 + $0x2a8] sm:$0xff] %vm523, 0.0
  %3832 = vst.msk [vmem:[#allocation2 + $0x2b0] sm:$0x3] %vm3747, 0.0
  %3833 = vst.msk [vmem:[#allocation2 + $0x2b8] sm:$0xff] %vm523, 0.0
  %3834 = vst.msk [vmem:[#allocation2 + $0x2c0] sm:$0xff] %vm523, 0.0
  %3835 = vst.msk [vmem:[#allocation2 + $0x2c8] sm:$0x3] %vm3747, 0.0
  %3836 = vst.msk [vmem:[#allocation2 + $0x2d0] sm:$0xff] %vm523, 0.0
  %3837 = vst.msk [vmem:[#allocation2 + $0x2d8] sm:$0xff] %vm523, 0.0
  %3838 = vst.msk [vmem:[#allocation2 + $0x2e0] sm:$0x3] %vm3747, 0.0
  %3839 = vst.msk [vmem:[#allocation2 + $0x2e8] sm:$0xff] %vm523, 0.0
  %3840 = vst.msk [vmem:[#allocation2 + $0x2f0] sm:$0xff] %vm523, 0.0
  %3841 = vst.msk [vmem:[#allocation2 + $0x2f8] sm:$0x3] %vm3747, 0.0
  %3842 = vst.msk [vmem:[#allocation2 + $0x300] sm:$0xff] %vm523, 0.0
  %3843 = vst.msk [vmem:[#allocation2 + $0x308] sm:$0xff] %vm523, 0.0
  %3844 = vst.msk [vmem:[#allocation2 + $0x310] sm:$0x3] %vm3747, 0.0
  %3845 = vst.msk [vmem:[#allocation2 + $0x318] sm:$0xff] %vm523, 0.0
  %3846 = vst.msk [vmem:[#allocation2 + $0x320] sm:$0xff] %vm523, 0.0
  %3847 = vst.msk [vmem:[#allocation2 + $0x328] sm:$0x3] %vm3747, 0.0
  %3848 = vst.msk [vmem:[#allocation2 + $0x330] sm:$0xff] %vm523, 0.0
  %3849 = vst.msk [vmem:[#allocation2 + $0x338] sm:$0xff] %vm523, 0.0
  %3850 = vst.msk [vmem:[#allocation2 + $0x340] sm:$0x3] %vm3747, 0.0
  %3851 = vst.msk [vmem:[#allocation2 + $0x348] sm:$0xff] %vm523, 0.0
  %3852 = vst.msk [vmem:[#allocation2 + $0x350] sm:$0xff] %vm523, 0.0
  %3853 = vst.msk [vmem:[#allocation2 + $0x358] sm:$0x3] %vm3747, 0.0
  %s3854 = scalar_lea.vmem [#allocation2], 24
  %3855 = vst.msk [vmem:[%s3854 + $0x1] sm:$0xff] %vm523, %v3681
  %3856 = vst.msk [vmem:[%s3854 + $0x9] sm:$0xff] %vm523, %v3682
  %3857 = vst.msk [vmem:[%s3854 + $0x19] sm:$0xff] %vm523, %v3683
  %3858 = vst.msk [vmem:[%s3854 + $0x21] sm:$0xff] %vm523, %v3684
  %3859 = vst.msk [vmem:[%s3854 + $0x31] sm:$0xff] %vm523, %v3685
  %3860 = vst.msk [vmem:[%s3854 + $0x39] sm:$0xff] %vm523, %v3686
  %3861 = vst.msk [vmem:[%s3854 + $0x49] sm:$0xff] %vm523, %v3687
  %3862 = vst.msk [vmem:[%s3854 + $0x51] sm:$0xff] %vm523, %v3688
  %3863 = vst.msk [vmem:[%s3854 + $0x61] sm:$0xff] %vm523, %v3689
  %3864 = vst.msk [vmem:[%s3854 + $0x69] sm:$0xff] %vm523, %v3690
  %3865 = vst.msk [vmem:[%s3854 + $0x79] sm:$0xff] %vm523, %v3691
  %3866 = vst.msk [vmem:[%s3854 + $0x81] sm:$0xff] %vm523, %v3692
  %3867 = vst.msk [vmem:[%s3854 + $0x91] sm:$0xff] %vm523, %v3693
  %3868 = vst.msk [vmem:[%s3854 + $0x99] sm:$0xff] %vm523, %v3694
  %3869 = vst.msk [vmem:[%s3854 + $0xa9] sm:$0xff] %vm523, %v3695
  %3870 = vst.msk [vmem:[%s3854 + $0xb1] sm:$0xff] %vm523, %v3696
  %3871 = vst.msk [vmem:[%s3854 + $0xc1] sm:$0xff] %vm523, %v3697
  %3872 = vst.msk [vmem:[%s3854 + $0xc9] sm:$0xff] %vm523, %v3698
  %3873 = vst.msk [vmem:[%s3854 + $0xd9] sm:$0xff] %vm523, %v3699
  %3874 = vst.msk [vmem:[%s3854 + $0xe1] sm:$0xff] %vm523, %v3700
  %3875 = vst.msk [vmem:[%s3854 + $0xf1] sm:$0xff] %vm523, %v3701
  %3876 = vst.msk [vmem:[%s3854 + $0xf9] sm:$0xff] %vm523, %v3702
  %3877 = vst.msk [vmem:[%s3854 + $0x109] sm:$0xff] %vm523, %v3703
  %3878 = vst.msk [vmem:[%s3854 + $0x111] sm:$0xff] %vm523, %v3704
  %3879 = vst.msk [vmem:[%s3854 + $0x121] sm:$0xff] %vm523, %v3705
  %3880 = vst.msk [vmem:[%s3854 + $0x129] sm:$0xff] %vm523, %v3706
  %3881 = vst.msk [vmem:[%s3854 + $0x139] sm:$0xff] %vm523, %v3707
  %3882 = vst.msk [vmem:[%s3854 + $0x141] sm:$0xff] %vm523, %v3708
  %3883 = vst.msk [vmem:[%s3854 + $0x151] sm:$0xff] %vm523, %v3709
  %3884 = vst.msk [vmem:[%s3854 + $0x159] sm:$0xff] %vm523, %v3710
  %3885 = vst.msk [vmem:[%s3854 + $0x169] sm:$0xff] %vm523, %v3711
  %3886 = vst.msk [vmem:[%s3854 + $0x171] sm:$0xff] %vm523, %v3712
  %3887 = vst.msk [vmem:[%s3854 + $0x1b1] sm:$0xff] %vm523, %v3713
  %3888 = vst.msk [vmem:[%s3854 + $0x1b9] sm:$0xff] %vm523, %v3714
  %3889 = vst.msk [vmem:[%s3854 + $0x1c9] sm:$0xff] %vm523, %v3715
  %3890 = vst.msk [vmem:[%s3854 + $0x1d1] sm:$0xff] %vm523, %v3716
  %3891 = vst.msk [vmem:[%s3854 + $0x1e1] sm:$0xff] %vm523, %v3717
  %3892 = vst.msk [vmem:[%s3854 + $0x1e9] sm:$0xff] %vm523, %v3718
  %3893 = vst.msk [vmem:[%s3854 + $0x1f9] sm:$0xff] %vm523, %v3719
  %3894 = vst.msk [vmem:[%s3854 + $0x201] sm:$0xff] %vm523, %v3720
  %3895 = vst.msk [vmem:[%s3854 + $0x211] sm:$0xff] %vm523, %v3721
  %3896 = vst.msk [vmem:[%s3854 + $0x219] sm:$0xff] %vm523, %v3722
  %3897 = vst.msk [vmem:[%s3854 + $0x229] sm:$0xff] %vm523, %v3723
  %3898 = vst.msk [vmem:[%s3854 + $0x231] sm:$0xff] %vm523, %v3724
  %3899 = vst.msk [vmem:[%s3854 + $0x241] sm:$0xff] %vm523, %v3725
  %3900 = vst.msk [vmem:[%s3854 + $0x249] sm:$0xff] %vm523, %v3726
  %3901 = vst.msk [vmem:[%s3854 + $0x259] sm:$0xff] %vm523, %v3727
  %3902 = vst.msk [vmem:[%s3854 + $0x261] sm:$0xff] %vm523, %v3728
  %3903 = vst.msk [vmem:[%s3854 + $0x271] sm:$0xff] %vm523, %v3729
  %3904 = vst.msk [vmem:[%s3854 + $0x279] sm:$0xff] %vm523, %v3730
  %3905 = vst.msk [vmem:[%s3854 + $0x289] sm:$0xff] %vm523, %v3731
  %3906 = vst.msk [vmem:[%s3854 + $0x291] sm:$0xff] %vm523, %v3732
  %3907 = vst.msk [vmem:[%s3854 + $0x2a1] sm:$0xff] %vm523, %v3733
  %3908 = vst.msk [vmem:[%s3854 + $0x2a9] sm:$0xff] %vm523, %v3734
  %3909 = vst.msk [vmem:[%s3854 + $0x2b9] sm:$0xff] %vm523, %v3735
  %3910 = vst.msk [vmem:[%s3854 + $0x2c1] sm:$0xff] %vm523, %v3736
  %3911 = vst.msk [vmem:[%s3854 + $0x2d1] sm:$0xff] %vm523, %v3737
  %3912 = vst.msk [vmem:[%s3854 + $0x2d9] sm:$0xff] %vm523, %v3738
  %3913 = vst.msk [vmem:[%s3854 + $0x2e9] sm:$0xff] %vm523, %v3739
  %3914 = vst.msk [vmem:[%s3854 + $0x2f1] sm:$0xff] %vm523, %v3740
  %3915 = vst.msk [vmem:[%s3854 + $0x301] sm:$0xff] %vm523, %v3741
  %3916 = vst.msk [vmem:[%s3854 + $0x309] sm:$0xff] %vm523, %v3742
  %3917 = vst.msk [vmem:[%s3854 + $0x319] sm:$0xff] %vm523, %v3743
  %3918 = vst.msk [vmem:[%s3854 + $0x321] sm:$0xff] %vm523, %v3744
  %v3919 = vld [vmem:[#allocation2] sm:$0xff]
  %v3920 = vld [vmem:[#allocation2 + $0x8] sm:$0xff]
  %v3921 = vld [vmem:[#allocation2 + $0x10] sm:$0x3]
  %v3922 = vld [vmem:[#allocation2 + $0x18] sm:$0xff]
  %v3923 = vld [vmem:[#allocation2 + $0x20] sm:$0xff]
  %v3924 = vld [vmem:[#allocation2 + $0x28] sm:$0x3]
  %v3925 = vld [vmem:[#allocation2 + $0x30] sm:$0xff]
  %v3926 = vld [vmem:[#allocation2 + $0x38] sm:$0xff]
  %v3927 = vld [vmem:[#allocation2 + $0x40] sm:$0x3]
  %v3928 = vld [vmem:[#allocation2 + $0x48] sm:$0xff]
  %v3929 = vld [vmem:[#allocation2 + $0x50] sm:$0xff]
  %v3930 = vld [vmem:[#allocation2 + $0x58] sm:$0x3]
  %v3931 = vld [vmem:[#allocation2 + $0x60] sm:$0xff]
  %v3932 = vld [vmem:[#allocation2 + $0x68] sm:$0xff]
  %v3933 = vld [vmem:[#allocation2 + $0x70] sm:$0x3]
  %v3934 = vld [vmem:[#allocation2 + $0x78] sm:$0xff]
  %v3935 = vld [vmem:[#allocation2 + $0x80] sm:$0xff]
  %v3936 = vld [vmem:[#allocation2 + $0x88] sm:$0x3]
  %v3937 = vld [vmem:[#allocation2 + $0x90] sm:$0xff]
  %v3938 = vld [vmem:[#allocation2 + $0x98] sm:$0xff]
  %v3939 = vld [vmem:[#allocation2 + $0xa0] sm:$0x3]
  %v3940 = vld [vmem:[#allocation2 + $0xa8] sm:$0xff]
  %v3941 = vld [vmem:[#allocation2 + $0xb0] sm:$0xff]
  %v3942 = vld [vmem:[#allocation2 + $0xb8] sm:$0x3]
  %v3943 = vld [vmem:[#allocation2 + $0xc0] sm:$0xff]
  %v3944 = vld [vmem:[#allocation2 + $0xc8] sm:$0xff]
  %v3945 = vld [vmem:[#allocation2 + $0xd0] sm:$0x3]
  %v3946 = vld [vmem:[#allocation2 + $0xd8] sm:$0xff]
  %v3947 = vld [vmem:[#allocation2 + $0xe0] sm:$0xff]
  %v3948 = vld [vmem:[#allocation2 + $0xe8] sm:$0x3]
  %v3949 = vld [vmem:[#allocation2 + $0xf0] sm:$0xff]
  %v3950 = vld [vmem:[#allocation2 + $0xf8] sm:$0xff]
  %v3951 = vld [vmem:[#allocation2 + $0x100] sm:$0x3]
  %v3952 = vld [vmem:[#allocation2 + $0x108] sm:$0xff]
  %v3953 = vld [vmem:[#allocation2 + $0x110] sm:$0xff]
  %v3954 = vld [vmem:[#allocation2 + $0x118] sm:$0x3]
  %v3955 = vld [vmem:[#allocation2 + $0x120] sm:$0xff]
  %v3956 = vld [vmem:[#allocation2 + $0x128] sm:$0xff]
  %v3957 = vld [vmem:[#allocation2 + $0x130] sm:$0x3]
  %v3958 = vld [vmem:[#allocation2 + $0x138] sm:$0xff]
  %v3959 = vld [vmem:[#allocation2 + $0x140] sm:$0xff]
  %v3960 = vld [vmem:[#allocation2 + $0x148] sm:$0x3]
  %v3961 = vld [vmem:[#allocation2 + $0x150] sm:$0xff]
  %v3962 = vld [vmem:[#allocation2 + $0x158] sm:$0xff]
  %v3963 = vld [vmem:[#allocation2 + $0x160] sm:$0x3]
  %v3964 = vld [vmem:[#allocation2 + $0x168] sm:$0xff]
  %v3965 = vld [vmem:[#allocation2 + $0x170] sm:$0xff]
  %v3966 = vld [vmem:[#allocation2 + $0x178] sm:$0x3]
  %v3967 = vld [vmem:[#allocation2 + $0x180] sm:$0xff]
  %v3968 = vld [vmem:[#allocation2 + $0x188] sm:$0xff]
  %v3969 = vld [vmem:[#allocation2 + $0x190] sm:$0x3]
  %v3970 = vld [vmem:[#allocation2 + $0x198] sm:$0xff]
  %v3971 = vld [vmem:[#allocation2 + $0x1a0] sm:$0xff]
  %v3972 = vld [vmem:[#allocation2 + $0x1a8] sm:$0x3]
  %v3973 = vld [vmem:[#allocation2 + $0x1b0] sm:$0xff]
  %v3974 = vld [vmem:[#allocation2 + $0x1b8] sm:$0xff]
  %v3975 = vld [vmem:[#allocation2 + $0x1c0] sm:$0x3]
  %v3976 = vld [vmem:[#allocation2 + $0x1c8] sm:$0xff]
  %v3977 = vld [vmem:[#allocation2 + $0x1d0] sm:$0xff]
  %v3978 = vld [vmem:[#allocation2 + $0x1d8] sm:$0x3]
  %v3979 = vld [vmem:[#allocation2 + $0x1e0] sm:$0xff]
  %v3980 = vld [vmem:[#allocation2 + $0x1e8] sm:$0xff]
  %v3981 = vld [vmem:[#allocation2 + $0x1f0] sm:$0x3]
  %v3982 = vld [vmem:[#allocation2 + $0x1f8] sm:$0xff]
  %v3983 = vld [vmem:[#allocation2 + $0x200] sm:$0xff]
  %v3984 = vld [vmem:[#allocation2 + $0x208] sm:$0x3]
  %v3985 = vld [vmem:[#allocation2 + $0x210] sm:$0xff]
  %v3986 = vld [vmem:[#allocation2 + $0x218] sm:$0xff]
  %v3987 = vld [vmem:[#allocation2 + $0x220] sm:$0x3]
  %v3988 = vld [vmem:[#allocation2 + $0x228] sm:$0xff]
  %v3989 = vld [vmem:[#allocation2 + $0x230] sm:$0xff]
  %v3990 = vld [vmem:[#allocation2 + $0x238] sm:$0x3]
  %v3991 = vld [vmem:[#allocation2 + $0x240] sm:$0xff]
  %v3992 = vld [vmem:[#allocation2 + $0x248] sm:$0xff]
  %v3993 = vld [vmem:[#allocation2 + $0x250] sm:$0x3]
  %v3994 = vld [vmem:[#allocation2 + $0x258] sm:$0xff]
  %v3995 = vld [vmem:[#allocation2 + $0x260] sm:$0xff]
  %v3996 = vld [vmem:[#allocation2 + $0x268] sm:$0x3]
  %v3997 = vld [vmem:[#allocation2 + $0x270] sm:$0xff]
  %v3998 = vld [vmem:[#allocation2 + $0x278] sm:$0xff]
  %v3999 = vld [vmem:[#allocation2 + $0x280] sm:$0x3]
  %v4000 = vld [vmem:[#allocation2 + $0x288] sm:$0xff]
  %v4001 = vld [vmem:[#allocation2 + $0x290] sm:$0xff]
  %v4002 = vld [vmem:[#allocation2 + $0x298] sm:$0x3]
  %v4003 = vld [vmem:[#allocation2 + $0x2a0] sm:$0xff]
  %v4004 = vld [vmem:[#allocation2 + $0x2a8] sm:$0xff]
  %v4005 = vld [vmem:[#allocation2 + $0x2b0] sm:$0x3]
  %v4006 = vld [vmem:[#allocation2 + $0x2b8] sm:$0xff]
  %v4007 = vld [vmem:[#allocation2 + $0x2c0] sm:$0xff]
  %v4008 = vld [vmem:[#allocation2 + $0x2c8] sm:$0x3]
  %v4009 = vld [vmem:[#allocation2 + $0x2d0] sm:$0xff]
  %v4010 = vld [vmem:[#allocation2 + $0x2d8] sm:$0xff]
  %v4011 = vld [vmem:[#allocation2 + $0x2e0] sm:$0x3]
  %v4012 = vld [vmem:[#allocation2 + $0x2e8] sm:$0xff]
  %v4013 = vld [vmem:[#allocation2 + $0x2f0] sm:$0xff]
  %v4014 = vld [vmem:[#allocation2 + $0x2f8] sm:$0x3]
  %v4015 = vld [vmem:[#allocation2 + $0x300] sm:$0xff]
  %v4016 = vld [vmem:[#allocation2 + $0x308] sm:$0xff]
  %v4017 = vld [vmem:[#allocation2 + $0x310] sm:$0x3]
  %v4018 = vld [vmem:[#allocation2 + $0x318] sm:$0xff]
  %v4019 = vld [vmem:[#allocation2 + $0x320] sm:$0xff]
  %v4020 = vld [vmem:[#allocation2 + $0x328] sm:$0x3]
  %v4021 = vld [vmem:[#allocation2 + $0x330] sm:$0xff]
  %v4022 = vld [vmem:[#allocation2 + $0x338] sm:$0xff]
  %v4023 = vld [vmem:[#allocation2 + $0x340] sm:$0x3]
  %v4024 = vld [vmem:[#allocation2 + $0x348] sm:$0xff]
  %v4025 = vld [vmem:[#allocation2 + $0x350] sm:$0xff]
  %v4026 = vld [vmem:[#allocation2 + $0x358] sm:$0x3]
  %v4027 = vpack.c.bf16 %v3920, %v3919
  %v4028 = vpack.c.bf16 %v3923, %v3922
  %v4029 = vpack.c.bf16 %v3926, %v3925
  %v4030 = vpack.c.bf16 %v3929, %v3928
  %v4031 = vpack.c.bf16 %v3932, %v3931
  %v4032 = vpack.c.bf16 %v3935, %v3934
  %v4033 = vpack.c.bf16 %v3938, %v3937
  %v4034 = vpack.c.bf16 %v3941, %v3940
  %v4035 = vpack.c.bf16 %v3944, %v3943
  %v4036 = vpack.c.bf16 %v3947, %v3946
  %v4037 = vpack.c.bf16 %v3950, %v3949
  %v4038 = vpack.c.bf16 %v3953, %v3952
  %v4039 = vpack.c.bf16 %v3956, %v3955
  %v4040 = vpack.c.bf16 %v3959, %v3958
  %v4041 = vpack.c.bf16 %v3962, %v3961
  %v4042 = vpack.c.bf16 %v3965, %v3964
  %v4043 = vpack.c.bf16 %v3974, %v3973
  %v4044 = vpack.c.bf16 %v3977, %v3976
  %v4045 = vpack.c.bf16 %v3980, %v3979
  %v4046 = vpack.c.bf16 %v3983, %v3982
  %v4047 = vpack.c.bf16 %v3986, %v3985
  %v4048 = vpack.c.bf16 %v3989, %v3988
  %v4049 = vpack.c.bf16 %v3992, %v3991
  %v4050 = vpack.c.bf16 %v3995, %v3994
  %v4051 = vpack.c.bf16 %v3998, %v3997
  %v4052 = vpack.c.bf16 %v4001, %v4000
  %v4053 = vpack.c.bf16 %v4004, %v4003
  %v4054 = vpack.c.bf16 %v4007, %v4006
  %v4055 = vpack.c.bf16 %v4010, %v4009
  %v4056 = vpack.c.bf16 %v4013, %v4012
  %v4057 = vpack.c.bf16 %v4016, %v4015
  %v4058 = vpack.c.bf16 %v4019, %v4018
  %v4059 = vld [vmem:[%s4] sm:$0x3]
  %v4156 = vrot.slane %v3919, 1
  %v4157 = vrot.slane %v3920, 1
  %v4158 = vsel %vm264, %v4156, %v4157
  %v4159 = vrot.slane %v3921, 1
  %v4160 = vsel %vm264, %v4157, %v4159
  %v4161 = vrot.slane %v3922, 1
  %v4162 = vrot.slane %v3923, 1
  %v4163 = vsel %vm264, %v4161, %v4162
  %v4164 = vrot.slane %v3924, 1
  %v4165 = vsel %vm264, %v4162, %v4164
  %v4166 = vrot.slane %v3925, 1
  %v4167 = vrot.slane %v3926, 1
  %v4168 = vsel %vm264, %v4166, %v4167
  %v4169 = vrot.slane %v3927, 1
  %v4170 = vsel %vm264, %v4167, %v4169
  %v4171 = vrot.slane %v3928, 1
  %v4172 = vrot.slane %v3929, 1
  %v4173 = vsel %vm264, %v4171, %v4172
  %v4174 = vrot.slane %v3930, 1
  %v4175 = vsel %vm264, %v4172, %v4174
  %v4176 = vrot.slane %v3931, 1
  %v4177 = vrot.slane %v3932, 1
  %v4178 = vsel %vm264, %v4176, %v4177
  %v4179 = vrot.slane %v3933, 1
  %v4180 = vsel %vm264, %v4177, %v4179
  %v4181 = vrot.slane %v3934, 1
  %v4182 = vrot.slane %v3935, 1
  %v4183 = vsel %vm264, %v4181, %v4182
  %v4184 = vrot.slane %v3936, 1
  %v4185 = vsel %vm264, %v4182, %v4184
  %v4186 = vrot.slane %v3937, 1
  %v4187 = vrot.slane %v3938, 1
  %v4188 = vsel %vm264, %v4186, %v4187
  %v4189 = vrot.slane %v3939, 1
  %v4190 = vsel %vm264, %v4187, %v4189
  %v4191 = vrot.slane %v3940, 1
  %v4192 = vrot.slane %v3941, 1
  %v4193 = vsel %vm264, %v4191, %v4192
  %v4194 = vrot.slane %v3942, 1
  %v4195 = vsel %vm264, %v4192, %v4194
  %v4196 = vrot.slane %v3943, 1
  %v4197 = vrot.slane %v3944, 1
  %v4198 = vsel %vm264, %v4196, %v4197
  %v4199 = vrot.slane %v3945, 1
  %v4200 = vsel %vm264, %v4197, %v4199
  %v4201 = vrot.slane %v3946, 1
  %v4202 = vrot.slane %v3947, 1
  %v4203 = vsel %vm264, %v4201, %v4202
  %v4204 = vrot.slane %v3948, 1
  %v4205 = vsel %vm264, %v4202, %v4204
  %v4206 = vrot.slane %v3949, 1
  %v4207 = vrot.slane %v3950, 1
  %v4208 = vsel %vm264, %v4206, %v4207
  %v4209 = vrot.slane %v3951, 1
  %v4210 = vsel %vm264, %v4207, %v4209
  %v4211 = vrot.slane %v3952, 1
  %v4212 = vrot.slane %v3953, 1
  %v4213 = vsel %vm264, %v4211, %v4212
  %v4214 = vrot.slane %v3954, 1
  %v4215 = vsel %vm264, %v4212, %v4214
  %v4216 = vrot.slane %v3955, 1
  %v4217 = vrot.slane %v3956, 1
  %v4218 = vsel %vm264, %v4216, %v4217
  %v4219 = vrot.slane %v3957, 1
  %v4220 = vsel %vm264, %v4217, %v4219
  %v4221 = vrot.slane %v3958, 1
  %v4222 = vrot.slane %v3959, 1
  %v4223 = vsel %vm264, %v4221, %v4222
  %v4224 = vrot.slane %v3960, 1
  %v4225 = vsel %vm264, %v4222, %v4224
  %v4226 = vrot.slane %v3961, 1
  %v4227 = vrot.slane %v3962, 1
  %v4228 = vsel %vm264, %v4226, %v4227
  %v4229 = vrot.slane %v3963, 1
  %v4230 = vsel %vm264, %v4227, %v4229
  %v4231 = vrot.slane %v3964, 1
  %v4232 = vrot.slane %v3965, 1
  %v4233 = vsel %vm264, %v4231, %v4232
  %v4234 = vrot.slane %v3966, 1
  %v4235 = vsel %vm264, %v4232, %v4234
  %v4236 = vrot.slane %v3973, 1
  %v4237 = vrot.slane %v3974, 1
  %v4238 = vsel %vm264, %v4236, %v4237
  %v4239 = vrot.slane %v3975, 1
  %v4240 = vsel %vm264, %v4237, %v4239
  %v4241 = vrot.slane %v3976, 1
  %v4242 = vrot.slane %v3977, 1
  %v4243 = vsel %vm264, %v4241, %v4242
  %v4244 = vrot.slane %v3978, 1
  %v4245 = vsel %vm264, %v4242, %v4244
  %v4246 = vrot.slane %v3979, 1
  %v4247 = vrot.slane %v3980, 1
  %v4248 = vsel %vm264, %v4246, %v4247
  %v4249 = vrot.slane %v3981, 1
  %v4250 = vsel %vm264, %v4247, %v4249
  %v4251 = vrot.slane %v3982, 1
  %v4252 = vrot.slane %v3983, 1
  %v4253 = vsel %vm264, %v4251, %v4252
  %v4254 = vrot.slane %v3984, 1
  %v4255 = vsel %vm264, %v4252, %v4254
  %v4256 = vrot.slane %v3985, 1
  %v4257 = vrot.slane %v3986, 1
  %v4258 = vsel %vm264, %v4256, %v4257
  %v4259 = vrot.slane %v3987, 1
  %v4260 = vsel %vm264, %v4257, %v4259
  %v4261 = vrot.slane %v3988, 1
  %v4262 = vrot.slane %v3989, 1
  %v4263 = vsel %vm264, %v4261, %v4262
  %v4264 = vrot.slane %v3990, 1
  %v4265 = vsel %vm264, %v4262, %v4264
  %v4266 = vrot.slane %v3991, 1
  %v4267 = vrot.slane %v3992, 1
  %v4268 = vsel %vm264, %v4266, %v4267
  %v4269 = vrot.slane %v3993, 1
  %v4270 = vsel %vm264, %v4267, %v4269
  %v4271 = vrot.slane %v3994, 1
  %v4272 = vrot.slane %v3995, 1
  %v4273 = vsel %vm264, %v4271, %v4272
  %v4274 = vrot.slane %v3996, 1
  %v4275 = vsel %vm264, %v4272, %v4274
  %v4276 = vrot.slane %v3997, 1
  %v4277 = vrot.slane %v3998, 1
  %v4278 = vsel %vm264, %v4276, %v4277
  %v4279 = vrot.slane %v3999, 1
  %v4280 = vsel %vm264, %v4277, %v4279
  %v4281 = vrot.slane %v4000, 1
  %v4282 = vrot.slane %v4001, 1
  %v4283 = vsel %vm264, %v4281, %v4282
  %v4284 = vrot.slane %v4002, 1
  %v4285 = vsel %vm264, %v4282, %v4284
  %v4286 = vrot.slane %v4003, 1
  %v4287 = vrot.slane %v4004, 1
  %v4288 = vsel %vm264, %v4286, %v4287
  %v4289 = vrot.slane %v4005, 1
  %v4290 = vsel %vm264, %v4287, %v4289
  %v4291 = vrot.slane %v4006, 1
  %v4292 = vrot.slane %v4007, 1
  %v4293 = vsel %vm264, %v4291, %v4292
  %v4294 = vrot.slane %v4008, 1
  %v4295 = vsel %vm264, %v4292, %v4294
  %v4296 = vrot.slane %v4009, 1
  %v4297 = vrot.slane %v4010, 1
  %v4298 = vsel %vm264, %v4296, %v4297
  %v4299 = vrot.slane %v4011, 1
  %v4300 = vsel %vm264, %v4297, %v4299
  %v4301 = vrot.slane %v4012, 1
  %v4302 = vrot.slane %v4013, 1
  %v4303 = vsel %vm264, %v4301, %v4302
  %v4304 = vrot.slane %v4014, 1
  %v4305 = vsel %vm264, %v4302, %v4304
  %v4306 = vrot.slane %v4015, 1
  %v4307 = vrot.slane %v4016, 1
  %v4308 = vsel %vm264, %v4306, %v4307
  %v4309 = vrot.slane %v4017, 1
  %v4310 = vsel %vm264, %v4307, %v4309
  %v4311 = vrot.slane %v4018, 1
  %v4312 = vrot.slane %v4019, 1
  %v4313 = vsel %vm264, %v4311, %v4312
  %v4314 = vrot.slane %v4020, 1
  %v4315 = vsel %vm264, %v4312, %v4314
  %v4380 = vpack.c.bf16 %v4160, %v4158
  %v4381 = vpack.c.bf16 %v4165, %v4163
  %v4382 = vpack.c.bf16 %v4170, %v4168
  %v4383 = vpack.c.bf16 %v4175, %v4173
  %v4384 = vpack.c.bf16 %v4180, %v4178
  %v4385 = vpack.c.bf16 %v4185, %v4183
  %v4386 = vpack.c.bf16 %v4190, %v4188
  %v4387 = vpack.c.bf16 %v4195, %v4193
  %v4388 = vpack.c.bf16 %v4200, %v4198
  %v4389 = vpack.c.bf16 %v4205, %v4203
  %v4390 = vpack.c.bf16 %v4210, %v4208
  %v4391 = vpack.c.bf16 %v4215, %v4213
  %v4392 = vpack.c.bf16 %v4220, %v4218
  %v4393 = vpack.c.bf16 %v4225, %v4223
  %v4394 = vpack.c.bf16 %v4230, %v4228
  %v4395 = vpack.c.bf16 %v4235, %v4233
  %v4396 = vpack.c.bf16 %v4240, %v4238
  %v4397 = vpack.c.bf16 %v4245, %v4243
  %v4398 = vpack.c.bf16 %v4250, %v4248
  %v4399 = vpack.c.bf16 %v4255, %v4253
  %v4400 = vpack.c.bf16 %v4260, %v4258
  %v4401 = vpack.c.bf16 %v4265, %v4263
  %v4402 = vpack.c.bf16 %v4270, %v4268
  %v4403 = vpack.c.bf16 %v4275, %v4273
  %v4404 = vpack.c.bf16 %v4280, %v4278
  %v4405 = vpack.c.bf16 %v4285, %v4283
  %v4406 = vpack.c.bf16 %v4290, %v4288
  %v4407 = vpack.c.bf16 %v4295, %v4293
  %v4408 = vpack.c.bf16 %v4300, %v4298
  %v4409 = vpack.c.bf16 %v4305, %v4303
  %v4410 = vpack.c.bf16 %v4310, %v4308
  %v4411 = vpack.c.bf16 %v4315, %v4313
  %s4412 = scalar_lea.vmem %s4, 2
  %v4413 = vld [vmem:[%s4412] sm:$0x3]
  %v4415 = vsel %vm523, %v4380, 0
  %v4418 = vsel %vm523, %v4381, 0
  %v4421 = vsel %vm523, %v4382, 0
  %v4424 = vsel %vm523, %v4383, 0
  %v4427 = vsel %vm523, %v4384, 0
  %v4430 = vsel %vm523, %v4385, 0
  %v4433 = vsel %vm523, %v4386, 0
  %v4436 = vsel %vm523, %v4387, 0
  %v4439 = vsel %vm523, %v4388, 0
  %v4442 = vsel %vm523, %v4389, 0
  %v4445 = vsel %vm523, %v4390, 0
  %v4448 = vsel %vm523, %v4391, 0
  %v4451 = vsel %vm523, %v4392, 0
  %v4454 = vsel %vm523, %v4393, 0
  %v4457 = vsel %vm523, %v4394, 0
  %v4460 = vsel %vm523, %v4395, 0
  %v4463 = vsel %vm523, %v4396, 0
  %v4466 = vsel %vm523, %v4397, 0
  %v4469 = vsel %vm523, %v4398, 0
  %v4472 = vsel %vm523, %v4399, 0
  %v4475 = vsel %vm523, %v4400, 0
  %v4478 = vsel %vm523, %v4401, 0
  %v4481 = vsel %vm523, %v4402, 0
  %v4484 = vsel %vm523, %v4403, 0
  %v4487 = vsel %vm523, %v4404, 0
  %v4490 = vsel %vm523, %v4405, 0
  %v4493 = vsel %vm523, %v4406, 0
  %v4496 = vsel %vm523, %v4407, 0
  %v4499 = vsel %vm523, %v4408, 0
  %v4502 = vsel %vm523, %v4409, 0
  %v4505 = vsel %vm523, %v4410, 0
  %v4508 = vsel %vm523, %v4411, 0
  %v4511 = vsel %vm620, %v4413, 0
  %4513 = vmatpush.bf16.msra.mxu0 0
  %4514 = vmatpush.bf16.msra.mxu0 0
  %4515 = vmatpush.bf16.msra.mxu0 0
  %4516 = vmatpush.bf16.msra.mxu0 0
  %4517 = vmatpush.bf16.msra.mxu0 0
  %4518 = vmatpush.bf16.msra.mxu0 0
  %4519 = vmatpush.bf16.msra.mxu0 0
  %4520 = vmatpush.bf16.msra.mxu0 %v4511
  %4521 = vmatmul.bf16.gmra.mxu0 %v4415
  %v4522 = vpop.f32.mrf.mxu0
  %v4523 = vadd.f32 0.0, %v4522
  %v4524 = vpop.f32.mrf.mxu0
  %v4525 = vadd.f32 0.0, %v4524
  %4526 = vmatmul.bf16.gmra.mxu0 %v4418
  %v4527 = vpop.f32.mrf.mxu0
  %v4528 = vadd.f32 0.0, %v4527
  %v4529 = vpop.f32.mrf.mxu0
  %v4530 = vadd.f32 0.0, %v4529
  %4531 = vmatmul.bf16.gmra.mxu0 %v4421
  %v4532 = vpop.f32.mrf.mxu0
  %v4533 = vadd.f32 0.0, %v4532
  %v4534 = vpop.f32.mrf.mxu0
  %v4535 = vadd.f32 0.0, %v4534
  %4536 = vmatmul.bf16.gmra.mxu0 %v4424
  %v4537 = vpop.f32.mrf.mxu0
  %v4538 = vadd.f32 0.0, %v4537
  %v4539 = vpop.f32.mrf.mxu0
  %v4540 = vadd.f32 0.0, %v4539
  %4541 = vmatmul.bf16.gmra.mxu0 %v4427
  %v4542 = vpop.f32.mrf.mxu0
  %v4543 = vadd.f32 0.0, %v4542
  %v4544 = vpop.f32.mrf.mxu0
  %v4545 = vadd.f32 0.0, %v4544
  %4546 = vmatmul.bf16.gmra.mxu0 %v4430
  %v4547 = vpop.f32.mrf.mxu0
  %v4548 = vadd.f32 0.0, %v4547
  %v4549 = vpop.f32.mrf.mxu0
  %v4550 = vadd.f32 0.0, %v4549
  %4551 = vmatmul.bf16.gmra.mxu0 %v4433
  %v4552 = vpop.f32.mrf.mxu0
  %v4553 = vadd.f32 0.0, %v4552
  %v4554 = vpop.f32.mrf.mxu0
  %v4555 = vadd.f32 0.0, %v4554
  %4556 = vmatmul.bf16.gmra.mxu0 %v4436
  %v4557 = vpop.f32.mrf.mxu0
  %v4558 = vadd.f32 0.0, %v4557
  %v4559 = vpop.f32.mrf.mxu0
  %v4560 = vadd.f32 0.0, %v4559
  %4561 = vmatmul.bf16.gmra.mxu0 %v4439
  %v4562 = vpop.f32.mrf.mxu0
  %v4563 = vadd.f32 0.0, %v4562
  %v4564 = vpop.f32.mrf.mxu0
  %v4565 = vadd.f32 0.0, %v4564
  %4566 = vmatmul.bf16.gmra.mxu0 %v4442
  %v4567 = vpop.f32.mrf.mxu0
  %v4568 = vadd.f32 0.0, %v4567
  %v4569 = vpop.f32.mrf.mxu0
  %v4570 = vadd.f32 0.0, %v4569
  %4571 = vmatmul.bf16.gmra.mxu0 %v4445
  %v4572 = vpop.f32.mrf.mxu0
  %v4573 = vadd.f32 0.0, %v4572
  %v4574 = vpop.f32.mrf.mxu0
  %v4575 = vadd.f32 0.0, %v4574
  %4576 = vmatmul.bf16.gmra.mxu0 %v4448
  %v4577 = vpop.f32.mrf.mxu0
  %v4578 = vadd.f32 0.0, %v4577
  %v4579 = vpop.f32.mrf.mxu0
  %v4580 = vadd.f32 0.0, %v4579
  %4581 = vmatmul.bf16.gmra.mxu0 %v4451
  %v4582 = vpop.f32.mrf.mxu0
  %v4583 = vadd.f32 0.0, %v4582
  %v4584 = vpop.f32.mrf.mxu0
  %v4585 = vadd.f32 0.0, %v4584
  %4586 = vmatmul.bf16.gmra.mxu0 %v4454
  %v4587 = vpop.f32.mrf.mxu0
  %v4588 = vadd.f32 0.0, %v4587
  %v4589 = vpop.f32.mrf.mxu0
  %v4590 = vadd.f32 0.0, %v4589
  %4591 = vmatmul.bf16.gmra.mxu0 %v4457
  %v4592 = vpop.f32.mrf.mxu0
  %v4593 = vadd.f32 0.0, %v4592
  %v4594 = vpop.f32.mrf.mxu0
  %v4595 = vadd.f32 0.0, %v4594
  %4596 = vmatmul.bf16.gmra.mxu0 %v4460
  %v4597 = vpop.f32.mrf.mxu0
  %v4598 = vadd.f32 0.0, %v4597
  %v4599 = vpop.f32.mrf.mxu0
  %v4600 = vadd.f32 0.0, %v4599
  %4601 = vmatmul.bf16.gmra.mxu0 %v4463
  %v4602 = vpop.f32.mrf.mxu0
  %v4603 = vadd.f32 0.0, %v4602
  %v4604 = vpop.f32.mrf.mxu0
  %v4605 = vadd.f32 0.0, %v4604
  %4606 = vmatmul.bf16.gmra.mxu0 %v4466
  %v4607 = vpop.f32.mrf.mxu0
  %v4608 = vadd.f32 0.0, %v4607
  %v4609 = vpop.f32.mrf.mxu0
  %v4610 = vadd.f32 0.0, %v4609
  %4611 = vmatmul.bf16.gmra.mxu0 %v4469
  %v4612 = vpop.f32.mrf.mxu0
  %v4613 = vadd.f32 0.0, %v4612
  %v4614 = vpop.f32.mrf.mxu0
  %v4615 = vadd.f32 0.0, %v4614
  %4616 = vmatmul.bf16.gmra.mxu0 %v4472
  %v4617 = vpop.f32.mrf.mxu0
  %v4618 = vadd.f32 0.0, %v4617
  %v4619 = vpop.f32.mrf.mxu0
  %v4620 = vadd.f32 0.0, %v4619
  %4621 = vmatmul.bf16.gmra.mxu0 %v4475
  %v4622 = vpop.f32.mrf.mxu0
  %v4623 = vadd.f32 0.0, %v4622
  %v4624 = vpop.f32.mrf.mxu0
  %v4625 = vadd.f32 0.0, %v4624
  %4626 = vmatmul.bf16.gmra.mxu0 %v4478
  %v4627 = vpop.f32.mrf.mxu0
  %v4628 = vadd.f32 0.0, %v4627
  %v4629 = vpop.f32.mrf.mxu0
  %v4630 = vadd.f32 0.0, %v4629
  %4631 = vmatmul.bf16.gmra.mxu0 %v4481
  %v4632 = vpop.f32.mrf.mxu0
  %v4633 = vadd.f32 0.0, %v4632
  %v4634 = vpop.f32.mrf.mxu0
  %v4635 = vadd.f32 0.0, %v4634
  %4636 = vmatmul.bf16.gmra.mxu0 %v4484
  %v4637 = vpop.f32.mrf.mxu0
  %v4638 = vadd.f32 0.0, %v4637
  %v4639 = vpop.f32.mrf.mxu0
  %v4640 = vadd.f32 0.0, %v4639
  %4641 = vmatmul.bf16.gmra.mxu0 %v4487
  %v4642 = vpop.f32.mrf.mxu0
  %v4643 = vadd.f32 0.0, %v4642
  %v4644 = vpop.f32.mrf.mxu0
  %v4645 = vadd.f32 0.0, %v4644
  %4646 = vmatmul.bf16.gmra.mxu0 %v4490
  %v4647 = vpop.f32.mrf.mxu0
  %v4648 = vadd.f32 0.0, %v4647
  %v4649 = vpop.f32.mrf.mxu0
  %v4650 = vadd.f32 0.0, %v4649
  %4651 = vmatmul.bf16.gmra.mxu0 %v4493
  %v4652 = vpop.f32.mrf.mxu0
  %v4653 = vadd.f32 0.0, %v4652
  %v4654 = vpop.f32.mrf.mxu0
  %v4655 = vadd.f32 0.0, %v4654
  %4656 = vmatmul.bf16.gmra.mxu0 %v4496
  %v4657 = vpop.f32.mrf.mxu0
  %v4658 = vadd.f32 0.0, %v4657
  %v4659 = vpop.f32.mrf.mxu0
  %v4660 = vadd.f32 0.0, %v4659
  %4661 = vmatmul.bf16.gmra.mxu0 %v4499
  %v4662 = vpop.f32.mrf.mxu0
  %v4663 = vadd.f32 0.0, %v4662
  %v4664 = vpop.f32.mrf.mxu0
  %v4665 = vadd.f32 0.0, %v4664
  %4666 = vmatmul.bf16.gmra.mxu0 %v4502
  %v4667 = vpop.f32.mrf.mxu0
  %v4668 = vadd.f32 0.0, %v4667
  %v4669 = vpop.f32.mrf.mxu0
  %v4670 = vadd.f32 0.0, %v4669
  %4671 = vmatmul.bf16.gmra.mxu0 %v4505
  %v4672 = vpop.f32.mrf.mxu0
  %v4673 = vadd.f32 0.0, %v4672
  %v4674 = vpop.f32.mrf.mxu0
  %v4675 = vadd.f32 0.0, %v4674
  %4676 = vmatmul.bf16.gmra.mxu0 %v4508
  %v4677 = vpop.f32.mrf.mxu0
  %v4678 = vadd.f32 0.0, %v4677
  %v4679 = vpop.f32.mrf.mxu0
  %v4680 = vadd.f32 0.0, %v4679
  %4681 = vdwg.mxu0
  %v4683 = vsel %vm523, %v4027, 0
  %v4686 = vsel %vm523, %v4028, 0
  %v4689 = vsel %vm523, %v4029, 0
  %v4692 = vsel %vm523, %v4030, 0
  %v4695 = vsel %vm523, %v4031, 0
  %v4698 = vsel %vm523, %v4032, 0
  %v4701 = vsel %vm523, %v4033, 0
  %v4704 = vsel %vm523, %v4034, 0
  %v4707 = vsel %vm523, %v4035, 0
  %v4710 = vsel %vm523, %v4036, 0
  %v4713 = vsel %vm523, %v4037, 0
  %v4716 = vsel %vm523, %v4038, 0
  %v4719 = vsel %vm523, %v4039, 0
  %v4722 = vsel %vm523, %v4040, 0
  %v4725 = vsel %vm523, %v4041, 0
  %v4728 = vsel %vm523, %v4042, 0
  %v4731 = vsel %vm523, %v4043, 0
  %v4734 = vsel %vm523, %v4044, 0
  %v4737 = vsel %vm523, %v4045, 0
  %v4740 = vsel %vm523, %v4046, 0
  %v4743 = vsel %vm523, %v4047, 0
  %v4746 = vsel %vm523, %v4048, 0
  %v4749 = vsel %vm523, %v4049, 0
  %v4752 = vsel %vm523, %v4050, 0
  %v4755 = vsel %vm523, %v4051, 0
  %v4758 = vsel %vm523, %v4052, 0
  %v4761 = vsel %vm523, %v4053, 0
  %v4764 = vsel %vm523, %v4054, 0
  %v4767 = vsel %vm523, %v4055, 0
  %v4770 = vsel %vm523, %v4056, 0
  %v4773 = vsel %vm523, %v4057, 0
  %v4776 = vsel %vm523, %v4058, 0
  %v4779 = vsel %vm620, %v4059, 0
  %4781 = vmatpush.bf16.msra.mxu0 0
  %4782 = vmatpush.bf16.msra.mxu0 0
  %4783 = vmatpush.bf16.msra.mxu0 0
  %4784 = vmatpush.bf16.msra.mxu0 0
  %4785 = vmatpush.bf16.msra.mxu0 0
  %4786 = vmatpush.bf16.msra.mxu0 0
  %4787 = vmatpush.bf16.msra.mxu0 0
  %4788 = vmatpush.bf16.msra.mxu0 %v4779
  %4789 = vmatmul.bf16.gmra.mxu0 %v4683
  %v4790 = vpop.f32.mrf.mxu0
  %v4791 = vadd.f32 %v4523, %v4790
  %v4792 = vpop.f32.mrf.mxu0
  %v4793 = vadd.f32 %v4525, %v4792
  %4794 = vmatmul.bf16.gmra.mxu0 %v4686
  %v4795 = vpop.f32.mrf.mxu0
  %v4796 = vadd.f32 %v4528, %v4795
  %v4797 = vpop.f32.mrf.mxu0
  %v4798 = vadd.f32 %v4530, %v4797
  %4799 = vmatmul.bf16.gmra.mxu0 %v4689
  %v4800 = vpop.f32.mrf.mxu0
  %v4801 = vadd.f32 %v4533, %v4800
  %v4802 = vpop.f32.mrf.mxu0
  %v4803 = vadd.f32 %v4535, %v4802
  %4804 = vmatmul.bf16.gmra.mxu0 %v4692
  %v4805 = vpop.f32.mrf.mxu0
  %v4806 = vadd.f32 %v4538, %v4805
  %v4807 = vpop.f32.mrf.mxu0
  %v4808 = vadd.f32 %v4540, %v4807
  %4809 = vmatmul.bf16.gmra.mxu0 %v4695
  %v4810 = vpop.f32.mrf.mxu0
  %v4811 = vadd.f32 %v4543, %v4810
  %v4812 = vpop.f32.mrf.mxu0
  %v4813 = vadd.f32 %v4545, %v4812
  %4814 = vmatmul.bf16.gmra.mxu0 %v4698
  %v4815 = vpop.f32.mrf.mxu0
  %v4816 = vadd.f32 %v4548, %v4815
  %v4817 = vpop.f32.mrf.mxu0
  %v4818 = vadd.f32 %v4550, %v4817
  %4819 = vmatmul.bf16.gmra.mxu0 %v4701
  %v4820 = vpop.f32.mrf.mxu0
  %v4821 = vadd.f32 %v4553, %v4820
  %v4822 = vpop.f32.mrf.mxu0
  %v4823 = vadd.f32 %v4555, %v4822
  %4824 = vmatmul.bf16.gmra.mxu0 %v4704
  %v4825 = vpop.f32.mrf.mxu0
  %v4826 = vadd.f32 %v4558, %v4825
  %v4827 = vpop.f32.mrf.mxu0
  %v4828 = vadd.f32 %v4560, %v4827
  %4829 = vmatmul.bf16.gmra.mxu0 %v4707
  %v4830 = vpop.f32.mrf.mxu0
  %v4831 = vadd.f32 %v4563, %v4830
  %v4832 = vpop.f32.mrf.mxu0
  %v4833 = vadd.f32 %v4565, %v4832
  %4834 = vmatmul.bf16.gmra.mxu0 %v4710
  %v4835 = vpop.f32.mrf.mxu0
  %v4836 = vadd.f32 %v4568, %v4835
  %v4837 = vpop.f32.mrf.mxu0
  %v4838 = vadd.f32 %v4570, %v4837
  %4839 = vmatmul.bf16.gmra.mxu0 %v4713
  %v4840 = vpop.f32.mrf.mxu0
  %v4841 = vadd.f32 %v4573, %v4840
  %v4842 = vpop.f32.mrf.mxu0
  %v4843 = vadd.f32 %v4575, %v4842
  %4844 = vmatmul.bf16.gmra.mxu0 %v4716
  %v4845 = vpop.f32.mrf.mxu0
  %v4846 = vadd.f32 %v4578, %v4845
  %v4847 = vpop.f32.mrf.mxu0
  %v4848 = vadd.f32 %v4580, %v4847
  %4849 = vmatmul.bf16.gmra.mxu0 %v4719
  %v4850 = vpop.f32.mrf.mxu0
  %v4851 = vadd.f32 %v4583, %v4850
  %v4852 = vpop.f32.mrf.mxu0
  %v4853 = vadd.f32 %v4585, %v4852
  %4854 = vmatmul.bf16.gmra.mxu0 %v4722
  %v4855 = vpop.f32.mrf.mxu0
  %v4856 = vadd.f32 %v4588, %v4855
  %v4857 = vpop.f32.mrf.mxu0
  %v4858 = vadd.f32 %v4590, %v4857
  %4859 = vmatmul.bf16.gmra.mxu0 %v4725
  %v4860 = vpop.f32.mrf.mxu0
  %v4861 = vadd.f32 %v4593, %v4860
  %v4862 = vpop.f32.mrf.mxu0
  %v4863 = vadd.f32 %v4595, %v4862
  %4864 = vmatmul.bf16.gmra.mxu0 %v4728
  %v4865 = vpop.f32.mrf.mxu0
  %v4866 = vadd.f32 %v4598, %v4865
  %v4867 = vpop.f32.mrf.mxu0
  %v4868 = vadd.f32 %v4600, %v4867
  %4869 = vmatmul.bf16.gmra.mxu0 %v4731
  %v4870 = vpop.f32.mrf.mxu0
  %v4871 = vadd.f32 %v4603, %v4870
  %v4872 = vpop.f32.mrf.mxu0
  %v4873 = vadd.f32 %v4605, %v4872
  %4874 = vmatmul.bf16.gmra.mxu0 %v4734
  %v4875 = vpop.f32.mrf.mxu0
  %v4876 = vadd.f32 %v4608, %v4875
  %v4877 = vpop.f32.mrf.mxu0
  %v4878 = vadd.f32 %v4610, %v4877
  %4879 = vmatmul.bf16.gmra.mxu0 %v4737
  %v4880 = vpop.f32.mrf.mxu0
  %v4881 = vadd.f32 %v4613, %v4880
  %v4882 = vpop.f32.mrf.mxu0
  %v4883 = vadd.f32 %v4615, %v4882
  %4884 = vmatmul.bf16.gmra.mxu0 %v4740
  %v4885 = vpop.f32.mrf.mxu0
  %v4886 = vadd.f32 %v4618, %v4885
  %v4887 = vpop.f32.mrf.mxu0
  %v4888 = vadd.f32 %v4620, %v4887
  %4889 = vmatmul.bf16.gmra.mxu0 %v4743
  %v4890 = vpop.f32.mrf.mxu0
  %v4891 = vadd.f32 %v4623, %v4890
  %v4892 = vpop.f32.mrf.mxu0
  %v4893 = vadd.f32 %v4625, %v4892
  %4894 = vmatmul.bf16.gmra.mxu0 %v4746
  %v4895 = vpop.f32.mrf.mxu0
  %v4896 = vadd.f32 %v4628, %v4895
  %v4897 = vpop.f32.mrf.mxu0
  %v4898 = vadd.f32 %v4630, %v4897
  %4899 = vmatmul.bf16.gmra.mxu0 %v4749
  %v4900 = vpop.f32.mrf.mxu0
  %v4901 = vadd.f32 %v4633, %v4900
  %v4902 = vpop.f32.mrf.mxu0
  %v4903 = vadd.f32 %v4635, %v4902
  %4904 = vmatmul.bf16.gmra.mxu0 %v4752
  %v4905 = vpop.f32.mrf.mxu0
  %v4906 = vadd.f32 %v4638, %v4905
  %v4907 = vpop.f32.mrf.mxu0
  %v4908 = vadd.f32 %v4640, %v4907
  %4909 = vmatmul.bf16.gmra.mxu0 %v4755
  %v4910 = vpop.f32.mrf.mxu0
  %v4911 = vadd.f32 %v4643, %v4910
  %v4912 = vpop.f32.mrf.mxu0
  %v4913 = vadd.f32 %v4645, %v4912
  %4914 = vmatmul.bf16.gmra.mxu0 %v4758
  %v4915 = vpop.f32.mrf.mxu0
  %v4916 = vadd.f32 %v4648, %v4915
  %v4917 = vpop.f32.mrf.mxu0
  %v4918 = vadd.f32 %v4650, %v4917
  %4919 = vmatmul.bf16.gmra.mxu0 %v4761
  %v4920 = vpop.f32.mrf.mxu0
  %v4921 = vadd.f32 %v4653, %v4920
  %v4922 = vpop.f32.mrf.mxu0
  %v4923 = vadd.f32 %v4655, %v4922
  %4924 = vmatmul.bf16.gmra.mxu0 %v4764
  %v4925 = vpop.f32.mrf.mxu0
  %v4926 = vadd.f32 %v4658, %v4925
  %v4927 = vpop.f32.mrf.mxu0
  %v4928 = vadd.f32 %v4660, %v4927
  %4929 = vmatmul.bf16.gmra.mxu0 %v4767
  %v4930 = vpop.f32.mrf.mxu0
  %v4931 = vadd.f32 %v4663, %v4930
  %v4932 = vpop.f32.mrf.mxu0
  %v4933 = vadd.f32 %v4665, %v4932
  %4934 = vmatmul.bf16.gmra.mxu0 %v4770
  %v4935 = vpop.f32.mrf.mxu0
  %v4936 = vadd.f32 %v4668, %v4935
  %v4937 = vpop.f32.mrf.mxu0
  %v4938 = vadd.f32 %v4670, %v4937
  %4939 = vmatmul.bf16.gmra.mxu0 %v4773
  %v4940 = vpop.f32.mrf.mxu0
  %v4941 = vadd.f32 %v4673, %v4940
  %v4942 = vpop.f32.mrf.mxu0
  %v4943 = vadd.f32 %v4675, %v4942
  %4944 = vmatmul.bf16.gmra.mxu0 %v4776
  %v4945 = vpop.f32.mrf.mxu0
  %v4946 = vadd.f32 %v4678, %v4945
  %v4947 = vpop.f32.mrf.mxu0
  %v4948 = vadd.f32 %v4680, %v4947
  %4949 = vdwg.mxu0
  %v4950 = vrot.slane %v3919, 2
  %v4951 = vrot.slane %v3920, 2
  %v4952 = vsel %vm1061, %v4950, %v4951
  %v4953 = vrot.slane %v3921, 2
  %v4954 = vsel %vm1061, %v4951, %v4953
  %v4955 = vrot.slane %v3922, 2
  %v4956 = vrot.slane %v3923, 2
  %v4957 = vsel %vm1061, %v4955, %v4956
  %v4958 = vrot.slane %v3924, 2
  %v4959 = vsel %vm1061, %v4956, %v4958
  %v4960 = vrot.slane %v3925, 2
  %v4961 = vrot.slane %v3926, 2
  %v4962 = vsel %vm1061, %v4960, %v4961
  %v4963 = vrot.slane %v3927, 2
  %v4964 = vsel %vm1061, %v4961, %v4963
  %v4965 = vrot.slane %v3928, 2
  %v4966 = vrot.slane %v3929, 2
  %v4967 = vsel %vm1061, %v4965, %v4966
  %v4968 = vrot.slane %v3930, 2
  %v4969 = vsel %vm1061, %v4966, %v4968
  %v4970 = vrot.slane %v3931, 2
  %v4971 = vrot.slane %v3932, 2
  %v4972 = vsel %vm1061, %v4970, %v4971
  %v4973 = vrot.slane %v3933, 2
  %v4974 = vsel %vm1061, %v4971, %v4973
  %v4975 = vrot.slane %v3934, 2
  %v4976 = vrot.slane %v3935, 2
  %v4977 = vsel %vm1061, %v4975, %v4976
  %v4978 = vrot.slane %v3936, 2
  %v4979 = vsel %vm1061, %v4976, %v4978
  %v4980 = vrot.slane %v3937, 2
  %v4981 = vrot.slane %v3938, 2
  %v4982 = vsel %vm1061, %v4980, %v4981
  %v4983 = vrot.slane %v3939, 2
  %v4984 = vsel %vm1061, %v4981, %v4983
  %v4985 = vrot.slane %v3940, 2
  %v4986 = vrot.slane %v3941, 2
  %v4987 = vsel %vm1061, %v4985, %v4986
  %v4988 = vrot.slane %v3942, 2
  %v4989 = vsel %vm1061, %v4986, %v4988
  %v4990 = vrot.slane %v3943, 2
  %v4991 = vrot.slane %v3944, 2
  %v4992 = vsel %vm1061, %v4990, %v4991
  %v4993 = vrot.slane %v3945, 2
  %v4994 = vsel %vm1061, %v4991, %v4993
  %v4995 = vrot.slane %v3946, 2
  %v4996 = vrot.slane %v3947, 2
  %v4997 = vsel %vm1061, %v4995, %v4996
  %v4998 = vrot.slane %v3948, 2
  %v4999 = vsel %vm1061, %v4996, %v4998
  %v5000 = vrot.slane %v3949, 2
  %v5001 = vrot.slane %v3950, 2
  %v5002 = vsel %vm1061, %v5000, %v5001
  %v5003 = vrot.slane %v3951, 2
  %v5004 = vsel %vm1061, %v5001, %v5003
  %v5005 = vrot.slane %v3952, 2
  %v5006 = vrot.slane %v3953, 2
  %v5007 = vsel %vm1061, %v5005, %v5006
  %v5008 = vrot.slane %v3954, 2
  %v5009 = vsel %vm1061, %v5006, %v5008
  %v5010 = vrot.slane %v3955, 2
  %v5011 = vrot.slane %v3956, 2
  %v5012 = vsel %vm1061, %v5010, %v5011
  %v5013 = vrot.slane %v3957, 2
  %v5014 = vsel %vm1061, %v5011, %v5013
  %v5015 = vrot.slane %v3958, 2
  %v5016 = vrot.slane %v3959, 2
  %v5017 = vsel %vm1061, %v5015, %v5016
  %v5018 = vrot.slane %v3960, 2
  %v5019 = vsel %vm1061, %v5016, %v5018
  %v5020 = vrot.slane %v3961, 2
  %v5021 = vrot.slane %v3962, 2
  %v5022 = vsel %vm1061, %v5020, %v5021
  %v5023 = vrot.slane %v3963, 2
  %v5024 = vsel %vm1061, %v5021, %v5023
  %v5025 = vrot.slane %v3964, 2
  %v5026 = vrot.slane %v3965, 2
  %v5027 = vsel %vm1061, %v5025, %v5026
  %v5028 = vrot.slane %v3966, 2
  %v5029 = vsel %vm1061, %v5026, %v5028
  %v5030 = vrot.slane %v3973, 2
  %v5031 = vrot.slane %v3974, 2
  %v5032 = vsel %vm1061, %v5030, %v5031
  %v5033 = vrot.slane %v3975, 2
  %v5034 = vsel %vm1061, %v5031, %v5033
  %v5035 = vrot.slane %v3976, 2
  %v5036 = vrot.slane %v3977, 2
  %v5037 = vsel %vm1061, %v5035, %v5036
  %v5038 = vrot.slane %v3978, 2
  %v5039 = vsel %vm1061, %v5036, %v5038
  %v5040 = vrot.slane %v3979, 2
  %v5041 = vrot.slane %v3980, 2
  %v5042 = vsel %vm1061, %v5040, %v5041
  %v5043 = vrot.slane %v3981, 2
  %v5044 = vsel %vm1061, %v5041, %v5043
  %v5045 = vrot.slane %v3982, 2
  %v5046 = vrot.slane %v3983, 2
  %v5047 = vsel %vm1061, %v5045, %v5046
  %v5048 = vrot.slane %v3984, 2
  %v5049 = vsel %vm1061, %v5046, %v5048
  %v5050 = vrot.slane %v3985, 2
  %v5051 = vrot.slane %v3986, 2
  %v5052 = vsel %vm1061, %v5050, %v5051
  %v5053 = vrot.slane %v3987, 2
  %v5054 = vsel %vm1061, %v5051, %v5053
  %v5055 = vrot.slane %v3988, 2
  %v5056 = vrot.slane %v3989, 2
  %v5057 = vsel %vm1061, %v5055, %v5056
  %v5058 = vrot.slane %v3990, 2
  %v5059 = vsel %vm1061, %v5056, %v5058
  %v5060 = vrot.slane %v3991, 2
  %v5061 = vrot.slane %v3992, 2
  %v5062 = vsel %vm1061, %v5060, %v5061
  %v5063 = vrot.slane %v3993, 2
  %v5064 = vsel %vm1061, %v5061, %v5063
  %v5065 = vrot.slane %v3994, 2
  %v5066 = vrot.slane %v3995, 2
  %v5067 = vsel %vm1061, %v5065, %v5066
  %v5068 = vrot.slane %v3996, 2
  %v5069 = vsel %vm1061, %v5066, %v5068
  %v5070 = vrot.slane %v3997, 2
  %v5071 = vrot.slane %v3998, 2
  %v5072 = vsel %vm1061, %v5070, %v5071
  %v5073 = vrot.slane %v3999, 2
  %v5074 = vsel %vm1061, %v5071, %v5073
  %v5075 = vrot.slane %v4000, 2
  %v5076 = vrot.slane %v4001, 2
  %v5077 = vsel %vm1061, %v5075, %v5076
  %v5078 = vrot.slane %v4002, 2
  %v5079 = vsel %vm1061, %v5076, %v5078
  %v5080 = vrot.slane %v4003, 2
  %v5081 = vrot.slane %v4004, 2
  %v5082 = vsel %vm1061, %v5080, %v5081
  %v5083 = vrot.slane %v4005, 2
  %v5084 = vsel %vm1061, %v5081, %v5083
  %v5085 = vrot.slane %v4006, 2
  %v5086 = vrot.slane %v4007, 2
  %v5087 = vsel %vm1061, %v5085, %v5086
  %v5088 = vrot.slane %v4008, 2
  %v5089 = vsel %vm1061, %v5086, %v5088
  %v5090 = vrot.slane %v4009, 2
  %v5091 = vrot.slane %v4010, 2
  %v5092 = vsel %vm1061, %v5090, %v5091
  %v5093 = vrot.slane %v4011, 2
  %v5094 = vsel %vm1061, %v5091, %v5093
  %v5095 = vrot.slane %v4012, 2
  %v5096 = vrot.slane %v4013, 2
  %v5097 = vsel %vm1061, %v5095, %v5096
  %v5098 = vrot.slane %v4014, 2
  %v5099 = vsel %vm1061, %v5096, %v5098
  %v5100 = vrot.slane %v4015, 2
  %v5101 = vrot.slane %v4016, 2
  %v5102 = vsel %vm1061, %v5100, %v5101
  %v5103 = vrot.slane %v4017, 2
  %v5104 = vsel %vm1061, %v5101, %v5103
  %v5105 = vrot.slane %v4018, 2
  %v5106 = vrot.slane %v4019, 2
  %v5107 = vsel %vm1061, %v5105, %v5106
  %v5108 = vrot.slane %v4020, 2
  %v5109 = vsel %vm1061, %v5106, %v5108
  %v5174 = vpack.c.bf16 %v4954, %v4952
  %v5175 = vpack.c.bf16 %v4959, %v4957
  %v5176 = vpack.c.bf16 %v4964, %v4962
  %v5177 = vpack.c.bf16 %v4969, %v4967
  %v5178 = vpack.c.bf16 %v4974, %v4972
  %v5179 = vpack.c.bf16 %v4979, %v4977
  %v5180 = vpack.c.bf16 %v4984, %v4982
  %v5181 = vpack.c.bf16 %v4989, %v4987
  %v5182 = vpack.c.bf16 %v4994, %v4992
  %v5183 = vpack.c.bf16 %v4999, %v4997
  %v5184 = vpack.c.bf16 %v5004, %v5002
  %v5185 = vpack.c.bf16 %v5009, %v5007
  %v5186 = vpack.c.bf16 %v5014, %v5012
  %v5187 = vpack.c.bf16 %v5019, %v5017
  %v5188 = vpack.c.bf16 %v5024, %v5022
  %v5189 = vpack.c.bf16 %v5029, %v5027
  %v5190 = vpack.c.bf16 %v5034, %v5032
  %v5191 = vpack.c.bf16 %v5039, %v5037
  %v5192 = vpack.c.bf16 %v5044, %v5042
  %v5193 = vpack.c.bf16 %v5049, %v5047
  %v5194 = vpack.c.bf16 %v5054, %v5052
  %v5195 = vpack.c.bf16 %v5059, %v5057
  %v5196 = vpack.c.bf16 %v5064, %v5062
  %v5197 = vpack.c.bf16 %v5069, %v5067
  %v5198 = vpack.c.bf16 %v5074, %v5072
  %v5199 = vpack.c.bf16 %v5079, %v5077
  %v5200 = vpack.c.bf16 %v5084, %v5082
  %v5201 = vpack.c.bf16 %v5089, %v5087
  %v5202 = vpack.c.bf16 %v5094, %v5092
  %v5203 = vpack.c.bf16 %v5099, %v5097
  %v5204 = vpack.c.bf16 %v5104, %v5102
  %v5205 = vpack.c.bf16 %v5109, %v5107
  %s5206 = scalar_lea.vmem %s4, 4
  %v5207 = vld [vmem:[%s5206] sm:$0x3]
  %v5209 = vsel %vm523, %v5174, 0
  %v5212 = vsel %vm523, %v5175, 0
  %v5215 = vsel %vm523, %v5176, 0
  %v5218 = vsel %vm523, %v5177, 0
  %v5221 = vsel %vm523, %v5178, 0
  %v5224 = vsel %vm523, %v5179, 0
  %v5227 = vsel %vm523, %v5180, 0
  %v5230 = vsel %vm523, %v5181, 0
  %v5233 = vsel %vm523, %v5182, 0
  %v5236 = vsel %vm523, %v5183, 0
  %v5239 = vsel %vm523, %v5184, 0
  %v5242 = vsel %vm523, %v5185, 0
  %v5245 = vsel %vm523, %v5186, 0
  %v5248 = vsel %vm523, %v5187, 0
  %v5251 = vsel %vm523, %v5188, 0
  %v5254 = vsel %vm523, %v5189, 0
  %v5257 = vsel %vm523, %v5190, 0
  %v5260 = vsel %vm523, %v5191, 0
  %v5263 = vsel %vm523, %v5192, 0
  %v5266 = vsel %vm523, %v5193, 0
  %v5269 = vsel %vm523, %v5194, 0
  %v5272 = vsel %vm523, %v5195, 0
  %v5275 = vsel %vm523, %v5196, 0
  %v5278 = vsel %vm523, %v5197, 0
  %v5281 = vsel %vm523, %v5198, 0
  %v5284 = vsel %vm523, %v5199, 0
  %v5287 = vsel %vm523, %v5200, 0
  %v5290 = vsel %vm523, %v5201, 0
  %v5293 = vsel %vm523, %v5202, 0
  %v5296 = vsel %vm523, %v5203, 0
  %v5299 = vsel %vm523, %v5204, 0
  %v5302 = vsel %vm523, %v5205, 0
  %v5305 = vsel %vm620, %v5207, 0
  %5307 = vmatpush.bf16.msra.mxu0 0
  %5308 = vmatpush.bf16.msra.mxu0 0
  %5309 = vmatpush.bf16.msra.mxu0 0
  %5310 = vmatpush.bf16.msra.mxu0 0
  %5311 = vmatpush.bf16.msra.mxu0 0
  %5312 = vmatpush.bf16.msra.mxu0 0
  %5313 = vmatpush.bf16.msra.mxu0 0
  %5314 = vmatpush.bf16.msra.mxu0 %v5305
  %5315 = vmatmul.bf16.gmra.mxu0 %v5209
  %v5316 = vpop.f32.mrf.mxu0
  %v5317 = vadd.f32 0.0, %v5316
  %v5318 = vpop.f32.mrf.mxu0
  %v5319 = vadd.f32 0.0, %v5318
  %5320 = vmatmul.bf16.gmra.mxu0 %v5212
  %v5321 = vpop.f32.mrf.mxu0
  %v5322 = vadd.f32 0.0, %v5321
  %v5323 = vpop.f32.mrf.mxu0
  %v5324 = vadd.f32 0.0, %v5323
  %5325 = vmatmul.bf16.gmra.mxu0 %v5215
  %v5326 = vpop.f32.mrf.mxu0
  %v5327 = vadd.f32 0.0, %v5326
  %v5328 = vpop.f32.mrf.mxu0
  %v5329 = vadd.f32 0.0, %v5328
  %5330 = vmatmul.bf16.gmra.mxu0 %v5218
  %v5331 = vpop.f32.mrf.mxu0
  %v5332 = vadd.f32 0.0, %v5331
  %v5333 = vpop.f32.mrf.mxu0
  %v5334 = vadd.f32 0.0, %v5333
  %5335 = vmatmul.bf16.gmra.mxu0 %v5221
  %v5336 = vpop.f32.mrf.mxu0
  %v5337 = vadd.f32 0.0, %v5336
  %v5338 = vpop.f32.mrf.mxu0
  %v5339 = vadd.f32 0.0, %v5338
  %5340 = vmatmul.bf16.gmra.mxu0 %v5224
  %v5341 = vpop.f32.mrf.mxu0
  %v5342 = vadd.f32 0.0, %v5341
  %v5343 = vpop.f32.mrf.mxu0
  %v5344 = vadd.f32 0.0, %v5343
  %5345 = vmatmul.bf16.gmra.mxu0 %v5227
  %v5346 = vpop.f32.mrf.mxu0
  %v5347 = vadd.f32 0.0, %v5346
  %v5348 = vpop.f32.mrf.mxu0
  %v5349 = vadd.f32 0.0, %v5348
  %5350 = vmatmul.bf16.gmra.mxu0 %v5230
  %v5351 = vpop.f32.mrf.mxu0
  %v5352 = vadd.f32 0.0, %v5351
  %v5353 = vpop.f32.mrf.mxu0
  %v5354 = vadd.f32 0.0, %v5353
  %5355 = vmatmul.bf16.gmra.mxu0 %v5233
  %v5356 = vpop.f32.mrf.mxu0
  %v5357 = vadd.f32 0.0, %v5356
  %v5358 = vpop.f32.mrf.mxu0
  %v5359 = vadd.f32 0.0, %v5358
  %5360 = vmatmul.bf16.gmra.mxu0 %v5236
  %v5361 = vpop.f32.mrf.mxu0
  %v5362 = vadd.f32 0.0, %v5361
  %v5363 = vpop.f32.mrf.mxu0
  %v5364 = vadd.f32 0.0, %v5363
  %5365 = vmatmul.bf16.gmra.mxu0 %v5239
  %v5366 = vpop.f32.mrf.mxu0
  %v5367 = vadd.f32 0.0, %v5366
  %v5368 = vpop.f32.mrf.mxu0
  %v5369 = vadd.f32 0.0, %v5368
  %5370 = vmatmul.bf16.gmra.mxu0 %v5242
  %v5371 = vpop.f32.mrf.mxu0
  %v5372 = vadd.f32 0.0, %v5371
  %v5373 = vpop.f32.mrf.mxu0
  %v5374 = vadd.f32 0.0, %v5373
  %5375 = vmatmul.bf16.gmra.mxu0 %v5245
  %v5376 = vpop.f32.mrf.mxu0
  %v5377 = vadd.f32 0.0, %v5376
  %v5378 = vpop.f32.mrf.mxu0
  %v5379 = vadd.f32 0.0, %v5378
  %5380 = vmatmul.bf16.gmra.mxu0 %v5248
  %v5381 = vpop.f32.mrf.mxu0
  %v5382 = vadd.f32 0.0, %v5381
  %v5383 = vpop.f32.mrf.mxu0
  %v5384 = vadd.f32 0.0, %v5383
  %5385 = vmatmul.bf16.gmra.mxu0 %v5251
  %v5386 = vpop.f32.mrf.mxu0
  %v5387 = vadd.f32 0.0, %v5386
  %v5388 = vpop.f32.mrf.mxu0
  %v5389 = vadd.f32 0.0, %v5388
  %5390 = vmatmul.bf16.gmra.mxu0 %v5254
  %v5391 = vpop.f32.mrf.mxu0
  %v5392 = vadd.f32 0.0, %v5391
  %v5393 = vpop.f32.mrf.mxu0
  %v5394 = vadd.f32 0.0, %v5393
  %5395 = vmatmul.bf16.gmra.mxu0 %v5257
  %v5396 = vpop.f32.mrf.mxu0
  %v5397 = vadd.f32 0.0, %v5396
  %v5398 = vpop.f32.mrf.mxu0
  %v5399 = vadd.f32 0.0, %v5398
  %5400 = vmatmul.bf16.gmra.mxu0 %v5260
  %v5401 = vpop.f32.mrf.mxu0
  %v5402 = vadd.f32 0.0, %v5401
  %v5403 = vpop.f32.mrf.mxu0
  %v5404 = vadd.f32 0.0, %v5403
  %5405 = vmatmul.bf16.gmra.mxu0 %v5263
  %v5406 = vpop.f32.mrf.mxu0
  %v5407 = vadd.f32 0.0, %v5406
  %v5408 = vpop.f32.mrf.mxu0
  %v5409 = vadd.f32 0.0, %v5408
  %5410 = vmatmul.bf16.gmra.mxu0 %v5266
  %v5411 = vpop.f32.mrf.mxu0
  %v5412 = vadd.f32 0.0, %v5411
  %v5413 = vpop.f32.mrf.mxu0
  %v5414 = vadd.f32 0.0, %v5413
  %5415 = vmatmul.bf16.gmra.mxu0 %v5269
  %v5416 = vpop.f32.mrf.mxu0
  %v5417 = vadd.f32 0.0, %v5416
  %v5418 = vpop.f32.mrf.mxu0
  %v5419 = vadd.f32 0.0, %v5418
  %5420 = vmatmul.bf16.gmra.mxu0 %v5272
  %v5421 = vpop.f32.mrf.mxu0
  %v5422 = vadd.f32 0.0, %v5421
  %v5423 = vpop.f32.mrf.mxu0
  %v5424 = vadd.f32 0.0, %v5423
  %5425 = vmatmul.bf16.gmra.mxu0 %v5275
  %v5426 = vpop.f32.mrf.mxu0
  %v5427 = vadd.f32 0.0, %v5426
  %v5428 = vpop.f32.mrf.mxu0
  %v5429 = vadd.f32 0.0, %v5428
  %5430 = vmatmul.bf16.gmra.mxu0 %v5278
  %v5431 = vpop.f32.mrf.mxu0
  %v5432 = vadd.f32 0.0, %v5431
  %v5433 = vpop.f32.mrf.mxu0
  %v5434 = vadd.f32 0.0, %v5433
  %5435 = vmatmul.bf16.gmra.mxu0 %v5281
  %v5436 = vpop.f32.mrf.mxu0
  %v5437 = vadd.f32 0.0, %v5436
  %v5438 = vpop.f32.mrf.mxu0
  %v5439 = vadd.f32 0.0, %v5438
  %5440 = vmatmul.bf16.gmra.mxu0 %v5284
  %v5441 = vpop.f32.mrf.mxu0
  %v5442 = vadd.f32 0.0, %v5441
  %v5443 = vpop.f32.mrf.mxu0
  %v5444 = vadd.f32 0.0, %v5443
  %5445 = vmatmul.bf16.gmra.mxu0 %v5287
  %v5446 = vpop.f32.mrf.mxu0
  %v5447 = vadd.f32 0.0, %v5446
  %v5448 = vpop.f32.mrf.mxu0
  %v5449 = vadd.f32 0.0, %v5448
  %5450 = vmatmul.bf16.gmra.mxu0 %v5290
  %v5451 = vpop.f32.mrf.mxu0
  %v5452 = vadd.f32 0.0, %v5451
  %v5453 = vpop.f32.mrf.mxu0
  %v5454 = vadd.f32 0.0, %v5453
  %5455 = vmatmul.bf16.gmra.mxu0 %v5293
  %v5456 = vpop.f32.mrf.mxu0
  %v5457 = vadd.f32 0.0, %v5456
  %v5458 = vpop.f32.mrf.mxu0
  %v5459 = vadd.f32 0.0, %v5458
  %5460 = vmatmul.bf16.gmra.mxu0 %v5296
  %v5461 = vpop.f32.mrf.mxu0
  %v5462 = vadd.f32 0.0, %v5461
  %v5463 = vpop.f32.mrf.mxu0
  %v5464 = vadd.f32 0.0, %v5463
  %5465 = vmatmul.bf16.gmra.mxu0 %v5299
  %v5466 = vpop.f32.mrf.mxu0
  %v5467 = vadd.f32 0.0, %v5466
  %v5468 = vpop.f32.mrf.mxu0
  %v5469 = vadd.f32 0.0, %v5468
  %5470 = vmatmul.bf16.gmra.mxu0 %v5302
  %v5471 = vpop.f32.mrf.mxu0
  %v5472 = vadd.f32 0.0, %v5471
  %v5473 = vpop.f32.mrf.mxu0
  %v5474 = vadd.f32 0.0, %v5473
  %5475 = vdwg.mxu0
  %v5476 = vadd.f32 %v4791, %v5317
  %v5477 = vadd.f32 %v4793, %v5319
  %v5478 = vadd.f32 %v4796, %v5322
  %v5479 = vadd.f32 %v4798, %v5324
  %v5480 = vadd.f32 %v4801, %v5327
  %v5481 = vadd.f32 %v4803, %v5329
  %v5482 = vadd.f32 %v4806, %v5332
  %v5483 = vadd.f32 %v4808, %v5334
  %v5484 = vadd.f32 %v4811, %v5337
  %v5485 = vadd.f32 %v4813, %v5339
  %v5486 = vadd.f32 %v4816, %v5342
  %v5487 = vadd.f32 %v4818, %v5344
  %v5488 = vadd.f32 %v4821, %v5347
  %v5489 = vadd.f32 %v4823, %v5349
  %v5490 = vadd.f32 %v4826, %v5352
  %v5491 = vadd.f32 %v4828, %v5354
  %v5492 = vadd.f32 %v4831, %v5357
  %v5493 = vadd.f32 %v4833, %v5359
  %v5494 = vadd.f32 %v4836, %v5362
  %v5495 = vadd.f32 %v4838, %v5364
  %v5496 = vadd.f32 %v4841, %v5367
  %v5497 = vadd.f32 %v4843, %v5369
  %v5498 = vadd.f32 %v4846, %v5372
  %v5499 = vadd.f32 %v4848, %v5374
  %v5500 = vadd.f32 %v4851, %v5377
  %v5501 = vadd.f32 %v4853, %v5379
  %v5502 = vadd.f32 %v4856, %v5382
  %v5503 = vadd.f32 %v4858, %v5384
  %v5504 = vadd.f32 %v4861, %v5387
  %v5505 = vadd.f32 %v4863, %v5389
  %v5506 = vadd.f32 %v4866, %v5392
  %v5507 = vadd.f32 %v4868, %v5394
  %v5508 = vadd.f32 %v4871, %v5397
  %v5509 = vadd.f32 %v4873, %v5399
  %v5510 = vadd.f32 %v4876, %v5402
  %v5511 = vadd.f32 %v4878, %v5404
  %v5512 = vadd.f32 %v4881, %v5407
  %v5513 = vadd.f32 %v4883, %v5409
  %v5514 = vadd.f32 %v4886, %v5412
  %v5515 = vadd.f32 %v4888, %v5414
  %v5516 = vadd.f32 %v4891, %v5417
  %v5517 = vadd.f32 %v4893, %v5419
  %v5518 = vadd.f32 %v4896, %v5422
  %v5519 = vadd.f32 %v4898, %v5424
  %v5520 = vadd.f32 %v4901, %v5427
  %v5521 = vadd.f32 %v4903, %v5429
  %v5522 = vadd.f32 %v4906, %v5432
  %v5523 = vadd.f32 %v4908, %v5434
  %v5524 = vadd.f32 %v4911, %v5437
  %v5525 = vadd.f32 %v4913, %v5439
  %v5526 = vadd.f32 %v4916, %v5442
  %v5527 = vadd.f32 %v4918, %v5444
  %v5528 = vadd.f32 %v4921, %v5447
  %v5529 = vadd.f32 %v4923, %v5449
  %v5530 = vadd.f32 %v4926, %v5452
  %v5531 = vadd.f32 %v4928, %v5454
  %v5532 = vadd.f32 %v4931, %v5457
  %v5533 = vadd.f32 %v4933, %v5459
  %v5534 = vadd.f32 %v4936, %v5462
  %v5535 = vadd.f32 %v4938, %v5464
  %v5536 = vadd.f32 %v4941, %v5467
  %v5537 = vadd.f32 %v4943, %v5469
  %v5538 = vadd.f32 %v4946, %v5472
  %v5539 = vadd.f32 %v4948, %v5474
  %v5540 = vpack.c.bf16 %v3968, %v3967
  %v5541 = vpack.c.bf16 %v4022, %v4021
  %s5542 = scalar_lea.vmem %s4, 6
  %v5543 = vld [vmem:[%s5542] sm:$0x3]
  %v5545 = vsel %vm523, %v5540, 0
  %v5548 = vsel %vm523, %v5541, 0
  %v5551 = vsel %vm620, %v5543, 0
  %5553 = vmatpush.bf16.msra.mxu0 0
  %5554 = vmatpush.bf16.msra.mxu0 0
  %5555 = vmatpush.bf16.msra.mxu0 0
  %5556 = vmatpush.bf16.msra.mxu0 0
  %5557 = vmatpush.bf16.msra.mxu0 0
  %5558 = vmatpush.bf16.msra.mxu0 0
  %5559 = vmatpush.bf16.msra.mxu0 0
  %5560 = vmatpush.bf16.msra.mxu0 %v5551
  %5561 = vmatmul.bf16.gmra.mxu0 %v4686
  %v5562 = vpop.f32.mrf.mxu0
  %v5563 = vadd.f32 0.0, %v5562
  %v5564 = vpop.f32.mrf.mxu0
  %v5565 = vadd.f32 0.0, %v5564
  %5566 = vmatmul.bf16.gmra.mxu0 %v4689
  %v5567 = vpop.f32.mrf.mxu0
  %v5568 = vadd.f32 0.0, %v5567
  %v5569 = vpop.f32.mrf.mxu0
  %v5570 = vadd.f32 0.0, %v5569
  %5571 = vmatmul.bf16.gmra.mxu0 %v4692
  %v5572 = vpop.f32.mrf.mxu0
  %v5573 = vadd.f32 0.0, %v5572
  %v5574 = vpop.f32.mrf.mxu0
  %v5575 = vadd.f32 0.0, %v5574
  %5576 = vmatmul.bf16.gmra.mxu0 %v4695
  %v5577 = vpop.f32.mrf.mxu0
  %v5578 = vadd.f32 0.0, %v5577
  %v5579 = vpop.f32.mrf.mxu0
  %v5580 = vadd.f32 0.0, %v5579
  %5581 = vmatmul.bf16.gmra.mxu0 %v4698
  %v5582 = vpop.f32.mrf.mxu0
  %v5583 = vadd.f32 0.0, %v5582
  %v5584 = vpop.f32.mrf.mxu0
  %v5585 = vadd.f32 0.0, %v5584
  %5586 = vmatmul.bf16.gmra.mxu0 %v4701
  %v5587 = vpop.f32.mrf.mxu0
  %v5588 = vadd.f32 0.0, %v5587
  %v5589 = vpop.f32.mrf.mxu0
  %v5590 = vadd.f32 0.0, %v5589
  %5591 = vmatmul.bf16.gmra.mxu0 %v4704
  %v5592 = vpop.f32.mrf.mxu0
  %v5593 = vadd.f32 0.0, %v5592
  %v5594 = vpop.f32.mrf.mxu0
  %v5595 = vadd.f32 0.0, %v5594
  %5596 = vmatmul.bf16.gmra.mxu0 %v4707
  %v5597 = vpop.f32.mrf.mxu0
  %v5598 = vadd.f32 0.0, %v5597
  %v5599 = vpop.f32.mrf.mxu0
  %v5600 = vadd.f32 0.0, %v5599
  %5601 = vmatmul.bf16.gmra.mxu0 %v4710
  %v5602 = vpop.f32.mrf.mxu0
  %v5603 = vadd.f32 0.0, %v5602
  %v5604 = vpop.f32.mrf.mxu0
  %v5605 = vadd.f32 0.0, %v5604
  %5606 = vmatmul.bf16.gmra.mxu0 %v4713
  %v5607 = vpop.f32.mrf.mxu0
  %v5608 = vadd.f32 0.0, %v5607
  %v5609 = vpop.f32.mrf.mxu0
  %v5610 = vadd.f32 0.0, %v5609
  %5611 = vmatmul.bf16.gmra.mxu0 %v4716
  %v5612 = vpop.f32.mrf.mxu0
  %v5613 = vadd.f32 0.0, %v5612
  %v5614 = vpop.f32.mrf.mxu0
  %v5615 = vadd.f32 0.0, %v5614
  %5616 = vmatmul.bf16.gmra.mxu0 %v4719
  %v5617 = vpop.f32.mrf.mxu0
  %v5618 = vadd.f32 0.0, %v5617
  %v5619 = vpop.f32.mrf.mxu0
  %v5620 = vadd.f32 0.0, %v5619
  %5621 = vmatmul.bf16.gmra.mxu0 %v4722
  %v5622 = vpop.f32.mrf.mxu0
  %v5623 = vadd.f32 0.0, %v5622
  %v5624 = vpop.f32.mrf.mxu0
  %v5625 = vadd.f32 0.0, %v5624
  %5626 = vmatmul.bf16.gmra.mxu0 %v4725
  %v5627 = vpop.f32.mrf.mxu0
  %v5628 = vadd.f32 0.0, %v5627
  %v5629 = vpop.f32.mrf.mxu0
  %v5630 = vadd.f32 0.0, %v5629
  %5631 = vmatmul.bf16.gmra.mxu0 %v4728
  %v5632 = vpop.f32.mrf.mxu0
  %v5633 = vadd.f32 0.0, %v5632
  %v5634 = vpop.f32.mrf.mxu0
  %v5635 = vadd.f32 0.0, %v5634
  %5636 = vmatmul.bf16.gmra.mxu0 %v5545
  %v5637 = vpop.f32.mrf.mxu0
  %v5638 = vadd.f32 0.0, %v5637
  %v5639 = vpop.f32.mrf.mxu0
  %v5640 = vadd.f32 0.0, %v5639
  %5641 = vmatmul.bf16.gmra.mxu0 %v4734
  %v5642 = vpop.f32.mrf.mxu0
  %v5643 = vadd.f32 0.0, %v5642
  %v5644 = vpop.f32.mrf.mxu0
  %v5645 = vadd.f32 0.0, %v5644
  %5646 = vmatmul.bf16.gmra.mxu0 %v4737
  %v5647 = vpop.f32.mrf.mxu0
  %v5648 = vadd.f32 0.0, %v5647
  %v5649 = vpop.f32.mrf.mxu0
  %v5650 = vadd.f32 0.0, %v5649
  %5651 = vmatmul.bf16.gmra.mxu0 %v4740
  %v5652 = vpop.f32.mrf.mxu0
  %v5653 = vadd.f32 0.0, %v5652
  %v5654 = vpop.f32.mrf.mxu0
  %v5655 = vadd.f32 0.0, %v5654
  %5656 = vmatmul.bf16.gmra.mxu0 %v4743
  %v5657 = vpop.f32.mrf.mxu0
  %v5658 = vadd.f32 0.0, %v5657
  %v5659 = vpop.f32.mrf.mxu0
  %v5660 = vadd.f32 0.0, %v5659
  %5661 = vmatmul.bf16.gmra.mxu0 %v4746
  %v5662 = vpop.f32.mrf.mxu0
  %v5663 = vadd.f32 0.0, %v5662
  %v5664 = vpop.f32.mrf.mxu0
  %v5665 = vadd.f32 0.0, %v5664
  %5666 = vmatmul.bf16.gmra.mxu0 %v4749
  %v5667 = vpop.f32.mrf.mxu0
  %v5668 = vadd.f32 0.0, %v5667
  %v5669 = vpop.f32.mrf.mxu0
  %v5670 = vadd.f32 0.0, %v5669
  %5671 = vmatmul.bf16.gmra.mxu0 %v4752
  %v5672 = vpop.f32.mrf.mxu0
  %v5673 = vadd.f32 0.0, %v5672
  %v5674 = vpop.f32.mrf.mxu0
  %v5675 = vadd.f32 0.0, %v5674
  %5676 = vmatmul.bf16.gmra.mxu0 %v4755
  %v5677 = vpop.f32.mrf.mxu0
  %v5678 = vadd.f32 0.0, %v5677
  %v5679 = vpop.f32.mrf.mxu0
  %v5680 = vadd.f32 0.0, %v5679
  %5681 = vmatmul.bf16.gmra.mxu0 %v4758
  %v5682 = vpop.f32.mrf.mxu0
  %v5683 = vadd.f32 0.0, %v5682
  %v5684 = vpop.f32.mrf.mxu0
  %v5685 = vadd.f32 0.0, %v5684
  %5686 = vmatmul.bf16.gmra.mxu0 %v4761
  %v5687 = vpop.f32.mrf.mxu0
  %v5688 = vadd.f32 0.0, %v5687
  %v5689 = vpop.f32.mrf.mxu0
  %v5690 = vadd.f32 0.0, %v5689
  %5691 = vmatmul.bf16.gmra.mxu0 %v4764
  %v5692 = vpop.f32.mrf.mxu0
  %v5693 = vadd.f32 0.0, %v5692
  %v5694 = vpop.f32.mrf.mxu0
  %v5695 = vadd.f32 0.0, %v5694
  %5696 = vmatmul.bf16.gmra.mxu0 %v4767
  %v5697 = vpop.f32.mrf.mxu0
  %v5698 = vadd.f32 0.0, %v5697
  %v5699 = vpop.f32.mrf.mxu0
  %v5700 = vadd.f32 0.0, %v5699
  %5701 = vmatmul.bf16.gmra.mxu0 %v4770
  %v5702 = vpop.f32.mrf.mxu0
  %v5703 = vadd.f32 0.0, %v5702
  %v5704 = vpop.f32.mrf.mxu0
  %v5705 = vadd.f32 0.0, %v5704
  %5706 = vmatmul.bf16.gmra.mxu0 %v4773
  %v5707 = vpop.f32.mrf.mxu0
  %v5708 = vadd.f32 0.0, %v5707
  %v5709 = vpop.f32.mrf.mxu0
  %v5710 = vadd.f32 0.0, %v5709
  %5711 = vmatmul.bf16.gmra.mxu0 %v4776
  %v5712 = vpop.f32.mrf.mxu0
  %v5713 = vadd.f32 0.0, %v5712
  %v5714 = vpop.f32.mrf.mxu0
  %v5715 = vadd.f32 0.0, %v5714
  %5716 = vmatmul.bf16.gmra.mxu0 %v5548
  %v5717 = vpop.f32.mrf.mxu0
  %v5718 = vadd.f32 0.0, %v5717
  %v5719 = vpop.f32.mrf.mxu0
  %v5720 = vadd.f32 0.0, %v5719
  %5721 = vdwg.mxu0
  %v5722 = vadd.f32 %v5476, %v5563
  %v5723 = vadd.f32 %v5477, %v5565
  %v5724 = vadd.f32 %v5478, %v5568
  %v5725 = vadd.f32 %v5479, %v5570
  %v5726 = vadd.f32 %v5480, %v5573
  %v5727 = vadd.f32 %v5481, %v5575
  %v5728 = vadd.f32 %v5482, %v5578
  %v5729 = vadd.f32 %v5483, %v5580
  %v5730 = vadd.f32 %v5484, %v5583
  %v5731 = vadd.f32 %v5485, %v5585
  %v5732 = vadd.f32 %v5486, %v5588
  %v5733 = vadd.f32 %v5487, %v5590
  %v5734 = vadd.f32 %v5488, %v5593
  %v5735 = vadd.f32 %v5489, %v5595
  %v5736 = vadd.f32 %v5490, %v5598
  %v5737 = vadd.f32 %v5491, %v5600
  %v5738 = vadd.f32 %v5492, %v5603
  %v5739 = vadd.f32 %v5493, %v5605
  %v5740 = vadd.f32 %v5494, %v5608
  %v5741 = vadd.f32 %v5495, %v5610
  %v5742 = vadd.f32 %v5496, %v5613
  %v5743 = vadd.f32 %v5497, %v5615
  %v5744 = vadd.f32 %v5498, %v5618
  %v5745 = vadd.f32 %v5499, %v5620
  %v5746 = vadd.f32 %v5500, %v5623
  %v5747 = vadd.f32 %v5501, %v5625
  %v5748 = vadd.f32 %v5502, %v5628
  %v5749 = vadd.f32 %v5503, %v5630
  %v5750 = vadd.f32 %v5504, %v5633
  %v5751 = vadd.f32 %v5505, %v5635
  %v5752 = vadd.f32 %v5506, %v5638
  %v5753 = vadd.f32 %v5507, %v5640
  %v5754 = vadd.f32 %v5508, %v5643
  %v5755 = vadd.f32 %v5509, %v5645
  %v5756 = vadd.f32 %v5510, %v5648
  %v5757 = vadd.f32 %v5511, %v5650
  %v5758 = vadd.f32 %v5512, %v5653
  %v5759 = vadd.f32 %v5513, %v5655
  %v5760 = vadd.f32 %v5514, %v5658
  %v5761 = vadd.f32 %v5515, %v5660
  %v5762 = vadd.f32 %v5516, %v5663
  %v5763 = vadd.f32 %v5517, %v5665
  %v5764 = vadd.f32 %v5518, %v5668
  %v5765 = vadd.f32 %v5519, %v5670
  %v5766 = vadd.f32 %v5520, %v5673
  %v5767 = vadd.f32 %v5521, %v5675
  %v5768 = vadd.f32 %v5522, %v5678
  %v5769 = vadd.f32 %v5523, %v5680
  %v5770 = vadd.f32 %v5524, %v5683
  %v5771 = vadd.f32 %v5525, %v5685
  %v5772 = vadd.f32 %v5526, %v5688
  %v5773 = vadd.f32 %v5527, %v5690
  %v5774 = vadd.f32 %v5528, %v5693
  %v5775 = vadd.f32 %v5529, %v5695
  %v5776 = vadd.f32 %v5530, %v5698
  %v5777 = vadd.f32 %v5531, %v5700
  %v5778 = vadd.f32 %v5532, %v5703
  %v5779 = vadd.f32 %v5533, %v5705
  %v5780 = vadd.f32 %v5534, %v5708
  %v5781 = vadd.f32 %v5535, %v5710
  %v5782 = vadd.f32 %v5536, %v5713
  %v5783 = vadd.f32 %v5537, %v5715
  %v5784 = vadd.f32 %v5538, %v5718
  %v5785 = vadd.f32 %v5539, %v5720
  %v5792 = vrot.slane %v3967, 1
  %v5793 = vrot.slane %v3968, 1
  %v5794 = vsel %vm264, %v5792, %v5793
  %v5795 = vrot.slane %v3969, 1
  %v5796 = vsel %vm264, %v5793, %v5795
  %v5797 = vrot.slane %v4021, 1
  %v5798 = vrot.slane %v4022, 1
  %v5799 = vsel %vm264, %v5797, %v5798
  %v5800 = vrot.slane %v4023, 1
  %v5801 = vsel %vm264, %v5798, %v5800
  %v5806 = vpack.c.bf16 %v5796, %v5794
  %v5807 = vpack.c.bf16 %v5801, %v5799
  %s5808 = scalar_lea.vmem %s4, 8
  %v5809 = vld [vmem:[%s5808] sm:$0x3]
  %v5811 = vsel %vm523, %v5806, 0
  %v5814 = vsel %vm523, %v5807, 0
  %v5817 = vsel %vm620, %v5809, 0
  %5819 = vmatpush.bf16.msra.mxu0 0
  %5820 = vmatpush.bf16.msra.mxu0 0
  %5821 = vmatpush.bf16.msra.mxu0 0
  %5822 = vmatpush.bf16.msra.mxu0 0
  %5823 = vmatpush.bf16.msra.mxu0 0
  %5824 = vmatpush.bf16.msra.mxu0 0
  %5825 = vmatpush.bf16.msra.mxu0 0
  %5826 = vmatpush.bf16.msra.mxu0 %v5817
  %5827 = vmatmul.bf16.gmra.mxu0 %v4418
  %v5828 = vpop.f32.mrf.mxu0
  %v5829 = vadd.f32 0.0, %v5828
  %v5830 = vpop.f32.mrf.mxu0
  %v5831 = vadd.f32 0.0, %v5830
  %5832 = vmatmul.bf16.gmra.mxu0 %v4421
  %v5833 = vpop.f32.mrf.mxu0
  %v5834 = vadd.f32 0.0, %v5833
  %v5835 = vpop.f32.mrf.mxu0
  %v5836 = vadd.f32 0.0, %v5835
  %5837 = vmatmul.bf16.gmra.mxu0 %v4424
  %v5838 = vpop.f32.mrf.mxu0
  %v5839 = vadd.f32 0.0, %v5838
  %v5840 = vpop.f32.mrf.mxu0
  %v5841 = vadd.f32 0.0, %v5840
  %5842 = vmatmul.bf16.gmra.mxu0 %v4427
  %v5843 = vpop.f32.mrf.mxu0
  %v5844 = vadd.f32 0.0, %v5843
  %v5845 = vpop.f32.mrf.mxu0
  %v5846 = vadd.f32 0.0, %v5845
  %5847 = vmatmul.bf16.gmra.mxu0 %v4430
  %v5848 = vpop.f32.mrf.mxu0
  %v5849 = vadd.f32 0.0, %v5848
  %v5850 = vpop.f32.mrf.mxu0
  %v5851 = vadd.f32 0.0, %v5850
  %5852 = vmatmul.bf16.gmra.mxu0 %v4433
  %v5853 = vpop.f32.mrf.mxu0
  %v5854 = vadd.f32 0.0, %v5853
  %v5855 = vpop.f32.mrf.mxu0
  %v5856 = vadd.f32 0.0, %v5855
  %5857 = vmatmul.bf16.gmra.mxu0 %v4436
  %v5858 = vpop.f32.mrf.mxu0
  %v5859 = vadd.f32 0.0, %v5858
  %v5860 = vpop.f32.mrf.mxu0
  %v5861 = vadd.f32 0.0, %v5860
  %5862 = vmatmul.bf16.gmra.mxu0 %v4439
  %v5863 = vpop.f32.mrf.mxu0
  %v5864 = vadd.f32 0.0, %v5863
  %v5865 = vpop.f32.mrf.mxu0
  %v5866 = vadd.f32 0.0, %v5865
  %5867 = vmatmul.bf16.gmra.mxu0 %v4442
  %v5868 = vpop.f32.mrf.mxu0
  %v5869 = vadd.f32 0.0, %v5868
  %v5870 = vpop.f32.mrf.mxu0
  %v5871 = vadd.f32 0.0, %v5870
  %5872 = vmatmul.bf16.gmra.mxu0 %v4445
  %v5873 = vpop.f32.mrf.mxu0
  %v5874 = vadd.f32 0.0, %v5873
  %v5875 = vpop.f32.mrf.mxu0
  %v5876 = vadd.f32 0.0, %v5875
  %5877 = vmatmul.bf16.gmra.mxu0 %v4448
  %v5878 = vpop.f32.mrf.mxu0
  %v5879 = vadd.f32 0.0, %v5878
  %v5880 = vpop.f32.mrf.mxu0
  %v5881 = vadd.f32 0.0, %v5880
  %5882 = vmatmul.bf16.gmra.mxu0 %v4451
  %v5883 = vpop.f32.mrf.mxu0
  %v5884 = vadd.f32 0.0, %v5883
  %v5885 = vpop.f32.mrf.mxu0
  %v5886 = vadd.f32 0.0, %v5885
  %5887 = vmatmul.bf16.gmra.mxu0 %v4454
  %v5888 = vpop.f32.mrf.mxu0
  %v5889 = vadd.f32 0.0, %v5888
  %v5890 = vpop.f32.mrf.mxu0
  %v5891 = vadd.f32 0.0, %v5890
  %5892 = vmatmul.bf16.gmra.mxu0 %v4457
  %v5893 = vpop.f32.mrf.mxu0
  %v5894 = vadd.f32 0.0, %v5893
  %v5895 = vpop.f32.mrf.mxu0
  %v5896 = vadd.f32 0.0, %v5895
  %5897 = vmatmul.bf16.gmra.mxu0 %v4460
  %v5898 = vpop.f32.mrf.mxu0
  %v5899 = vadd.f32 0.0, %v5898
  %v5900 = vpop.f32.mrf.mxu0
  %v5901 = vadd.f32 0.0, %v5900
  %5902 = vmatmul.bf16.gmra.mxu0 %v5811
  %v5903 = vpop.f32.mrf.mxu0
  %v5904 = vadd.f32 0.0, %v5903
  %v5905 = vpop.f32.mrf.mxu0
  %v5906 = vadd.f32 0.0, %v5905
  %5907 = vmatmul.bf16.gmra.mxu0 %v4466
  %v5908 = vpop.f32.mrf.mxu0
  %v5909 = vadd.f32 0.0, %v5908
  %v5910 = vpop.f32.mrf.mxu0
  %v5911 = vadd.f32 0.0, %v5910
  %5912 = vmatmul.bf16.gmra.mxu0 %v4469
  %v5913 = vpop.f32.mrf.mxu0
  %v5914 = vadd.f32 0.0, %v5913
  %v5915 = vpop.f32.mrf.mxu0
  %v5916 = vadd.f32 0.0, %v5915
  %5917 = vmatmul.bf16.gmra.mxu0 %v4472
  %v5918 = vpop.f32.mrf.mxu0
  %v5919 = vadd.f32 0.0, %v5918
  %v5920 = vpop.f32.mrf.mxu0
  %v5921 = vadd.f32 0.0, %v5920
  %5922 = vmatmul.bf16.gmra.mxu0 %v4475
  %v5923 = vpop.f32.mrf.mxu0
  %v5924 = vadd.f32 0.0, %v5923
  %v5925 = vpop.f32.mrf.mxu0
  %v5926 = vadd.f32 0.0, %v5925
  %5927 = vmatmul.bf16.gmra.mxu0 %v4478
  %v5928 = vpop.f32.mrf.mxu0
  %v5929 = vadd.f32 0.0, %v5928
  %v5930 = vpop.f32.mrf.mxu0
  %v5931 = vadd.f32 0.0, %v5930
  %5932 = vmatmul.bf16.gmra.mxu0 %v4481
  %v5933 = vpop.f32.mrf.mxu0
  %v5934 = vadd.f32 0.0, %v5933
  %v5935 = vpop.f32.mrf.mxu0
  %v5936 = vadd.f32 0.0, %v5935
  %5937 = vmatmul.bf16.gmra.mxu0 %v4484
  %v5938 = vpop.f32.mrf.mxu0
  %v5939 = vadd.f32 0.0, %v5938
  %v5940 = vpop.f32.mrf.mxu0
  %v5941 = vadd.f32 0.0, %v5940
  %5942 = vmatmul.bf16.gmra.mxu0 %v4487
  %v5943 = vpop.f32.mrf.mxu0
  %v5944 = vadd.f32 0.0, %v5943
  %v5945 = vpop.f32.mrf.mxu0
  %v5946 = vadd.f32 0.0, %v5945
  %5947 = vmatmul.bf16.gmra.mxu0 %v4490
  %v5948 = vpop.f32.mrf.mxu0
  %v5949 = vadd.f32 0.0, %v5948
  %v5950 = vpop.f32.mrf.mxu0
  %v5951 = vadd.f32 0.0, %v5950
  %5952 = vmatmul.bf16.gmra.mxu0 %v4493
  %v5953 = vpop.f32.mrf.mxu0
  %v5954 = vadd.f32 0.0, %v5953
  %v5955 = vpop.f32.mrf.mxu0
  %v5956 = vadd.f32 0.0, %v5955
  %5957 = vmatmul.bf16.gmra.mxu0 %v4496
  %v5958 = vpop.f32.mrf.mxu0
  %v5959 = vadd.f32 0.0, %v5958
  %v5960 = vpop.f32.mrf.mxu0
  %v5961 = vadd.f32 0.0, %v5960
  %5962 = vmatmul.bf16.gmra.mxu0 %v4499
  %v5963 = vpop.f32.mrf.mxu0
  %v5964 = vadd.f32 0.0, %v5963
  %v5965 = vpop.f32.mrf.mxu0
  %v5966 = vadd.f32 0.0, %v5965
  %5967 = vmatmul.bf16.gmra.mxu0 %v4502
  %v5968 = vpop.f32.mrf.mxu0
  %v5969 = vadd.f32 0.0, %v5968
  %v5970 = vpop.f32.mrf.mxu0
  %v5971 = vadd.f32 0.0, %v5970
  %5972 = vmatmul.bf16.gmra.mxu0 %v4505
  %v5973 = vpop.f32.mrf.mxu0
  %v5974 = vadd.f32 0.0, %v5973
  %v5975 = vpop.f32.mrf.mxu0
  %v5976 = vadd.f32 0.0, %v5975
  %5977 = vmatmul.bf16.gmra.mxu0 %v4508
  %v5978 = vpop.f32.mrf.mxu0
  %v5979 = vadd.f32 0.0, %v5978
  %v5980 = vpop.f32.mrf.mxu0
  %v5981 = vadd.f32 0.0, %v5980
  %5982 = vmatmul.bf16.gmra.mxu0 %v5814
  %v5983 = vpop.f32.mrf.mxu0
  %v5984 = vadd.f32 0.0, %v5983
  %v5985 = vpop.f32.mrf.mxu0
  %v5986 = vadd.f32 0.0, %v5985
  %5987 = vdwg.mxu0
  %v5988 = vadd.f32 %v5722, %v5829
  %v5989 = vadd.f32 %v5723, %v5831
  %v5990 = vadd.f32 %v5724, %v5834
  %v5991 = vadd.f32 %v5725, %v5836
  %v5992 = vadd.f32 %v5726, %v5839
  %v5993 = vadd.f32 %v5727, %v5841
  %v5994 = vadd.f32 %v5728, %v5844
  %v5995 = vadd.f32 %v5729, %v5846
  %v5996 = vadd.f32 %v5730, %v5849
  %v5997 = vadd.f32 %v5731, %v5851
  %v5998 = vadd.f32 %v5732, %v5854
  %v5999 = vadd.f32 %v5733, %v5856
  %v6000 = vadd.f32 %v5734, %v5859
  %v6001 = vadd.f32 %v5735, %v5861
  %v6002 = vadd.f32 %v5736, %v5864
  %v6003 = vadd.f32 %v5737, %v5866
  %v6004 = vadd.f32 %v5738, %v5869
  %v6005 = vadd.f32 %v5739, %v5871
  %v6006 = vadd.f32 %v5740, %v5874
  %v6007 = vadd.f32 %v5741, %v5876
  %v6008 = vadd.f32 %v5742, %v5879
  %v6009 = vadd.f32 %v5743, %v5881
  %v6010 = vadd.f32 %v5744, %v5884
  %v6011 = vadd.f32 %v5745, %v5886
  %v6012 = vadd.f32 %v5746, %v5889
  %v6013 = vadd.f32 %v5747, %v5891
  %v6014 = vadd.f32 %v5748, %v5894
  %v6015 = vadd.f32 %v5749, %v5896
  %v6016 = vadd.f32 %v5750, %v5899
  %v6017 = vadd.f32 %v5751, %v5901
  %v6018 = vadd.f32 %v5752, %v5904
  %v6019 = vadd.f32 %v5753, %v5906
  %v6020 = vadd.f32 %v5754, %v5909
  %v6021 = vadd.f32 %v5755, %v5911
  %v6022 = vadd.f32 %v5756, %v5914
  %v6023 = vadd.f32 %v5757, %v5916
  %v6024 = vadd.f32 %v5758, %v5919
  %v6025 = vadd.f32 %v5759, %v5921
  %v6026 = vadd.f32 %v5760, %v5924
  %v6027 = vadd.f32 %v5761, %v5926
  %v6028 = vadd.f32 %v5762, %v5929
  %v6029 = vadd.f32 %v5763, %v5931
  %v6030 = vadd.f32 %v5764, %v5934
  %v6031 = vadd.f32 %v5765, %v5936
  %v6032 = vadd.f32 %v5766, %v5939
  %v6033 = vadd.f32 %v5767, %v5941
  %v6034 = vadd.f32 %v5768, %v5944
  %v6035 = vadd.f32 %v5769, %v5946
  %v6036 = vadd.f32 %v5770, %v5949
  %v6037 = vadd.f32 %v5771, %v5951
  %v6038 = vadd.f32 %v5772, %v5954
  %v6039 = vadd.f32 %v5773, %v5956
  %v6040 = vadd.f32 %v5774, %v5959
  %v6041 = vadd.f32 %v5775, %v5961
  %v6042 = vadd.f32 %v5776, %v5964
  %v6043 = vadd.f32 %v5777, %v5966
  %v6044 = vadd.f32 %v5778, %v5969
  %v6045 = vadd.f32 %v5779, %v5971
  %v6046 = vadd.f32 %v5780, %v5974
  %v6047 = vadd.f32 %v5781, %v5976
  %v6048 = vadd.f32 %v5782, %v5979
  %v6049 = vadd.f32 %v5783, %v5981
  %v6050 = vadd.f32 %v5784, %v5984
  %v6051 = vadd.f32 %v5785, %v5986
  %v6052 = vrot.slane %v3967, 2
  %v6053 = vrot.slane %v3968, 2
  %v6054 = vsel %vm1061, %v6052, %v6053
  %v6055 = vrot.slane %v3969, 2
  %v6056 = vsel %vm1061, %v6053, %v6055
  %v6057 = vrot.slane %v4021, 2
  %v6058 = vrot.slane %v4022, 2
  %v6059 = vsel %vm1061, %v6057, %v6058
  %v6060 = vrot.slane %v4023, 2
  %v6061 = vsel %vm1061, %v6058, %v6060
  %v6066 = vpack.c.bf16 %v6056, %v6054
  %v6067 = vpack.c.bf16 %v6061, %v6059
  %s6068 = scalar_lea.vmem %s4, 10
  %v6069 = vld [vmem:[%s6068] sm:$0x3]
  %v6071 = vsel %vm523, %v6066, 0
  %v6074 = vsel %vm523, %v6067, 0
  %v6077 = vsel %vm620, %v6069, 0
  %6079 = vmatpush.bf16.msra.mxu0 0
  %6080 = vmatpush.bf16.msra.mxu0 0
  %6081 = vmatpush.bf16.msra.mxu0 0
  %6082 = vmatpush.bf16.msra.mxu0 0
  %6083 = vmatpush.bf16.msra.mxu0 0
  %6084 = vmatpush.bf16.msra.mxu0 0
  %6085 = vmatpush.bf16.msra.mxu0 0
  %6086 = vmatpush.bf16.msra.mxu0 %v6077
  %6087 = vmatmul.bf16.gmra.mxu0 %v5212
  %v6088 = vpop.f32.mrf.mxu0
  %v6089 = vadd.f32 0.0, %v6088
  %v6090 = vpop.f32.mrf.mxu0
  %v6091 = vadd.f32 0.0, %v6090
  %6092 = vmatmul.bf16.gmra.mxu0 %v5215
  %v6093 = vpop.f32.mrf.mxu0
  %v6094 = vadd.f32 0.0, %v6093
  %v6095 = vpop.f32.mrf.mxu0
  %v6096 = vadd.f32 0.0, %v6095
  %6097 = vmatmul.bf16.gmra.mxu0 %v5218
  %v6098 = vpop.f32.mrf.mxu0
  %v6099 = vadd.f32 0.0, %v6098
  %v6100 = vpop.f32.mrf.mxu0
  %v6101 = vadd.f32 0.0, %v6100
  %6102 = vmatmul.bf16.gmra.mxu0 %v5221
  %v6103 = vpop.f32.mrf.mxu0
  %v6104 = vadd.f32 0.0, %v6103
  %v6105 = vpop.f32.mrf.mxu0
  %v6106 = vadd.f32 0.0, %v6105
  %6107 = vmatmul.bf16.gmra.mxu0 %v5224
  %v6108 = vpop.f32.mrf.mxu0
  %v6109 = vadd.f32 0.0, %v6108
  %v6110 = vpop.f32.mrf.mxu0
  %v6111 = vadd.f32 0.0, %v6110
  %6112 = vmatmul.bf16.gmra.mxu0 %v5227
  %v6113 = vpop.f32.mrf.mxu0
  %v6114 = vadd.f32 0.0, %v6113
  %v6115 = vpop.f32.mrf.mxu0
  %v6116 = vadd.f32 0.0, %v6115
  %6117 = vmatmul.bf16.gmra.mxu0 %v5230
  %v6118 = vpop.f32.mrf.mxu0
  %v6119 = vadd.f32 0.0, %v6118
  %v6120 = vpop.f32.mrf.mxu0
  %v6121 = vadd.f32 0.0, %v6120
  %6122 = vmatmul.bf16.gmra.mxu0 %v5233
  %v6123 = vpop.f32.mrf.mxu0
  %v6124 = vadd.f32 0.0, %v6123
  %v6125 = vpop.f32.mrf.mxu0
  %v6126 = vadd.f32 0.0, %v6125
  %6127 = vmatmul.bf16.gmra.mxu0 %v5236
  %v6128 = vpop.f32.mrf.mxu0
  %v6129 = vadd.f32 0.0, %v6128
  %v6130 = vpop.f32.mrf.mxu0
  %v6131 = vadd.f32 0.0, %v6130
  %6132 = vmatmul.bf16.gmra.mxu0 %v5239
  %v6133 = vpop.f32.mrf.mxu0
  %v6134 = vadd.f32 0.0, %v6133
  %v6135 = vpop.f32.mrf.mxu0
  %v6136 = vadd.f32 0.0, %v6135
  %6137 = vmatmul.bf16.gmra.mxu0 %v5242
  %v6138 = vpop.f32.mrf.mxu0
  %v6139 = vadd.f32 0.0, %v6138
  %v6140 = vpop.f32.mrf.mxu0
  %v6141 = vadd.f32 0.0, %v6140
  %6142 = vmatmul.bf16.gmra.mxu0 %v5245
  %v6143 = vpop.f32.mrf.mxu0
  %v6144 = vadd.f32 0.0, %v6143
  %v6145 = vpop.f32.mrf.mxu0
  %v6146 = vadd.f32 0.0, %v6145
  %6147 = vmatmul.bf16.gmra.mxu0 %v5248
  %v6148 = vpop.f32.mrf.mxu0
  %v6149 = vadd.f32 0.0, %v6148
  %v6150 = vpop.f32.mrf.mxu0
  %v6151 = vadd.f32 0.0, %v6150
  %6152 = vmatmul.bf16.gmra.mxu0 %v5251
  %v6153 = vpop.f32.mrf.mxu0
  %v6154 = vadd.f32 0.0, %v6153
  %v6155 = vpop.f32.mrf.mxu0
  %v6156 = vadd.f32 0.0, %v6155
  %6157 = vmatmul.bf16.gmra.mxu0 %v5254
  %v6158 = vpop.f32.mrf.mxu0
  %v6159 = vadd.f32 0.0, %v6158
  %v6160 = vpop.f32.mrf.mxu0
  %v6161 = vadd.f32 0.0, %v6160
  %6162 = vmatmul.bf16.gmra.mxu0 %v6071
  %v6163 = vpop.f32.mrf.mxu0
  %v6164 = vadd.f32 0.0, %v6163
  %v6165 = vpop.f32.mrf.mxu0
  %v6166 = vadd.f32 0.0, %v6165
  %6167 = vmatmul.bf16.gmra.mxu0 %v5260
  %v6168 = vpop.f32.mrf.mxu0
  %v6169 = vadd.f32 0.0, %v6168
  %v6170 = vpop.f32.mrf.mxu0
  %v6171 = vadd.f32 0.0, %v6170
  %6172 = vmatmul.bf16.gmra.mxu0 %v5263
  %v6173 = vpop.f32.mrf.mxu0
  %v6174 = vadd.f32 0.0, %v6173
  %v6175 = vpop.f32.mrf.mxu0
  %v6176 = vadd.f32 0.0, %v6175
  %6177 = vmatmul.bf16.gmra.mxu0 %v5266
  %v6178 = vpop.f32.mrf.mxu0
  %v6179 = vadd.f32 0.0, %v6178
  %v6180 = vpop.f32.mrf.mxu0
  %v6181 = vadd.f32 0.0, %v6180
  %6182 = vmatmul.bf16.gmra.mxu0 %v5269
  %v6183 = vpop.f32.mrf.mxu0
  %v6184 = vadd.f32 0.0, %v6183
  %v6185 = vpop.f32.mrf.mxu0
  %v6186 = vadd.f32 0.0, %v6185
  %6187 = vmatmul.bf16.gmra.mxu0 %v5272
  %v6188 = vpop.f32.mrf.mxu0
  %v6189 = vadd.f32 0.0, %v6188
  %v6190 = vpop.f32.mrf.mxu0
  %v6191 = vadd.f32 0.0, %v6190
  %6192 = vmatmul.bf16.gmra.mxu0 %v5275
  %v6193 = vpop.f32.mrf.mxu0
  %v6194 = vadd.f32 0.0, %v6193
  %v6195 = vpop.f32.mrf.mxu0
  %v6196 = vadd.f32 0.0, %v6195
  %6197 = vmatmul.bf16.gmra.mxu0 %v5278
  %v6198 = vpop.f32.mrf.mxu0
  %v6199 = vadd.f32 0.0, %v6198
  %v6200 = vpop.f32.mrf.mxu0
  %v6201 = vadd.f32 0.0, %v6200
  %6202 = vmatmul.bf16.gmra.mxu0 %v5281
  %v6203 = vpop.f32.mrf.mxu0
  %v6204 = vadd.f32 0.0, %v6203
  %v6205 = vpop.f32.mrf.mxu0
  %v6206 = vadd.f32 0.0, %v6205
  %6207 = vmatmul.bf16.gmra.mxu0 %v5284
  %v6208 = vpop.f32.mrf.mxu0
  %v6209 = vadd.f32 0.0, %v6208
  %v6210 = vpop.f32.mrf.mxu0
  %v6211 = vadd.f32 0.0, %v6210
  %6212 = vmatmul.bf16.gmra.mxu0 %v5287
  %v6213 = vpop.f32.mrf.mxu0
  %v6214 = vadd.f32 0.0, %v6213
  %v6215 = vpop.f32.mrf.mxu0
  %v6216 = vadd.f32 0.0, %v6215
  %6217 = vmatmul.bf16.gmra.mxu0 %v5290
  %v6218 = vpop.f32.mrf.mxu0
  %v6219 = vadd.f32 0.0, %v6218
  %v6220 = vpop.f32.mrf.mxu0
  %v6221 = vadd.f32 0.0, %v6220
  %6222 = vmatmul.bf16.gmra.mxu0 %v5293
  %v6223 = vpop.f32.mrf.mxu0
  %v6224 = vadd.f32 0.0, %v6223
  %v6225 = vpop.f32.mrf.mxu0
  %v6226 = vadd.f32 0.0, %v6225
  %6227 = vmatmul.bf16.gmra.mxu0 %v5296
  %v6228 = vpop.f32.mrf.mxu0
  %v6229 = vadd.f32 0.0, %v6228
  %v6230 = vpop.f32.mrf.mxu0
  %v6231 = vadd.f32 0.0, %v6230
  %6232 = vmatmul.bf16.gmra.mxu0 %v5299
  %v6233 = vpop.f32.mrf.mxu0
  %v6234 = vadd.f32 0.0, %v6233
  %v6235 = vpop.f32.mrf.mxu0
  %v6236 = vadd.f32 0.0, %v6235
  %6237 = vmatmul.bf16.gmra.mxu0 %v5302
  %v6238 = vpop.f32.mrf.mxu0
  %v6239 = vadd.f32 0.0, %v6238
  %v6240 = vpop.f32.mrf.mxu0
  %v6241 = vadd.f32 0.0, %v6240
  %6242 = vmatmul.bf16.gmra.mxu0 %v6074
  %v6243 = vpop.f32.mrf.mxu0
  %v6244 = vadd.f32 0.0, %v6243
  %v6245 = vpop.f32.mrf.mxu0
  %v6246 = vadd.f32 0.0, %v6245
  %6247 = vdwg.mxu0
  %v6248 = vadd.f32 %v5988, %v6089
  %v6249 = vadd.f32 %v5989, %v6091
  %v6250 = vadd.f32 %v5990, %v6094
  %v6251 = vadd.f32 %v5991, %v6096
  %v6252 = vadd.f32 %v5992, %v6099
  %v6253 = vadd.f32 %v5993, %v6101
  %v6254 = vadd.f32 %v5994, %v6104
  %v6255 = vadd.f32 %v5995, %v6106
  %v6256 = vadd.f32 %v5996, %v6109
  %v6257 = vadd.f32 %v5997, %v6111
  %v6258 = vadd.f32 %v5998, %v6114
  %v6259 = vadd.f32 %v5999, %v6116
  %v6260 = vadd.f32 %v6000, %v6119
  %v6261 = vadd.f32 %v6001, %v6121
  %v6262 = vadd.f32 %v6002, %v6124
  %v6263 = vadd.f32 %v6003, %v6126
  %v6264 = vadd.f32 %v6004, %v6129
  %v6265 = vadd.f32 %v6005, %v6131
  %v6266 = vadd.f32 %v6006, %v6134
  %v6267 = vadd.f32 %v6007, %v6136
  %v6268 = vadd.f32 %v6008, %v6139
  %v6269 = vadd.f32 %v6009, %v6141
  %v6270 = vadd.f32 %v6010, %v6144
  %v6271 = vadd.f32 %v6011, %v6146
  %v6272 = vadd.f32 %v6012, %v6149
  %v6273 = vadd.f32 %v6013, %v6151
  %v6274 = vadd.f32 %v6014, %v6154
  %v6275 = vadd.f32 %v6015, %v6156
  %v6276 = vadd.f32 %v6016, %v6159
  %v6277 = vadd.f32 %v6017, %v6161
  %v6278 = vadd.f32 %v6018, %v6164
  %v6279 = vadd.f32 %v6019, %v6166
  %v6280 = vadd.f32 %v6020, %v6169
  %v6281 = vadd.f32 %v6021, %v6171
  %v6282 = vadd.f32 %v6022, %v6174
  %v6283 = vadd.f32 %v6023, %v6176
  %v6284 = vadd.f32 %v6024, %v6179
  %v6285 = vadd.f32 %v6025, %v6181
  %v6286 = vadd.f32 %v6026, %v6184
  %v6287 = vadd.f32 %v6027, %v6186
  %v6288 = vadd.f32 %v6028, %v6189
  %v6289 = vadd.f32 %v6029, %v6191
  %v6290 = vadd.f32 %v6030, %v6194
  %v6291 = vadd.f32 %v6031, %v6196
  %v6292 = vadd.f32 %v6032, %v6199
  %v6293 = vadd.f32 %v6033, %v6201
  %v6294 = vadd.f32 %v6034, %v6204
  %v6295 = vadd.f32 %v6035, %v6206
  %v6296 = vadd.f32 %v6036, %v6209
  %v6297 = vadd.f32 %v6037, %v6211
  %v6298 = vadd.f32 %v6038, %v6214
  %v6299 = vadd.f32 %v6039, %v6216
  %v6300 = vadd.f32 %v6040, %v6219
  %v6301 = vadd.f32 %v6041, %v6221
  %v6302 = vadd.f32 %v6042, %v6224
  %v6303 = vadd.f32 %v6043, %v6226
  %v6304 = vadd.f32 %v6044, %v6229
  %v6305 = vadd.f32 %v6045, %v6231
  %v6306 = vadd.f32 %v6046, %v6234
  %v6307 = vadd.f32 %v6047, %v6236
  %v6308 = vadd.f32 %v6048, %v6239
  %v6309 = vadd.f32 %v6049, %v6241
  %v6310 = vadd.f32 %v6050, %v6244
  %v6311 = vadd.f32 %v6051, %v6246
  %v6312 = vpack.c.bf16 %v3971, %v3970
  %v6313 = vpack.c.bf16 %v4025, %v4024
  %s6314 = scalar_lea.vmem %s4, 12
  %v6315 = vld [vmem:[%s6314] sm:$0x3]
  %v6317 = vsel %vm523, %v6312, 0
  %v6320 = vsel %vm523, %v6313, 0
  %v6323 = vsel %vm620, %v6315, 0
  %6325 = vmatpush.bf16.msra.mxu0 0
  %6326 = vmatpush.bf16.msra.mxu0 0
  %6327 = vmatpush.bf16.msra.mxu0 0
  %6328 = vmatpush.bf16.msra.mxu0 0
  %6329 = vmatpush.bf16.msra.mxu0 0
  %6330 = vmatpush.bf16.msra.mxu0 0
  %6331 = vmatpush.bf16.msra.mxu0 0
  %6332 = vmatpush.bf16.msra.mxu0 %v6323
  %6333 = vmatmul.bf16.gmra.mxu0 %v4689
  %v6334 = vpop.f32.mrf.mxu0
  %v6335 = vadd.f32 0.0, %v6334
  %v6336 = vpop.f32.mrf.mxu0
  %v6337 = vadd.f32 0.0, %v6336
  %6338 = vmatmul.bf16.gmra.mxu0 %v4692
  %v6339 = vpop.f32.mrf.mxu0
  %v6340 = vadd.f32 0.0, %v6339
  %v6341 = vpop.f32.mrf.mxu0
  %v6342 = vadd.f32 0.0, %v6341
  %6343 = vmatmul.bf16.gmra.mxu0 %v4695
  %v6344 = vpop.f32.mrf.mxu0
  %v6345 = vadd.f32 0.0, %v6344
  %v6346 = vpop.f32.mrf.mxu0
  %v6347 = vadd.f32 0.0, %v6346
  %6348 = vmatmul.bf16.gmra.mxu0 %v4698
  %v6349 = vpop.f32.mrf.mxu0
  %v6350 = vadd.f32 0.0, %v6349
  %v6351 = vpop.f32.mrf.mxu0
  %v6352 = vadd.f32 0.0, %v6351
  %6353 = vmatmul.bf16.gmra.mxu0 %v4701
  %v6354 = vpop.f32.mrf.mxu0
  %v6355 = vadd.f32 0.0, %v6354
  %v6356 = vpop.f32.mrf.mxu0
  %v6357 = vadd.f32 0.0, %v6356
  %6358 = vmatmul.bf16.gmra.mxu0 %v4704
  %v6359 = vpop.f32.mrf.mxu0
  %v6360 = vadd.f32 0.0, %v6359
  %v6361 = vpop.f32.mrf.mxu0
  %v6362 = vadd.f32 0.0, %v6361
  %6363 = vmatmul.bf16.gmra.mxu0 %v4707
  %v6364 = vpop.f32.mrf.mxu0
  %v6365 = vadd.f32 0.0, %v6364
  %v6366 = vpop.f32.mrf.mxu0
  %v6367 = vadd.f32 0.0, %v6366
  %6368 = vmatmul.bf16.gmra.mxu0 %v4710
  %v6369 = vpop.f32.mrf.mxu0
  %v6370 = vadd.f32 0.0, %v6369
  %v6371 = vpop.f32.mrf.mxu0
  %v6372 = vadd.f32 0.0, %v6371
  %6373 = vmatmul.bf16.gmra.mxu0 %v4713
  %v6374 = vpop.f32.mrf.mxu0
  %v6375 = vadd.f32 0.0, %v6374
  %v6376 = vpop.f32.mrf.mxu0
  %v6377 = vadd.f32 0.0, %v6376
  %6378 = vmatmul.bf16.gmra.mxu0 %v4716
  %v6379 = vpop.f32.mrf.mxu0
  %v6380 = vadd.f32 0.0, %v6379
  %v6381 = vpop.f32.mrf.mxu0
  %v6382 = vadd.f32 0.0, %v6381
  %6383 = vmatmul.bf16.gmra.mxu0 %v4719
  %v6384 = vpop.f32.mrf.mxu0
  %v6385 = vadd.f32 0.0, %v6384
  %v6386 = vpop.f32.mrf.mxu0
  %v6387 = vadd.f32 0.0, %v6386
  %6388 = vmatmul.bf16.gmra.mxu0 %v4722
  %v6389 = vpop.f32.mrf.mxu0
  %v6390 = vadd.f32 0.0, %v6389
  %v6391 = vpop.f32.mrf.mxu0
  %v6392 = vadd.f32 0.0, %v6391
  %6393 = vmatmul.bf16.gmra.mxu0 %v4725
  %v6394 = vpop.f32.mrf.mxu0
  %v6395 = vadd.f32 0.0, %v6394
  %v6396 = vpop.f32.mrf.mxu0
  %v6397 = vadd.f32 0.0, %v6396
  %6398 = vmatmul.bf16.gmra.mxu0 %v4728
  %v6399 = vpop.f32.mrf.mxu0
  %v6400 = vadd.f32 0.0, %v6399
  %v6401 = vpop.f32.mrf.mxu0
  %v6402 = vadd.f32 0.0, %v6401
  %6403 = vmatmul.bf16.gmra.mxu0 %v5545
  %v6404 = vpop.f32.mrf.mxu0
  %v6405 = vadd.f32 0.0, %v6404
  %v6406 = vpop.f32.mrf.mxu0
  %v6407 = vadd.f32 0.0, %v6406
  %6408 = vmatmul.bf16.gmra.mxu0 %v6317
  %v6409 = vpop.f32.mrf.mxu0
  %v6410 = vadd.f32 0.0, %v6409
  %v6411 = vpop.f32.mrf.mxu0
  %v6412 = vadd.f32 0.0, %v6411
  %6413 = vmatmul.bf16.gmra.mxu0 %v4737
  %v6414 = vpop.f32.mrf.mxu0
  %v6415 = vadd.f32 0.0, %v6414
  %v6416 = vpop.f32.mrf.mxu0
  %v6417 = vadd.f32 0.0, %v6416
  %6418 = vmatmul.bf16.gmra.mxu0 %v4740
  %v6419 = vpop.f32.mrf.mxu0
  %v6420 = vadd.f32 0.0, %v6419
  %v6421 = vpop.f32.mrf.mxu0
  %v6422 = vadd.f32 0.0, %v6421
  %6423 = vmatmul.bf16.gmra.mxu0 %v4743
  %v6424 = vpop.f32.mrf.mxu0
  %v6425 = vadd.f32 0.0, %v6424
  %v6426 = vpop.f32.mrf.mxu0
  %v6427 = vadd.f32 0.0, %v6426
  %6428 = vmatmul.bf16.gmra.mxu0 %v4746
  %v6429 = vpop.f32.mrf.mxu0
  %v6430 = vadd.f32 0.0, %v6429
  %v6431 = vpop.f32.mrf.mxu0
  %v6432 = vadd.f32 0.0, %v6431
  %6433 = vmatmul.bf16.gmra.mxu0 %v4749
  %v6434 = vpop.f32.mrf.mxu0
  %v6435 = vadd.f32 0.0, %v6434
  %v6436 = vpop.f32.mrf.mxu0
  %v6437 = vadd.f32 0.0, %v6436
  %6438 = vmatmul.bf16.gmra.mxu0 %v4752
  %v6439 = vpop.f32.mrf.mxu0
  %v6440 = vadd.f32 0.0, %v6439
  %v6441 = vpop.f32.mrf.mxu0
  %v6442 = vadd.f32 0.0, %v6441
  %6443 = vmatmul.bf16.gmra.mxu0 %v4755
  %v6444 = vpop.f32.mrf.mxu0
  %v6445 = vadd.f32 0.0, %v6444
  %v6446 = vpop.f32.mrf.mxu0
  %v6447 = vadd.f32 0.0, %v6446
  %6448 = vmatmul.bf16.gmra.mxu0 %v4758
  %v6449 = vpop.f32.mrf.mxu0
  %v6450 = vadd.f32 0.0, %v6449
  %v6451 = vpop.f32.mrf.mxu0
  %v6452 = vadd.f32 0.0, %v6451
  %6453 = vmatmul.bf16.gmra.mxu0 %v4761
  %v6454 = vpop.f32.mrf.mxu0
  %v6455 = vadd.f32 0.0, %v6454
  %v6456 = vpop.f32.mrf.mxu0
  %v6457 = vadd.f32 0.0, %v6456
  %6458 = vmatmul.bf16.gmra.mxu0 %v4764
  %v6459 = vpop.f32.mrf.mxu0
  %v6460 = vadd.f32 0.0, %v6459
  %v6461 = vpop.f32.mrf.mxu0
  %v6462 = vadd.f32 0.0, %v6461
  %6463 = vmatmul.bf16.gmra.mxu0 %v4767
  %v6464 = vpop.f32.mrf.mxu0
  %v6465 = vadd.f32 0.0, %v6464
  %v6466 = vpop.f32.mrf.mxu0
  %v6467 = vadd.f32 0.0, %v6466
  %6468 = vmatmul.bf16.gmra.mxu0 %v4770
  %v6469 = vpop.f32.mrf.mxu0
  %v6470 = vadd.f32 0.0, %v6469
  %v6471 = vpop.f32.mrf.mxu0
  %v6472 = vadd.f32 0.0, %v6471
  %6473 = vmatmul.bf16.gmra.mxu0 %v4773
  %v6474 = vpop.f32.mrf.mxu0
  %v6475 = vadd.f32 0.0, %v6474
  %v6476 = vpop.f32.mrf.mxu0
  %v6477 = vadd.f32 0.0, %v6476
  %6478 = vmatmul.bf16.gmra.mxu0 %v4776
  %v6479 = vpop.f32.mrf.mxu0
  %v6480 = vadd.f32 0.0, %v6479
  %v6481 = vpop.f32.mrf.mxu0
  %v6482 = vadd.f32 0.0, %v6481
  %6483 = vmatmul.bf16.gmra.mxu0 %v5548
  %v6484 = vpop.f32.mrf.mxu0
  %v6485 = vadd.f32 0.0, %v6484
  %v6486 = vpop.f32.mrf.mxu0
  %v6487 = vadd.f32 0.0, %v6486
  %6488 = vmatmul.bf16.gmra.mxu0 %v6320
  %v6489 = vpop.f32.mrf.mxu0
  %v6490 = vadd.f32 0.0, %v6489
  %v6491 = vpop.f32.mrf.mxu0
  %v6492 = vadd.f32 0.0, %v6491
  %6493 = vdwg.mxu0
  %v6494 = vadd.f32 %v6248, %v6335
  %v6495 = vadd.f32 %v6249, %v6337
  %v6496 = vadd.f32 %v6250, %v6340
  %v6497 = vadd.f32 %v6251, %v6342
  %v6498 = vadd.f32 %v6252, %v6345
  %v6499 = vadd.f32 %v6253, %v6347
  %v6500 = vadd.f32 %v6254, %v6350
  %v6501 = vadd.f32 %v6255, %v6352
  %v6502 = vadd.f32 %v6256, %v6355
  %v6503 = vadd.f32 %v6257, %v6357
  %v6504 = vadd.f32 %v6258, %v6360
  %v6505 = vadd.f32 %v6259, %v6362
  %v6506 = vadd.f32 %v6260, %v6365
  %v6507 = vadd.f32 %v6261, %v6367
  %v6508 = vadd.f32 %v6262, %v6370
  %v6509 = vadd.f32 %v6263, %v6372
  %v6510 = vadd.f32 %v6264, %v6375
  %v6511 = vadd.f32 %v6265, %v6377
  %v6512 = vadd.f32 %v6266, %v6380
  %v6513 = vadd.f32 %v6267, %v6382
  %v6514 = vadd.f32 %v6268, %v6385
  %v6515 = vadd.f32 %v6269, %v6387
  %v6516 = vadd.f32 %v6270, %v6390
  %v6517 = vadd.f32 %v6271, %v6392
  %v6518 = vadd.f32 %v6272, %v6395
  %v6519 = vadd.f32 %v6273, %v6397
  %v6520 = vadd.f32 %v6274, %v6400
  %v6521 = vadd.f32 %v6275, %v6402
  %v6522 = vadd.f32 %v6276, %v6405
  %v6523 = vadd.f32 %v6277, %v6407
  %v6524 = vadd.f32 %v6278, %v6410
  %v6525 = vadd.f32 %v6279, %v6412
  %v6526 = vadd.f32 %v6280, %v6415
  %v6527 = vadd.f32 %v6281, %v6417
  %v6528 = vadd.f32 %v6282, %v6420
  %v6529 = vadd.f32 %v6283, %v6422
  %v6530 = vadd.f32 %v6284, %v6425
  %v6531 = vadd.f32 %v6285, %v6427
  %v6532 = vadd.f32 %v6286, %v6430
  %v6533 = vadd.f32 %v6287, %v6432
  %v6534 = vadd.f32 %v6288, %v6435
  %v6535 = vadd.f32 %v6289, %v6437
  %v6536 = vadd.f32 %v6290, %v6440
  %v6537 = vadd.f32 %v6291, %v6442
  %v6538 = vadd.f32 %v6292, %v6445
  %v6539 = vadd.f32 %v6293, %v6447
  %v6540 = vadd.f32 %v6294, %v6450
  %v6541 = vadd.f32 %v6295, %v6452
  %v6542 = vadd.f32 %v6296, %v6455
  %v6543 = vadd.f32 %v6297, %v6457
  %v6544 = vadd.f32 %v6298, %v6460
  %v6545 = vadd.f32 %v6299, %v6462
  %v6546 = vadd.f32 %v6300, %v6465
  %v6547 = vadd.f32 %v6301, %v6467
  %v6548 = vadd.f32 %v6302, %v6470
  %v6549 = vadd.f32 %v6303, %v6472
  %v6550 = vadd.f32 %v6304, %v6475
  %v6551 = vadd.f32 %v6305, %v6477
  %v6552 = vadd.f32 %v6306, %v6480
  %v6553 = vadd.f32 %v6307, %v6482
  %v6554 = vadd.f32 %v6308, %v6485
  %v6555 = vadd.f32 %v6309, %v6487
  %v6556 = vadd.f32 %v6310, %v6490
  %v6557 = vadd.f32 %v6311, %v6492
  %v6564 = vrot.slane %v3970, 1
  %v6565 = vrot.slane %v3971, 1
  %v6566 = vsel %vm264, %v6564, %v6565
  %v6567 = vrot.slane %v3972, 1
  %v6568 = vsel %vm264, %v6565, %v6567
  %v6569 = vrot.slane %v4024, 1
  %v6570 = vrot.slane %v4025, 1
  %v6571 = vsel %vm264, %v6569, %v6570
  %v6572 = vrot.slane %v4026, 1
  %v6573 = vsel %vm264, %v6570, %v6572
  %v6578 = vpack.c.bf16 %v6568, %v6566
  %v6579 = vpack.c.bf16 %v6573, %v6571
  %s6580 = scalar_lea.vmem %s4, 14
  %v6581 = vld [vmem:[%s6580] sm:$0x3]
  %v6583 = vsel %vm523, %v6578, 0
  %v6586 = vsel %vm523, %v6579, 0
  %v6589 = vsel %vm620, %v6581, 0
  %6591 = vmatpush.bf16.msra.mxu0 0
  %6592 = vmatpush.bf16.msra.mxu0 0
  %6593 = vmatpush.bf16.msra.mxu0 0
  %6594 = vmatpush.bf16.msra.mxu0 0
  %6595 = vmatpush.bf16.msra.mxu0 0
  %6596 = vmatpush.bf16.msra.mxu0 0
  %6597 = vmatpush.bf16.msra.mxu0 0
  %6598 = vmatpush.bf16.msra.mxu0 %v6589
  %6599 = vmatmul.bf16.gmra.mxu0 %v4421
  %v6600 = vpop.f32.mrf.mxu0
  %v6601 = vadd.f32 0.0, %v6600
  %v6602 = vpop.f32.mrf.mxu0
  %v6603 = vadd.f32 0.0, %v6602
  %6604 = vmatmul.bf16.gmra.mxu0 %v4424
  %v6605 = vpop.f32.mrf.mxu0
  %v6606 = vadd.f32 0.0, %v6605
  %v6607 = vpop.f32.mrf.mxu0
  %v6608 = vadd.f32 0.0, %v6607
  %6609 = vmatmul.bf16.gmra.mxu0 %v4427
  %v6610 = vpop.f32.mrf.mxu0
  %v6611 = vadd.f32 0.0, %v6610
  %v6612 = vpop.f32.mrf.mxu0
  %v6613 = vadd.f32 0.0, %v6612
  %6614 = vmatmul.bf16.gmra.mxu0 %v4430
  %v6615 = vpop.f32.mrf.mxu0
  %v6616 = vadd.f32 0.0, %v6615
  %v6617 = vpop.f32.mrf.mxu0
  %v6618 = vadd.f32 0.0, %v6617
  %6619 = vmatmul.bf16.gmra.mxu0 %v4433
  %v6620 = vpop.f32.mrf.mxu0
  %v6621 = vadd.f32 0.0, %v6620
  %v6622 = vpop.f32.mrf.mxu0
  %v6623 = vadd.f32 0.0, %v6622
  %6624 = vmatmul.bf16.gmra.mxu0 %v4436
  %v6625 = vpop.f32.mrf.mxu0
  %v6626 = vadd.f32 0.0, %v6625
  %v6627 = vpop.f32.mrf.mxu0
  %v6628 = vadd.f32 0.0, %v6627
  %6629 = vmatmul.bf16.gmra.mxu0 %v4439
  %v6630 = vpop.f32.mrf.mxu0
  %v6631 = vadd.f32 0.0, %v6630
  %v6632 = vpop.f32.mrf.mxu0
  %v6633 = vadd.f32 0.0, %v6632
  %6634 = vmatmul.bf16.gmra.mxu0 %v4442
  %v6635 = vpop.f32.mrf.mxu0
  %v6636 = vadd.f32 0.0, %v6635
  %v6637 = vpop.f32.mrf.mxu0
  %v6638 = vadd.f32 0.0, %v6637
  %6639 = vmatmul.bf16.gmra.mxu0 %v4445
  %v6640 = vpop.f32.mrf.mxu0
  %v6641 = vadd.f32 0.0, %v6640
  %v6642 = vpop.f32.mrf.mxu0
  %v6643 = vadd.f32 0.0, %v6642
  %6644 = vmatmul.bf16.gmra.mxu0 %v4448
  %v6645 = vpop.f32.mrf.mxu0
  %v6646 = vadd.f32 0.0, %v6645
  %v6647 = vpop.f32.mrf.mxu0
  %v6648 = vadd.f32 0.0, %v6647
  %6649 = vmatmul.bf16.gmra.mxu0 %v4451
  %v6650 = vpop.f32.mrf.mxu0
  %v6651 = vadd.f32 0.0, %v6650
  %v6652 = vpop.f32.mrf.mxu0
  %v6653 = vadd.f32 0.0, %v6652
  %6654 = vmatmul.bf16.gmra.mxu0 %v4454
  %v6655 = vpop.f32.mrf.mxu0
  %v6656 = vadd.f32 0.0, %v6655
  %v6657 = vpop.f32.mrf.mxu0
  %v6658 = vadd.f32 0.0, %v6657
  %6659 = vmatmul.bf16.gmra.mxu0 %v4457
  %v6660 = vpop.f32.mrf.mxu0
  %v6661 = vadd.f32 0.0, %v6660
  %v6662 = vpop.f32.mrf.mxu0
  %v6663 = vadd.f32 0.0, %v6662
  %6664 = vmatmul.bf16.gmra.mxu0 %v4460
  %v6665 = vpop.f32.mrf.mxu0
  %v6666 = vadd.f32 0.0, %v6665
  %v6667 = vpop.f32.mrf.mxu0
  %v6668 = vadd.f32 0.0, %v6667
  %6669 = vmatmul.bf16.gmra.mxu0 %v5811
  %v6670 = vpop.f32.mrf.mxu0
  %v6671 = vadd.f32 0.0, %v6670
  %v6672 = vpop.f32.mrf.mxu0
  %v6673 = vadd.f32 0.0, %v6672
  %6674 = vmatmul.bf16.gmra.mxu0 %v6583
  %v6675 = vpop.f32.mrf.mxu0
  %v6676 = vadd.f32 0.0, %v6675
  %v6677 = vpop.f32.mrf.mxu0
  %v6678 = vadd.f32 0.0, %v6677
  %6679 = vmatmul.bf16.gmra.mxu0 %v4469
  %v6680 = vpop.f32.mrf.mxu0
  %v6681 = vadd.f32 0.0, %v6680
  %v6682 = vpop.f32.mrf.mxu0
  %v6683 = vadd.f32 0.0, %v6682
  %6684 = vmatmul.bf16.gmra.mxu0 %v4472
  %v6685 = vpop.f32.mrf.mxu0
  %v6686 = vadd.f32 0.0, %v6685
  %v6687 = vpop.f32.mrf.mxu0
  %v6688 = vadd.f32 0.0, %v6687
  %6689 = vmatmul.bf16.gmra.mxu0 %v4475
  %v6690 = vpop.f32.mrf.mxu0
  %v6691 = vadd.f32 0.0, %v6690
  %v6692 = vpop.f32.mrf.mxu0
  %v6693 = vadd.f32 0.0, %v6692
  %6694 = vmatmul.bf16.gmra.mxu0 %v4478
  %v6695 = vpop.f32.mrf.mxu0
  %v6696 = vadd.f32 0.0, %v6695
  %v6697 = vpop.f32.mrf.mxu0
  %v6698 = vadd.f32 0.0, %v6697
  %6699 = vmatmul.bf16.gmra.mxu0 %v4481
  %v6700 = vpop.f32.mrf.mxu0
  %v6701 = vadd.f32 0.0, %v6700
  %v6702 = vpop.f32.mrf.mxu0
  %v6703 = vadd.f32 0.0, %v6702
  %6704 = vmatmul.bf16.gmra.mxu0 %v4484
  %v6705 = vpop.f32.mrf.mxu0
  %v6706 = vadd.f32 0.0, %v6705
  %v6707 = vpop.f32.mrf.mxu0
  %v6708 = vadd.f32 0.0, %v6707
  %6709 = vmatmul.bf16.gmra.mxu0 %v4487
  %v6710 = vpop.f32.mrf.mxu0
  %v6711 = vadd.f32 0.0, %v6710
  %v6712 = vpop.f32.mrf.mxu0
  %v6713 = vadd.f32 0.0, %v6712
  %6714 = vmatmul.bf16.gmra.mxu0 %v4490
  %v6715 = vpop.f32.mrf.mxu0
  %v6716 = vadd.f32 0.0, %v6715
  %v6717 = vpop.f32.mrf.mxu0
  %v6718 = vadd.f32 0.0, %v6717
  %6719 = vmatmul.bf16.gmra.mxu0 %v4493
  %v6720 = vpop.f32.mrf.mxu0
  %v6721 = vadd.f32 0.0, %v6720
  %v6722 = vpop.f32.mrf.mxu0
  %v6723 = vadd.f32 0.0, %v6722
  %6724 = vmatmul.bf16.gmra.mxu0 %v4496
  %v6725 = vpop.f32.mrf.mxu0
  %v6726 = vadd.f32 0.0, %v6725
  %v6727 = vpop.f32.mrf.mxu0
  %v6728 = vadd.f32 0.0, %v6727
  %6729 = vmatmul.bf16.gmra.mxu0 %v4499
  %v6730 = vpop.f32.mrf.mxu0
  %v6731 = vadd.f32 0.0, %v6730
  %v6732 = vpop.f32.mrf.mxu0
  %v6733 = vadd.f32 0.0, %v6732
  %6734 = vmatmul.bf16.gmra.mxu0 %v4502
  %v6735 = vpop.f32.mrf.mxu0
  %v6736 = vadd.f32 0.0, %v6735
  %v6737 = vpop.f32.mrf.mxu0
  %v6738 = vadd.f32 0.0, %v6737
  %6739 = vmatmul.bf16.gmra.mxu0 %v4505
  %v6740 = vpop.f32.mrf.mxu0
  %v6741 = vadd.f32 0.0, %v6740
  %v6742 = vpop.f32.mrf.mxu0
  %v6743 = vadd.f32 0.0, %v6742
  %6744 = vmatmul.bf16.gmra.mxu0 %v4508
  %v6745 = vpop.f32.mrf.mxu0
  %v6746 = vadd.f32 0.0, %v6745
  %v6747 = vpop.f32.mrf.mxu0
  %v6748 = vadd.f32 0.0, %v6747
  %6749 = vmatmul.bf16.gmra.mxu0 %v5814
  %v6750 = vpop.f32.mrf.mxu0
  %v6751 = vadd.f32 0.0, %v6750
  %v6752 = vpop.f32.mrf.mxu0
  %v6753 = vadd.f32 0.0, %v6752
  %6754 = vmatmul.bf16.gmra.mxu0 %v6586
  %v6755 = vpop.f32.mrf.mxu0
  %v6756 = vadd.f32 0.0, %v6755
  %v6757 = vpop.f32.mrf.mxu0
  %v6758 = vadd.f32 0.0, %v6757
  %6759 = vdwg.mxu0
  %v6760 = vadd.f32 %v6494, %v6601
  %v6761 = vadd.f32 %v6495, %v6603
  %v6762 = vadd.f32 %v6496, %v6606
  %v6763 = vadd.f32 %v6497, %v6608
  %v6764 = vadd.f32 %v6498, %v6611
  %v6765 = vadd.f32 %v6499, %v6613
  %v6766 = vadd.f32 %v6500, %v6616
  %v6767 = vadd.f32 %v6501, %v6618
  %v6768 = vadd.f32 %v6502, %v6621
  %v6769 = vadd.f32 %v6503, %v6623
  %v6770 = vadd.f32 %v6504, %v6626
  %v6771 = vadd.f32 %v6505, %v6628
  %v6772 = vadd.f32 %v6506, %v6631
  %v6773 = vadd.f32 %v6507, %v6633
  %v6774 = vadd.f32 %v6508, %v6636
  %v6775 = vadd.f32 %v6509, %v6638
  %v6776 = vadd.f32 %v6510, %v6641
  %v6777 = vadd.f32 %v6511, %v6643
  %v6778 = vadd.f32 %v6512, %v6646
  %v6779 = vadd.f32 %v6513, %v6648
  %v6780 = vadd.f32 %v6514, %v6651
  %v6781 = vadd.f32 %v6515, %v6653
  %v6782 = vadd.f32 %v6516, %v6656
  %v6783 = vadd.f32 %v6517, %v6658
  %v6784 = vadd.f32 %v6518, %v6661
  %v6785 = vadd.f32 %v6519, %v6663
  %v6786 = vadd.f32 %v6520, %v6666
  %v6787 = vadd.f32 %v6521, %v6668
  %v6788 = vadd.f32 %v6522, %v6671
  %v6789 = vadd.f32 %v6523, %v6673
  %v6790 = vadd.f32 %v6524, %v6676
  %v6791 = vadd.f32 %v6525, %v6678
  %v6792 = vadd.f32 %v6526, %v6681
  %v6793 = vadd.f32 %v6527, %v6683
  %v6794 = vadd.f32 %v6528, %v6686
  %v6795 = vadd.f32 %v6529, %v6688
  %v6796 = vadd.f32 %v6530, %v6691
  %v6797 = vadd.f32 %v6531, %v6693
  %v6798 = vadd.f32 %v6532, %v6696
  %v6799 = vadd.f32 %v6533, %v6698
  %v6800 = vadd.f32 %v6534, %v6701
  %v6801 = vadd.f32 %v6535, %v6703
  %v6802 = vadd.f32 %v6536, %v6706
  %v6803 = vadd.f32 %v6537, %v6708
  %v6804 = vadd.f32 %v6538, %v6711
  %v6805 = vadd.f32 %v6539, %v6713
  %v6806 = vadd.f32 %v6540, %v6716
  %v6807 = vadd.f32 %v6541, %v6718
  %v6808 = vadd.f32 %v6542, %v6721
  %v6809 = vadd.f32 %v6543, %v6723
  %v6810 = vadd.f32 %v6544, %v6726
  %v6811 = vadd.f32 %v6545, %v6728
  %v6812 = vadd.f32 %v6546, %v6731
  %v6813 = vadd.f32 %v6547, %v6733
  %v6814 = vadd.f32 %v6548, %v6736
  %v6815 = vadd.f32 %v6549, %v6738
  %v6816 = vadd.f32 %v6550, %v6741
  %v6817 = vadd.f32 %v6551, %v6743
  %v6818 = vadd.f32 %v6552, %v6746
  %v6819 = vadd.f32 %v6553, %v6748
  %v6820 = vadd.f32 %v6554, %v6751
  %v6821 = vadd.f32 %v6555, %v6753
  %v6822 = vadd.f32 %v6556, %v6756
  %v6823 = vadd.f32 %v6557, %v6758
  %v6824 = vrot.slane %v3970, 2
  %v6825 = vrot.slane %v3971, 2
  %v6826 = vsel %vm1061, %v6824, %v6825
  %v6827 = vrot.slane %v3972, 2
  %v6828 = vsel %vm1061, %v6825, %v6827
  %v6829 = vrot.slane %v4024, 2
  %v6830 = vrot.slane %v4025, 2
  %v6831 = vsel %vm1061, %v6829, %v6830
  %v6832 = vrot.slane %v4026, 2
  %v6833 = vsel %vm1061, %v6830, %v6832
  %v6838 = vpack.c.bf16 %v6828, %v6826
  %v6839 = vpack.c.bf16 %v6833, %v6831
  %s6840 = scalar_lea.vmem %s4, 16
  %v6841 = vld [vmem:[%s6840] sm:$0x3]
  %v6843 = vsel %vm523, %v6838, 0
  %v6846 = vsel %vm523, %v6839, 0
  %v6849 = vsel %vm620, %v6841, 0
  %6851 = vmatpush.bf16.msra.mxu0 0
  %6852 = vmatpush.bf16.msra.mxu0 0
  %6853 = vmatpush.bf16.msra.mxu0 0
  %6854 = vmatpush.bf16.msra.mxu0 0
  %6855 = vmatpush.bf16.msra.mxu0 0
  %6856 = vmatpush.bf16.msra.mxu0 0
  %6857 = vmatpush.bf16.msra.mxu0 0
  %6858 = vmatpush.bf16.msra.mxu0 %v6849
  %6859 = vmatmul.bf16.gmra.mxu0 %v5215
  %v6860 = vpop.f32.mrf.mxu0
  %v6861 = vadd.f32 0.0, %v6860
  %v6862 = vpop.f32.mrf.mxu0
  %v6863 = vadd.f32 0.0, %v6862
  %6864 = vmatmul.bf16.gmra.mxu0 %v5218
  %v6865 = vpop.f32.mrf.mxu0
  %v6866 = vadd.f32 0.0, %v6865
  %v6867 = vpop.f32.mrf.mxu0
  %v6868 = vadd.f32 0.0, %v6867
  %6869 = vmatmul.bf16.gmra.mxu0 %v5221
  %v6870 = vpop.f32.mrf.mxu0
  %v6871 = vadd.f32 0.0, %v6870
  %v6872 = vpop.f32.mrf.mxu0
  %v6873 = vadd.f32 0.0, %v6872
  %6874 = vmatmul.bf16.gmra.mxu0 %v5224
  %v6875 = vpop.f32.mrf.mxu0
  %v6876 = vadd.f32 0.0, %v6875
  %v6877 = vpop.f32.mrf.mxu0
  %v6878 = vadd.f32 0.0, %v6877
  %6879 = vmatmul.bf16.gmra.mxu0 %v5227
  %v6880 = vpop.f32.mrf.mxu0
  %v6881 = vadd.f32 0.0, %v6880
  %v6882 = vpop.f32.mrf.mxu0
  %v6883 = vadd.f32 0.0, %v6882
  %6884 = vmatmul.bf16.gmra.mxu0 %v5230
  %v6885 = vpop.f32.mrf.mxu0
  %v6886 = vadd.f32 0.0, %v6885
  %v6887 = vpop.f32.mrf.mxu0
  %v6888 = vadd.f32 0.0, %v6887
  %6889 = vmatmul.bf16.gmra.mxu0 %v5233
  %v6890 = vpop.f32.mrf.mxu0
  %v6891 = vadd.f32 0.0, %v6890
  %v6892 = vpop.f32.mrf.mxu0
  %v6893 = vadd.f32 0.0, %v6892
  %6894 = vmatmul.bf16.gmra.mxu0 %v5236
  %v6895 = vpop.f32.mrf.mxu0
  %v6896 = vadd.f32 0.0, %v6895
  %v6897 = vpop.f32.mrf.mxu0
  %v6898 = vadd.f32 0.0, %v6897
  %6899 = vmatmul.bf16.gmra.mxu0 %v5239
  %v6900 = vpop.f32.mrf.mxu0
  %v6901 = vadd.f32 0.0, %v6900
  %v6902 = vpop.f32.mrf.mxu0
  %v6903 = vadd.f32 0.0, %v6902
  %6904 = vmatmul.bf16.gmra.mxu0 %v5242
  %v6905 = vpop.f32.mrf.mxu0
  %v6906 = vadd.f32 0.0, %v6905
  %v6907 = vpop.f32.mrf.mxu0
  %v6908 = vadd.f32 0.0, %v6907
  %6909 = vmatmul.bf16.gmra.mxu0 %v5245
  %v6910 = vpop.f32.mrf.mxu0
  %v6911 = vadd.f32 0.0, %v6910
  %v6912 = vpop.f32.mrf.mxu0
  %v6913 = vadd.f32 0.0, %v6912
  %6914 = vmatmul.bf16.gmra.mxu0 %v5248
  %v6915 = vpop.f32.mrf.mxu0
  %v6916 = vadd.f32 0.0, %v6915
  %v6917 = vpop.f32.mrf.mxu0
  %v6918 = vadd.f32 0.0, %v6917
  %6919 = vmatmul.bf16.gmra.mxu0 %v5251
  %v6920 = vpop.f32.mrf.mxu0
  %v6921 = vadd.f32 0.0, %v6920
  %v6922 = vpop.f32.mrf.mxu0
  %v6923 = vadd.f32 0.0, %v6922
  %6924 = vmatmul.bf16.gmra.mxu0 %v5254
  %v6925 = vpop.f32.mrf.mxu0
  %v6926 = vadd.f32 0.0, %v6925
  %v6927 = vpop.f32.mrf.mxu0
  %v6928 = vadd.f32 0.0, %v6927
  %6929 = vmatmul.bf16.gmra.mxu0 %v6071
  %v6930 = vpop.f32.mrf.mxu0
  %v6931 = vadd.f32 0.0, %v6930
  %v6932 = vpop.f32.mrf.mxu0
  %v6933 = vadd.f32 0.0, %v6932
  %6934 = vmatmul.bf16.gmra.mxu0 %v6843
  %v6935 = vpop.f32.mrf.mxu0
  %v6936 = vadd.f32 0.0, %v6935
  %v6937 = vpop.f32.mrf.mxu0
  %v6938 = vadd.f32 0.0, %v6937
  %6939 = vmatmul.bf16.gmra.mxu0 %v5263
  %v6940 = vpop.f32.mrf.mxu0
  %v6941 = vadd.f32 0.0, %v6940
  %v6942 = vpop.f32.mrf.mxu0
  %v6943 = vadd.f32 0.0, %v6942
  %6944 = vmatmul.bf16.gmra.mxu0 %v5266
  %v6945 = vpop.f32.mrf.mxu0
  %v6946 = vadd.f32 0.0, %v6945
  %v6947 = vpop.f32.mrf.mxu0
  %v6948 = vadd.f32 0.0, %v6947
  %6949 = vmatmul.bf16.gmra.mxu0 %v5269
  %v6950 = vpop.f32.mrf.mxu0
  %v6951 = vadd.f32 0.0, %v6950
  %v6952 = vpop.f32.mrf.mxu0
  %v6953 = vadd.f32 0.0, %v6952
  %6954 = vmatmul.bf16.gmra.mxu0 %v5272
  %v6955 = vpop.f32.mrf.mxu0
  %v6956 = vadd.f32 0.0, %v6955
  %v6957 = vpop.f32.mrf.mxu0
  %v6958 = vadd.f32 0.0, %v6957
  %6959 = vmatmul.bf16.gmra.mxu0 %v5275
  %v6960 = vpop.f32.mrf.mxu0
  %v6961 = vadd.f32 0.0, %v6960
  %v6962 = vpop.f32.mrf.mxu0
  %v6963 = vadd.f32 0.0, %v6962
  %6964 = vmatmul.bf16.gmra.mxu0 %v5278
  %v6965 = vpop.f32.mrf.mxu0
  %v6966 = vadd.f32 0.0, %v6965
  %v6967 = vpop.f32.mrf.mxu0
  %v6968 = vadd.f32 0.0, %v6967
  %6969 = vmatmul.bf16.gmra.mxu0 %v5281
  %v6970 = vpop.f32.mrf.mxu0
  %v6971 = vadd.f32 0.0, %v6970
  %v6972 = vpop.f32.mrf.mxu0
  %v6973 = vadd.f32 0.0, %v6972
  %6974 = vmatmul.bf16.gmra.mxu0 %v5284
  %v6975 = vpop.f32.mrf.mxu0
  %v6976 = vadd.f32 0.0, %v6975
  %v6977 = vpop.f32.mrf.mxu0
  %v6978 = vadd.f32 0.0, %v6977
  %6979 = vmatmul.bf16.gmra.mxu0 %v5287
  %v6980 = vpop.f32.mrf.mxu0
  %v6981 = vadd.f32 0.0, %v6980
  %v6982 = vpop.f32.mrf.mxu0
  %v6983 = vadd.f32 0.0, %v6982
  %6984 = vmatmul.bf16.gmra.mxu0 %v5290
  %v6985 = vpop.f32.mrf.mxu0
  %v6986 = vadd.f32 0.0, %v6985
  %v6987 = vpop.f32.mrf.mxu0
  %v6988 = vadd.f32 0.0, %v6987
  %6989 = vmatmul.bf16.gmra.mxu0 %v5293
  %v6990 = vpop.f32.mrf.mxu0
  %v6991 = vadd.f32 0.0, %v6990
  %v6992 = vpop.f32.mrf.mxu0
  %v6993 = vadd.f32 0.0, %v6992
  %6994 = vmatmul.bf16.gmra.mxu0 %v5296
  %v6995 = vpop.f32.mrf.mxu0
  %v6996 = vadd.f32 0.0, %v6995
  %v6997 = vpop.f32.mrf.mxu0
  %v6998 = vadd.f32 0.0, %v6997
  %6999 = vmatmul.bf16.gmra.mxu0 %v5299
  %v7000 = vpop.f32.mrf.mxu0
  %v7001 = vadd.f32 0.0, %v7000
  %v7002 = vpop.f32.mrf.mxu0
  %v7003 = vadd.f32 0.0, %v7002
  %7004 = vmatmul.bf16.gmra.mxu0 %v5302
  %v7005 = vpop.f32.mrf.mxu0
  %v7006 = vadd.f32 0.0, %v7005
  %v7007 = vpop.f32.mrf.mxu0
  %v7008 = vadd.f32 0.0, %v7007
  %7009 = vmatmul.bf16.gmra.mxu0 %v6074
  %v7010 = vpop.f32.mrf.mxu0
  %v7011 = vadd.f32 0.0, %v7010
  %v7012 = vpop.f32.mrf.mxu0
  %v7013 = vadd.f32 0.0, %v7012
  %7014 = vmatmul.bf16.gmra.mxu0 %v6846
  %v7015 = vpop.f32.mrf.mxu0
  %v7016 = vadd.f32 0.0, %v7015
  %v7017 = vpop.f32.mrf.mxu0
  %v7018 = vadd.f32 0.0, %v7017
  %7019 = vdwg.mxu0
  %v7020 = vadd.f32 %v6760, %v6861
  %v7021 = vadd.f32 %v6761, %v6863
  %v7022 = vadd.f32 %v6762, %v6866
  %v7023 = vadd.f32 %v6763, %v6868
  %v7024 = vadd.f32 %v6764, %v6871
  %v7025 = vadd.f32 %v6765, %v6873
  %v7026 = vadd.f32 %v6766, %v6876
  %v7027 = vadd.f32 %v6767, %v6878
  %v7028 = vadd.f32 %v6768, %v6881
  %v7029 = vadd.f32 %v6769, %v6883
  %v7030 = vadd.f32 %v6770, %v6886
  %v7031 = vadd.f32 %v6771, %v6888
  %v7032 = vadd.f32 %v6772, %v6891
  %v7033 = vadd.f32 %v6773, %v6893
  %v7034 = vadd.f32 %v6774, %v6896
  %v7035 = vadd.f32 %v6775, %v6898
  %v7036 = vadd.f32 %v6776, %v6901
  %v7037 = vadd.f32 %v6777, %v6903
  %v7038 = vadd.f32 %v6778, %v6906
  %v7039 = vadd.f32 %v6779, %v6908
  %v7040 = vadd.f32 %v6780, %v6911
  %v7041 = vadd.f32 %v6781, %v6913
  %v7042 = vadd.f32 %v6782, %v6916
  %v7043 = vadd.f32 %v6783, %v6918
  %v7044 = vadd.f32 %v6784, %v6921
  %v7045 = vadd.f32 %v6785, %v6923
  %v7046 = vadd.f32 %v6786, %v6926
  %v7047 = vadd.f32 %v6787, %v6928
  %v7048 = vadd.f32 %v6788, %v6931
  %v7049 = vadd.f32 %v6789, %v6933
  %v7050 = vadd.f32 %v6790, %v6936
  %v7051 = vadd.f32 %v6791, %v6938
  %v7052 = vadd.f32 %v6792, %v6941
  %v7053 = vadd.f32 %v6793, %v6943
  %v7054 = vadd.f32 %v6794, %v6946
  %v7055 = vadd.f32 %v6795, %v6948
  %v7056 = vadd.f32 %v6796, %v6951
  %v7057 = vadd.f32 %v6797, %v6953
  %v7058 = vadd.f32 %v6798, %v6956
  %v7059 = vadd.f32 %v6799, %v6958
  %v7060 = vadd.f32 %v6800, %v6961
  %v7061 = vadd.f32 %v6801, %v6963
  %v7062 = vadd.f32 %v6802, %v6966
  %v7063 = vadd.f32 %v6803, %v6968
  %v7064 = vadd.f32 %v6804, %v6971
  %v7065 = vadd.f32 %v6805, %v6973
  %v7066 = vadd.f32 %v6806, %v6976
  %v7067 = vadd.f32 %v6807, %v6978
  %v7068 = vadd.f32 %v6808, %v6981
  %v7069 = vadd.f32 %v6809, %v6983
  %v7070 = vadd.f32 %v6810, %v6986
  %v7071 = vadd.f32 %v6811, %v6988
  %v7072 = vadd.f32 %v6812, %v6991
  %v7073 = vadd.f32 %v6813, %v6993
  %v7074 = vadd.f32 %v6814, %v6996
  %v7075 = vadd.f32 %v6815, %v6998
  %v7076 = vadd.f32 %v6816, %v7001
  %v7077 = vadd.f32 %v6817, %v7003
  %v7078 = vadd.f32 %v6818, %v7006
  %v7079 = vadd.f32 %v6819, %v7008
  %v7080 = vadd.f32 %v6820, %v7011
  %v7081 = vadd.f32 %v6821, %v7013
  %v7082 = vadd.f32 %v6822, %v7016
  %v7083 = vadd.f32 %v6823, %v7018
  %v7084 = vsel %vm523, %v7020, 0.0
  %v7085 = vsel %vm523, %v7021, 0.0
  %v7086 = vadd.f32 %v7084, %v7085
  %v7087 = vsel %vm523, %v7022, 0.0
  %v7088 = vadd.f32 %v7086, %v7087
  %v7089 = vsel %vm523, %v7023, 0.0
  %v7090 = vadd.f32 %v7088, %v7089
  %v7091 = vsel %vm523, %v7024, 0.0
  %v7092 = vadd.f32 %v7090, %v7091
  %v7093 = vsel %vm523, %v7025, 0.0
  %v7094 = vadd.f32 %v7092, %v7093
  %v7095 = vsel %vm523, %v7026, 0.0
  %v7096 = vadd.f32 %v7094, %v7095
  %v7097 = vsel %vm523, %v7027, 0.0
  %v7098 = vadd.f32 %v7096, %v7097
  %v7099 = vsel %vm523, %v7028, 0.0
  %v7100 = vadd.f32 %v7098, %v7099
  %v7101 = vsel %vm523, %v7029, 0.0
  %v7102 = vadd.f32 %v7100, %v7101
  %v7103 = vsel %vm523, %v7030, 0.0
  %v7104 = vadd.f32 %v7102, %v7103
  %v7105 = vsel %vm523, %v7031, 0.0
  %v7106 = vadd.f32 %v7104, %v7105
  %v7107 = vsel %vm523, %v7032, 0.0
  %v7108 = vadd.f32 %v7106, %v7107
  %v7109 = vsel %vm523, %v7033, 0.0
  %v7110 = vadd.f32 %v7108, %v7109
  %v7111 = vsel %vm523, %v7034, 0.0
  %v7112 = vadd.f32 %v7110, %v7111
  %v7113 = vsel %vm523, %v7035, 0.0
  %v7114 = vadd.f32 %v7112, %v7113
  %v7115 = vsel %vm523, %v7036, 0.0
  %v7116 = vadd.f32 %v7114, %v7115
  %v7117 = vsel %vm523, %v7037, 0.0
  %v7118 = vadd.f32 %v7116, %v7117
  %v7119 = vsel %vm523, %v7038, 0.0
  %v7120 = vadd.f32 %v7118, %v7119
  %v7121 = vsel %vm523, %v7039, 0.0
  %v7122 = vadd.f32 %v7120, %v7121
  %v7123 = vsel %vm523, %v7040, 0.0
  %v7124 = vadd.f32 %v7122, %v7123
  %v7125 = vsel %vm523, %v7041, 0.0
  %v7126 = vadd.f32 %v7124, %v7125
  %v7127 = vsel %vm523, %v7042, 0.0
  %v7128 = vadd.f32 %v7126, %v7127
  %v7129 = vsel %vm523, %v7043, 0.0
  %v7130 = vadd.f32 %v7128, %v7129
  %v7131 = vsel %vm523, %v7044, 0.0
  %v7132 = vadd.f32 %v7130, %v7131
  %v7133 = vsel %vm523, %v7045, 0.0
  %v7134 = vadd.f32 %v7132, %v7133
  %v7135 = vsel %vm523, %v7046, 0.0
  %v7136 = vadd.f32 %v7134, %v7135
  %v7137 = vsel %vm523, %v7047, 0.0
  %v7138 = vadd.f32 %v7136, %v7137
  %v7139 = vsel %vm523, %v7048, 0.0
  %v7140 = vadd.f32 %v7138, %v7139
  %v7141 = vsel %vm523, %v7049, 0.0
  %v7142 = vadd.f32 %v7140, %v7141
  %v7143 = vsel %vm523, %v7050, 0.0
  %v7144 = vadd.f32 %v7142, %v7143
  %v7145 = vsel %vm523, %v7051, 0.0
  %v7146 = vadd.f32 %v7144, %v7145
  %v7147 = vsel %vm523, %v7052, 0.0
  %v7148 = vadd.f32 %v7146, %v7147
  %v7149 = vsel %vm523, %v7053, 0.0
  %v7150 = vadd.f32 %v7148, %v7149
  %v7151 = vsel %vm523, %v7054, 0.0
  %v7152 = vadd.f32 %v7150, %v7151
  %v7153 = vsel %vm523, %v7055, 0.0
  %v7154 = vadd.f32 %v7152, %v7153
  %v7155 = vsel %vm523, %v7056, 0.0
  %v7156 = vadd.f32 %v7154, %v7155
  %v7157 = vsel %vm523, %v7057, 0.0
  %v7158 = vadd.f32 %v7156, %v7157
  %v7159 = vsel %vm523, %v7058, 0.0
  %v7160 = vadd.f32 %v7158, %v7159
  %v7161 = vsel %vm523, %v7059, 0.0
  %v7162 = vadd.f32 %v7160, %v7161
  %v7163 = vsel %vm523, %v7060, 0.0
  %v7164 = vadd.f32 %v7162, %v7163
  %v7165 = vsel %vm523, %v7061, 0.0
  %v7166 = vadd.f32 %v7164, %v7165
  %v7167 = vsel %vm523, %v7062, 0.0
  %v7168 = vadd.f32 %v7166, %v7167
  %v7169 = vsel %vm523, %v7063, 0.0
  %v7170 = vadd.f32 %v7168, %v7169
  %v7171 = vsel %vm523, %v7064, 0.0
  %v7172 = vadd.f32 %v7170, %v7171
  %v7173 = vsel %vm523, %v7065, 0.0
  %v7174 = vadd.f32 %v7172, %v7173
  %v7175 = vsel %vm523, %v7066, 0.0
  %v7176 = vadd.f32 %v7174, %v7175
  %v7177 = vsel %vm523, %v7067, 0.0
  %v7178 = vadd.f32 %v7176, %v7177
  %v7179 = vsel %vm523, %v7068, 0.0
  %v7180 = vadd.f32 %v7178, %v7179
  %v7181 = vsel %vm523, %v7069, 0.0
  %v7182 = vadd.f32 %v7180, %v7181
  %v7183 = vsel %vm523, %v7070, 0.0
  %v7184 = vadd.f32 %v7182, %v7183
  %v7185 = vsel %vm523, %v7071, 0.0
  %v7186 = vadd.f32 %v7184, %v7185
  %v7187 = vsel %vm523, %v7072, 0.0
  %v7188 = vadd.f32 %v7186, %v7187
  %v7189 = vsel %vm523, %v7073, 0.0
  %v7190 = vadd.f32 %v7188, %v7189
  %v7191 = vsel %vm523, %v7074, 0.0
  %v7192 = vadd.f32 %v7190, %v7191
  %v7193 = vsel %vm523, %v7075, 0.0
  %v7194 = vadd.f32 %v7192, %v7193
  %v7195 = vsel %vm523, %v7076, 0.0
  %v7196 = vadd.f32 %v7194, %v7195
  %v7197 = vsel %vm523, %v7077, 0.0
  %v7198 = vadd.f32 %v7196, %v7197
  %v7199 = vsel %vm523, %v7078, 0.0
  %v7200 = vadd.f32 %v7198, %v7199
  %v7201 = vsel %vm523, %v7079, 0.0
  %v7202 = vadd.f32 %v7200, %v7201
  %v7203 = vsel %vm523, %v7080, 0.0
  %v7204 = vadd.f32 %v7202, %v7203
  %v7205 = vsel %vm523, %v7081, 0.0
  %v7206 = vadd.f32 %v7204, %v7205
  %v7207 = vsel %vm523, %v7082, 0.0
  %v7208 = vadd.f32 %v7206, %v7207
  %v7209 = vsel %vm523, %v7083, 0.0
  %v7210 = vadd.f32 %v7208, %v7209
  %v7211 = vrot.slane %v7210, 4
  %v7212 = vadd.f32 %v7210, %v7211
  %v7213 = vrot.slane %v7212, 2
  %v7214 = vadd.f32 %v7212, %v7213
  %v7215 = vrot.slane %v7214, 1
  %v7216 = vadd.f32 %v7214, %v7215
  %v7217 = vmul.f32 %v7216, 0.001953125
  %v7218 = vmul.f32 %v7020, %v7020
  %v7219 = vmul.f32 %v7021, %v7021
  %v7220 = vmul.f32 %v7022, %v7022
  %v7221 = vmul.f32 %v7023, %v7023
  %v7222 = vmul.f32 %v7024, %v7024
  %v7223 = vmul.f32 %v7025, %v7025
  %v7224 = vmul.f32 %v7026, %v7026
  %v7225 = vmul.f32 %v7027, %v7027
  %v7226 = vmul.f32 %v7028, %v7028
  %v7227 = vmul.f32 %v7029, %v7029
  %v7228 = vmul.f32 %v7030, %v7030
  %v7229 = vmul.f32 %v7031, %v7031
  %v7230 = vmul.f32 %v7032, %v7032
  %v7231 = vmul.f32 %v7033, %v7033
  %v7232 = vmul.f32 %v7034, %v7034
  %v7233 = vmul.f32 %v7035, %v7035
  %v7234 = vmul.f32 %v7036, %v7036
  %v7235 = vmul.f32 %v7037, %v7037
  %v7236 = vmul.f32 %v7038, %v7038
  %v7237 = vmul.f32 %v7039, %v7039
  %v7238 = vmul.f32 %v7040, %v7040
  %v7239 = vmul.f32 %v7041, %v7041
  %v7240 = vmul.f32 %v7042, %v7042
  %v7241 = vmul.f32 %v7043, %v7043
  %v7242 = vmul.f32 %v7044, %v7044
  %v7243 = vmul.f32 %v7045, %v7045
  %v7244 = vmul.f32 %v7046, %v7046
  %v7245 = vmul.f32 %v7047, %v7047
  %v7246 = vmul.f32 %v7048, %v7048
  %v7247 = vmul.f32 %v7049, %v7049
  %v7248 = vmul.f32 %v7050, %v7050
  %v7249 = vmul.f32 %v7051, %v7051
  %v7250 = vmul.f32 %v7052, %v7052
  %v7251 = vmul.f32 %v7053, %v7053
  %v7252 = vmul.f32 %v7054, %v7054
  %v7253 = vmul.f32 %v7055, %v7055
  %v7254 = vmul.f32 %v7056, %v7056
  %v7255 = vmul.f32 %v7057, %v7057
  %v7256 = vmul.f32 %v7058, %v7058
  %v7257 = vmul.f32 %v7059, %v7059
  %v7258 = vmul.f32 %v7060, %v7060
  %v7259 = vmul.f32 %v7061, %v7061
  %v7260 = vmul.f32 %v7062, %v7062
  %v7261 = vmul.f32 %v7063, %v7063
  %v7262 = vmul.f32 %v7064, %v7064
  %v7263 = vmul.f32 %v7065, %v7065
  %v7264 = vmul.f32 %v7066, %v7066
  %v7265 = vmul.f32 %v7067, %v7067
  %v7266 = vmul.f32 %v7068, %v7068
  %v7267 = vmul.f32 %v7069, %v7069
  %v7268 = vmul.f32 %v7070, %v7070
  %v7269 = vmul.f32 %v7071, %v7071
  %v7270 = vmul.f32 %v7072, %v7072
  %v7271 = vmul.f32 %v7073, %v7073
  %v7272 = vmul.f32 %v7074, %v7074
  %v7273 = vmul.f32 %v7075, %v7075
  %v7274 = vmul.f32 %v7076, %v7076
  %v7275 = vmul.f32 %v7077, %v7077
  %v7276 = vmul.f32 %v7078, %v7078
  %v7277 = vmul.f32 %v7079, %v7079
  %v7278 = vmul.f32 %v7080, %v7080
  %v7279 = vmul.f32 %v7081, %v7081
  %v7280 = vmul.f32 %v7082, %v7082
  %v7281 = vmul.f32 %v7083, %v7083
  %v7282 = vsel %vm523, %v7218, 0.0
  %v7283 = vsel %vm523, %v7219, 0.0
  %v7284 = vadd.f32 %v7282, %v7283
  %v7285 = vsel %vm523, %v7220, 0.0
  %v7286 = vadd.f32 %v7284, %v7285
  %v7287 = vsel %vm523, %v7221, 0.0
  %v7288 = vadd.f32 %v7286, %v7287
  %v7289 = vsel %vm523, %v7222, 0.0
  %v7290 = vadd.f32 %v7288, %v7289
  %v7291 = vsel %vm523, %v7223, 0.0
  %v7292 = vadd.f32 %v7290, %v7291
  %v7293 = vsel %vm523, %v7224, 0.0
  %v7294 = vadd.f32 %v7292, %v7293
  %v7295 = vsel %vm523, %v7225, 0.0
  %v7296 = vadd.f32 %v7294, %v7295
  %v7297 = vsel %vm523, %v7226, 0.0
  %v7298 = vadd.f32 %v7296, %v7297
  %v7299 = vsel %vm523, %v7227, 0.0
  %v7300 = vadd.f32 %v7298, %v7299
  %v7301 = vsel %vm523, %v7228, 0.0
  %v7302 = vadd.f32 %v7300, %v7301
  %v7303 = vsel %vm523, %v7229, 0.0
  %v7304 = vadd.f32 %v7302, %v7303
  %v7305 = vsel %vm523, %v7230, 0.0
  %v7306 = vadd.f32 %v7304, %v7305
  %v7307 = vsel %vm523, %v7231, 0.0
  %v7308 = vadd.f32 %v7306, %v7307
  %v7309 = vsel %vm523, %v7232, 0.0
  %v7310 = vadd.f32 %v7308, %v7309
  %v7311 = vsel %vm523, %v7233, 0.0
  %v7312 = vadd.f32 %v7310, %v7311
  %v7313 = vsel %vm523, %v7234, 0.0
  %v7314 = vadd.f32 %v7312, %v7313
  %v7315 = vsel %vm523, %v7235, 0.0
  %v7316 = vadd.f32 %v7314, %v7315
  %v7317 = vsel %vm523, %v7236, 0.0
  %v7318 = vadd.f32 %v7316, %v7317
  %v7319 = vsel %vm523, %v7237, 0.0
  %v7320 = vadd.f32 %v7318, %v7319
  %v7321 = vsel %vm523, %v7238, 0.0
  %v7322 = vadd.f32 %v7320, %v7321
  %v7323 = vsel %vm523, %v7239, 0.0
  %v7324 = vadd.f32 %v7322, %v7323
  %v7325 = vsel %vm523, %v7240, 0.0
  %v7326 = vadd.f32 %v7324, %v7325
  %v7327 = vsel %vm523, %v7241, 0.0
  %v7328 = vadd.f32 %v7326, %v7327
  %v7329 = vsel %vm523, %v7242, 0.0
  %v7330 = vadd.f32 %v7328, %v7329
  %v7331 = vsel %vm523, %v7243, 0.0
  %v7332 = vadd.f32 %v7330, %v7331
  %v7333 = vsel %vm523, %v7244, 0.0
  %v7334 = vadd.f32 %v7332, %v7333
  %v7335 = vsel %vm523, %v7245, 0.0
  %v7336 = vadd.f32 %v7334, %v7335
  %v7337 = vsel %vm523, %v7246, 0.0
  %v7338 = vadd.f32 %v7336, %v7337
  %v7339 = vsel %vm523, %v7247, 0.0
  %v7340 = vadd.f32 %v7338, %v7339
  %v7341 = vsel %vm523, %v7248, 0.0
  %v7342 = vadd.f32 %v7340, %v7341
  %v7343 = vsel %vm523, %v7249, 0.0
  %v7344 = vadd.f32 %v7342, %v7343
  %v7345 = vsel %vm523, %v7250, 0.0
  %v7346 = vadd.f32 %v7344, %v7345
  %v7347 = vsel %vm523, %v7251, 0.0
  %v7348 = vadd.f32 %v7346, %v7347
  %v7349 = vsel %vm523, %v7252, 0.0
  %v7350 = vadd.f32 %v7348, %v7349
  %v7351 = vsel %vm523, %v7253, 0.0
  %v7352 = vadd.f32 %v7350, %v7351
  %v7353 = vsel %vm523, %v7254, 0.0
  %v7354 = vadd.f32 %v7352, %v7353
  %v7355 = vsel %vm523, %v7255, 0.0
  %v7356 = vadd.f32 %v7354, %v7355
  %v7357 = vsel %vm523, %v7256, 0.0
  %v7358 = vadd.f32 %v7356, %v7357
  %v7359 = vsel %vm523, %v7257, 0.0
  %v7360 = vadd.f32 %v7358, %v7359
  %v7361 = vsel %vm523, %v7258, 0.0
  %v7362 = vadd.f32 %v7360, %v7361
  %v7363 = vsel %vm523, %v7259, 0.0
  %v7364 = vadd.f32 %v7362, %v7363
  %v7365 = vsel %vm523, %v7260, 0.0
  %v7366 = vadd.f32 %v7364, %v7365
  %v7367 = vsel %vm523, %v7261, 0.0
  %v7368 = vadd.f32 %v7366, %v7367
  %v7369 = vsel %vm523, %v7262, 0.0
  %v7370 = vadd.f32 %v7368, %v7369
  %v7371 = vsel %vm523, %v7263, 0.0
  %v7372 = vadd.f32 %v7370, %v7371
  %v7373 = vsel %vm523, %v7264, 0.0
  %v7374 = vadd.f32 %v7372, %v7373
  %v7375 = vsel %vm523, %v7265, 0.0
  %v7376 = vadd.f32 %v7374, %v7375
  %v7377 = vsel %vm523, %v7266, 0.0
  %v7378 = vadd.f32 %v7376, %v7377
  %v7379 = vsel %vm523, %v7267, 0.0
  %v7380 = vadd.f32 %v7378, %v7379
  %v7381 = vsel %vm523, %v7268, 0.0
  %v7382 = vadd.f32 %v7380, %v7381
  %v7383 = vsel %vm523, %v7269, 0.0
  %v7384 = vadd.f32 %v7382, %v7383
  %v7385 = vsel %vm523, %v7270, 0.0
  %v7386 = vadd.f32 %v7384, %v7385
  %v7387 = vsel %vm523, %v7271, 0.0
  %v7388 = vadd.f32 %v7386, %v7387
  %v7389 = vsel %vm523, %v7272, 0.0
  %v7390 = vadd.f32 %v7388, %v7389
  %v7391 = vsel %vm523, %v7273, 0.0
  %v7392 = vadd.f32 %v7390, %v7391
  %v7393 = vsel %vm523, %v7274, 0.0
  %v7394 = vadd.f32 %v7392, %v7393
  %v7395 = vsel %vm523, %v7275, 0.0
  %v7396 = vadd.f32 %v7394, %v7395
  %v7397 = vsel %vm523, %v7276, 0.0
  %v7398 = vadd.f32 %v7396, %v7397
  %v7399 = vsel %vm523, %v7277, 0.0
  %v7400 = vadd.f32 %v7398, %v7399
  %v7401 = vsel %vm523, %v7278, 0.0
  %v7402 = vadd.f32 %v7400, %v7401
  %v7403 = vsel %vm523, %v7279, 0.0
  %v7404 = vadd.f32 %v7402, %v7403
  %v7405 = vsel %vm523, %v7280, 0.0
  %v7406 = vadd.f32 %v7404, %v7405
  %v7407 = vsel %vm523, %v7281, 0.0
  %v7408 = vadd.f32 %v7406, %v7407
  %v7409 = vrot.slane %v7408, 4
  %v7410 = vadd.f32 %v7408, %v7409
  %v7411 = vrot.slane %v7410, 2
  %v7412 = vadd.f32 %v7410, %v7411
  %v7413 = vrot.slane %v7412, 1
  %v7414 = vadd.f32 %v7412, %v7413
  %v7415 = vmul.f32 %v7414, 0.001953125
  %v7416 = vmul.f32 %v7217, %v7217
  %v7417 = vsub.f32 %v7415, %v7416
  %v7418 = vmax.f32 %v7417, 0.0
  %v7419 = vld [vmem:[%s5] sm:$0x1]
  %v7420 = vadd.f32 %v7418, 1e-05
  %v7421 = vrsqrt.pop %v7420
  %v7422 = vmul.f32 %v7421, %v7420
  %v7423 = vmul.f32 %v7422, %v7421
  %v7424 = vmul.f32 0.5, %v7423
  %v7425 = vsub.f32 1.5, %v7424
  %v7426 = vmul.f32 %v7421, %v7425
  %vm7427 = vweird.f32 %v7420
  %vm7428 = vweird.f32 %v7421
  %vm7429 = vmor %vm7427, %vm7428
  %v7430 = vsel %vm7429, %v7421, %v7426
  %v7431 = vmul.f32 %v7419, %v7430
  %v7432 = vld [vmem:[%s6] sm:$0x1]
  %v7433 = vmul.f32 %v7217, %v7431
  %v7434 = vsub.f32 %v7432, %v7433
  %v7436 = vperm.slane %v7431, 0
  %v7438 = vmul.f32 %v7020, %v7436
  %v7439 = vmul.f32 %v7021, %v7436
  %v7440 = vmul.f32 %v7022, %v7436
  %v7441 = vmul.f32 %v7023, %v7436
  %v7442 = vmul.f32 %v7024, %v7436
  %v7443 = vmul.f32 %v7025, %v7436
  %v7444 = vmul.f32 %v7026, %v7436
  %v7445 = vmul.f32 %v7027, %v7436
  %v7446 = vmul.f32 %v7028, %v7436
  %v7447 = vmul.f32 %v7029, %v7436
  %v7448 = vmul.f32 %v7030, %v7436
  %v7449 = vmul.f32 %v7031, %v7436
  %v7450 = vmul.f32 %v7032, %v7436
  %v7451 = vmul.f32 %v7033, %v7436
  %v7452 = vmul.f32 %v7034, %v7436
  %v7453 = vmul.f32 %v7035, %v7436
  %v7454 = vmul.f32 %v7036, %v7436
  %v7455 = vmul.f32 %v7037, %v7436
  %v7456 = vmul.f32 %v7038, %v7436
  %v7457 = vmul.f32 %v7039, %v7436
  %v7458 = vmul.f32 %v7040, %v7436
  %v7459 = vmul.f32 %v7041, %v7436
  %v7460 = vmul.f32 %v7042, %v7436
  %v7461 = vmul.f32 %v7043, %v7436
  %v7462 = vmul.f32 %v7044, %v7436
  %v7463 = vmul.f32 %v7045, %v7436
  %v7464 = vmul.f32 %v7046, %v7436
  %v7465 = vmul.f32 %v7047, %v7436
  %v7466 = vmul.f32 %v7048, %v7436
  %v7467 = vmul.f32 %v7049, %v7436
  %v7468 = vmul.f32 %v7050, %v7436
  %v7469 = vmul.f32 %v7051, %v7436
  %v7470 = vmul.f32 %v7052, %v7436
  %v7471 = vmul.f32 %v7053, %v7436
  %v7472 = vmul.f32 %v7054, %v7436
  %v7473 = vmul.f32 %v7055, %v7436
  %v7474 = vmul.f32 %v7056, %v7436
  %v7475 = vmul.f32 %v7057, %v7436
  %v7476 = vmul.f32 %v7058, %v7436
  %v7477 = vmul.f32 %v7059, %v7436
  %v7478 = vmul.f32 %v7060, %v7436
  %v7479 = vmul.f32 %v7061, %v7436
  %v7480 = vmul.f32 %v7062, %v7436
  %v7481 = vmul.f32 %v7063, %v7436
  %v7482 = vmul.f32 %v7064, %v7436
  %v7483 = vmul.f32 %v7065, %v7436
  %v7484 = vmul.f32 %v7066, %v7436
  %v7485 = vmul.f32 %v7067, %v7436
  %v7486 = vmul.f32 %v7068, %v7436
  %v7487 = vmul.f32 %v7069, %v7436
  %v7488 = vmul.f32 %v7070, %v7436
  %v7489 = vmul.f32 %v7071, %v7436
  %v7490 = vmul.f32 %v7072, %v7436
  %v7491 = vmul.f32 %v7073, %v7436
  %v7492 = vmul.f32 %v7074, %v7436
  %v7493 = vmul.f32 %v7075, %v7436
  %v7494 = vmul.f32 %v7076, %v7436
  %v7495 = vmul.f32 %v7077, %v7436
  %v7496 = vmul.f32 %v7078, %v7436
  %v7497 = vmul.f32 %v7079, %v7436
  %v7498 = vmul.f32 %v7080, %v7436
  %v7499 = vmul.f32 %v7081, %v7436
  %v7500 = vmul.f32 %v7082, %v7436
  %v7501 = vmul.f32 %v7083, %v7436
  %v7503 = vperm.slane %v7434, 0
  %v7505 = vadd.f32 %v7438, %v7503
  %v7506 = vadd.f32 %v7439, %v7503
  %v7507 = vadd.f32 %v7440, %v7503
  %v7508 = vadd.f32 %v7441, %v7503
  %v7509 = vadd.f32 %v7442, %v7503
  %v7510 = vadd.f32 %v7443, %v7503
  %v7511 = vadd.f32 %v7444, %v7503
  %v7512 = vadd.f32 %v7445, %v7503
  %v7513 = vadd.f32 %v7446, %v7503
  %v7514 = vadd.f32 %v7447, %v7503
  %v7515 = vadd.f32 %v7448, %v7503
  %v7516 = vadd.f32 %v7449, %v7503
  %v7517 = vadd.f32 %v7450, %v7503
  %v7518 = vadd.f32 %v7451, %v7503
  %v7519 = vadd.f32 %v7452, %v7503
  %v7520 = vadd.f32 %v7453, %v7503
  %v7521 = vadd.f32 %v7454, %v7503
  %v7522 = vadd.f32 %v7455, %v7503
  %v7523 = vadd.f32 %v7456, %v7503
  %v7524 = vadd.f32 %v7457, %v7503
  %v7525 = vadd.f32 %v7458, %v7503
  %v7526 = vadd.f32 %v7459, %v7503
  %v7527 = vadd.f32 %v7460, %v7503
  %v7528 = vadd.f32 %v7461, %v7503
  %v7529 = vadd.f32 %v7462, %v7503
  %v7530 = vadd.f32 %v7463, %v7503
  %v7531 = vadd.f32 %v7464, %v7503
  %v7532 = vadd.f32 %v7465, %v7503
  %v7533 = vadd.f32 %v7466, %v7503
  %v7534 = vadd.f32 %v7467, %v7503
  %v7535 = vadd.f32 %v7468, %v7503
  %v7536 = vadd.f32 %v7469, %v7503
  %v7537 = vadd.f32 %v7470, %v7503
  %v7538 = vadd.f32 %v7471, %v7503
  %v7539 = vadd.f32 %v7472, %v7503
  %v7540 = vadd.f32 %v7473, %v7503
  %v7541 = vadd.f32 %v7474, %v7503
  %v7542 = vadd.f32 %v7475, %v7503
  %v7543 = vadd.f32 %v7476, %v7503
  %v7544 = vadd.f32 %v7477, %v7503
  %v7545 = vadd.f32 %v7478, %v7503
  %v7546 = vadd.f32 %v7479, %v7503
  %v7547 = vadd.f32 %v7480, %v7503
  %v7548 = vadd.f32 %v7481, %v7503
  %v7549 = vadd.f32 %v7482, %v7503
  %v7550 = vadd.f32 %v7483, %v7503
  %v7551 = vadd.f32 %v7484, %v7503
  %v7552 = vadd.f32 %v7485, %v7503
  %v7553 = vadd.f32 %v7486, %v7503
  %v7554 = vadd.f32 %v7487, %v7503
  %v7555 = vadd.f32 %v7488, %v7503
  %v7556 = vadd.f32 %v7489, %v7503
  %v7557 = vadd.f32 %v7490, %v7503
  %v7558 = vadd.f32 %v7491, %v7503
  %v7559 = vadd.f32 %v7492, %v7503
  %v7560 = vadd.f32 %v7493, %v7503
  %v7561 = vadd.f32 %v7494, %v7503
  %v7562 = vadd.f32 %v7495, %v7503
  %v7563 = vadd.f32 %v7496, %v7503
  %v7564 = vadd.f32 %v7497, %v7503
  %v7565 = vadd.f32 %v7498, %v7503
  %v7566 = vadd.f32 %v7499, %v7503
  %v7567 = vadd.f32 %v7500, %v7503
  %v7568 = vadd.f32 %v7501, %v7503
  %v7569 = vadd.f32 %v7505, %v272
  %v7570 = vadd.f32 %v7506, %v274
  %v7571 = vadd.f32 %v7507, %v277
  %v7572 = vadd.f32 %v7508, %v279
  %v7573 = vadd.f32 %v7509, %v282
  %v7574 = vadd.f32 %v7510, %v284
  %v7575 = vadd.f32 %v7511, %v287
  %v7576 = vadd.f32 %v7512, %v289
  %v7577 = vadd.f32 %v7513, %v292
  %v7578 = vadd.f32 %v7514, %v294
  %v7579 = vadd.f32 %v7515, %v297
  %v7580 = vadd.f32 %v7516, %v299
  %v7581 = vadd.f32 %v7517, %v302
  %v7582 = vadd.f32 %v7518, %v304
  %v7583 = vadd.f32 %v7519, %v307
  %v7584 = vadd.f32 %v7520, %v309
  %v7585 = vadd.f32 %v7521, %v312
  %v7586 = vadd.f32 %v7522, %v314
  %v7587 = vadd.f32 %v7523, %v317
  %v7588 = vadd.f32 %v7524, %v319
  %v7589 = vadd.f32 %v7525, %v322
  %v7590 = vadd.f32 %v7526, %v324
  %v7591 = vadd.f32 %v7527, %v327
  %v7592 = vadd.f32 %v7528, %v329
  %v7593 = vadd.f32 %v7529, %v332
  %v7594 = vadd.f32 %v7530, %v334
  %v7595 = vadd.f32 %v7531, %v337
  %v7596 = vadd.f32 %v7532, %v339
  %v7597 = vadd.f32 %v7533, %v342
  %v7598 = vadd.f32 %v7534, %v344
  %v7599 = vadd.f32 %v7535, %v1906
  %v7600 = vadd.f32 %v7536, %v1908
  %v7601 = vadd.f32 %v7537, %v352
  %v7602 = vadd.f32 %v7538, %v354
  %v7603 = vadd.f32 %v7539, %v357
  %v7604 = vadd.f32 %v7540, %v359
  %v7605 = vadd.f32 %v7541, %v362
  %v7606 = vadd.f32 %v7542, %v364
  %v7607 = vadd.f32 %v7543, %v367
  %v7608 = vadd.f32 %v7544, %v369
  %v7609 = vadd.f32 %v7545, %v372
  %v7610 = vadd.f32 %v7546, %v374
  %v7611 = vadd.f32 %v7547, %v377
  %v7612 = vadd.f32 %v7548, %v379
  %v7613 = vadd.f32 %v7549, %v382
  %v7614 = vadd.f32 %v7550, %v384
  %v7615 = vadd.f32 %v7551, %v387
  %v7616 = vadd.f32 %v7552, %v389
  %v7617 = vadd.f32 %v7553, %v392
  %v7618 = vadd.f32 %v7554, %v394
  %v7619 = vadd.f32 %v7555, %v397
  %v7620 = vadd.f32 %v7556, %v399
  %v7621 = vadd.f32 %v7557, %v402
  %v7622 = vadd.f32 %v7558, %v404
  %v7623 = vadd.f32 %v7559, %v407
  %v7624 = vadd.f32 %v7560, %v409
  %v7625 = vadd.f32 %v7561, %v412
  %v7626 = vadd.f32 %v7562, %v414
  %v7627 = vadd.f32 %v7563, %v417
  %v7628 = vadd.f32 %v7564, %v419
  %v7629 = vadd.f32 %v7565, %v422
  %v7630 = vadd.f32 %v7566, %v424
  %v7631 = vadd.f32 %v7567, %v1911
  %v7632 = vadd.f32 %v7568, %v1913
  %v7633 = vmax.f32 %v7569, 0.0
  %v7634 = vmax.f32 %v7570, 0.0
  %v7635 = vmax.f32 %v7571, 0.0
  %v7636 = vmax.f32 %v7572, 0.0
  %v7637 = vmax.f32 %v7573, 0.0
  %v7638 = vmax.f32 %v7574, 0.0
  %v7639 = vmax.f32 %v7575, 0.0
  %v7640 = vmax.f32 %v7576, 0.0
  %v7641 = vmax.f32 %v7577, 0.0
  %v7642 = vmax.f32 %v7578, 0.0
  %v7643 = vmax.f32 %v7579, 0.0
  %v7644 = vmax.f32 %v7580, 0.0
  %v7645 = vmax.f32 %v7581, 0.0
  %v7646 = vmax.f32 %v7582, 0.0
  %v7647 = vmax.f32 %v7583, 0.0
  %v7648 = vmax.f32 %v7584, 0.0
  %v7649 = vmax.f32 %v7585, 0.0
  %v7650 = vmax.f32 %v7586, 0.0
  %v7651 = vmax.f32 %v7587, 0.0
  %v7652 = vmax.f32 %v7588, 0.0
  %v7653 = vmax.f32 %v7589, 0.0
  %v7654 = vmax.f32 %v7590, 0.0
  %v7655 = vmax.f32 %v7591, 0.0
  %v7656 = vmax.f32 %v7592, 0.0
  %v7657 = vmax.f32 %v7593, 0.0
  %v7658 = vmax.f32 %v7594, 0.0
  %v7659 = vmax.f32 %v7595, 0.0
  %v7660 = vmax.f32 %v7596, 0.0
  %v7661 = vmax.f32 %v7597, 0.0
  %v7662 = vmax.f32 %v7598, 0.0
  %v7663 = vmax.f32 %v7599, 0.0
  %v7664 = vmax.f32 %v7600, 0.0
  %v7665 = vmax.f32 %v7601, 0.0
  %v7666 = vmax.f32 %v7602, 0.0
  %v7667 = vmax.f32 %v7603, 0.0
  %v7668 = vmax.f32 %v7604, 0.0
  %v7669 = vmax.f32 %v7605, 0.0
  %v7670 = vmax.f32 %v7606, 0.0
  %v7671 = vmax.f32 %v7607, 0.0
  %v7672 = vmax.f32 %v7608, 0.0
  %v7673 = vmax.f32 %v7609, 0.0
  %v7674 = vmax.f32 %v7610, 0.0
  %v7675 = vmax.f32 %v7611, 0.0
  %v7676 = vmax.f32 %v7612, 0.0
  %v7677 = vmax.f32 %v7613, 0.0
  %v7678 = vmax.f32 %v7614, 0.0
  %v7679 = vmax.f32 %v7615, 0.0
  %v7680 = vmax.f32 %v7616, 0.0
  %v7681 = vmax.f32 %v7617, 0.0
  %v7682 = vmax.f32 %v7618, 0.0
  %v7683 = vmax.f32 %v7619, 0.0
  %v7684 = vmax.f32 %v7620, 0.0
  %v7685 = vmax.f32 %v7621, 0.0
  %v7686 = vmax.f32 %v7622, 0.0
  %v7687 = vmax.f32 %v7623, 0.0
  %v7688 = vmax.f32 %v7624, 0.0
  %v7689 = vmax.f32 %v7625, 0.0
  %v7690 = vmax.f32 %v7626, 0.0
  %v7691 = vmax.f32 %v7627, 0.0
  %v7692 = vmax.f32 %v7628, 0.0
  %v7693 = vmax.f32 %v7629, 0.0
  %v7694 = vmax.f32 %v7630, 0.0
  %v7695 = vmax.f32 %v7631, 0.0
  %v7696 = vmax.f32 %v7632, 0.0
  %7697 = vst.msk [vmem:[%s7] sm:$0xff] %vm523, %v7633
  %7698 = vst.msk [vmem:[%s7 + $0x8] sm:$0xff] %vm523, %v7634
  %7699 = vst.msk [vmem:[%s7 + $0x10] sm:$0xff] %vm523, %v7635
  %7700 = vst.msk [vmem:[%s7 + $0x18] sm:$0xff] %vm523, %v7636
  %7701 = vst.msk [vmem:[%s7 + $0x20] sm:$0xff] %vm523, %v7637
  %7702 = vst.msk [vmem:[%s7 + $0x28] sm:$0xff] %vm523, %v7638
  %7703 = vst.msk [vmem:[%s7 + $0x30] sm:$0xff] %vm523, %v7639
  %7704 = vst.msk [vmem:[%s7 + $0x38] sm:$0xff] %vm523, %v7640
  %7705 = vst.msk [vmem:[%s7 + $0x40] sm:$0xff] %vm523, %v7641
  %7706 = vst.msk [vmem:[%s7 + $0x48] sm:$0xff] %vm523, %v7642
  %7707 = vst.msk [vmem:[%s7 + $0x50] sm:$0xff] %vm523, %v7643
  %7708 = vst.msk [vmem:[%s7 + $0x58] sm:$0xff] %vm523, %v7644
  %7709 = vst.msk [vmem:[%s7 + $0x60] sm:$0xff] %vm523, %v7645
  %7710 = vst.msk [vmem:[%s7 + $0x68] sm:$0xff] %vm523, %v7646
  %7711 = vst.msk [vmem:[%s7 + $0x70] sm:$0xff] %vm523, %v7647
  %7712 = vst.msk [vmem:[%s7 + $0x78] sm:$0xff] %vm523, %v7648
  %7713 = vst.msk [vmem:[%s7 + $0x80] sm:$0xff] %vm523, %v7649
  %7714 = vst.msk [vmem:[%s7 + $0x88] sm:$0xff] %vm523, %v7650
  %7715 = vst.msk [vmem:[%s7 + $0x90] sm:$0xff] %vm523, %v7651
  %7716 = vst.msk [vmem:[%s7 + $0x98] sm:$0xff] %vm523, %v7652
  %7717 = vst.msk [vmem:[%s7 + $0xa0] sm:$0xff] %vm523, %v7653
  %7718 = vst.msk [vmem:[%s7 + $0xa8] sm:$0xff] %vm523, %v7654
  %7719 = vst.msk [vmem:[%s7 + $0xb0] sm:$0xff] %vm523, %v7655
  %7720 = vst.msk [vmem:[%s7 + $0xb8] sm:$0xff] %vm523, %v7656
  %7721 = vst.msk [vmem:[%s7 + $0xc0] sm:$0xff] %vm523, %v7657
  %7722 = vst.msk [vmem:[%s7 + $0xc8] sm:$0xff] %vm523, %v7658
  %7723 = vst.msk [vmem:[%s7 + $0xd0] sm:$0xff] %vm523, %v7659
  %7724 = vst.msk [vmem:[%s7 + $0xd8] sm:$0xff] %vm523, %v7660
  %7725 = vst.msk [vmem:[%s7 + $0xe0] sm:$0xff] %vm523, %v7661
  %7726 = vst.msk [vmem:[%s7 + $0xe8] sm:$0xff] %vm523, %v7662
  %7727 = vst.msk [vmem:[%s7 + $0xf0] sm:$0xff] %vm523, %v7663
  %7728 = vst.msk [vmem:[%s7 + $0xf8] sm:$0xff] %vm523, %v7664
  %7729 = vst.msk [vmem:[%s7 + $0x100] sm:$0xff] %vm523, %v7665
  %7730 = vst.msk [vmem:[%s7 + $0x108] sm:$0xff] %vm523, %v7666
  %7731 = vst.msk [vmem:[%s7 + $0x110] sm:$0xff] %vm523, %v7667
  %7732 = vst.msk [vmem:[%s7 + $0x118] sm:$0xff] %vm523, %v7668
  %7733 = vst.msk [vmem:[%s7 + $0x120] sm:$0xff] %vm523, %v7669
  %7734 = vst.msk [vmem:[%s7 + $0x128] sm:$0xff] %vm523, %v7670
  %7735 = vst.msk [vmem:[%s7 + $0x130] sm:$0xff] %vm523, %v7671
  %7736 = vst.msk [vmem:[%s7 + $0x138] sm:$0xff] %vm523, %v7672
  %7737 = vst.msk [vmem:[%s7 + $0x140] sm:$0xff] %vm523, %v7673
  %7738 = vst.msk [vmem:[%s7 + $0x148] sm:$0xff] %vm523, %v7674
  %7739 = vst.msk [vmem:[%s7 + $0x150] sm:$0xff] %vm523, %v7675
  %7740 = vst.msk [vmem:[%s7 + $0x158] sm:$0xff] %vm523, %v7676
  %7741 = vst.msk [vmem:[%s7 + $0x160] sm:$0xff] %vm523, %v7677
  %7742 = vst.msk [vmem:[%s7 + $0x168] sm:$0xff] %vm523, %v7678
  %7743 = vst.msk [vmem:[%s7 + $0x170] sm:$0xff] %vm523, %v7679
  %7744 = vst.msk [vmem:[%s7 + $0x178] sm:$0xff] %vm523, %v7680
  %7745 = vst.msk [vmem:[%s7 + $0x180] sm:$0xff] %vm523, %v7681
  %7746 = vst.msk [vmem:[%s7 + $0x188] sm:$0xff] %vm523, %v7682
  %7747 = vst.msk [vmem:[%s7 + $0x190] sm:$0xff] %vm523, %v7683
  %7748 = vst.msk [vmem:[%s7 + $0x198] sm:$0xff] %vm523, %v7684
  %7749 = vst.msk [vmem:[%s7 + $0x1a0] sm:$0xff] %vm523, %v7685
  %7750 = vst.msk [vmem:[%s7 + $0x1a8] sm:$0xff] %vm523, %v7686
  %7751 = vst.msk [vmem:[%s7 + $0x1b0] sm:$0xff] %vm523, %v7687
  %7752 = vst.msk [vmem:[%s7 + $0x1b8] sm:$0xff] %vm523, %v7688
  %7753 = vst.msk [vmem:[%s7 + $0x1c0] sm:$0xff] %vm523, %v7689
  %7754 = vst.msk [vmem:[%s7 + $0x1c8] sm:$0xff] %vm523, %v7690
  %7755 = vst.msk [vmem:[%s7 + $0x1d0] sm:$0xff] %vm523, %v7691
  %7756 = vst.msk [vmem:[%s7 + $0x1d8] sm:$0xff] %vm523, %v7692
  %7757 = vst.msk [vmem:[%s7 + $0x1e0] sm:$0xff] %vm523, %v7693
  %7758 = vst.msk [vmem:[%s7 + $0x1e8] sm:$0xff] %vm523, %v7694
  %7759 = vst.msk [vmem:[%s7 + $0x1f0] sm:$0xff] %vm523, %v7695
  %7760 = vst.msk [vmem:[%s7 + $0x1f8] sm:$0xff] %vm523, %v7696
  // Predicated region
  $region30: #{tpu_custom_call.1} parent=0 // pred_check
    _
  $region31: #{tpu_custom_call.1} parent=0 // pred_check_branch
    %7762 = sbr.rel (0) target = $region33
  $region32: #{tpu_custom_call.1} parent=0 // pred_region
    _
  $region33: #{tpu_custom_call.1} parent=0 // pred_fallthru
    _
  // Predicated region
  $region34: #{tpu_custom_call.1} parent=0 // pred_check
    _
  $region35: #{tpu_custom_call.1} parent=0 // pred_check_branch
    %7764 = sbr.rel (0) target = $region37
  $region36: #{tpu_custom_call.1} parent=0 // pred_region
    _
  $region37: #{tpu_custom_call.1} parent=0 // pred_fallthru
    _

// kernel: tpu_custom_call.1
$region0: #{tpu_custom_call.1}
  #allocation0 [shape = 'u32[]', space=smem, size = 0x4, offset = 0x4, fixed_abs, tag = 'smem constant byte address 0x4 - core index']
  #allocation1 [shape = 'u32[72,128]{1,0:T(1,128)}', space=vmem, size = 0x9000, scoped, tag = 'internal scratch']
  %s0 = inlined_call_operand.vmem [shape: bf16[512,36], index: 0, kind: input, shape index: {}]
  %s1 = inlined_call_operand.vmem [shape: bf16[36,4], index: 1, kind: input, shape index: {}]
  %s2 = inlined_call_operand.vmem [shape: f32[512,4], index: 2, kind: output, shape index: {0}]
  %s3 = inlined_call_operand.vmem [shape: f32[16,4], index: 3, kind: output, shape index: {1}]
  %s4 = inlined_call_operand.vmem [shape: f32[16,4], index: 4, kind: output, shape index: {2}]
  %5 = xla_tuple %s2, %s3, %s4
  %s6 = sld [smem:[#allocation0]]
  $region57: #{tpu_custom_call.1} parent=0
    _
  %s8 = ssub.s32 1, %s6
  %s9 = scalar_select 0, %s8, %s6
  loop: start=0, step=1, limit=4
  $region2: #{tpu_custom_call.1} parent=0 // loop_pre_header
    _
  $region3: #{tpu_custom_call.1} parent=0 // loop_header
    %s11 = sphi 0, %s15
    %p12 = scmp.ge.s32.totalorder %s11, 4
    %s21 = sphi 0, %s23
    %s24 = sphi 0, %s21
    %s25 = sphi 0, %s24
    %s41 = sphi 0, %s25
    %s45 = sphi 0, %s45
    %s47 = sphi 0, %s45
    %s48 = sphi 0, %s47
    %s62 = sphi 0, %s48
    %s68 = sphi 0, %s70
    %s71 = sphi 0, %s68
    %s72 = sphi 0, %s71
    %s88 = sphi 0, %s72
    %s94 = sphi 0, %s96
    %s97 = sphi 0, %s94
    %s98 = sphi 0, %s97
    %s114 = sphi 0, %s98
    %s120 = sphi 0, %s122
    %s123 = sphi 0, %s120
    %s124 = sphi 0, %s123
    %s140 = sphi 0, %s124
  $region4: #{tpu_custom_call.1} parent=0 // loop_header_branch
    %14 = sbr.rel (%p12) target = $region8
  $region5: #{tpu_custom_call.1} parent=0 // loop_body
    %s16 = ssub.s32 %s11, 1
    %s17 = ssub.s32 %s11, 2
    %s18 = sadd.s32 %s11, 1
    %s19 = ssub.s32 %s11, %s18
    %p20 = scmp.eq.s32.totalorder %s19, 0
    %s22 = sadd.s32 %s21, 1
    %s23 = scalar_select %p20, %s21, %s22
    %p26 = pneg %p20
    %p27 = scmp.eq.s32.totalorder %s11, 1
    %p28 = por %p26, %p27
    %p29 = scmp.ne.s32.totalorder %s21, %s24
    %p30 = scmp.eq.s32.totalorder %s11, 0
    %p31 = por %p29, %p30
    %p32 = scmp.ne.s32.totalorder %s21, %s24
    %p33 = scmp.eq.s32.totalorder %s16, 1
    %p34 = por %p32, %p33
    %p35 = scmp.ne.s32.totalorder %s24, %s25
    %p36 = scmp.eq.s32.totalorder %s16, 0
    %p37 = por %p35, %p36
    %p38 = scmp.ne.s32.totalorder %s24, %s25
    %p39 = scmp.eq.s32.totalorder %s17, 1
    %p40 = por %p38, %p39
    %p42 = scmp.ne.s32.totalorder %s25, %s41
    %p43 = scmp.eq.s32.totalorder %s17, 0
    %p44 = por %p42, %p43
    %s46 = sadd.s32 %s45, 1
    %p49 = scmp.eq.s32.totalorder %s11, 1
    %p50 = scmp.ne.s32.totalorder %s45, %s47
    %p51 = scmp.eq.s32.totalorder %s11, 0
    %p52 = por %p50, %p51
    %p53 = scmp.ne.s32.totalorder %s45, %s47
    %p54 = scmp.eq.s32.totalorder %s16, 1
    %p55 = por %p53, %p54
    %p56 = scmp.ne.s32.totalorder %s47, %s48
    %p57 = scmp.eq.s32.totalorder %s16, 0
    %p58 = por %p56, %p57
    %p59 = scmp.ne.s32.totalorder %s47, %s48
    %p60 = scmp.eq.s32.totalorder %s17, 1
    %p61 = por %p59, %p60
    %p63 = scmp.ne.s32.totalorder %s48, %s62
    %p64 = scmp.eq.s32.totalorder %s17, 0
    %p65 = por %p63, %p64
    %s66 = ssub.s32 %s11, %s18
    %p67 = scmp.eq.s32.totalorder %s66, 0
    %s69 = sadd.s32 %s68, 1
    %s70 = scalar_select %p67, %s68, %s69
    %p73 = pneg %p67
    %p74 = scmp.eq.s32.totalorder %s11, 1
    %p75 = por %p73, %p74
    %p76 = scmp.ne.s32.totalorder %s68, %s71
    %p77 = scmp.eq.s32.totalorder %s11, 0
    %p78 = por %p76, %p77
    %p79 = scmp.ne.s32.totalorder %s68, %s71
    %p80 = scmp.eq.s32.totalorder %s16, 1
    %p81 = por %p79, %p80
    %p82 = scmp.ne.s32.totalorder %s71, %s72
    %p83 = scmp.eq.s32.totalorder %s16, 0
    %p84 = por %p82, %p83
    %p85 = scmp.ne.s32.totalorder %s71, %s72
    %p86 = scmp.eq.s32.totalorder %s17, 1
    %p87 = por %p85, %p86
    %p89 = scmp.ne.s32.totalorder %s72, %s88
    %p90 = scmp.eq.s32.totalorder %s17, 0
    %p91 = por %p89, %p90
    %s92 = ssub.s32 %s11, %s18
    %p93 = scmp.eq.s32.totalorder %s92, 0
    %s95 = sadd.s32 %s94, 1
    %s96 = scalar_select %p93, %s94, %s95
    %p99 = pneg %p93
    %p100 = scmp.eq.s32.totalorder %s11, 1
    %p101 = por %p99, %p100
    %p102 = scmp.ne.s32.totalorder %s94, %s97
    %p103 = scmp.eq.s32.totalorder %s11, 0
    %p104 = por %p102, %p103
    %p105 = scmp.ne.s32.totalorder %s94, %s97
    %p106 = scmp.eq.s32.totalorder %s16, 1
    %p107 = por %p105, %p106
    %p108 = scmp.ne.s32.totalorder %s97, %s98
    %p109 = scmp.eq.s32.totalorder %s16, 0
    %p110 = por %p108, %p109
    %p111 = scmp.ne.s32.totalorder %s97, %s98
    %p112 = scmp.eq.s32.totalorder %s17, 1
    %p113 = por %p111, %p112
    %p115 = scmp.ne.s32.totalorder %s98, %s114
    %p116 = scmp.eq.s32.totalorder %s17, 0
    %p117 = por %p115, %p116
    %s118 = ssub.s32 %s11, %s18
    %p119 = scmp.eq.s32.totalorder %s118, 0
    %s121 = sadd.s32 %s120, 1
    %s122 = scalar_select %p119, %s120, %s121
    %p125 = pneg %p119
    %p126 = scmp.eq.s32.totalorder %s11, 1
    %p127 = por %p125, %p126
    %p128 = scmp.ne.s32.totalorder %s120, %s123
    %p129 = scmp.eq.s32.totalorder %s11, 0
    %p130 = por %p128, %p129
    %p131 = scmp.ne.s32.totalorder %s120, %s123
    %p132 = scmp.eq.s32.totalorder %s16, 1
    %p133 = por %p131, %p132
    %p134 = scmp.ne.s32.totalorder %s123, %s124
    %p135 = scmp.eq.s32.totalorder %s16, 0
    %p136 = por %p134, %p135
    %p137 = scmp.ne.s32.totalorder %s123, %s124
    %p138 = scmp.eq.s32.totalorder %s17, 1
    %p139 = por %p137, %p138
    %p141 = scmp.ne.s32.totalorder %s124, %s140
    %p142 = scmp.eq.s32.totalorder %s17, 0
    %p143 = por %p141, %p142
    %p144 = scmp.le.s32.totalorder 1, %s11
    %p145 = scmp.lt.s32.totalorder %s11, 3
    %p146 = pnand %p144, %p145
    %p147 = pneg %p146
    // Predicated region
    $region9: #{tpu_custom_call.1} parent=5 // pred_check
      _
    $region10: #{tpu_custom_call.1} parent=5 // pred_check_branch
      %149 = sbr.rel (%p146) target = $region12
    $region11: #{tpu_custom_call.1} parent=5 // pred_region
      %s150 = ssub.s32 %s11, 1
      // Predicated region
      $region13: #{tpu_custom_call.1} parent=11 // pred_check
        %p151 = pneg %p58
      $region14: #{tpu_custom_call.1} parent=11 // pred_check_branch
        %153 = sbr.rel (%p151) target = $region16
      $region15: #{tpu_custom_call.1} parent=11 // pred_region
        _
      $region16: #{tpu_custom_call.1} parent=11 // pred_fallthru
        _
    $region12: #{tpu_custom_call.1} parent=5 // pred_fallthru
      _
    %p154 = scmp.lt.s32.totalorder %s11, 2
    // Predicated region
    $region17: #{tpu_custom_call.1} parent=5 // pred_check
      %p155 = pneg %p154
    $region18: #{tpu_custom_call.1} parent=5 // pred_check_branch
      %157 = sbr.rel (%p155) target = $region20
    $region19: #{tpu_custom_call.1} parent=5 // pred_region
      // Predicated region
      $region21: #{tpu_custom_call.1} parent=19 // pred_check
        %p158 = pneg %p31
      $region22: #{tpu_custom_call.1} parent=19 // pred_check_branch
        %160 = sbr.rel (%p158) target = $region24
      $region23: #{tpu_custom_call.1} parent=19 // pred_region
        %s161 = smul.u32 32, %s11
        %p162 = scmp.lt.s32.totalorder %s161, 63
        %s163 = scalar_select %p162, %s161, 63
        %s164 = smul.addr %s163, 4
        %s165 = scalar_lea.vmem %s0, %s164
        %s166 = smul.u32 32, %s11
      $region24: #{tpu_custom_call.1} parent=19 // pred_fallthru
        _
    $region20: #{tpu_custom_call.1} parent=5 // pred_fallthru
      _
    %p167 = scmp.le.s32.totalorder 1, %s11
    %p168 = scmp.lt.s32.totalorder %s11, 3
    %p169 = pnand %p167, %p168
    %p170 = pneg %p169
    // Predicated region
    $region25: #{tpu_custom_call.1} parent=5 // pred_check
      _
    $region26: #{tpu_custom_call.1} parent=5 // pred_check_branch
      %172 = sbr.rel (%p169) target = $region28
    $region27: #{tpu_custom_call.1} parent=5 // pred_region
      %s173 = ssub.s32 %s11, 1
      %s174 = smul.u32 32, %s16
      %p175 = scmp.lt.s32.totalorder %s174, 63
      %s176 = scalar_select %p175, %s174, 63
      %s177 = smul.addr %s176, 4
      %s178 = scalar_lea.vmem %s0, %s177
      %p179 = pneg %p37
      %p180 = pneg %p34
      %p181 = pneg %p58
      %p182 = pneg %p55
      %p183 = pneg %p84
      %p184 = pneg %p81
      %s185 = smul.u32 32, %s16
      %p186 = scmp.lt.s32.totalorder %s185, 63
      %s187 = scalar_select %p186, %s185, 63
      %s188 = smul.addr %s187, 8
      %s189 = scalar_lea.vmem %s2, %s188
      %p190 = pneg %p110
      %p191 = pneg %p107
      %p192 = scmp.lt.s32.totalorder %s16, 1
      %s193 = scalar_select %p192, %s16, 1
      %s194 = smul.addr %s193, 8
      %s195 = scalar_lea.vmem %s3, %s194
      %p196 = pneg %p136
      %p197 = pneg %p133
      %p198 = scmp.lt.s32.totalorder %s16, 1
      %s199 = scalar_select %p198, %s16, 1
      %s200 = smul.addr %s199, 8
      %s201 = scalar_lea.vmem %s4, %s200
      %s202 = smul.u32 32, %s16
      %p203 = scmp.lt.s32.totalorder %s202, 63
      %s204 = scalar_select %p203, %s202, 63
      %s205 = smul.addr %s204, 4
      %s206 = scalar_lea.vmem %s0, %s205
      %s207 = smul.u32 32, %s16
      %s208 = smul.u32 32, %s16
      %p209 = scmp.lt.s32.totalorder %s208, 63
      %s210 = scalar_select %p209, %s208, 63
      %s211 = smul.addr %s210, 8
      %s212 = scalar_lea.vmem %s2, %s211
      %s213 = smul.u32 32, %s16
      %p214 = scmp.lt.s32.totalorder %s16, 1
      %s215 = scalar_select %p214, %s16, 1
      %s216 = smul.addr %s215, 8
      %s217 = scalar_lea.vmem %s3, %s216
      %p218 = scmp.lt.s32.totalorder %s16, 1
      %s219 = scalar_select %p218, %s16, 1
      %s220 = smul.addr %s219, 8
      %s221 = scalar_lea.vmem %s4, %s220
      %v223 = vld [vmem:[%s206] sm:$0xf]
      %v224 = vld [vmem:[%s206 + $0x4] sm:$0xf]
      %v225 = vld [vmem:[%s206 + $0x8] sm:$0xf]
      %v226 = vld [vmem:[%s206 + $0xc] sm:$0xf]
      %v227 = vld [vmem:[%s206 + $0x10] sm:$0xf]
      %v228 = vld [vmem:[%s206 + $0x14] sm:$0xf]
      %v229 = vld [vmem:[%s206 + $0x18] sm:$0xf]
      %v230 = vld [vmem:[%s206 + $0x1c] sm:$0xf]
      %v231 = vld [vmem:[%s206 + $0x20] sm:$0xf]
      %v232 = vld [vmem:[%s206 + $0x24] sm:$0xf]
      %v233 = vld [vmem:[%s206 + $0x28] sm:$0xf]
      %v234 = vld [vmem:[%s206 + $0x2c] sm:$0xf]
      %v235 = vld [vmem:[%s206 + $0x30] sm:$0xf]
      %v236 = vld [vmem:[%s206 + $0x34] sm:$0xf]
      %v237 = vld [vmem:[%s206 + $0x38] sm:$0xf]
      %v238 = vld [vmem:[%s206 + $0x3c] sm:$0xf]
      %v239 = vld [vmem:[%s206 + $0x40] sm:$0xf]
      %v240 = vld [vmem:[%s206 + $0x44] sm:$0xf]
      %v241 = vld [vmem:[%s206 + $0x48] sm:$0xf]
      %v242 = vld [vmem:[%s206 + $0x4c] sm:$0xf]
      %v243 = vld [vmem:[%s206 + $0x50] sm:$0xf]
      %v244 = vld [vmem:[%s206 + $0x54] sm:$0xf]
      %v245 = vld [vmem:[%s206 + $0x58] sm:$0xf]
      %v246 = vld [vmem:[%s206 + $0x5c] sm:$0xf]
      %v247 = vld [vmem:[%s206 + $0x60] sm:$0xf]
      %v248 = vld [vmem:[%s206 + $0x64] sm:$0xf]
      %v249 = vld [vmem:[%s206 + $0x68] sm:$0xf]
      %v250 = vld [vmem:[%s206 + $0x6c] sm:$0xf]
      %v251 = vld [vmem:[%s206 + $0x70] sm:$0xf]
      %v252 = vld [vmem:[%s206 + $0x74] sm:$0xf]
      %v253 = vld [vmem:[%s206 + $0x78] sm:$0xf]
      %v254 = vld [vmem:[%s206 + $0x7c] sm:$0xf]
      %v255 = vld [vmem:[%s1] sm:$0xf]
      %v256 = vld [vmem:[%s1 + $0x4] sm:$0xf]
      %v257 = vld [vmem:[%s1 + $0x8] sm:$0xf]
      %v258 = vld [vmem:[%s1 + $0xc] sm:$0xf]
      %v259 = vld [vmem:[%s1 + $0x10] sm:$0x3]
      %v292 = vunpack.c.l.b16 %v223
      %v293 = vunpack.c.l.b16 %v224
      %v294 = vunpack.c.l.b16 %v225
      %v295 = vunpack.c.l.b16 %v226
      %v296 = vunpack.c.l.b16 %v227
      %v297 = vunpack.c.l.b16 %v228
      %v298 = vunpack.c.l.b16 %v229
      %v299 = vunpack.c.l.b16 %v230
      %v300 = vunpack.c.l.b16 %v231
      %v301 = vunpack.c.l.b16 %v232
      %v302 = vunpack.c.l.b16 %v233
      %v303 = vunpack.c.l.b16 %v234
      %v304 = vunpack.c.l.b16 %v235
      %v305 = vunpack.c.l.b16 %v236
      %v306 = vunpack.c.l.b16 %v237
      %v307 = vunpack.c.l.b16 %v238
      %v308 = vunpack.c.l.b16 %v239
      %v309 = vunpack.c.l.b16 %v240
      %v310 = vunpack.c.l.b16 %v241
      %v311 = vunpack.c.l.b16 %v242
      %v312 = vunpack.c.l.b16 %v243
      %v313 = vunpack.c.l.b16 %v244
      %v314 = vunpack.c.l.b16 %v245
      %v315 = vunpack.c.l.b16 %v246
      %v316 = vunpack.c.l.b16 %v247
      %v317 = vunpack.c.l.b16 %v248
      %v318 = vunpack.c.l.b16 %v249
      %v319 = vunpack.c.l.b16 %v250
      %v320 = vunpack.c.l.b16 %v251
      %v321 = vunpack.c.l.b16 %v252
      %v322 = vunpack.c.l.b16 %v253
      %v323 = vunpack.c.l.b16 %v254
      %v324 = vpack.c.b16 %v293, %v292
      %v325 = vpack.c.b16 %v295, %v294
      %v326 = vpack.c.b16 %v297, %v296
      %v327 = vpack.c.b16 %v299, %v298
      %v328 = vpack.c.b16 %v301, %v300
      %v329 = vpack.c.b16 %v303, %v302
      %v330 = vpack.c.b16 %v305, %v304
      %v331 = vpack.c.b16 %v307, %v306
      %v332 = vpack.c.b16 %v309, %v308
      %v333 = vpack.c.b16 %v311, %v310
      %v334 = vpack.c.b16 %v313, %v312
      %v335 = vpack.c.b16 %v315, %v314
      %v336 = vpack.c.b16 %v317, %v316
      %v337 = vpack.c.b16 %v319, %v318
      %v338 = vpack.c.b16 %v321, %v320
      %v339 = vpack.c.b16 %v323, %v322
      %v345 = vunpack.c.l.b16 %v255
      %v346 = vunpack.c.l.b16 %v256
      %v347 = vunpack.c.l.b16 %v257
      %v348 = vunpack.c.l.b16 %v258
      %v349 = vunpack.c.l.b16 %v259
      %v350 = vpack.c.b16 %v346, %v345
      %v351 = vpack.c.b16 %v348, %v347
      %v352 = vpack.c.b16 %v349, %v349
      %vm355 = vcmask 293888
      %v357 = vsel %vm355, %v324, 0
      %v360 = vsel %vm355, %v325, 0
      %v363 = vsel %vm355, %v326, 0
      %v366 = vsel %vm355, %v327, 0
      %v369 = vsel %vm355, %v328, 0
      %v372 = vsel %vm355, %v329, 0
      %v375 = vsel %vm355, %v330, 0
      %v378 = vsel %vm355, %v331, 0
      %v381 = vsel %vm355, %v332, 0
      %v384 = vsel %vm355, %v333, 0
      %v387 = vsel %vm355, %v334, 0
      %v390 = vsel %vm355, %v335, 0
      %v393 = vsel %vm355, %v336, 0
      %v396 = vsel %vm355, %v337, 0
      %v399 = vsel %vm355, %v338, 0
      %v402 = vsel %vm355, %v339, 0
      %vm404 = vcmask 1041408
      %v406 = vsel %vm404, %v352, 0
      %408 = vmatpush.bf16.msra.mxu0 0
      %409 = vmatpush.bf16.msra.mxu0 0
      %410 = vmatpush.bf16.msra.mxu0 0
      %411 = vmatpush.bf16.msra.mxu0 0
      %412 = vmatpush.bf16.msra.mxu0 0
      %413 = vmatpush.bf16.msra.mxu0 %v406
      %414 = vmatpush.bf16.msra.mxu0 %v351
      %415 = vmatpush.bf16.msra.mxu0 %v350
      %416 = vmatmul.bf16.gmra.mxu0 %v357
      %v417 = vpop.f32.mrf.mxu0
      %v418 = vadd.f32 0.0, %v417
      %v419 = vpop.f32.mrf.mxu0
      %v420 = vadd.f32 0.0, %v419
      %421 = vmatmul.bf16.gmra.mxu0 %v360
      %v422 = vpop.f32.mrf.mxu0
      %v423 = vadd.f32 0.0, %v422
      %v424 = vpop.f32.mrf.mxu0
      %v425 = vadd.f32 0.0, %v424
      %426 = vmatmul.bf16.gmra.mxu0 %v363
      %v427 = vpop.f32.mrf.mxu0
      %v428 = vadd.f32 0.0, %v427
      %v429 = vpop.f32.mrf.mxu0
      %v430 = vadd.f32 0.0, %v429
      %431 = vmatmul.bf16.gmra.mxu0 %v366
      %v432 = vpop.f32.mrf.mxu0
      %v433 = vadd.f32 0.0, %v432
      %v434 = vpop.f32.mrf.mxu0
      %v435 = vadd.f32 0.0, %v434
      %436 = vmatmul.bf16.gmra.mxu0 %v369
      %v437 = vpop.f32.mrf.mxu0
      %v438 = vadd.f32 0.0, %v437
      %v439 = vpop.f32.mrf.mxu0
      %v440 = vadd.f32 0.0, %v439
      %441 = vmatmul.bf16.gmra.mxu0 %v372
      %v442 = vpop.f32.mrf.mxu0
      %v443 = vadd.f32 0.0, %v442
      %v444 = vpop.f32.mrf.mxu0
      %v445 = vadd.f32 0.0, %v444
      %446 = vmatmul.bf16.gmra.mxu0 %v375
      %v447 = vpop.f32.mrf.mxu0
      %v448 = vadd.f32 0.0, %v447
      %v449 = vpop.f32.mrf.mxu0
      %v450 = vadd.f32 0.0, %v449
      %451 = vmatmul.bf16.gmra.mxu0 %v378
      %v452 = vpop.f32.mrf.mxu0
      %v453 = vadd.f32 0.0, %v452
      %v454 = vpop.f32.mrf.mxu0
      %v455 = vadd.f32 0.0, %v454
      %456 = vmatmul.bf16.gmra.mxu0 %v381
      %v457 = vpop.f32.mrf.mxu0
      %v458 = vadd.f32 0.0, %v457
      %v459 = vpop.f32.mrf.mxu0
      %v460 = vadd.f32 0.0, %v459
      %461 = vmatmul.bf16.gmra.mxu0 %v384
      %v462 = vpop.f32.mrf.mxu0
      %v463 = vadd.f32 0.0, %v462
      %v464 = vpop.f32.mrf.mxu0
      %v465 = vadd.f32 0.0, %v464
      %466 = vmatmul.bf16.gmra.mxu0 %v387
      %v467 = vpop.f32.mrf.mxu0
      %v468 = vadd.f32 0.0, %v467
      %v469 = vpop.f32.mrf.mxu0
      %v470 = vadd.f32 0.0, %v469
      %471 = vmatmul.bf16.gmra.mxu0 %v390
      %v472 = vpop.f32.mrf.mxu0
      %v473 = vadd.f32 0.0, %v472
      %v474 = vpop.f32.mrf.mxu0
      %v475 = vadd.f32 0.0, %v474
      %476 = vmatmul.bf16.gmra.mxu0 %v393
      %v477 = vpop.f32.mrf.mxu0
      %v478 = vadd.f32 0.0, %v477
      %v479 = vpop.f32.mrf.mxu0
      %v480 = vadd.f32 0.0, %v479
      %481 = vmatmul.bf16.gmra.mxu0 %v396
      %v482 = vpop.f32.mrf.mxu0
      %v483 = vadd.f32 0.0, %v482
      %v484 = vpop.f32.mrf.mxu0
      %v485 = vadd.f32 0.0, %v484
      %486 = vmatmul.bf16.gmra.mxu0 %v399
      %v487 = vpop.f32.mrf.mxu0
      %v488 = vadd.f32 0.0, %v487
      %v489 = vpop.f32.mrf.mxu0
      %v490 = vadd.f32 0.0, %v489
      %491 = vmatmul.bf16.gmra.mxu0 %v402
      %v492 = vpop.f32.mrf.mxu0
      %v493 = vadd.f32 0.0, %v492
      %v494 = vpop.f32.mrf.mxu0
      %v495 = vadd.f32 0.0, %v494
      %496 = vdwg.mxu0
      %vm497 = vcmask 31744
      %498 = vst.msk [vmem:[%s212] sm:$0xff] %vm497, %v418
      %499 = vst.msk [vmem:[%s212 + $0x8] sm:$0xff] %vm497, %v420
      %500 = vst.msk [vmem:[%s212 + $0x10] sm:$0xff] %vm497, %v423
      %501 = vst.msk [vmem:[%s212 + $0x18] sm:$0xff] %vm497, %v425
      %502 = vst.msk [vmem:[%s212 + $0x20] sm:$0xff] %vm497, %v428
      %503 = vst.msk [vmem:[%s212 + $0x28] sm:$0xff] %vm497, %v430
      %504 = vst.msk [vmem:[%s212 + $0x30] sm:$0xff] %vm497, %v433
      %505 = vst.msk [vmem:[%s212 + $0x38] sm:$0xff] %vm497, %v435
      %506 = vst.msk [vmem:[%s212 + $0x40] sm:$0xff] %vm497, %v438
      %507 = vst.msk [vmem:[%s212 + $0x48] sm:$0xff] %vm497, %v440
      %508 = vst.msk [vmem:[%s212 + $0x50] sm:$0xff] %vm497, %v443
      %509 = vst.msk [vmem:[%s212 + $0x58] sm:$0xff] %vm497, %v445
      %510 = vst.msk [vmem:[%s212 + $0x60] sm:$0xff] %vm497, %v448
      %511 = vst.msk [vmem:[%s212 + $0x68] sm:$0xff] %vm497, %v450
      %512 = vst.msk [vmem:[%s212 + $0x70] sm:$0xff] %vm497, %v453
      %513 = vst.msk [vmem:[%s212 + $0x78] sm:$0xff] %vm497, %v455
      %514 = vst.msk [vmem:[%s212 + $0x80] sm:$0xff] %vm497, %v458
      %515 = vst.msk [vmem:[%s212 + $0x88] sm:$0xff] %vm497, %v460
      %516 = vst.msk [vmem:[%s212 + $0x90] sm:$0xff] %vm497, %v463
      %517 = vst.msk [vmem:[%s212 + $0x98] sm:$0xff] %vm497, %v465
      %518 = vst.msk [vmem:[%s212 + $0xa0] sm:$0xff] %vm497, %v468
      %519 = vst.msk [vmem:[%s212 + $0xa8] sm:$0xff] %vm497, %v470
      %520 = vst.msk [vmem:[%s212 + $0xb0] sm:$0xff] %vm497, %v473
      %521 = vst.msk [vmem:[%s212 + $0xb8] sm:$0xff] %vm497, %v475
      %522 = vst.msk [vmem:[%s212 + $0xc0] sm:$0xff] %vm497, %v478
      %523 = vst.msk [vmem:[%s212 + $0xc8] sm:$0xff] %vm497, %v480
      %524 = vst.msk [vmem:[%s212 + $0xd0] sm:$0xff] %vm497, %v483
      %525 = vst.msk [vmem:[%s212 + $0xd8] sm:$0xff] %vm497, %v485
      %526 = vst.msk [vmem:[%s212 + $0xe0] sm:$0xff] %vm497, %v488
      %527 = vst.msk [vmem:[%s212 + $0xe8] sm:$0xff] %vm497, %v490
      %528 = vst.msk [vmem:[%s212 + $0xf0] sm:$0xff] %vm497, %v493
      %529 = vst.msk [vmem:[%s212 + $0xf8] sm:$0xff] %vm497, %v495
      %530 = vmatpush.msra.mxu0 %v455
      %531 = vmatpush.msra.mxu0 %v453
      %532 = vmatpush.msra.mxu0 %v450
      %533 = vmatpush.msra.mxu0 %v448
      %534 = vmatpush.msra.mxu0 %v445
      %535 = vmatpush.msra.mxu0 %v443
      %536 = vmatpush.msra.mxu0 %v440
      %537 = vmatpush.msra.mxu0 %v438
      %538 = vmatpush.msra.mxu0 %v435
      %539 = vmatpush.msra.mxu0 %v433
      %540 = vmatpush.msra.mxu0 %v430
      %541 = vmatpush.msra.mxu0 %v428
      %542 = vmatpush.msra.mxu0 %v425
      %543 = vmatpush.msra.mxu0 %v423
      %544 = vmatpush.msra.mxu0 %v420
      %545 = vmatpush.msra.mxu0 %v418
      %546 = vmatmul.f32.gmra.mxu0 1.0
      %v547 = vpop.f32.mrf.mxu0
      %v548 = vadd.f32 0.0, %v547
      %549 = vdwg.mxu0
      %550 = vmatpush.msra.mxu0 %v495
      %551 = vmatpush.msra.mxu0 %v493
      %552 = vmatpush.msra.mxu0 %v490
      %553 = vmatpush.msra.mxu0 %v488
      %554 = vmatpush.msra.mxu0 %v485
      %555 = vmatpush.msra.mxu0 %v483
      %556 = vmatpush.msra.mxu0 %v480
      %557 = vmatpush.msra.mxu0 %v478
      %558 = vmatpush.msra.mxu0 %v475
      %559 = vmatpush.msra.mxu0 %v473
      %560 = vmatpush.msra.mxu0 %v470
      %561 = vmatpush.msra.mxu0 %v468
      %562 = vmatpush.msra.mxu0 %v465
      %563 = vmatpush.msra.mxu0 %v463
      %564 = vmatpush.msra.mxu0 %v460
      %565 = vmatpush.msra.mxu0 %v458
      %566 = vmatmul.f32.gmra.mxu0 1.0
      %v567 = vpop.f32.mrf.mxu0
      %v568 = vadd.f32 %v548, %v567
      %569 = vdwg.mxu0
      %570 = vst.msk [vmem:[%s217] sm:$0xff] %vm497, %v568
      %v571 = vmul.f32 %v418, %v418
      %v572 = vmul.f32 %v420, %v420
      %v573 = vmul.f32 %v423, %v423
      %v574 = vmul.f32 %v425, %v425
      %v575 = vmul.f32 %v428, %v428
      %v576 = vmul.f32 %v430, %v430
      %v577 = vmul.f32 %v433, %v433
      %v578 = vmul.f32 %v435, %v435
      %v579 = vmul.f32 %v438, %v438
      %v580 = vmul.f32 %v440, %v440
      %v581 = vmul.f32 %v443, %v443
      %v582 = vmul.f32 %v445, %v445
      %v583 = vmul.f32 %v448, %v448
      %v584 = vmul.f32 %v450, %v450
      %v585 = vmul.f32 %v453, %v453
      %v586 = vmul.f32 %v455, %v455
      %v587 = vmul.f32 %v458, %v458
      %v588 = vmul.f32 %v460, %v460
      %v589 = vmul.f32 %v463, %v463
      %v590 = vmul.f32 %v465, %v465
      %v591 = vmul.f32 %v468, %v468
      %v592 = vmul.f32 %v470, %v470
      %v593 = vmul.f32 %v473, %v473
      %v594 = vmul.f32 %v475, %v475
      %v595 = vmul.f32 %v478, %v478
      %v596 = vmul.f32 %v480, %v480
      %v597 = vmul.f32 %v483, %v483
      %v598 = vmul.f32 %v485, %v485
      %v599 = vmul.f32 %v488, %v488
      %v600 = vmul.f32 %v490, %v490
      %v601 = vmul.f32 %v493, %v493
      %v602 = vmul.f32 %v495, %v495
      %603 = vmatpush.msra.mxu0 %v586
      %604 = vmatpush.msra.mxu0 %v585
      %605 = vmatpush.msra.mxu0 %v584
      %606 = vmatpush.msra.mxu0 %v583
      %607 = vmatpush.msra.mxu0 %v582
      %608 = vmatpush.msra.mxu0 %v581
      %609 = vmatpush.msra.mxu0 %v580
      %610 = vmatpush.msra.mxu0 %v579
      %611 = vmatpush.msra.mxu0 %v578
      %612 = vmatpush.msra.mxu0 %v577
      %613 = vmatpush.msra.mxu0 %v576
      %614 = vmatpush.msra.mxu0 %v575
      %615 = vmatpush.msra.mxu0 %v574
      %616 = vmatpush.msra.mxu0 %v573
      %617 = vmatpush.msra.mxu0 %v572
      %618 = vmatpush.msra.mxu0 %v571
      %619 = vmatmul.f32.gmra.mxu0 1.0
      %v620 = vpop.f32.mrf.mxu0
      %v621 = vadd.f32 0.0, %v620
      %622 = vdwg.mxu0
      %623 = vmatpush.msra.mxu0 %v602
      %624 = vmatpush.msra.mxu0 %v601
      %625 = vmatpush.msra.mxu0 %v600
      %626 = vmatpush.msra.mxu0 %v599
      %627 = vmatpush.msra.mxu0 %v598
      %628 = vmatpush.msra.mxu0 %v597
      %629 = vmatpush.msra.mxu0 %v596
      %630 = vmatpush.msra.mxu0 %v595
      %631 = vmatpush.msra.mxu0 %v594
      %632 = vmatpush.msra.mxu0 %v593
      %633 = vmatpush.msra.mxu0 %v592
      %634 = vmatpush.msra.mxu0 %v591
      %635 = vmatpush.msra.mxu0 %v590
      %636 = vmatpush.msra.mxu0 %v589
      %637 = vmatpush.msra.mxu0 %v588
      %638 = vmatpush.msra.mxu0 %v587
      %639 = vmatmul.f32.gmra.mxu0 1.0
      %v640 = vpop.f32.mrf.mxu0
      %v641 = vadd.f32 %v621, %v640
      %642 = vdwg.mxu0
      %643 = vst.msk [vmem:[%s221] sm:$0xff] %vm497, %v641
      %s644 = smul.u32 32, %s16
      %p645 = scmp.lt.s32.totalorder %s644, 63
      %s646 = scalar_select %p645, %s644, 63
      %s647 = smul.addr %s646, 8
      %s648 = scalar_lea.vmem %s2, %s647
      %p649 = scmp.lt.s32.totalorder %s16, 1
      %s650 = scalar_select %p649, %s16, 1
      %s651 = smul.addr %s650, 8
      %s652 = scalar_lea.vmem %s3, %s651
      %p653 = scmp.lt.s32.totalorder %s16, 1
      %s654 = scalar_select %p653, %s16, 1
      %s655 = smul.addr %s654, 8
      %s656 = scalar_lea.vmem %s4, %s655
      // Predicated region
      $region29: #{tpu_custom_call.1} parent=27 // pred_check
        %p657 = pneg %p81
      $region30: #{tpu_custom_call.1} parent=27 // pred_check_branch
        %659 = sbr.rel (%p657) target = $region32
      $region31: #{tpu_custom_call.1} parent=27 // pred_region
        %s660 = smul.u32 32, %s16
      $region32: #{tpu_custom_call.1} parent=27 // pred_fallthru
        _
      // Predicated region
      $region33: #{tpu_custom_call.1} parent=27 // pred_check
        %p661 = pneg %p107
      $region34: #{tpu_custom_call.1} parent=27 // pred_check_branch
        %663 = sbr.rel (%p661) target = $region36
      $region35: #{tpu_custom_call.1} parent=27 // pred_region
        _
      $region36: #{tpu_custom_call.1} parent=27 // pred_fallthru
        _
      // Predicated region
      $region37: #{tpu_custom_call.1} parent=27 // pred_check
        %p664 = pneg %p133
      $region38: #{tpu_custom_call.1} parent=27 // pred_check_branch
        %666 = sbr.rel (%p664) target = $region40
      $region39: #{tpu_custom_call.1} parent=27 // pred_region
        _
      $region40: #{tpu_custom_call.1} parent=27 // pred_fallthru
        _
    $region28: #{tpu_custom_call.1} parent=5 // pred_fallthru
      _
    %p667 = scmp.le.s32.totalorder 2, %s11
    // Predicated region
    $region41: #{tpu_custom_call.1} parent=5 // pred_check
      %p668 = pneg %p667
    $region42: #{tpu_custom_call.1} parent=5 // pred_check_branch
      %670 = sbr.rel (%p668) target = $region44
    $region43: #{tpu_custom_call.1} parent=5 // pred_region
      %s671 = ssub.s32 %s11, 2
      // Predicated region
      $region45: #{tpu_custom_call.1} parent=43 // pred_check
        %p672 = pneg %p87
      $region46: #{tpu_custom_call.1} parent=43 // pred_check_branch
        %674 = sbr.rel (%p672) target = $region48
      $region47: #{tpu_custom_call.1} parent=43 // pred_region
        %s675 = smul.u32 32, %s17
        %p676 = scmp.lt.s32.totalorder %s675, 63
        %s677 = scalar_select %p676, %s675, 63
        %s678 = smul.addr %s677, 8
        %s679 = scalar_lea.vmem %s2, %s678
      $region48: #{tpu_custom_call.1} parent=43 // pred_fallthru
        _
      // Predicated region
      $region49: #{tpu_custom_call.1} parent=43 // pred_check
        %p680 = pneg %p113
      $region50: #{tpu_custom_call.1} parent=43 // pred_check_branch
        %682 = sbr.rel (%p680) target = $region52
      $region51: #{tpu_custom_call.1} parent=43 // pred_region
        %p683 = scmp.lt.s32.totalorder %s17, 1
        %s684 = scalar_select %p683, %s17, 1
        %s685 = smul.addr %s684, 8
        %s686 = scalar_lea.vmem %s3, %s685
      $region52: #{tpu_custom_call.1} parent=43 // pred_fallthru
        _
      // Predicated region
      $region53: #{tpu_custom_call.1} parent=43 // pred_check
        %p687 = pneg %p139
      $region54: #{tpu_custom_call.1} parent=43 // pred_check_branch
        %689 = sbr.rel (%p687) target = $region56
      $region55: #{tpu_custom_call.1} parent=43 // pred_region
        %p690 = scmp.lt.s32.totalorder %s17, 1
        %s691 = scalar_select %p690, %s17, 1
        %s692 = smul.addr %s691, 8
        %s693 = scalar_lea.vmem %s4, %s692
      $region56: #{tpu_custom_call.1} parent=43 // pred_fallthru
        _
    $region44: #{tpu_custom_call.1} parent=5 // pred_fallthru
      _
  $region6: #{tpu_custom_call.1} parent=0 // loop_footer
    %s15 = sadd.s32 1, %s11
  $region7: #{tpu_custom_call.1} parent=0 // loop_footer_branch
    %10 = sbr.rel target = $region3
  $region8: #{tpu_custom_call.1} parent=0 // loop_exit
    _

</llo_original>
